<compile_context>
chip_gen: v5e
topology: v5e:2x2
jax: 0.10.0
libtpu: 0.0.40
codegen_flags: <defaults>
</compile_context>

<pallas_src>
import jax
import jax.numpy as jnp
import numpy as np
from jax.experimental import pallas as pl
from jax.experimental.pallas import tpu as pltpu


NODE_TYPES = ("news", "entities", "topic")
# (src_type, relation, dst_type, conv_kind) — mirrors the HeteroConv dict in the module.
RELATIONS = (
    ("news", "has", "entities", "gatv2"),
    ("entities", "in", "news", "gat"),
    ("news", "on", "topic", "gat"),
    ("topic", "in", "news", "gat"),
    ("entities", "similar", "entities", "gatv2"),
)
REL_KIND = {(s, r, d): k for (s, r, d, k) in RELATIONS}

# For every node type: ordered (relation, role) list.  Role i of type t occupies lanes
# [i*H, (i+1)*H) of t's block in the packed per-layer weight slab; GAT roles additionally
# get one folded attention column (W @ att^T) right after the role blocks.
ROLE_LAYOUT = {
    "news": ((("news", "has", "entities"), "src"),
             (("news", "on", "topic"), "src"),
             (("entities", "in", "news"), "dst"),
             (("topic", "in", "news"), "dst")),
    "entities": ((("entities", "in", "news"), "src"),
                 (("entities", "similar", "entities"), "src"),
                 (("news", "has", "entities"), "dst"),
                 (("entities", "similar", "entities"), "dst")),
    "topic": ((("topic", "in", "news"), "src"),
              (("news", "on", "topic"), "dst")),
}

NEG_INF = -1e30
VEC_ROWS = 16                                     # rows of the per-layer f32 vector slab
ATT_ROW = {("news", "has", "entities"): 1,        # GATv2 attention-vector rows
           ("entities", "similar", "entities"): 2}
BIAS_ROW0 = 3                                     # conv output-bias row = BIAS_ROW0 + rel idx
LIN_B_ROW = BIAS_ROW0 + len(RELATIONS)            # final Linear bias (last layer's slab only)

# bf16 broadcast + LeakyReLU for the GATv2 score (v6e/v7x have bf16 VALUs); on v5e set
# this to jnp.float32 — bf16 elementwise there is emulated through converts.
GATV2_BCAST_DTYPE = jnp.bfloat16


# ----------------------------- layout helpers (static) -----------------------------
def _round_up(n, m):
    return ((n + m - 1) // m) * m


def _layer_layout(h):
    """Lane layout of one layer's packed weight slab: per-type blocks (128-lane padded)
    containing all role projections plus one folded attention column per GAT role."""
    layout = {}
    off = 0
    for t in NODE_TYPES:
        roles = ROLE_LAYOUT[t]
        gat_role_ids = [i for i, (rel, _) in enumerate(roles) if REL_KIND[rel] == "gat"]
        att_col = {i: len(roles) * h + j for j, i in enumerate(gat_role_ids)}
        bw = _round_up(len(roles) * h + len(gat_role_ids), 128)
        layout[t] = dict(off=off, bw=bw, att_col=att_col)
        off += bw
    return layout, off


def _role_index(t, rel, role):
    for i, (r, ro) in enumerate(ROLE_LAYOUT[t]):
        if r == rel and ro == role:
            return i
    raise KeyError((t, rel, role))


# ----------------------------- in-kernel helpers -----------------------------
def _leaky_relu(x, slope=0.2):
    return jnp.where(x >= 0, x, slope * x)


def _masked_softmax_agg(e, mask_bias, h_src16, conv_bias):
    """Masked softmax over axis=1 (deferred normalization) + MXU aggregation of h_src.
    Max/exp/sum stay in f32; destinations with no incoming edges return conv_bias."""
    e = e + mask_bias                                   # masked entries -> ~ -1e30 (f32)
    m = jnp.max(e, axis=1, keepdims=True)
    m = jnp.where(m > 0.5 * NEG_INF, m, 0.0)            # safe max for isolated dst rows
    p = jnp.exp(e - m)                                  # masked entries underflow to 0
    s = jnp.sum(p, axis=1, keepdims=True)
    acc = jnp.dot(p.astype(jnp.bfloat16), h_src16, preferred_element_type=jnp.float32)
    inv = pl.reciprocal(jnp.where(s > 0.0, s, 1.0), approx=True)   # EUP, off the VPU path
    return acc * inv + conv_bias


# ----------------------------------- kernel -----------------------------------
def _make_kernel(cfg):
    nn = cfg["num_nodes"]
    n_layers = cfg["num_layers"]
    out_c = cfg["out_channels"]

    def kernel(x_ref, mask_ref, *rest):
        # rest = (w_0, vec_0, ..., w_{L-1}, vec_{L-1}, lin_w, out)
        out_ref, lin_w_ref = rest[-1], rest[-2]

        x16 = x_ref[...].astype(jnp.bfloat16)
        masks_all = mask_ref[...]
        masks = {}
        for ri, (s, r, d, _) in enumerate(RELATIONS):
            ro = cfg["mask_off"][ri]
            masks[(s, r, d)] = masks_all[ro:ro + nn[d], :nn[s]]

        # layer-0 inputs: per-type row blocks of the zero-padded 128-lane feature slab
        cur16 = {t: x16[cfg["x_off"][t]:cfg["x_off"][t] + nn[t], :] for t in NODE_TYPES}

        vec = None
        for li in range(n_layers):
            w = rest[2 * li][...]          # bf16 packed weights (all roles of all types)
            vec = rest[2 * li + 1][...]    # f32: row0 linear biases, att rows, conv biases
            lcfg = cfg["layers"][li]
            h, layout = lcfg["h"], lcfg["layout"]

            # One wide lane-dense bf16 MXU matmul per node type: every relation role plus
            # the folded GAT attention columns at once; linear biases added in f32.
            hp, hp16 = {}, {}
            for t in NODE_TYPES:
                off, bw = layout[t]["off"], layout[t]["bw"]
                ht = jnp.dot(cur16[t], w[:, off:off + bw],
                             preferred_element_type=jnp.float32) + vec[0:1, off:off + bw]
                hp[t] = ht
                hp16[t] = ht.astype(jnp.bfloat16)     # reused by all relations touching t

            ys = {}
            for ri, (s, r, d, kind) in enumerate(RELATIONS):
                rel = (s, r, d)
                si = _role_index(s, rel, "src")
                di = _role_index(d, rel, "dst")
                hsrc16 = hp16[s][:, si * h:(si + 1) * h]
                if kind == "gat":
                    # GATConv: e_ij = LeakyReLU(a_dst_i + a_src_j); a_* are the folded
                    # attention columns of the packed projection (came off the MXU).
                    cs = layout[s]["att_col"][si]
                    cd = layout[d]["att_col"][di]
                    a_s = hp[s][:, cs:cs + 1]                       # [Ns, 1]
                    a_d = hp[d][:, cd:cd + 1]                       # [Nd, 1]
                    e = _leaky_relu(a_d + a_s.T)                    # [Nd, Ns] f32
                else:
                    # GATv2Conv: e_ij = att . LeakyReLU(h_dst_i + h_src_j); broadcast +
                    # LeakyReLU in GATV2_BCAST_DTYPE, score reduce kept in f32 (see header).
                    hsel = hp16 if GATV2_BCAST_DTYPE == jnp.bfloat16 else hp
                    hs_b = hsel[s][:, si * h:(si + 1) * h]
                    hd_b = hsel[d][:, di * h:(di + 1) * h]
                    att_row = vec[ATT_ROW[rel]:ATT_ROW[rel] + 1, :h]        # [1, H] f32
                    z = _leaky_relu(hd_b[:, None, :] + hs_b[None, :, :])    # [Nd, Ns, H]
                    e = jnp.sum(z.astype(jnp.float32) * att_row[None, :, :], axis=-1)
                conv_bias = vec[BIAS_ROW0 + ri:BIAS_ROW0 + ri + 1, :h]
                y = _masked_softmax_agg(e, masks[rel], hsrc16, conv_bias)
                ys[d] = y if d not in ys else ys[d] + y

            # HeteroConv aggr='sum' + per-type ReLU; keep bf16 (only consumed by MXU next).
            cur16 = {t: jnp.maximum(ys[t], 0.0).astype(jnp.bfloat16) for t in NODE_TYPES}

        # final Linear on the news embeddings; its bias rides in the last layer's slab.
        out_ref[...] = (jnp.dot(cur16["news"], lin_w_ref[...],
                                preferred_element_type=jnp.float32)
                        + vec[LIN_B_ROW:LIN_B_ROW + 1, :out_c])

    return kernel


def build_forward(cfg):
    kernel = _make_kernel(cfg)
    n_news = cfg["num_nodes"]["news"]
    out_c = cfg["out_channels"]

    def forward(arrs, x_slab, mask_slab):
        ins = [x_slab, mask_slab] + list(arrs)
        return pl.pallas_call(
            kernel,
            out_shape=jax.ShapeDtypeStruct((n_news, out_c), jnp.float32),
            in_specs=[pl.BlockSpec(memory_space=pltpu.MemorySpace.VMEM)] * len(ins),
            out_specs=pl.BlockSpec(memory_space=pltpu.MemorySpace.VMEM),
        )(*ins)

    return forward


# ------------------------- parameters / graph glue (plain JAX) -------------------------
def _init_gat(key, f_src, f_dst, h):
    ks = jax.random.split(key, 4)
    return dict(
        w_src=jax.random.normal(ks[0], (f_src, h), jnp.float32) * 0.1,
        w_dst=jax.random.normal(ks[1], (f_dst, h), jnp.float32) * 0.1,
        att_src=jax.random.normal(ks[2], (1, h), jnp.float32) * 0.1,
        att_dst=jax.random.normal(ks[3], (1, h), jnp.float32) * 0.1,
        bias=jnp.zeros((1, h), jnp.float32),
    )


def _init_gatv2(key, f_src, f_dst, h):
    ks = jax.random.split(key, 3)
    return dict(
        w_src=jax.random.normal(ks[0], (f_src, h), jnp.float32) * 0.1,
        w_dst=jax.random.normal(ks[1], (f_dst, h), jnp.float32) * 0.1,
        b_src=jnp.zeros((1, h), jnp.float32),
        b_dst=jnp.zeros((1, h), jnp.float32),
        att=jax.random.normal(ks[2], (1, h), jnp.float32) * 0.1,
        bias=jnp.zeros((1, h), jnp.float32),
    )


def init_params(key, feat_dims, hidden_channels, out_channels, num_layers):
    # TODO(synk): weights are deterministic synthetic init (normal*0.1 / zeros), not PyTorch glorot.
    convs = []
    dims = dict(feat_dims)
    h = hidden_channels
    for i in range(num_layers):
        layer = {}
        for (s, r, d, kind) in RELATIONS:
            key, sub = jax.random.split(key)
            if kind == "gat":
                layer[(s, r, d)] = _init_gat(sub, dims[s], dims[d], h)
            else:
                layer[(s, r, d)] = _init_gatv2(sub, dims[s], dims[d], h)
        convs.append(layer)
        dims = {t: h for t in NODE_TYPES}        # lazy (-1) dims of the next layer
        if i != num_layers - 1:
            h = h // 2                            # hidden_channels halving, as in __init__
    key, sub = jax.random.split(key)
    lin = dict(w=jax.random.normal(sub, (h, out_channels), jnp.float32) * 0.1,
               b=jnp.zeros((1, out_channels), jnp.float32))
    return dict(convs=convs, lin=lin)


def pack_model(params, feat_dims, num_nodes, out_channels):
    """Pack the whole model into one lane-dense bf16 weight slab + one f32 vector slab per
    layer (GAT attention vectors folded as extra projection columns) and build the static
    layout config the kernel closes over."""
    x_lanes = _round_up(max(feat_dims.values()), 128)

    x_off, rows = {}, 0
    for t in NODE_TYPES:
        x_off[t] = rows
        rows += _round_up(num_nodes[t], 8)
    x_rows = rows

    mask_off, mrows = [], 0
    for (s, r, d, _) in RELATIONS:
        mask_off.append(mrows)
        mrows += _round_up(num_nodes[d], 8)
    mask_rows = mrows

    layers_arrs, layers_cfg = [], []
    k = x_lanes                                   # rows of layer-0 weight slab (padded x)
    for li, layer in enumerate(params["convs"]):
        h = int(np.asarray(layer[RELATIONS[0][:3]]["w_src"]).shape[1])
        layout, total = _layer_layout(h)
        w_slab = np.zeros((k, total), np.float32)
        vec = np.zeros((VEC_ROWS, total), np.float32)
        for t in NODE_TYPES:
            off = layout[t]["off"]
            for i, (rel, role) in enumerate(ROLE_LAYOUT[t]):
                p = layer[rel]
                w = np.asarray(p["w_src"] if role == "src" else p["w_dst"], np.float32)
                f_t = w.shape[0]
                w_slab[:f_t, off + i * h:off + (i + 1) * h] = w
                if REL_KIND[rel] == "gatv2":
                    b = np.asarray(p["b_src"] if role == "src" else p["b_dst"], np.float32)
                    vec[0, off + i * h:off + (i + 1) * h] = b[0]
                else:
                    # GAT roles have no linear bias -> fold a = (x@W).att as x @ (W@att^T)
                    att = np.asarray(p["att_src"] if role == "src" else p["att_dst"],
                                     np.float32)
                    w_slab[:f_t, off + layout[t]["att_col"][i]] = w @ att[0]
        for rel, row in ATT_ROW.items():
            vec[row, :h] = np.asarray(layer[rel]["att"], np.float32)[0]
        for ri, (s, r, d, _) in enumerate(RELATIONS):
            vec[BIAS_ROW0 + ri, :h] = np.asarray(layer[(s, r, d)]["bias"], np.float32)[0]
        if li == len(params["convs"]) - 1:
            vec[LIN_B_ROW, :out_channels] = np.asarray(params["lin"]["b"], np.float32)[0]
        layers_arrs.append((jnp.asarray(w_slab, jnp.bfloat16), jnp.asarray(vec, jnp.float32)))
        layers_cfg.append(dict(h=h, layout=layout, k=k))
        k = h                                      # next layer consumes this layer's hidden

    lin_w = jnp.asarray(np.asarray(params["lin"]["w"], np.float32), jnp.bfloat16)

    cfg = dict(num_layers=len(params["convs"]), layers=tuple(layers_cfg),
               x_lanes=x_lanes, x_off=x_off, x_rows=x_rows,
               mask_off=tuple(mask_off), mask_rows=mask_rows,
               num_nodes=dict(num_nodes), out_channels=out_channels)
    arrs = []
    for (w, v) in layers_arrs:
        arrs += [w, v]
    arrs.append(lin_w)
    return cfg, arrs


def pack_x(cfg, x_dict):
    slab = jnp.zeros((cfg["x_rows"], cfg["x_lanes"]), jnp.float32)
    for t in NODE_TYPES:
        x = x_dict[t]
        slab = slab.at[cfg["x_off"][t]:cfg["x_off"][t] + x.shape[0], :x.shape[1]].set(x)
    return slab


def pack_masks(cfg, mask_biases):
    lanes = _round_up(max(cfg["num_nodes"].values()), 128)
    slab = jnp.full((cfg["mask_rows"], lanes), NEG_INF, jnp.float32)
    for ri, (s, r, d, _) in enumerate(RELATIONS):
        m = mask_biases[(s, r, d)]
        slab = slab.at[cfg["mask_off"][ri]:cfg["mask_off"][ri] + m.shape[0],
                       :m.shape[1]].set(m)
    return slab


def build_mask_bias(key, n_src, n_dst, n_edges):
    """Random edge_index -> dense additive mask bias [N_dst, N_src]: 0.0 where an edge
    exists, -1e30 otherwise (remove_self_loops then add_self_loops on the diagonal)."""
    # TODO(synk): the diagonal self-loop handling is applied even for bipartite relations,
    # which is not exactly PyG's add_self_loops semantics across node types.
    k1, k2 = jax.random.split(key)
    src = jax.random.randint(k1, (n_edges,), 0, n_src)
    dst = jax.random.randint(k2, (n_edges,), 0, n_dst)
    mask = jnp.zeros((n_dst, n_src), jnp.float32).at[dst, src].set(1.0)
    ii = jnp.arange(n_dst)[:, None]
    jj = jnp.arange(n_src)[None, :]
    diag = ii == jj
    mask = jnp.where(diag, 0.0, mask)                               # remove_self_loops
    mask = jnp.where(diag & (ii < min(n_src, n_dst)), 1.0, mask)    # add_self_loops
    return jnp.where(mask > 0.5, 0.0, NEG_INF).astype(jnp.float32)


# --------------------------------------- main ---------------------------------------
if __name__ == "__main__":
    key = jax.random.PRNGKey(0)

    num_nodes = {"news": 16, "entities": 24, "topic": 8}
    feat_dims = {"news": 16, "entities": 24, "topic": 8}
    hidden_channels = 32
    out_channels = 8
    num_layers = 2
    edges_per_rel = 40

    x_dict = {}
    for t in NODE_TYPES:
        key, sub = jax.random.split(key)
        x_dict[t] = jax.random.normal(sub, (num_nodes[t], feat_dims[t]), jnp.float32)

    mask_biases = {}
    for (s, r, d, _) in RELATIONS:
        key, sub = jax.random.split(key)
        mask_biases[(s, r, d)] = build_mask_bias(sub, num_nodes[s], num_nodes[d],
                                                 edges_per_rel)

    key, sub = jax.random.split(key)
    params = init_params(sub, feat_dims, hidden_channels, out_channels, num_layers)

    cfg, arrs = pack_model(params, feat_dims, num_nodes, out_channels)
    x_slab = pack_x(cfg, x_dict)
    mask_slab = pack_masks(cfg, mask_biases)

    forward = build_forward(cfg)
    out = jax.jit(forward)(arrs, x_slab, mask_slab)
    out = jax.block_until_ready(out)

    assert out.shape == (num_nodes["news"], out_channels), out.shape
    assert out.dtype == jnp.float32
    assert bool(jnp.all(jnp.isfinite(out)))
    print("KERNEL_OK")
</pallas_src>

<mosaic_0001>
module attributes {stable_mosaic.version = 11 : i64} {
  func.func @kernel(%arg0: memref<48x128xf32, #tpu.memory_space<vmem>>, %arg1: memref<88x128xf32, #tpu.memory_space<vmem>>, %arg2: memref<128x640xbf16, #tpu.memory_space<vmem>>, %arg3: memref<16x640xf32, #tpu.memory_space<vmem>>, %arg4: memref<32x384xbf16, #tpu.memory_space<vmem>>, %arg5: memref<16x384xf32, #tpu.memory_space<vmem>>, %arg6: memref<16x8xbf16, #tpu.memory_space<vmem>>, %arg7: memref<16x8xf32, #tpu.memory_space<vmem>>) attributes {dimension_semantics = [], scalar_prefetch = 0 : i64, scratch_operands = 0 : i64, tpu.core_type = #tpu.core_type<tc>} {
    %c0 = arith.constant 0 : index
    %c0_0 = arith.constant 0 : index
    %0 = vector.load %arg0[%c0, %c0_0] : memref<48x128xf32, #tpu.memory_space<vmem>>, vector<48x128xf32>
    %1 = arith.truncf %0 : vector<48x128xf32> to vector<48x128xbf16>
    %c0_1 = arith.constant 0 : index
    %c0_2 = arith.constant 0 : index
    %2 = vector.load %arg1[%c0_1, %c0_2] : memref<88x128xf32, #tpu.memory_space<vmem>>, vector<88x128xf32>
    %3 = vector.extract_strided_slice %2 {offsets = [0, 0], sizes = [24, 16], strides = [1, 1]} : vector<88x128xf32> to vector<24x16xf32>
    %4 = vector.extract_strided_slice %2 {offsets = [24, 0], sizes = [16, 24], strides = [1, 1]} : vector<88x128xf32> to vector<16x24xf32>
    %5 = vector.extract_strided_slice %2 {offsets = [40, 0], sizes = [8, 16], strides = [1, 1]} : vector<88x128xf32> to vector<8x16xf32>
    %6 = vector.extract_strided_slice %2 {offsets = [48, 0], sizes = [16, 8], strides = [1, 1]} : vector<88x128xf32> to vector<16x8xf32>
    %7 = vector.extract_strided_slice %2 {offsets = [64, 0], sizes = [24, 24], strides = [1, 1]} : vector<88x128xf32> to vector<24x24xf32>
    %8 = vector.extract_strided_slice %1 {offsets = [0, 0], sizes = [16, 128], strides = [1, 1]} : vector<48x128xbf16> to vector<16x128xbf16>
    %9 = vector.extract_strided_slice %1 {offsets = [16, 0], sizes = [24, 128], strides = [1, 1]} : vector<48x128xbf16> to vector<24x128xbf16>
    %10 = vector.extract_strided_slice %1 {offsets = [40, 0], sizes = [8, 128], strides = [1, 1]} : vector<48x128xbf16> to vector<8x128xbf16>
    %c0_3 = arith.constant 0 : index
    %c0_4 = arith.constant 0 : index
    %11 = vector.load %arg2[%c0_3, %c0_4] : memref<128x640xbf16, #tpu.memory_space<vmem>>, vector<128x640xbf16>
    %c0_5 = arith.constant 0 : index
    %c0_6 = arith.constant 0 : index
    %12 = vector.load %arg3[%c0_5, %c0_6] : memref<16x640xf32, #tpu.memory_space<vmem>>, vector<16x640xf32>
    %13 = vector.extract_strided_slice %11 {offsets = [0, 0], sizes = [128, 256], strides = [1, 1]} : vector<128x640xbf16> to vector<128x256xbf16>
    %cst = arith.constant dense<0.000000e+00> : vector<16x256xf32>
    %14 = tpu.matmul %8, %13, %cst {dimension_numbers = #tpu.dot_dimension_numbers<[1], [0], [0], [1], [0, 0, 1, 1], [], []>} : vector<16x128xbf16>, vector<128x256xbf16>, vector<16x256xf32> -> vector<16x256xf32>
    %15 = vector.extract_strided_slice %12 {offsets = [0, 0], sizes = [1, 256], strides = [1, 1]} : vector<16x640xf32> to vector<1x256xf32>
    %16 = vector.broadcast %15 : vector<1x256xf32> to vector<16x256xf32>
    %17 = arith.addf %14, %16 : vector<16x256xf32>
    %18 = arith.truncf %17 : vector<16x256xf32> to vector<16x256xbf16>
    %19 = vector.extract_strided_slice %11 {offsets = [0, 256], sizes = [128, 256], strides = [1, 1]} : vector<128x640xbf16> to vector<128x256xbf16>
    %cst_7 = arith.constant dense<0.000000e+00> : vector<24x256xf32>
    %20 = tpu.matmul %9, %19, %cst_7 {dimension_numbers = #tpu.dot_dimension_numbers<[1], [0], [0], [1], [0, 0, 1, 1], [], []>} : vector<24x128xbf16>, vector<128x256xbf16>, vector<24x256xf32> -> vector<24x256xf32>
    %21 = vector.extract_strided_slice %12 {offsets = [0, 256], sizes = [1, 256], strides = [1, 1]} : vector<16x640xf32> to vector<1x256xf32>
    %22 = vector.broadcast %21 : vector<1x256xf32> to vector<24x256xf32>
    %23 = arith.addf %20, %22 : vector<24x256xf32>
    %24 = arith.truncf %23 : vector<24x256xf32> to vector<24x256xbf16>
    %25 = vector.extract_strided_slice %11 {offsets = [0, 512], sizes = [128, 128], strides = [1, 1]} : vector<128x640xbf16> to vector<128x128xbf16>
    %cst_8 = arith.constant dense<0.000000e+00> : vector<8x128xf32>
    %26 = tpu.matmul %10, %25, %cst_8 {dimension_numbers = #tpu.dot_dimension_numbers<[1], [0], [0], [1], [0, 0, 1, 1], [], []>} : vector<8x128xbf16>, vector<128x128xbf16>, vector<8x128xf32> -> vector<8x128xf32>
    %27 = vector.extract_strided_slice %12 {offsets = [0, 512], sizes = [1, 128], strides = [1, 1]} : vector<16x640xf32> to vector<1x128xf32>
    %28 = vector.broadcast %27 : vector<1x128xf32> to vector<8x128xf32>
    %29 = arith.addf %26, %28 : vector<8x128xf32>
    %30 = arith.truncf %29 : vector<8x128xf32> to vector<8x128xbf16>
    %31 = vector.extract_strided_slice %18 {offsets = [0, 0], sizes = [16, 32], strides = [1, 1]} : vector<16x256xbf16> to vector<16x32xbf16>
    %32 = vector.extract_strided_slice %18 {offsets = [0, 0], sizes = [16, 32], strides = [1, 1]} : vector<16x256xbf16> to vector<16x32xbf16>
    %33 = vector.extract_strided_slice %24 {offsets = [0, 64], sizes = [24, 32], strides = [1, 1]} : vector<24x256xbf16> to vector<24x32xbf16>
    %34 = vector.extract_strided_slice %12 {offsets = [1, 0], sizes = [1, 32], strides = [1, 1]} : vector<16x640xf32> to vector<1x32xf32>
    %35 = vector.shape_cast %33 : vector<24x32xbf16> to vector<24x1x32xbf16>
    %36 = vector.shape_cast %32 : vector<16x32xbf16> to vector<1x16x32xbf16>
    %37 = vector.broadcast %35 : vector<24x1x32xbf16> to vector<24x16x32xbf16>
    %38 = vector.broadcast %36 : vector<1x16x32xbf16> to vector<24x16x32xbf16>
    %39 = arith.addf %37, %38 : vector<24x16x32xbf16>
    %cst_9 = arith.constant 0.000000e+00 : bf16
    %40 = vector.broadcast %cst_9 : bf16 to vector<24x16x32xbf16>
    %41 = arith.cmpf oge, %39, %40 : vector<24x16x32xbf16>
    %cst_10 = arith.constant 2.001950e-01 : bf16
    %42 = vector.broadcast %cst_10 : bf16 to vector<24x16x32xbf16>
    %43 = arith.mulf %42, %39 : vector<24x16x32xbf16>
    %44 = arith.select %41, %39, %43 : vector<24x16x32xi1>, vector<24x16x32xbf16>
    %45 = arith.extf %44 : vector<24x16x32xbf16> to vector<24x16x32xf32>
    %46 = vector.shape_cast %34 : vector<1x32xf32> to vector<1x1x32xf32>
    %47 = vector.broadcast %46 : vector<1x1x32xf32> to vector<24x16x32xf32>
    %48 = arith.mulf %45, %47 : vector<24x16x32xf32>
    %cst_11 = arith.constant dense<0.000000e+00> : vector<24x16xf32>
    %49 = vector.multi_reduction <add>, %48, %cst_11 [2] : vector<24x16x32xf32> to vector<24x16xf32>
    %50 = vector.extract_strided_slice %12 {offsets = [3, 0], sizes = [1, 32], strides = [1, 1]} : vector<16x640xf32> to vector<1x32xf32>
    %51 = arith.addf %49, %3 : vector<24x16xf32>
    %cst_12 = arith.constant dense<0xFF800000> : vector<24xf32>
    %52 = vector.multi_reduction <maximumf>, %51, %cst_12 [1] : vector<24x16xf32> to vector<24xf32>
    %53 = vector.shape_cast %52 : vector<24xf32> to vector<24x1xf32>
    %cst_13 = arith.constant -5.000000e+29 : f32
    %54 = vector.broadcast %cst_13 : f32 to vector<24x1xf32>
    %55 = arith.cmpf ogt, %53, %54 : vector<24x1xf32>
    %cst_14 = arith.constant 0.000000e+00 : f32
    %56 = vector.broadcast %cst_14 : f32 to vector<24x1xf32>
    %57 = arith.select %55, %53, %56 : vector<24x1xi1>, vector<24x1xf32>
    %58 = vector.broadcast %57 : vector<24x1xf32> to vector<24x16xf32>
    %59 = arith.subf %51, %58 : vector<24x16xf32>
    %60 = math.exp %59 : vector<24x16xf32>
    %cst_15 = arith.constant dense<0.000000e+00> : vector<24xf32>
    %61 = vector.multi_reduction <add>, %60, %cst_15 [1] : vector<24x16xf32> to vector<24xf32>
    %62 = vector.shape_cast %61 : vector<24xf32> to vector<24x1xf32>
    %63 = arith.truncf %60 : vector<24x16xf32> to vector<24x16xbf16>
    %cst_16 = arith.constant dense<0.000000e+00> : vector<24x32xf32>
    %64 = tpu.matmul %63, %31, %cst_16 {dimension_numbers = #tpu.dot_dimension_numbers<[1], [0], [0], [1], [0, 0, 1, 1], [], []>} : vector<24x16xbf16>, vector<16x32xbf16>, vector<24x32xf32> -> vector<24x32xf32>
    %cst_17 = arith.constant 0.000000e+00 : f32
    %65 = vector.broadcast %cst_17 : f32 to vector<24x1xf32>
    %66 = arith.cmpf ogt, %62, %65 : vector<24x1xf32>
    %cst_18 = arith.constant 1.000000e+00 : f32
    %67 = vector.broadcast %cst_18 : f32 to vector<24x1xf32>
    %68 = arith.select %66, %62, %67 : vector<24x1xi1>, vector<24x1xf32>
    %69 = tpu.reciprocal %68 {approx = true} : vector<24x1xf32> -> vector<24x1xf32>
    %70 = vector.broadcast %69 : vector<24x1xf32> to vector<24x32xf32>
    %71 = arith.mulf %64, %70 : vector<24x32xf32>
    %72 = vector.broadcast %50 : vector<1x32xf32> to vector<24x32xf32>
    %73 = arith.addf %71, %72 : vector<24x32xf32>
    %74 = vector.extract_strided_slice %24 {offsets = [0, 0], sizes = [24, 32], strides = [1, 1]} : vector<24x256xbf16> to vector<24x32xbf16>
    %75 = vector.extract_strided_slice %23 {offsets = [0, 128], sizes = [24, 1], strides = [1, 1]} : vector<24x256xf32> to vector<24x1xf32>
    %76 = vector.extract_strided_slice %17 {offsets = [0, 129], sizes = [16, 1], strides = [1, 1]} : vector<16x256xf32> to vector<16x1xf32>
    %77 = tpu.transpose %75, [1, 0] : vector<24x1xf32> -> vector<1x24xf32>
    %78 = vector.broadcast %76 : vector<16x1xf32> to vector<16x24xf32>
    %79 = vector.broadcast %77 : vector<1x24xf32> to vector<16x24xf32>
    %80 = arith.addf %78, %79 : vector<16x24xf32>
    %cst_19 = arith.constant 0.000000e+00 : f32
    %81 = vector.broadcast %cst_19 : f32 to vector<16x24xf32>
    %82 = arith.cmpf oge, %80, %81 : vector<16x24xf32>
    %cst_20 = arith.constant 2.000000e-01 : f32
    %83 = vector.broadcast %cst_20 : f32 to vector<16x24xf32>
    %84 = arith.mulf %83, %80 : vector<16x24xf32>
    %85 = arith.select %82, %80, %84 : vector<16x24xi1>, vector<16x24xf32>
    %86 = vector.extract_strided_slice %12 {offsets = [4, 0], sizes = [1, 32], strides = [1, 1]} : vector<16x640xf32> to vector<1x32xf32>
    %87 = arith.addf %85, %4 : vector<16x24xf32>
    %cst_21 = arith.constant dense<0xFF800000> : vector<16xf32>
    %88 = vector.multi_reduction <maximumf>, %87, %cst_21 [1] : vector<16x24xf32> to vector<16xf32>
    %89 = vector.shape_cast %88 : vector<16xf32> to vector<16x1xf32>
    %cst_22 = arith.constant -5.000000e+29 : f32
    %90 = vector.broadcast %cst_22 : f32 to vector<16x1xf32>
    %91 = arith.cmpf ogt, %89, %90 : vector<16x1xf32>
    %cst_23 = arith.constant 0.000000e+00 : f32
    %92 = vector.broadcast %cst_23 : f32 to vector<16x1xf32>
    %93 = arith.select %91, %89, %92 : vector<16x1xi1>, vector<16x1xf32>
    %94 = vector.broadcast %93 : vector<16x1xf32> to vector<16x24xf32>
    %95 = arith.subf %87, %94 : vector<16x24xf32>
    %96 = math.exp %95 : vector<16x24xf32>
    %cst_24 = arith.constant dense<0.000000e+00> : vector<16xf32>
    %97 = vector.multi_reduction <add>, %96, %cst_24 [1] : vector<16x24xf32> to vector<16xf32>
    %98 = vector.shape_cast %97 : vector<16xf32> to vector<16x1xf32>
    %99 = arith.truncf %96 : vector<16x24xf32> to vector<16x24xbf16>
    %cst_25 = arith.constant dense<0.000000e+00> : vector<16x32xf32>
    %100 = tpu.matmul %99, %74, %cst_25 {dimension_numbers = #tpu.dot_dimension_numbers<[1], [0], [0], [1], [0, 0, 1, 1], [], []>} : vector<16x24xbf16>, vector<24x32xbf16>, vector<16x32xf32> -> vector<16x32xf32>
    %cst_26 = arith.constant 0.000000e+00 : f32
    %101 = vector.broadcast %cst_26 : f32 to vector<16x1xf32>
    %102 = arith.cmpf ogt, %98, %101 : vector<16x1xf32>
    %cst_27 = arith.constant 1.000000e+00 : f32
    %103 = vector.broadcast %cst_27 : f32 to vector<16x1xf32>
    %104 = arith.select %102, %98, %103 : vector<16x1xi1>, vector<16x1xf32>
    %105 = tpu.reciprocal %104 {approx = true} : vector<16x1xf32> -> vector<16x1xf32>
    %106 = vector.broadcast %105 : vector<16x1xf32> to vector<16x32xf32>
    %107 = arith.mulf %100, %106 : vector<16x32xf32>
    %108 = vector.broadcast %86 : vector<1x32xf32> to vector<16x32xf32>
    %109 = arith.addf %107, %108 : vector<16x32xf32>
    %110 = vector.extract_strided_slice %18 {offsets = [0, 32], sizes = [16, 32], strides = [1, 1]} : vector<16x256xbf16> to vector<16x32xbf16>
    %111 = vector.extract_strided_slice %17 {offsets = [0, 128], sizes = [16, 1], strides = [1, 1]} : vector<16x256xf32> to vector<16x1xf32>
    %112 = vector.extract_strided_slice %29 {offsets = [0, 65], sizes = [8, 1], strides = [1, 1]} : vector<8x128xf32> to vector<8x1xf32>
    %113 = tpu.transpose %111, [1, 0] : vector<16x1xf32> -> vector<1x16xf32>
    %114 = vector.broadcast %112 : vector<8x1xf32> to vector<8x16xf32>
    %115 = vector.broadcast %113 : vector<1x16xf32> to vector<8x16xf32>
    %116 = arith.addf %114, %115 : vector<8x16xf32>
    %cst_28 = arith.constant 0.000000e+00 : f32
    %117 = vector.broadcast %cst_28 : f32 to vector<8x16xf32>
    %118 = arith.cmpf oge, %116, %117 : vector<8x16xf32>
    %cst_29 = arith.constant 2.000000e-01 : f32
    %119 = vector.broadcast %cst_29 : f32 to vector<8x16xf32>
    %120 = arith.mulf %119, %116 : vector<8x16xf32>
    %121 = arith.select %118, %116, %120 : vector<8x16xi1>, vector<8x16xf32>
    %122 = vector.extract_strided_slice %12 {offsets = [5, 0], sizes = [1, 32], strides = [1, 1]} : vector<16x640xf32> to vector<1x32xf32>
    %123 = arith.addf %121, %5 : vector<8x16xf32>
    %cst_30 = arith.constant dense<0xFF800000> : vector<8xf32>
    %124 = vector.multi_reduction <maximumf>, %123, %cst_30 [1] : vector<8x16xf32> to vector<8xf32>
    %125 = vector.shape_cast %124 : vector<8xf32> to vector<8x1xf32>
    %cst_31 = arith.constant -5.000000e+29 : f32
    %126 = vector.broadcast %cst_31 : f32 to vector<8x1xf32>
    %127 = arith.cmpf ogt, %125, %126 : vector<8x1xf32>
    %cst_32 = arith.constant 0.000000e+00 : f32
    %128 = vector.broadcast %cst_32 : f32 to vector<8x1xf32>
    %129 = arith.select %127, %125, %128 : vector<8x1xi1>, vector<8x1xf32>
    %130 = vector.broadcast %129 : vector<8x1xf32> to vector<8x16xf32>
    %131 = arith.subf %123, %130 : vector<8x16xf32>
    %132 = math.exp %131 : vector<8x16xf32>
    %cst_33 = arith.constant dense<0.000000e+00> : vector<8xf32>
    %133 = vector.multi_reduction <add>, %132, %cst_33 [1] : vector<8x16xf32> to vector<8xf32>
    %134 = vector.shape_cast %133 : vector<8xf32> to vector<8x1xf32>
    %135 = arith.truncf %132 : vector<8x16xf32> to vector<8x16xbf16>
    %cst_34 = arith.constant dense<0.000000e+00> : vector<8x32xf32>
    %136 = tpu.matmul %135, %110, %cst_34 {dimension_numbers = #tpu.dot_dimension_numbers<[1], [0], [0], [1], [0, 0, 1, 1], [], []>} : vector<8x16xbf16>, vector<16x32xbf16>, vector<8x32xf32> -> vector<8x32xf32>
    %cst_35 = arith.constant 0.000000e+00 : f32
    %137 = vector.broadcast %cst_35 : f32 to vector<8x1xf32>
    %138 = arith.cmpf ogt, %134, %137 : vector<8x1xf32>
    %cst_36 = arith.constant 1.000000e+00 : f32
    %139 = vector.broadcast %cst_36 : f32 to vector<8x1xf32>
    %140 = arith.select %138, %134, %139 : vector<8x1xi1>, vector<8x1xf32>
    %141 = tpu.reciprocal %140 {approx = true} : vector<8x1xf32> -> vector<8x1xf32>
    %142 = vector.broadcast %141 : vector<8x1xf32> to vector<8x32xf32>
    %143 = arith.mulf %136, %142 : vector<8x32xf32>
    %144 = vector.broadcast %122 : vector<1x32xf32> to vector<8x32xf32>
    %145 = arith.addf %143, %144 : vector<8x32xf32>
    %146 = vector.extract_strided_slice %30 {offsets = [0, 0], sizes = [8, 32], strides = [1, 1]} : vector<8x128xbf16> to vector<8x32xbf16>
    %147 = vector.extract_strided_slice %29 {offsets = [0, 64], sizes = [8, 1], strides = [1, 1]} : vector<8x128xf32> to vector<8x1xf32>
    %148 = vector.extract_strided_slice %17 {offsets = [0, 130], sizes = [16, 1], strides = [1, 1]} : vector<16x256xf32> to vector<16x1xf32>
    %149 = tpu.transpose %147, [1, 0] : vector<8x1xf32> -> vector<1x8xf32>
    %150 = vector.broadcast %148 : vector<16x1xf32> to vector<16x8xf32>
    %151 = vector.broadcast %149 : vector<1x8xf32> to vector<16x8xf32>
    %152 = arith.addf %150, %151 : vector<16x8xf32>
    %cst_37 = arith.constant 0.000000e+00 : f32
    %153 = vector.broadcast %cst_37 : f32 to vector<16x8xf32>
    %154 = arith.cmpf oge, %152, %153 : vector<16x8xf32>
    %cst_38 = arith.constant 2.000000e-01 : f32
    %155 = vector.broadcast %cst_38 : f32 to vector<16x8xf32>
    %156 = arith.mulf %155, %152 : vector<16x8xf32>
    %157 = arith.select %154, %152, %156 : vector<16x8xi1>, vector<16x8xf32>
    %158 = vector.extract_strided_slice %12 {offsets = [6, 0], sizes = [1, 32], strides = [1, 1]} : vector<16x640xf32> to vector<1x32xf32>
    %159 = arith.addf %157, %6 : vector<16x8xf32>
    %cst_39 = arith.constant dense<0xFF800000> : vector<16xf32>
    %160 = vector.multi_reduction <maximumf>, %159, %cst_39 [1] : vector<16x8xf32> to vector<16xf32>
    %161 = vector.shape_cast %160 : vector<16xf32> to vector<16x1xf32>
    %cst_40 = arith.constant -5.000000e+29 : f32
    %162 = vector.broadcast %cst_40 : f32 to vector<16x1xf32>
    %163 = arith.cmpf ogt, %161, %162 : vector<16x1xf32>
    %cst_41 = arith.constant 0.000000e+00 : f32
    %164 = vector.broadcast %cst_41 : f32 to vector<16x1xf32>
    %165 = arith.select %163, %161, %164 : vector<16x1xi1>, vector<16x1xf32>
    %166 = vector.broadcast %165 : vector<16x1xf32> to vector<16x8xf32>
    %167 = arith.subf %159, %166 : vector<16x8xf32>
    %168 = math.exp %167 : vector<16x8xf32>
    %cst_42 = arith.constant dense<0.000000e+00> : vector<16xf32>
    %169 = vector.multi_reduction <add>, %168, %cst_42 [1] : vector<16x8xf32> to vector<16xf32>
    %170 = vector.shape_cast %169 : vector<16xf32> to vector<16x1xf32>
    %171 = arith.truncf %168 : vector<16x8xf32> to vector<16x8xbf16>
    %cst_43 = arith.constant dense<0.000000e+00> : vector<16x32xf32>
    %172 = tpu.matmul %171, %146, %cst_43 {dimension_numbers = #tpu.dot_dimension_numbers<[1], [0], [0], [1], [0, 0, 1, 1], [], []>} : vector<16x8xbf16>, vector<8x32xbf16>, vector<16x32xf32> -> vector<16x32xf32>
    %cst_44 = arith.constant 0.000000e+00 : f32
    %173 = vector.broadcast %cst_44 : f32 to vector<16x1xf32>
    %174 = arith.cmpf ogt, %170, %173 : vector<16x1xf32>
    %cst_45 = arith.constant 1.000000e+00 : f32
    %175 = vector.broadcast %cst_45 : f32 to vector<16x1xf32>
    %176 = arith.select %174, %170, %175 : vector<16x1xi1>, vector<16x1xf32>
    %177 = tpu.reciprocal %176 {approx = true} : vector<16x1xf32> -> vector<16x1xf32>
    %178 = vector.broadcast %177 : vector<16x1xf32> to vector<16x32xf32>
    %179 = arith.mulf %172, %178 : vector<16x32xf32>
    %180 = vector.broadcast %158 : vector<1x32xf32> to vector<16x32xf32>
    %181 = arith.addf %179, %180 : vector<16x32xf32>
    %182 = arith.addf %109, %181 : vector<16x32xf32>
    %183 = vector.extract_strided_slice %24 {offsets = [0, 32], sizes = [24, 32], strides = [1, 1]} : vector<24x256xbf16> to vector<24x32xbf16>
    %184 = vector.extract_strided_slice %24 {offsets = [0, 32], sizes = [24, 32], strides = [1, 1]} : vector<24x256xbf16> to vector<24x32xbf16>
    %185 = vector.extract_strided_slice %24 {offsets = [0, 96], sizes = [24, 32], strides = [1, 1]} : vector<24x256xbf16> to vector<24x32xbf16>
    %186 = vector.extract_strided_slice %12 {offsets = [2, 0], sizes = [1, 32], strides = [1, 1]} : vector<16x640xf32> to vector<1x32xf32>
    %187 = vector.shape_cast %185 : vector<24x32xbf16> to vector<24x1x32xbf16>
    %188 = vector.shape_cast %184 : vector<24x32xbf16> to vector<1x24x32xbf16>
    %189 = vector.broadcast %187 : vector<24x1x32xbf16> to vector<24x24x32xbf16>
    %190 = vector.broadcast %188 : vector<1x24x32xbf16> to vector<24x24x32xbf16>
    %191 = arith.addf %189, %190 : vector<24x24x32xbf16>
    %cst_46 = arith.constant 0.000000e+00 : bf16
    %192 = vector.broadcast %cst_46 : bf16 to vector<24x24x32xbf16>
    %193 = arith.cmpf oge, %191, %192 : vector<24x24x32xbf16>
    %cst_47 = arith.constant 2.001950e-01 : bf16
    %194 = vector.broadcast %cst_47 : bf16 to vector<24x24x32xbf16>
    %195 = arith.mulf %194, %191 : vector<24x24x32xbf16>
    %196 = arith.select %193, %191, %195 : vector<24x24x32xi1>, vector<24x24x32xbf16>
    %197 = arith.extf %196 : vector<24x24x32xbf16> to vector<24x24x32xf32>
    %198 = vector.shape_cast %186 : vector<1x32xf32> to vector<1x1x32xf32>
    %199 = vector.broadcast %198 : vector<1x1x32xf32> to vector<24x24x32xf32>
    %200 = arith.mulf %197, %199 : vector<24x24x32xf32>
    %cst_48 = arith.constant dense<0.000000e+00> : vector<24x24xf32>
    %201 = vector.multi_reduction <add>, %200, %cst_48 [2] : vector<24x24x32xf32> to vector<24x24xf32>
    %202 = vector.extract_strided_slice %12 {offsets = [7, 0], sizes = [1, 32], strides = [1, 1]} : vector<16x640xf32> to vector<1x32xf32>
    %203 = arith.addf %201, %7 : vector<24x24xf32>
    %cst_49 = arith.constant dense<0xFF800000> : vector<24xf32>
    %204 = vector.multi_reduction <maximumf>, %203, %cst_49 [1] : vector<24x24xf32> to vector<24xf32>
    %205 = vector.shape_cast %204 : vector<24xf32> to vector<24x1xf32>
    %cst_50 = arith.constant -5.000000e+29 : f32
    %206 = vector.broadcast %cst_50 : f32 to vector<24x1xf32>
    %207 = arith.cmpf ogt, %205, %206 : vector<24x1xf32>
    %cst_51 = arith.constant 0.000000e+00 : f32
    %208 = vector.broadcast %cst_51 : f32 to vector<24x1xf32>
    %209 = arith.select %207, %205, %208 : vector<24x1xi1>, vector<24x1xf32>
    %210 = vector.broadcast %209 : vector<24x1xf32> to vector<24x24xf32>
    %211 = arith.subf %203, %210 : vector<24x24xf32>
    %212 = math.exp %211 : vector<24x24xf32>
    %cst_52 = arith.constant dense<0.000000e+00> : vector<24xf32>
    %213 = vector.multi_reduction <add>, %212, %cst_52 [1] : vector<24x24xf32> to vector<24xf32>
    %214 = vector.shape_cast %213 : vector<24xf32> to vector<24x1xf32>
    %215 = arith.truncf %212 : vector<24x24xf32> to vector<24x24xbf16>
    %cst_53 = arith.constant dense<0.000000e+00> : vector<24x32xf32>
    %216 = tpu.matmul %215, %183, %cst_53 {dimension_numbers = #tpu.dot_dimension_numbers<[1], [0], [0], [1], [0, 0, 1, 1], [], []>} : vector<24x24xbf16>, vector<24x32xbf16>, vector<24x32xf32> -> vector<24x32xf32>
    %cst_54 = arith.constant 0.000000e+00 : f32
    %217 = vector.broadcast %cst_54 : f32 to vector<24x1xf32>
    %218 = arith.cmpf ogt, %214, %217 : vector<24x1xf32>
    %cst_55 = arith.constant 1.000000e+00 : f32
    %219 = vector.broadcast %cst_55 : f32 to vector<24x1xf32>
    %220 = arith.select %218, %214, %219 : vector<24x1xi1>, vector<24x1xf32>
    %221 = tpu.reciprocal %220 {approx = true} : vector<24x1xf32> -> vector<24x1xf32>
    %222 = vector.broadcast %221 : vector<24x1xf32> to vector<24x32xf32>
    %223 = arith.mulf %216, %222 : vector<24x32xf32>
    %224 = vector.broadcast %202 : vector<1x32xf32> to vector<24x32xf32>
    %225 = arith.addf %223, %224 : vector<24x32xf32>
    %226 = arith.addf %73, %225 : vector<24x32xf32>
    %cst_56 = arith.constant 0.000000e+00 : f32
    %227 = vector.broadcast %cst_56 : f32 to vector<16x32xf32>
    %228 = arith.maximumf %182, %227 : vector<16x32xf32>
    %229 = arith.truncf %228 : vector<16x32xf32> to vector<16x32xbf16>
    %cst_57 = arith.constant 0.000000e+00 : f32
    %230 = vector.broadcast %cst_57 : f32 to vector<24x32xf32>
    %231 = arith.maximumf %226, %230 : vector<24x32xf32>
    %232 = arith.truncf %231 : vector<24x32xf32> to vector<24x32xbf16>
    %cst_58 = arith.constant 0.000000e+00 : f32
    %233 = vector.broadcast %cst_58 : f32 to vector<8x32xf32>
    %234 = arith.maximumf %145, %233 : vector<8x32xf32>
    %235 = arith.truncf %234 : vector<8x32xf32> to vector<8x32xbf16>
    %c0_59 = arith.constant 0 : index
    %c0_60 = arith.constant 0 : index
    %236 = vector.load %arg4[%c0_59, %c0_60] : memref<32x384xbf16, #tpu.memory_space<vmem>>, vector<32x384xbf16>
    %c0_61 = arith.constant 0 : index
    %c0_62 = arith.constant 0 : index
    %237 = vector.load %arg5[%c0_61, %c0_62] : memref<16x384xf32, #tpu.memory_space<vmem>>, vector<16x384xf32>
    %238 = vector.extract_strided_slice %236 {offsets = [0, 0], sizes = [32, 128], strides = [1, 1]} : vector<32x384xbf16> to vector<32x128xbf16>
    %cst_63 = arith.constant dense<0.000000e+00> : vector<16x128xf32>
    %239 = tpu.matmul %229, %238, %cst_63 {dimension_numbers = #tpu.dot_dimension_numbers<[1], [0], [0], [1], [0, 0, 1, 1], [], []>} : vector<16x32xbf16>, vector<32x128xbf16>, vector<16x128xf32> -> vector<16x128xf32>
    %240 = vector.extract_strided_slice %237 {offsets = [0, 0], sizes = [1, 128], strides = [1, 1]} : vector<16x384xf32> to vector<1x128xf32>
    %241 = vector.broadcast %240 : vector<1x128xf32> to vector<16x128xf32>
    %242 = arith.addf %239, %241 : vector<16x128xf32>
    %243 = vector.extract_strided_slice %236 {offsets = [0, 128], sizes = [32, 128], strides = [1, 1]} : vector<32x384xbf16> to vector<32x128xbf16>
    %cst_64 = arith.constant dense<0.000000e+00> : vector<24x128xf32>
    %244 = tpu.matmul %232, %243, %cst_64 {dimension_numbers = #tpu.dot_dimension_numbers<[1], [0], [0], [1], [0, 0, 1, 1], [], []>} : vector<24x32xbf16>, vector<32x128xbf16>, vector<24x128xf32> -> vector<24x128xf32>
    %245 = vector.extract_strided_slice %237 {offsets = [0, 128], sizes = [1, 128], strides = [1, 1]} : vector<16x384xf32> to vector<1x128xf32>
    %246 = vector.broadcast %245 : vector<1x128xf32> to vector<24x128xf32>
    %247 = arith.addf %244, %246 : vector<24x128xf32>
    %248 = arith.truncf %247 : vector<24x128xf32> to vector<24x128xbf16>
    %249 = vector.extract_strided_slice %236 {offsets = [0, 256], sizes = [32, 128], strides = [1, 1]} : vector<32x384xbf16> to vector<32x128xbf16>
    %cst_65 = arith.constant dense<0.000000e+00> : vector<8x128xf32>
    %250 = tpu.matmul %235, %249, %cst_65 {dimension_numbers = #tpu.dot_dimension_numbers<[1], [0], [0], [1], [0, 0, 1, 1], [], []>} : vector<8x32xbf16>, vector<32x128xbf16>, vector<8x128xf32> -> vector<8x128xf32>
    %251 = vector.extract_strided_slice %237 {offsets = [0, 256], sizes = [1, 128], strides = [1, 1]} : vector<16x384xf32> to vector<1x128xf32>
    %252 = vector.broadcast %251 : vector<1x128xf32> to vector<8x128xf32>
    %253 = arith.addf %250, %252 : vector<8x128xf32>
    %254 = arith.truncf %253 : vector<8x128xf32> to vector<8x128xbf16>
    %255 = vector.extract_strided_slice %248 {offsets = [0, 0], sizes = [24, 16], strides = [1, 1]} : vector<24x128xbf16> to vector<24x16xbf16>
    %256 = vector.extract_strided_slice %247 {offsets = [0, 64], sizes = [24, 1], strides = [1, 1]} : vector<24x128xf32> to vector<24x1xf32>
    %257 = vector.extract_strided_slice %242 {offsets = [0, 65], sizes = [16, 1], strides = [1, 1]} : vector<16x128xf32> to vector<16x1xf32>
    %258 = tpu.transpose %256, [1, 0] : vector<24x1xf32> -> vector<1x24xf32>
    %259 = vector.broadcast %257 : vector<16x1xf32> to vector<16x24xf32>
    %260 = vector.broadcast %258 : vector<1x24xf32> to vector<16x24xf32>
    %261 = arith.addf %259, %260 : vector<16x24xf32>
    %cst_66 = arith.constant 0.000000e+00 : f32
    %262 = vector.broadcast %cst_66 : f32 to vector<16x24xf32>
    %263 = arith.cmpf oge, %261, %262 : vector<16x24xf32>
    %cst_67 = arith.constant 2.000000e-01 : f32
    %264 = vector.broadcast %cst_67 : f32 to vector<16x24xf32>
    %265 = arith.mulf %264, %261 : vector<16x24xf32>
    %266 = arith.select %263, %261, %265 : vector<16x24xi1>, vector<16x24xf32>
    %267 = vector.extract_strided_slice %237 {offsets = [4, 0], sizes = [1, 16], strides = [1, 1]} : vector<16x384xf32> to vector<1x16xf32>
    %268 = arith.addf %266, %4 : vector<16x24xf32>
    %cst_68 = arith.constant dense<0xFF800000> : vector<16xf32>
    %269 = vector.multi_reduction <maximumf>, %268, %cst_68 [1] : vector<16x24xf32> to vector<16xf32>
    %270 = vector.shape_cast %269 : vector<16xf32> to vector<16x1xf32>
    %cst_69 = arith.constant -5.000000e+29 : f32
    %271 = vector.broadcast %cst_69 : f32 to vector<16x1xf32>
    %272 = arith.cmpf ogt, %270, %271 : vector<16x1xf32>
    %cst_70 = arith.constant 0.000000e+00 : f32
    %273 = vector.broadcast %cst_70 : f32 to vector<16x1xf32>
    %274 = arith.select %272, %270, %273 : vector<16x1xi1>, vector<16x1xf32>
    %275 = vector.broadcast %274 : vector<16x1xf32> to vector<16x24xf32>
    %276 = arith.subf %268, %275 : vector<16x24xf32>
    %277 = math.exp %276 : vector<16x24xf32>
    %cst_71 = arith.constant dense<0.000000e+00> : vector<16xf32>
    %278 = vector.multi_reduction <add>, %277, %cst_71 [1] : vector<16x24xf32> to vector<16xf32>
    %279 = vector.shape_cast %278 : vector<16xf32> to vector<16x1xf32>
    %280 = arith.truncf %277 : vector<16x24xf32> to vector<16x24xbf16>
    %cst_72 = arith.constant dense<0.000000e+00> : vector<16x16xf32>
    %281 = tpu.matmul %280, %255, %cst_72 {dimension_numbers = #tpu.dot_dimension_numbers<[1], [0], [0], [1], [0, 0, 1, 1], [], []>} : vector<16x24xbf16>, vector<24x16xbf16>, vector<16x16xf32> -> vector<16x16xf32>
    %cst_73 = arith.constant 0.000000e+00 : f32
    %282 = vector.broadcast %cst_73 : f32 to vector<16x1xf32>
    %283 = arith.cmpf ogt, %279, %282 : vector<16x1xf32>
    %cst_74 = arith.constant 1.000000e+00 : f32
    %284 = vector.broadcast %cst_74 : f32 to vector<16x1xf32>
    %285 = arith.select %283, %279, %284 : vector<16x1xi1>, vector<16x1xf32>
    %286 = tpu.reciprocal %285 {approx = true} : vector<16x1xf32> -> vector<16x1xf32>
    %287 = vector.broadcast %286 : vector<16x1xf32> to vector<16x16xf32>
    %288 = arith.mulf %281, %287 : vector<16x16xf32>
    %289 = vector.broadcast %267 : vector<1x16xf32> to vector<16x16xf32>
    %290 = arith.addf %288, %289 : vector<16x16xf32>
    %291 = vector.extract_strided_slice %254 {offsets = [0, 0], sizes = [8, 16], strides = [1, 1]} : vector<8x128xbf16> to vector<8x16xbf16>
    %292 = vector.extract_strided_slice %253 {offsets = [0, 32], sizes = [8, 1], strides = [1, 1]} : vector<8x128xf32> to vector<8x1xf32>
    %293 = vector.extract_strided_slice %242 {offsets = [0, 66], sizes = [16, 1], strides = [1, 1]} : vector<16x128xf32> to vector<16x1xf32>
    %294 = tpu.transpose %292, [1, 0] : vector<8x1xf32> -> vector<1x8xf32>
    %295 = vector.broadcast %293 : vector<16x1xf32> to vector<16x8xf32>
    %296 = vector.broadcast %294 : vector<1x8xf32> to vector<16x8xf32>
    %297 = arith.addf %295, %296 : vector<16x8xf32>
    %cst_75 = arith.constant 0.000000e+00 : f32
    %298 = vector.broadcast %cst_75 : f32 to vector<16x8xf32>
    %299 = arith.cmpf oge, %297, %298 : vector<16x8xf32>
    %cst_76 = arith.constant 2.000000e-01 : f32
    %300 = vector.broadcast %cst_76 : f32 to vector<16x8xf32>
    %301 = arith.mulf %300, %297 : vector<16x8xf32>
    %302 = arith.select %299, %297, %301 : vector<16x8xi1>, vector<16x8xf32>
    %303 = vector.extract_strided_slice %237 {offsets = [6, 0], sizes = [1, 16], strides = [1, 1]} : vector<16x384xf32> to vector<1x16xf32>
    %304 = arith.addf %302, %6 : vector<16x8xf32>
    %cst_77 = arith.constant dense<0xFF800000> : vector<16xf32>
    %305 = vector.multi_reduction <maximumf>, %304, %cst_77 [1] : vector<16x8xf32> to vector<16xf32>
    %306 = vector.shape_cast %305 : vector<16xf32> to vector<16x1xf32>
    %cst_78 = arith.constant -5.000000e+29 : f32
    %307 = vector.broadcast %cst_78 : f32 to vector<16x1xf32>
    %308 = arith.cmpf ogt, %306, %307 : vector<16x1xf32>
    %cst_79 = arith.constant 0.000000e+00 : f32
    %309 = vector.broadcast %cst_79 : f32 to vector<16x1xf32>
    %310 = arith.select %308, %306, %309 : vector<16x1xi1>, vector<16x1xf32>
    %311 = vector.broadcast %310 : vector<16x1xf32> to vector<16x8xf32>
    %312 = arith.subf %304, %311 : vector<16x8xf32>
    %313 = math.exp %312 : vector<16x8xf32>
    %cst_80 = arith.constant dense<0.000000e+00> : vector<16xf32>
    %314 = vector.multi_reduction <add>, %313, %cst_80 [1] : vector<16x8xf32> to vector<16xf32>
    %315 = vector.shape_cast %314 : vector<16xf32> to vector<16x1xf32>
    %316 = arith.truncf %313 : vector<16x8xf32> to vector<16x8xbf16>
    %cst_81 = arith.constant dense<0.000000e+00> : vector<16x16xf32>
    %317 = tpu.matmul %316, %291, %cst_81 {dimension_numbers = #tpu.dot_dimension_numbers<[1], [0], [0], [1], [0, 0, 1, 1], [], []>} : vector<16x8xbf16>, vector<8x16xbf16>, vector<16x16xf32> -> vector<16x16xf32>
    %cst_82 = arith.constant 0.000000e+00 : f32
    %318 = vector.broadcast %cst_82 : f32 to vector<16x1xf32>
    %319 = arith.cmpf ogt, %315, %318 : vector<16x1xf32>
    %cst_83 = arith.constant 1.000000e+00 : f32
    %320 = vector.broadcast %cst_83 : f32 to vector<16x1xf32>
    %321 = arith.select %319, %315, %320 : vector<16x1xi1>, vector<16x1xf32>
    %322 = tpu.reciprocal %321 {approx = true} : vector<16x1xf32> -> vector<16x1xf32>
    %323 = vector.broadcast %322 : vector<16x1xf32> to vector<16x16xf32>
    %324 = arith.mulf %317, %323 : vector<16x16xf32>
    %325 = vector.broadcast %303 : vector<1x16xf32> to vector<16x16xf32>
    %326 = arith.addf %324, %325 : vector<16x16xf32>
    %327 = arith.addf %290, %326 : vector<16x16xf32>
    %cst_84 = arith.constant 0.000000e+00 : f32
    %328 = vector.broadcast %cst_84 : f32 to vector<16x16xf32>
    %329 = arith.maximumf %327, %328 : vector<16x16xf32>
    %330 = arith.truncf %329 : vector<16x16xf32> to vector<16x16xbf16>
    %c0_85 = arith.constant 0 : index
    %c0_86 = arith.constant 0 : index
    %331 = vector.load %arg6[%c0_85, %c0_86] : memref<16x8xbf16, #tpu.memory_space<vmem>>, vector<16x8xbf16>
    %cst_87 = arith.constant dense<0.000000e+00> : vector<16x8xf32>
    %332 = tpu.matmul %330, %331, %cst_87 {dimension_numbers = #tpu.dot_dimension_numbers<[1], [0], [0], [1], [0, 0, 1, 1], [], []>} : vector<16x16xbf16>, vector<16x8xbf16>, vector<16x8xf32> -> vector<16x8xf32>
    %333 = vector.extract_strided_slice %237 {offsets = [8, 0], sizes = [1, 8], strides = [1, 1]} : vector<16x384xf32> to vector<1x8xf32>
    %334 = vector.broadcast %333 : vector<1x8xf32> to vector<16x8xf32>
    %335 = arith.addf %332, %334 : vector<16x8xf32>
    %c0_88 = arith.constant 0 : index
    %c0_89 = arith.constant 0 : index
    %336 = vector.load %arg7[%c0_88, %c0_89] : memref<16x8xf32, #tpu.memory_space<vmem>>, vector<16x8xf32>
    tpu.vector_store %arg7[%c0_88, %c0_89], %335 {strides = array<i32>} : memref<16x8xf32, #tpu.memory_space<vmem>>, vector<16x8xf32>,
    return
  }
}

</mosaic_0001>

<llo_original>
// kernel: forward.1
$region0: #{forward.1}
  #allocation0 [shape = 'u32[]', space=smem, size = 0x4, offset = 0x4, fixed_abs, tag = 'smem constant byte address 0x4 - core index']
  #allocation1 [shape = 'u32[72,128]{1,0:T(1,128)}', space=vmem, size = 0x9000, scoped, tag = 'internal scratch']
  %s0 = inlined_call_operand.hbm [shape: f32[48,128], index: 0, kind: input, shape index: {}]
  %s1 = inlined_call_operand.hbm [shape: f32[88,128], index: 1, kind: input, shape index: {}]
  %s2 = inlined_call_operand.hbm [shape: bf16[128,640], index: 2, kind: input, shape index: {}]
  %s3 = inlined_call_operand.hbm [shape: f32[16,640], index: 3, kind: input, shape index: {}]
  %s4 = inlined_call_operand.hbm [shape: bf16[32,384], index: 4, kind: input, shape index: {}]
  %s5 = inlined_call_operand.hbm [shape: f32[16,384], index: 5, kind: input, shape index: {}]
  %s6 = inlined_call_operand.vmem [shape: bf16[16,8], index: 6, kind: input, shape index: {}]
  %s7 = inlined_call_operand.vmem [shape: f32[16,8], index: 7, kind: output, shape index: {}]
  %s8 = sld [smem:[#allocation0]]
  $region62: #{forward.1} parent=0
    _
  %s10 = ssub.s32 1, %s8
  %s11 = scalar_select 0, %s10, %s8
  $region1: #{forward.1} parent=0
    #allocation2 [shape = 'u8[24576]{0}', space=vmem, size = 0x6000, scoped, tag = 'input window, operand 0, single buffered']
    #allocation3 [shape = 's32[1]{0}', space=sflag, size = 0x4, scoped, tag = 'scoped memory for forward.1']
    #allocation4 [shape = 'u8[45056]{0}', space=vmem, size = 0xb000, scoped, tag = 'input window, operand 1, single buffered']
    #allocation5 [shape = 's32[1]{0}', space=sflag, size = 0x4, scoped, tag = 'scoped memory for forward.1']
    #allocation6 [shape = 'u8[163840]{0}', space=vmem, size = 0x28000, scoped, tag = 'input window, operand 2, single buffered']
    #allocation7 [shape = 'u8[40960]{0}', space=vmem, size = 0xa000, scoped, tag = 'input window, operand 3, single buffered']
    #allocation8 [shape = 's32[1]{0}', space=sflag, size = 0x4, scoped, tag = 'scoped memory for forward.1']
    #allocation9 [shape = 'u8[24576]{0}', space=vmem, size = 0x6000, scoped, tag = 'input window, operand 4, single buffered']
    #allocation10 [shape = 'u8[24576]{0}', space=vmem, size = 0x6000, scoped, tag = 'input window, operand 5, single buffered']
    #allocation11 [shape = 's32[1]{0}', space=sflag, size = 0x4, scoped, tag = 'scoped memory for forward.1']
    %12 = vsyncpa [#allocation3], 0
    %13 = vsyncpa [#allocation5], 0
    %14 = vsyncpa [#allocation8], 0
    %15 = vsyncpa [#allocation11], 0
    // Predicated region
    $region2: #{forward.1} parent=1 // pred_check
      _
    $region3: #{forward.1} parent=1 // pred_check_branch
      %17 = sbr.rel (0) target = $region5
    $region4: #{forward.1} parent=1 // pred_region
      %19 = vsyncadd [#allocation3], 0
      %s20 = sshll.u32 %s0, 4
      %s21 = int_to_ptr.hbm [resolvable:$true] %s20
      %s22 = sshll.u32 [#allocation2], 4
      %s23 = int_to_ptr.vmem [resolvable:$true] %s22
      %28 = dma.hbm_to_vmem [thread:$0]  %s21, 768, %s23, [#allocation3], 128, 128, 8
    $region5: #{forward.1} parent=1 // pred_fallthru
      _
    // Predicated region
    $region6: #{forward.1} parent=1 // pred_check
      _
    $region7: #{forward.1} parent=1 // pred_check_branch
      %30 = sbr.rel (0) target = $region9
    $region8: #{forward.1} parent=1 // pred_region
      %32 = vsyncadd [#allocation5], 0
      %s33 = sshll.u32 %s1, 4
      %s34 = int_to_ptr.hbm [resolvable:$true] %s33
      %s35 = sshll.u32 [#allocation4], 4
      %s36 = int_to_ptr.vmem [resolvable:$true] %s35
      %41 = dma.hbm_to_vmem [thread:$0]  %s34, 1408, %s36, [#allocation5], 128, 128, 8
    $region9: #{forward.1} parent=1 // pred_fallthru
      _
    // Predicated region
    $region10: #{forward.1} parent=1 // pred_check
      _
    $region11: #{forward.1} parent=1 // pred_check_branch
      %43 = sbr.rel (0) target = $region13
    $region12: #{forward.1} parent=1 // pred_region
      %45 = vsyncadd [#allocation5], 0
      %s46 = sshll.u32 %s2, 4
      %s47 = int_to_ptr.hbm [resolvable:$true] %s46
      %s48 = sshll.u32 [#allocation6], 4
      %s49 = int_to_ptr.vmem [resolvable:$true] %s48
      %54 = dma.hbm_to_vmem [thread:$0]  %s47, 5120, %s49, [#allocation5], 320, 320, 20
    $region13: #{forward.1} parent=1 // pred_fallthru
      _
    // Predicated region
    $region14: #{forward.1} parent=1 // pred_check
      _
    $region15: #{forward.1} parent=1 // pred_check_branch
      %56 = sbr.rel (0) target = $region17
    $region16: #{forward.1} parent=1 // pred_region
      %58 = vsyncadd [#allocation8], 0
      %s59 = sshll.u32 %s3, 4
      %s60 = int_to_ptr.hbm [resolvable:$true] %s59
      %s61 = sshll.u32 [#allocation7], 4
      %s62 = int_to_ptr.vmem [resolvable:$true] %s61
      %67 = dma.hbm_to_vmem [thread:$0]  %s60, 1280, %s62, [#allocation8], 640, 640, 40
    $region17: #{forward.1} parent=1 // pred_fallthru
      _
    // Predicated region
    $region18: #{forward.1} parent=1 // pred_check
      _
    $region19: #{forward.1} parent=1 // pred_check_branch
      %69 = sbr.rel (0) target = $region21
    $region20: #{forward.1} parent=1 // pred_region
      %71 = vsyncadd [#allocation8], 0
      %s72 = sshll.u32 %s4, 4
      %s73 = int_to_ptr.hbm [resolvable:$true] %s72
      %s74 = sshll.u32 [#allocation9], 4
      %s75 = int_to_ptr.vmem [resolvable:$true] %s74
      %80 = dma.hbm_to_vmem [thread:$0]  %s73, 768, %s75, [#allocation8], 192, 192, 12
    $region21: #{forward.1} parent=1 // pred_fallthru
      _
    // Predicated region
    $region22: #{forward.1} parent=1 // pred_check
      _
    $region23: #{forward.1} parent=1 // pred_check_branch
      %82 = sbr.rel (0) target = $region25
    $region24: #{forward.1} parent=1 // pred_region
      %84 = vsyncadd [#allocation11], 0
      %s85 = sshll.u32 %s5, 4
      %s86 = int_to_ptr.hbm [resolvable:$true] %s85
      %s87 = sshll.u32 [#allocation10], 4
      %s88 = int_to_ptr.vmem [resolvable:$true] %s87
      %93 = dma.hbm_to_vmem [thread:$0]  %s86, 768, %s88, [#allocation11], 384, 384, 24
    $region25: #{forward.1} parent=1 // pred_fallthru
      _
    // Predicated region
    $region26: #{forward.1} parent=1 // pred_check
      _
    $region27: #{forward.1} parent=1 // pred_check_branch
      %95 = sbr.rel (0) target = $region29
    $region28: #{forward.1} parent=1 // pred_region
      _
    $region29: #{forward.1} parent=1 // pred_fallthru
      _
    // Predicated region
    $region30: #{forward.1} parent=1 // pred_check
      _
    $region31: #{forward.1} parent=1 // pred_check_branch
      %97 = sbr.rel (0) target = $region33
    $region32: #{forward.1} parent=1 // pred_region
      %99 = dma.done [#allocation3], 768
    $region33: #{forward.1} parent=1 // pred_fallthru
      _
    // Predicated region
    $region34: #{forward.1} parent=1 // pred_check
      _
    $region35: #{forward.1} parent=1 // pred_check_branch
      %101 = sbr.rel (0) target = $region37
    $region36: #{forward.1} parent=1 // pred_region
      %103 = dma.done [#allocation5], 1408
    $region37: #{forward.1} parent=1 // pred_fallthru
      _
    // Predicated region
    $region38: #{forward.1} parent=1 // pred_check
      _
    $region39: #{forward.1} parent=1 // pred_check_branch
      %105 = sbr.rel (0) target = $region41
    $region40: #{forward.1} parent=1 // pred_region
      %107 = dma.done [#allocation5], 5120
    $region41: #{forward.1} parent=1 // pred_fallthru
      _
    // Predicated region
    $region42: #{forward.1} parent=1 // pred_check
      _
    $region43: #{forward.1} parent=1 // pred_check_branch
      %109 = sbr.rel (0) target = $region45
    $region44: #{forward.1} parent=1 // pred_region
      %111 = dma.done [#allocation8], 1280
    $region45: #{forward.1} parent=1 // pred_fallthru
      _
    // Predicated region
    $region46: #{forward.1} parent=1 // pred_check
      _
    $region47: #{forward.1} parent=1 // pred_check_branch
      %113 = sbr.rel (0) target = $region49
    $region48: #{forward.1} parent=1 // pred_region
      %115 = dma.done [#allocation8], 768
    $region49: #{forward.1} parent=1 // pred_fallthru
      _
    // Predicated region
    $region50: #{forward.1} parent=1 // pred_check
      _
    $region51: #{forward.1} parent=1 // pred_check_branch
      %117 = sbr.rel (0) target = $region53
    $region52: #{forward.1} parent=1 // pred_region
      %119 = dma.done [#allocation11], 768
    $region53: #{forward.1} parent=1 // pred_fallthru
      _
    %v121 = vld [vmem:[#allocation2] sm:$0xff]
    %v122 = vld [vmem:[#allocation2 + $0x8] sm:$0xff]
    %v123 = vld [vmem:[#allocation2 + $0x10] sm:$0xff]
    %v124 = vld [vmem:[#allocation2 + $0x18] sm:$0xff]
    %v125 = vld [vmem:[#allocation2 + $0x20] sm:$0xff]
    %v126 = vld [vmem:[#allocation2 + $0x28] sm:$0xff]
    %v127 = vpack.c.bf16 %v121, %v121
    %v128 = vpack.c.bf16 %v122, %v122
    %v129 = vpack.c.bf16 %v123, %v123
    %v130 = vpack.c.bf16 %v124, %v124
    %v131 = vpack.c.bf16 %v125, %v125
    %v132 = vpack.c.bf16 %v126, %v126
    %v133 = vld [vmem:[#allocation4] sm:$0xff]
    %v134 = vld [vmem:[#allocation4 + $0x8] sm:$0xff]
    %v135 = vld [vmem:[#allocation4 + $0x10] sm:$0xff]
    %v136 = vld [vmem:[#allocation4 + $0x18] sm:$0xff]
    %v137 = vld [vmem:[#allocation4 + $0x20] sm:$0xff]
    %v138 = vld [vmem:[#allocation4 + $0x28] sm:$0xff]
    %v139 = vld [vmem:[#allocation4 + $0x30] sm:$0xff]
    %v140 = vld [vmem:[#allocation4 + $0x38] sm:$0xff]
    %v141 = vld [vmem:[#allocation4 + $0x40] sm:$0xff]
    %v142 = vld [vmem:[#allocation4 + $0x48] sm:$0xff]
    %v143 = vld [vmem:[#allocation4 + $0x50] sm:$0xff]
    %v144 = vld [vmem:[#allocation6] sm:$0xff]
    %v145 = vld [vmem:[#allocation6 + $0x8] sm:$0xff]
    %v146 = vld [vmem:[#allocation6 + $0x10] sm:$0xf]
    %v147 = vld [vmem:[#allocation6 + $0x14] sm:$0xff]
    %v148 = vld [vmem:[#allocation6 + $0x1c] sm:$0xff]
    %v149 = vld [vmem:[#allocation6 + $0x24] sm:$0xf]
    %v150 = vld [vmem:[#allocation6 + $0x28] sm:$0xff]
    %v151 = vld [vmem:[#allocation6 + $0x30] sm:$0xff]
    %v152 = vld [vmem:[#allocation6 + $0x38] sm:$0xf]
    %v153 = vld [vmem:[#allocation6 + $0x3c] sm:$0xff]
    %v154 = vld [vmem:[#allocation6 + $0x44] sm:$0xff]
    %v155 = vld [vmem:[#allocation6 + $0x4c] sm:$0xf]
    %v156 = vld [vmem:[#allocation6 + $0x50] sm:$0xff]
    %v157 = vld [vmem:[#allocation6 + $0x58] sm:$0xff]
    %v158 = vld [vmem:[#allocation6 + $0x60] sm:$0xf]
    %v159 = vld [vmem:[#allocation6 + $0x64] sm:$0xff]
    %v160 = vld [vmem:[#allocation6 + $0x6c] sm:$0xff]
    %v161 = vld [vmem:[#allocation6 + $0x74] sm:$0xf]
    %v162 = vld [vmem:[#allocation6 + $0x78] sm:$0xff]
    %v163 = vld [vmem:[#allocation6 + $0x80] sm:$0xff]
    %v164 = vld [vmem:[#allocation6 + $0x88] sm:$0xf]
    %v165 = vld [vmem:[#allocation6 + $0x8c] sm:$0xff]
    %v166 = vld [vmem:[#allocation6 + $0x94] sm:$0xff]
    %v167 = vld [vmem:[#allocation6 + $0x9c] sm:$0xf]
    %v168 = vld [vmem:[#allocation6 + $0xa0] sm:$0xff]
    %v169 = vld [vmem:[#allocation6 + $0xa8] sm:$0xff]
    %v170 = vld [vmem:[#allocation6 + $0xb0] sm:$0xf]
    %v171 = vld [vmem:[#allocation6 + $0xb4] sm:$0xff]
    %v172 = vld [vmem:[#allocation6 + $0xbc] sm:$0xff]
    %v173 = vld [vmem:[#allocation6 + $0xc4] sm:$0xf]
    %v174 = vld [vmem:[#allocation6 + $0xc8] sm:$0xff]
    %v175 = vld [vmem:[#allocation6 + $0xd0] sm:$0xff]
    %v176 = vld [vmem:[#allocation6 + $0xd8] sm:$0xf]
    %v177 = vld [vmem:[#allocation6 + $0xdc] sm:$0xff]
    %v178 = vld [vmem:[#allocation6 + $0xe4] sm:$0xff]
    %v179 = vld [vmem:[#allocation6 + $0xec] sm:$0xf]
    %v180 = vld [vmem:[#allocation6 + $0xf0] sm:$0xff]
    %v181 = vld [vmem:[#allocation6 + $0xf8] sm:$0xff]
    %v182 = vld [vmem:[#allocation6 + $0x100] sm:$0xf]
    %v183 = vld [vmem:[#allocation6 + $0x104] sm:$0xff]
    %v184 = vld [vmem:[#allocation6 + $0x10c] sm:$0xff]
    %v185 = vld [vmem:[#allocation6 + $0x114] sm:$0xf]
    %v186 = vld [vmem:[#allocation6 + $0x118] sm:$0xff]
    %v187 = vld [vmem:[#allocation6 + $0x120] sm:$0xff]
    %v188 = vld [vmem:[#allocation6 + $0x128] sm:$0xf]
    %v189 = vld [vmem:[#allocation6 + $0x12c] sm:$0xff]
    %v190 = vld [vmem:[#allocation6 + $0x134] sm:$0xff]
    %v191 = vld [vmem:[#allocation6 + $0x13c] sm:$0xf]
    %v192 = vld [vmem:[#allocation7] sm:$0xff]
    %v193 = vld [vmem:[#allocation7 + $0x8] sm:$0xff]
    %v194 = vld [vmem:[#allocation7 + $0x10] sm:$0xff]
    %v195 = vld [vmem:[#allocation7 + $0x18] sm:$0xff]
    %v196 = vld [vmem:[#allocation7 + $0x20] sm:$0xff]
    %v197 = vperm.slane %v192, 0
    %v198 = vperm.slane %v193, 0
    %v201 = vunpack.c.l.b16 %v127
    %v202 = vunpack.c.l.b16 %v128
    %v203 = vpack.c.b16 %v202, %v201
    %v221 = vunpack.c.l.b16 %v144
    %v222 = vunpack.c.h.b16 %v144
    %v223 = vunpack.c.l.b16 %v147
    %v224 = vunpack.c.h.b16 %v147
    %v225 = vunpack.c.l.b16 %v150
    %v226 = vunpack.c.h.b16 %v150
    %v227 = vunpack.c.l.b16 %v153
    %v228 = vunpack.c.h.b16 %v153
    %v229 = vunpack.c.l.b16 %v156
    %v230 = vunpack.c.h.b16 %v156
    %v231 = vunpack.c.l.b16 %v159
    %v232 = vunpack.c.h.b16 %v159
    %v233 = vunpack.c.l.b16 %v162
    %v234 = vunpack.c.h.b16 %v162
    %v235 = vunpack.c.l.b16 %v165
    %v236 = vunpack.c.h.b16 %v165
    %v237 = vunpack.c.l.b16 %v168
    %v238 = vunpack.c.h.b16 %v168
    %v239 = vunpack.c.l.b16 %v171
    %v240 = vunpack.c.h.b16 %v171
    %v241 = vunpack.c.l.b16 %v174
    %v242 = vunpack.c.h.b16 %v174
    %v243 = vunpack.c.l.b16 %v177
    %v244 = vunpack.c.h.b16 %v177
    %v245 = vunpack.c.l.b16 %v180
    %v246 = vunpack.c.h.b16 %v180
    %v247 = vunpack.c.l.b16 %v183
    %v248 = vunpack.c.h.b16 %v183
    %v249 = vunpack.c.l.b16 %v186
    %v250 = vunpack.c.h.b16 %v186
    %v251 = vunpack.c.l.b16 %v189
    %v252 = vunpack.c.h.b16 %v189
    %v253 = vpack.c.b16 %v223, %v221
    %v254 = vpack.c.b16 %v224, %v222
    %v255 = vpack.c.b16 %v227, %v225
    %v256 = vpack.c.b16 %v228, %v226
    %v257 = vpack.c.b16 %v231, %v229
    %v258 = vpack.c.b16 %v232, %v230
    %v259 = vpack.c.b16 %v235, %v233
    %v260 = vpack.c.b16 %v236, %v234
    %v261 = vpack.c.b16 %v239, %v237
    %v262 = vpack.c.b16 %v240, %v238
    %v263 = vpack.c.b16 %v243, %v241
    %v264 = vpack.c.b16 %v244, %v242
    %v265 = vpack.c.b16 %v247, %v245
    %v266 = vpack.c.b16 %v248, %v246
    %v267 = vpack.c.b16 %v251, %v249
    %v268 = vpack.c.b16 %v252, %v250
    %285 = vmatpush.bf16.msra.mxu0 %v267
    %286 = vmatpush.bf16.msra.mxu0 %v265
    %287 = vmatpush.bf16.msra.mxu0 %v263
    %288 = vmatpush.bf16.msra.mxu0 %v261
    %289 = vmatpush.bf16.msra.mxu0 %v259
    %290 = vmatpush.bf16.msra.mxu0 %v257
    %291 = vmatpush.bf16.msra.mxu0 %v255
    %292 = vmatpush.bf16.msra.mxu0 %v253
    %293 = vmatmul.bf16.gmra.mxu0 %v203
    %v294 = vpop.f32.mrf.mxu0
    %v295 = vadd.f32 %v197, %v294
    %v296 = vpop.f32.mrf.mxu0
    %v297 = vadd.f32 %v197, %v296
    %298 = vdwg.mxu0
    %299 = vmatpush.bf16.msra.mxu0 %v268
    %300 = vmatpush.bf16.msra.mxu0 %v266
    %301 = vmatpush.bf16.msra.mxu0 %v264
    %302 = vmatpush.bf16.msra.mxu0 %v262
    %303 = vmatpush.bf16.msra.mxu0 %v260
    %304 = vmatpush.bf16.msra.mxu0 %v258
    %305 = vmatpush.bf16.msra.mxu0 %v256
    %306 = vmatpush.bf16.msra.mxu0 %v254
    %307 = vmatmul.bf16.gmra.mxu0 %v203
    %v308 = vpop.f32.mrf.mxu0
    %v309 = vadd.f32 %v198, %v308
    %v310 = vpop.f32.mrf.mxu0
    %v311 = vadd.f32 %v198, %v310
    %312 = vdwg.mxu0
    %v313 = vpack.c.bf16 %v309, %v295
    %v314 = vpack.c.bf16 %v311, %v297
    %v315 = vperm.slane %v194, 0
    %v316 = vperm.slane %v195, 0
    %v320 = vunpack.c.l.b16 %v129
    %v321 = vunpack.c.l.b16 %v130
    %v322 = vunpack.c.l.b16 %v131
    %v323 = vpack.c.b16 %v321, %v320
    %v324 = vpack.c.b16 %v322, %v322
    %v343 = vunpack.c.l.b16 %v145
    %v344 = vunpack.c.h.b16 %v145
    %v345 = vunpack.c.l.b16 %v148
    %v346 = vunpack.c.h.b16 %v148
    %v347 = vunpack.c.l.b16 %v151
    %v348 = vunpack.c.h.b16 %v151
    %v349 = vunpack.c.l.b16 %v154
    %v350 = vunpack.c.h.b16 %v154
    %v351 = vunpack.c.l.b16 %v157
    %v352 = vunpack.c.h.b16 %v157
    %v353 = vunpack.c.l.b16 %v160
    %v354 = vunpack.c.h.b16 %v160
    %v355 = vunpack.c.l.b16 %v163
    %v356 = vunpack.c.h.b16 %v163
    %v357 = vunpack.c.l.b16 %v166
    %v358 = vunpack.c.h.b16 %v166
    %v359 = vunpack.c.l.b16 %v169
    %v360 = vunpack.c.h.b16 %v169
    %v361 = vunpack.c.l.b16 %v172
    %v362 = vunpack.c.h.b16 %v172
    %v363 = vunpack.c.l.b16 %v175
    %v364 = vunpack.c.h.b16 %v175
    %v365 = vunpack.c.l.b16 %v178
    %v366 = vunpack.c.h.b16 %v178
    %v367 = vunpack.c.l.b16 %v181
    %v368 = vunpack.c.h.b16 %v181
    %v369 = vunpack.c.l.b16 %v184
    %v370 = vunpack.c.h.b16 %v184
    %v371 = vunpack.c.l.b16 %v187
    %v372 = vunpack.c.h.b16 %v187
    %v373 = vunpack.c.l.b16 %v190
    %v374 = vunpack.c.h.b16 %v190
    %v375 = vpack.c.b16 %v345, %v343
    %v376 = vpack.c.b16 %v346, %v344
    %v377 = vpack.c.b16 %v349, %v347
    %v378 = vpack.c.b16 %v350, %v348
    %v379 = vpack.c.b16 %v353, %v351
    %v380 = vpack.c.b16 %v354, %v352
    %v381 = vpack.c.b16 %v357, %v355
    %v382 = vpack.c.b16 %v358, %v356
    %v383 = vpack.c.b16 %v361, %v359
    %v384 = vpack.c.b16 %v362, %v360
    %v385 = vpack.c.b16 %v365, %v363
    %v386 = vpack.c.b16 %v366, %v364
    %v387 = vpack.c.b16 %v369, %v367
    %v388 = vpack.c.b16 %v370, %v368
    %v389 = vpack.c.b16 %v373, %v371
    %v390 = vpack.c.b16 %v374, %v372
    %407 = vmatpush.bf16.msra.mxu0 %v389
    %408 = vmatpush.bf16.msra.mxu0 %v387
    %409 = vmatpush.bf16.msra.mxu0 %v385
    %410 = vmatpush.bf16.msra.mxu0 %v383
    %411 = vmatpush.bf16.msra.mxu0 %v381
    %412 = vmatpush.bf16.msra.mxu0 %v379
    %413 = vmatpush.bf16.msra.mxu0 %v377
    %414 = vmatpush.bf16.msra.mxu0 %v375
    %415 = vmatmul.bf16.gmra.mxu0 %v323
    %v416 = vpop.f32.mrf.mxu0
    %v417 = vadd.f32 %v315, %v416
    %v418 = vpop.f32.mrf.mxu0
    %v419 = vadd.f32 %v315, %v418
    %420 = vmatmul.bf16.gmra.mxu0 %v324
    %v421 = vpop.f32.mrf.mxu0
    %v422 = vadd.f32 %v315, %v421
    %v423 = vpop.f32.mrf.mxu0
    %424 = vdwg.mxu0
    %425 = vmatpush.bf16.msra.mxu0 %v390
    %426 = vmatpush.bf16.msra.mxu0 %v388
    %427 = vmatpush.bf16.msra.mxu0 %v386
    %428 = vmatpush.bf16.msra.mxu0 %v384
    %429 = vmatpush.bf16.msra.mxu0 %v382
    %430 = vmatpush.bf16.msra.mxu0 %v380
    %431 = vmatpush.bf16.msra.mxu0 %v378
    %432 = vmatpush.bf16.msra.mxu0 %v376
    %433 = vmatmul.bf16.gmra.mxu0 %v323
    %v434 = vpop.f32.mrf.mxu0
    %v435 = vadd.f32 %v316, %v434
    %v436 = vpop.f32.mrf.mxu0
    %v437 = vadd.f32 %v316, %v436
    %438 = vmatmul.bf16.gmra.mxu0 %v324
    %v439 = vpop.f32.mrf.mxu0
    %v440 = vadd.f32 %v316, %v439
    %v441 = vpop.f32.mrf.mxu0
    %442 = vdwg.mxu0
    %v443 = vpack.c.bf16 %v435, %v417
    %v444 = vpack.c.bf16 %v437, %v419
    %v445 = vpack.c.bf16 %v440, %v422
    %v446 = vperm.slane %v196, 0
    %v463 = vunpack.c.l.b16 %v146
    %v464 = vunpack.c.l.b16 %v149
    %v465 = vunpack.c.l.b16 %v152
    %v466 = vunpack.c.l.b16 %v155
    %v467 = vunpack.c.l.b16 %v158
    %v468 = vunpack.c.l.b16 %v161
    %v469 = vunpack.c.l.b16 %v164
    %v470 = vunpack.c.l.b16 %v167
    %v471 = vunpack.c.l.b16 %v170
    %v472 = vunpack.c.l.b16 %v173
    %v473 = vunpack.c.l.b16 %v176
    %v474 = vunpack.c.l.b16 %v179
    %v475 = vunpack.c.l.b16 %v182
    %v476 = vunpack.c.l.b16 %v185
    %v477 = vunpack.c.l.b16 %v188
    %v478 = vunpack.c.l.b16 %v191
    %v479 = vpack.c.b16 %v464, %v463
    %v480 = vpack.c.b16 %v466, %v465
    %v481 = vpack.c.b16 %v468, %v467
    %v482 = vpack.c.b16 %v470, %v469
    %v483 = vpack.c.b16 %v472, %v471
    %v484 = vpack.c.b16 %v474, %v473
    %v485 = vpack.c.b16 %v476, %v475
    %v486 = vpack.c.b16 %v478, %v477
    %495 = vmatpush.bf16.msra.mxu0 %v486
    %496 = vmatpush.bf16.msra.mxu0 %v485
    %497 = vmatpush.bf16.msra.mxu0 %v484
    %498 = vmatpush.bf16.msra.mxu0 %v483
    %499 = vmatpush.bf16.msra.mxu0 %v482
    %500 = vmatpush.bf16.msra.mxu0 %v481
    %501 = vmatpush.bf16.msra.mxu0 %v480
    %502 = vmatpush.bf16.msra.mxu0 %v479
    %503 = vmatmul.bf16.gmra.mxu0 %v132
    %v504 = vpop.f32.mrf.mxu0
    %v505 = vadd.f32 %v446, %v504
    %v506 = vpop.f32.mrf.mxu0
    %507 = vdwg.mxu0
    %v508 = vpack.c.bf16 %v505, %v505
    %v512 = vrot.slane %v443, 3
    %v513 = vrot.slane %v444, 3
    %v514 = vrot.slane %v445, 3
    %vm515 = vcmask 1040384
    %v518 = vsel %vm515, %v443, %v512
    %vm520 = vcmask 1041409
    %v521 = vsel %vm520, %v443, %v512
    %v523 = vrot.slane %v521, 1
    %vm524 = vcmask 1042434
    %v525 = vsel %vm524, %v443, %v512
    %v527 = vrot.slane %v525, 2
    %vm528 = vcmask 1043459
    %v529 = vsel %vm528, %v443, %v512
    %v531 = vrot.slane %v529, 3
    %v534 = vsel %vm515, %v444, %v513
    %v536 = vsel %vm520, %v444, %v513
    %v538 = vrot.slane %v536, 1
    %v539 = vsel %vm524, %v444, %v513
    %v541 = vrot.slane %v539, 2
    %v542 = vsel %vm528, %v444, %v513
    %v544 = vrot.slane %v542, 3
    %v547 = vsel %vm515, %v445, %v514
    %v549 = vsel %vm520, %v445, %v514
    %v551 = vrot.slane %v549, 1
    %v552 = vsel %vm524, %v445, %v514
    %v554 = vrot.slane %v552, 2
    %v555 = vsel %vm528, %v445, %v514
    %v557 = vrot.slane %v555, 3
    %v558 = vunpack.i.l.s16 %v518
    %v559 = vunpack.i.h.s16 %v518
    %v560 = vunpack.i.l.s16 %v523
    %v561 = vunpack.i.h.s16 %v523
    %v562 = vunpack.i.l.s16 %v527
    %v563 = vunpack.i.h.s16 %v527
    %v564 = vunpack.i.l.s16 %v531
    %v565 = vunpack.i.h.s16 %v531
    %v566 = vunpack.i.l.s16 %v534
    %v567 = vunpack.i.h.s16 %v534
    %v568 = vunpack.i.l.s16 %v538
    %v569 = vunpack.i.h.s16 %v538
    %v570 = vunpack.i.l.s16 %v541
    %v571 = vunpack.i.h.s16 %v541
    %v572 = vunpack.i.l.s16 %v544
    %v573 = vunpack.i.h.s16 %v544
    %v574 = vunpack.i.l.s16 %v547
    %v575 = vunpack.i.h.s16 %v547
    %v576 = vunpack.i.l.s16 %v551
    %v577 = vunpack.i.h.s16 %v551
    %v578 = vunpack.i.l.s16 %v554
    %v579 = vunpack.i.h.s16 %v554
    %v580 = vunpack.i.l.s16 %v557
    %v581 = vunpack.i.h.s16 %v557
    %v582 = vpack.i.b16 %v558, %v558
    %v583 = vpack.i.b16 %v559, %v559
    %v584 = vpack.i.b16 %v560, %v560
    %v585 = vpack.i.b16 %v561, %v561
    %v586 = vpack.i.b16 %v562, %v562
    %v587 = vpack.i.b16 %v563, %v563
    %v588 = vpack.i.b16 %v564, %v564
    %v589 = vpack.i.b16 %v565, %v565
    %v590 = vpack.i.b16 %v566, %v566
    %v591 = vpack.i.b16 %v567, %v567
    %v592 = vpack.i.b16 %v568, %v568
    %v593 = vpack.i.b16 %v569, %v569
    %v594 = vpack.i.b16 %v570, %v570
    %v595 = vpack.i.b16 %v571, %v571
    %v596 = vpack.i.b16 %v572, %v572
    %v597 = vpack.i.b16 %v573, %v573
    %v598 = vpack.i.b16 %v574, %v574
    %v599 = vpack.i.b16 %v575, %v575
    %v600 = vpack.i.b16 %v576, %v576
    %v601 = vpack.i.b16 %v577, %v577
    %v602 = vpack.i.b16 %v578, %v578
    %v603 = vpack.i.b16 %v579, %v579
    %v604 = vpack.i.b16 %v580, %v580
    %v605 = vpack.i.b16 %v581, %v581
    %v606 = vperm.slane %v582, 0
    %v607 = vperm.slane %v583, 0
    %v608 = vperm.slane %v584, 0
    %v609 = vperm.slane %v585, 0
    %v610 = vperm.slane %v586, 0
    %v611 = vperm.slane %v587, 0
    %v612 = vperm.slane %v588, 0
    %v613 = vperm.slane %v589, 0
    %v614 = vperm.slane %v590, 0
    %v615 = vperm.slane %v591, 0
    %v616 = vperm.slane %v592, 0
    %v617 = vperm.slane %v593, 0
    %v618 = vperm.slane %v594, 0
    %v619 = vperm.slane %v595, 0
    %v620 = vperm.slane %v596, 0
    %v621 = vperm.slane %v597, 0
    %v622 = vperm.slane %v598, 0
    %v623 = vperm.slane %v599, 0
    %v624 = vperm.slane %v600, 0
    %v625 = vperm.slane %v601, 0
    %v626 = vperm.slane %v602, 0
    %v627 = vperm.slane %v603, 0
    %v628 = vperm.slane %v604, 0
    %v629 = vperm.slane %v605, 0
    %v631 = vpack.i.b16 %v606, %v606
    %v633 = vperm.slane %v631, 0
    %v635 = vpack.i.b16 %v607, %v607
    %v637 = vperm.slane %v635, 0
    %v639 = vpack.i.b16 %v608, %v608
    %v641 = vperm.slane %v639, 0
    %v643 = vpack.i.b16 %v609, %v609
    %v645 = vperm.slane %v643, 0
    %v647 = vpack.i.b16 %v610, %v610
    %v649 = vperm.slane %v647, 0
    %v651 = vpack.i.b16 %v611, %v611
    %v653 = vperm.slane %v651, 0
    %v655 = vpack.i.b16 %v612, %v612
    %v657 = vperm.slane %v655, 0
    %v659 = vpack.i.b16 %v613, %v613
    %v661 = vperm.slane %v659, 0
    %v663 = vpack.i.b16 %v614, %v614
    %v665 = vperm.slane %v663, 0
    %v667 = vpack.i.b16 %v615, %v615
    %v669 = vperm.slane %v667, 0
    %v671 = vpack.i.b16 %v616, %v616
    %v673 = vperm.slane %v671, 0
    %v675 = vpack.i.b16 %v617, %v617
    %v677 = vperm.slane %v675, 0
    %v679 = vpack.i.b16 %v618, %v618
    %v681 = vperm.slane %v679, 0
    %v683 = vpack.i.b16 %v619, %v619
    %v685 = vperm.slane %v683, 0
    %v687 = vpack.i.b16 %v620, %v620
    %v689 = vperm.slane %v687, 0
    %v691 = vpack.i.b16 %v621, %v621
    %v693 = vperm.slane %v691, 0
    %v695 = vpack.i.b16 %v622, %v622
    %v697 = vperm.slane %v695, 0
    %v699 = vpack.i.b16 %v623, %v623
    %v701 = vperm.slane %v699, 0
    %v703 = vpack.i.b16 %v624, %v624
    %v705 = vperm.slane %v703, 0
    %v707 = vpack.i.b16 %v625, %v625
    %v709 = vperm.slane %v707, 0
    %v711 = vpack.i.b16 %v626, %v626
    %v713 = vperm.slane %v711, 0
    %v715 = vpack.i.b16 %v627, %v627
    %v717 = vperm.slane %v715, 0
    %v719 = vpack.i.b16 %v628, %v628
    %v721 = vperm.slane %v719, 0
    %v723 = vpack.i.b16 %v629, %v629
    %v725 = vperm.slane %v723, 0
    %v726 = vunpack.c.l.bf16 %v633
    %v727 = vunpack.c.l.bf16 %v637
    %v728 = vunpack.c.l.bf16 %v641
    %v729 = vunpack.c.l.bf16 %v645
    %v730 = vunpack.c.l.bf16 %v649
    %v731 = vunpack.c.l.bf16 %v653
    %v732 = vunpack.c.l.bf16 %v657
    %v733 = vunpack.c.l.bf16 %v661
    %v734 = vunpack.c.l.bf16 %v665
    %v735 = vunpack.c.l.bf16 %v669
    %v736 = vunpack.c.l.bf16 %v673
    %v737 = vunpack.c.l.bf16 %v677
    %v738 = vunpack.c.l.bf16 %v681
    %v739 = vunpack.c.l.bf16 %v685
    %v740 = vunpack.c.l.bf16 %v689
    %v741 = vunpack.c.l.bf16 %v693
    %v742 = vunpack.c.l.bf16 %v697
    %v743 = vunpack.c.l.bf16 %v701
    %v744 = vunpack.c.l.bf16 %v705
    %v745 = vunpack.c.l.bf16 %v709
    %v746 = vunpack.c.l.bf16 %v713
    %v747 = vunpack.c.l.bf16 %v717
    %v748 = vunpack.c.l.bf16 %v721
    %v749 = vunpack.c.l.bf16 %v725
    %v750 = vunpack.c.l.bf16 %v313
    %v751 = vunpack.c.l.bf16 %v314
    %754 = vrot.lane.b32.xlu0 %v750, 64
    %v755 = vpop.permute.xlu0 %754
    %756 = vrot.lane.b32.xlu0 %v751, 64
    %v757 = vpop.permute.xlu0 %756
    %v760 = vadd.f32 %v726, %v755
    %v761 = vadd.f32 %v726, %v757
    %v762 = vadd.f32 %v727, %v755
    %v763 = vadd.f32 %v727, %v757
    %v764 = vadd.f32 %v728, %v755
    %v765 = vadd.f32 %v728, %v757
    %v766 = vadd.f32 %v729, %v755
    %v767 = vadd.f32 %v729, %v757
    %v768 = vadd.f32 %v730, %v755
    %v769 = vadd.f32 %v730, %v757
    %v770 = vadd.f32 %v731, %v755
    %v771 = vadd.f32 %v731, %v757
    %v772 = vadd.f32 %v732, %v755
    %v773 = vadd.f32 %v732, %v757
    %v774 = vadd.f32 %v733, %v755
    %v775 = vadd.f32 %v733, %v757
    %v776 = vadd.f32 %v734, %v755
    %v777 = vadd.f32 %v734, %v757
    %v778 = vadd.f32 %v735, %v755
    %v779 = vadd.f32 %v735, %v757
    %v780 = vadd.f32 %v736, %v755
    %v781 = vadd.f32 %v736, %v757
    %v782 = vadd.f32 %v737, %v755
    %v783 = vadd.f32 %v737, %v757
    %v784 = vadd.f32 %v738, %v755
    %v785 = vadd.f32 %v738, %v757
    %v786 = vadd.f32 %v739, %v755
    %v787 = vadd.f32 %v739, %v757
    %v788 = vadd.f32 %v740, %v755
    %v789 = vadd.f32 %v740, %v757
    %v790 = vadd.f32 %v741, %v755
    %v791 = vadd.f32 %v741, %v757
    %v792 = vadd.f32 %v742, %v755
    %v793 = vadd.f32 %v742, %v757
    %v794 = vadd.f32 %v743, %v755
    %v795 = vadd.f32 %v743, %v757
    %v796 = vadd.f32 %v744, %v755
    %v797 = vadd.f32 %v744, %v757
    %v798 = vadd.f32 %v745, %v755
    %v799 = vadd.f32 %v745, %v757
    %v800 = vadd.f32 %v746, %v755
    %v801 = vadd.f32 %v746, %v757
    %v802 = vadd.f32 %v747, %v755
    %v803 = vadd.f32 %v747, %v757
    %v804 = vadd.f32 %v748, %v755
    %v805 = vadd.f32 %v748, %v757
    %v806 = vadd.f32 %v749, %v755
    %v807 = vadd.f32 %v749, %v757
    %v808 = vpack.c.bf16 %v760, %v760
    %v809 = vpack.c.bf16 %v761, %v761
    %v810 = vpack.c.bf16 %v762, %v762
    %v811 = vpack.c.bf16 %v763, %v763
    %v812 = vpack.c.bf16 %v764, %v764
    %v813 = vpack.c.bf16 %v765, %v765
    %v814 = vpack.c.bf16 %v766, %v766
    %v815 = vpack.c.bf16 %v767, %v767
    %v816 = vpack.c.bf16 %v768, %v768
    %v817 = vpack.c.bf16 %v769, %v769
    %v818 = vpack.c.bf16 %v770, %v770
    %v819 = vpack.c.bf16 %v771, %v771
    %v820 = vpack.c.bf16 %v772, %v772
    %v821 = vpack.c.bf16 %v773, %v773
    %v822 = vpack.c.bf16 %v774, %v774
    %v823 = vpack.c.bf16 %v775, %v775
    %v824 = vpack.c.bf16 %v776, %v776
    %v825 = vpack.c.bf16 %v777, %v777
    %v826 = vpack.c.bf16 %v778, %v778
    %v827 = vpack.c.bf16 %v779, %v779
    %v828 = vpack.c.bf16 %v780, %v780
    %v829 = vpack.c.bf16 %v781, %v781
    %v830 = vpack.c.bf16 %v782, %v782
    %v831 = vpack.c.bf16 %v783, %v783
    %v832 = vpack.c.bf16 %v784, %v784
    %v833 = vpack.c.bf16 %v785, %v785
    %v834 = vpack.c.bf16 %v786, %v786
    %v835 = vpack.c.bf16 %v787, %v787
    %v836 = vpack.c.bf16 %v788, %v788
    %v837 = vpack.c.bf16 %v789, %v789
    %v838 = vpack.c.bf16 %v790, %v790
    %v839 = vpack.c.bf16 %v791, %v791
    %v840 = vpack.c.bf16 %v792, %v792
    %v841 = vpack.c.bf16 %v793, %v793
    %v842 = vpack.c.bf16 %v794, %v794
    %v843 = vpack.c.bf16 %v795, %v795
    %v844 = vpack.c.bf16 %v796, %v796
    %v845 = vpack.c.bf16 %v797, %v797
    %v846 = vpack.c.bf16 %v798, %v798
    %v847 = vpack.c.bf16 %v799, %v799
    %v848 = vpack.c.bf16 %v800, %v800
    %v849 = vpack.c.bf16 %v801, %v801
    %v850 = vpack.c.bf16 %v802, %v802
    %v851 = vpack.c.bf16 %v803, %v803
    %v852 = vpack.c.bf16 %v804, %v804
    %v853 = vpack.c.bf16 %v805, %v805
    %v854 = vpack.c.bf16 %v806, %v806
    %v855 = vpack.c.bf16 %v807, %v807
    %v856 = vunpack.c.l.bf16 %v808
    %v857 = vunpack.c.l.bf16 %v809
    %v858 = vunpack.c.l.bf16 %v810
    %v859 = vunpack.c.l.bf16 %v811
    %v860 = vunpack.c.l.bf16 %v812
    %v861 = vunpack.c.l.bf16 %v813
    %v862 = vunpack.c.l.bf16 %v814
    %v863 = vunpack.c.l.bf16 %v815
    %v864 = vunpack.c.l.bf16 %v816
    %v865 = vunpack.c.l.bf16 %v817
    %v866 = vunpack.c.l.bf16 %v818
    %v867 = vunpack.c.l.bf16 %v819
    %v868 = vunpack.c.l.bf16 %v820
    %v869 = vunpack.c.l.bf16 %v821
    %v870 = vunpack.c.l.bf16 %v822
    %v871 = vunpack.c.l.bf16 %v823
    %v872 = vunpack.c.l.bf16 %v824
    %v873 = vunpack.c.l.bf16 %v825
    %v874 = vunpack.c.l.bf16 %v826
    %v875 = vunpack.c.l.bf16 %v827
    %v876 = vunpack.c.l.bf16 %v828
    %v877 = vunpack.c.l.bf16 %v829
    %v878 = vunpack.c.l.bf16 %v830
    %v879 = vunpack.c.l.bf16 %v831
    %v880 = vunpack.c.l.bf16 %v832
    %v881 = vunpack.c.l.bf16 %v833
    %v882 = vunpack.c.l.bf16 %v834
    %v883 = vunpack.c.l.bf16 %v835
    %v884 = vunpack.c.l.bf16 %v836
    %v885 = vunpack.c.l.bf16 %v837
    %v886 = vunpack.c.l.bf16 %v838
    %v887 = vunpack.c.l.bf16 %v839
    %v888 = vunpack.c.l.bf16 %v840
    %v889 = vunpack.c.l.bf16 %v841
    %v890 = vunpack.c.l.bf16 %v842
    %v891 = vunpack.c.l.bf16 %v843
    %v892 = vunpack.c.l.bf16 %v844
    %v893 = vunpack.c.l.bf16 %v845
    %v894 = vunpack.c.l.bf16 %v846
    %v895 = vunpack.c.l.bf16 %v847
    %v896 = vunpack.c.l.bf16 %v848
    %v897 = vunpack.c.l.bf16 %v849
    %v898 = vunpack.c.l.bf16 %v850
    %v899 = vunpack.c.l.bf16 %v851
    %v900 = vunpack.c.l.bf16 %v852
    %v901 = vunpack.c.l.bf16 %v853
    %v902 = vunpack.c.l.bf16 %v854
    %v903 = vunpack.c.l.bf16 %v855
    %vm904 = vcmp.ge.f32.partialorder %v856, 0.0
    %vm905 = vcmp.ge.f32.partialorder %v857, 0.0
    %vm906 = vcmp.ge.f32.partialorder %v858, 0.0
    %vm907 = vcmp.ge.f32.partialorder %v859, 0.0
    %vm908 = vcmp.ge.f32.partialorder %v860, 0.0
    %vm909 = vcmp.ge.f32.partialorder %v861, 0.0
    %vm910 = vcmp.ge.f32.partialorder %v862, 0.0
    %vm911 = vcmp.ge.f32.partialorder %v863, 0.0
    %vm912 = vcmp.ge.f32.partialorder %v864, 0.0
    %vm913 = vcmp.ge.f32.partialorder %v865, 0.0
    %vm914 = vcmp.ge.f32.partialorder %v866, 0.0
    %vm915 = vcmp.ge.f32.partialorder %v867, 0.0
    %vm916 = vcmp.ge.f32.partialorder %v868, 0.0
    %vm917 = vcmp.ge.f32.partialorder %v869, 0.0
    %vm918 = vcmp.ge.f32.partialorder %v870, 0.0
    %vm919 = vcmp.ge.f32.partialorder %v871, 0.0
    %vm920 = vcmp.ge.f32.partialorder %v872, 0.0
    %vm921 = vcmp.ge.f32.partialorder %v873, 0.0
    %vm922 = vcmp.ge.f32.partialorder %v874, 0.0
    %vm923 = vcmp.ge.f32.partialorder %v875, 0.0
    %vm924 = vcmp.ge.f32.partialorder %v876, 0.0
    %vm925 = vcmp.ge.f32.partialorder %v877, 0.0
    %vm926 = vcmp.ge.f32.partialorder %v878, 0.0
    %vm927 = vcmp.ge.f32.partialorder %v879, 0.0
    %vm928 = vcmp.ge.f32.partialorder %v880, 0.0
    %vm929 = vcmp.ge.f32.partialorder %v881, 0.0
    %vm930 = vcmp.ge.f32.partialorder %v882, 0.0
    %vm931 = vcmp.ge.f32.partialorder %v883, 0.0
    %vm932 = vcmp.ge.f32.partialorder %v884, 0.0
    %vm933 = vcmp.ge.f32.partialorder %v885, 0.0
    %vm934 = vcmp.ge.f32.partialorder %v886, 0.0
    %vm935 = vcmp.ge.f32.partialorder %v887, 0.0
    %vm936 = vcmp.ge.f32.partialorder %v888, 0.0
    %vm937 = vcmp.ge.f32.partialorder %v889, 0.0
    %vm938 = vcmp.ge.f32.partialorder %v890, 0.0
    %vm939 = vcmp.ge.f32.partialorder %v891, 0.0
    %vm940 = vcmp.ge.f32.partialorder %v892, 0.0
    %vm941 = vcmp.ge.f32.partialorder %v893, 0.0
    %vm942 = vcmp.ge.f32.partialorder %v894, 0.0
    %vm943 = vcmp.ge.f32.partialorder %v895, 0.0
    %vm944 = vcmp.ge.f32.partialorder %v896, 0.0
    %vm945 = vcmp.ge.f32.partialorder %v897, 0.0
    %vm946 = vcmp.ge.f32.partialorder %v898, 0.0
    %vm947 = vcmp.ge.f32.partialorder %v899, 0.0
    %vm948 = vcmp.ge.f32.partialorder %v900, 0.0
    %vm949 = vcmp.ge.f32.partialorder %v901, 0.0
    %vm950 = vcmp.ge.f32.partialorder %v902, 0.0
    %vm951 = vcmp.ge.f32.partialorder %v903, 0.0
    %v952 = vmul.f32 %v856, 0.20019531
    %v953 = vmul.f32 %v857, 0.20019531
    %v954 = vmul.f32 %v858, 0.20019531
    %v955 = vmul.f32 %v859, 0.20019531
    %v956 = vmul.f32 %v860, 0.20019531
    %v957 = vmul.f32 %v861, 0.20019531
    %v958 = vmul.f32 %v862, 0.20019531
    %v959 = vmul.f32 %v863, 0.20019531
    %v960 = vmul.f32 %v864, 0.20019531
    %v961 = vmul.f32 %v865, 0.20019531
    %v962 = vmul.f32 %v866, 0.20019531
    %v963 = vmul.f32 %v867, 0.20019531
    %v964 = vmul.f32 %v868, 0.20019531
    %v965 = vmul.f32 %v869, 0.20019531
    %v966 = vmul.f32 %v870, 0.20019531
    %v967 = vmul.f32 %v871, 0.20019531
    %v968 = vmul.f32 %v872, 0.20019531
    %v969 = vmul.f32 %v873, 0.20019531
    %v970 = vmul.f32 %v874, 0.20019531
    %v971 = vmul.f32 %v875, 0.20019531
    %v972 = vmul.f32 %v876, 0.20019531
    %v973 = vmul.f32 %v877, 0.20019531
    %v974 = vmul.f32 %v878, 0.20019531
    %v975 = vmul.f32 %v879, 0.20019531
    %v976 = vmul.f32 %v880, 0.20019531
    %v977 = vmul.f32 %v881, 0.20019531
    %v978 = vmul.f32 %v882, 0.20019531
    %v979 = vmul.f32 %v883, 0.20019531
    %v980 = vmul.f32 %v884, 0.20019531
    %v981 = vmul.f32 %v885, 0.20019531
    %v982 = vmul.f32 %v886, 0.20019531
    %v983 = vmul.f32 %v887, 0.20019531
    %v984 = vmul.f32 %v888, 0.20019531
    %v985 = vmul.f32 %v889, 0.20019531
    %v986 = vmul.f32 %v890, 0.20019531
    %v987 = vmul.f32 %v891, 0.20019531
    %v988 = vmul.f32 %v892, 0.20019531
    %v989 = vmul.f32 %v893, 0.20019531
    %v990 = vmul.f32 %v894, 0.20019531
    %v991 = vmul.f32 %v895, 0.20019531
    %v992 = vmul.f32 %v896, 0.20019531
    %v993 = vmul.f32 %v897, 0.20019531
    %v994 = vmul.f32 %v898, 0.20019531
    %v995 = vmul.f32 %v899, 0.20019531
    %v996 = vmul.f32 %v900, 0.20019531
    %v997 = vmul.f32 %v901, 0.20019531
    %v998 = vmul.f32 %v902, 0.20019531
    %v999 = vmul.f32 %v903, 0.20019531
    %v1000 = vpack.c.bf16 %v952, %v952
    %v1001 = vpack.c.bf16 %v953, %v953
    %v1002 = vpack.c.bf16 %v954, %v954
    %v1003 = vpack.c.bf16 %v955, %v955
    %v1004 = vpack.c.bf16 %v956, %v956
    %v1005 = vpack.c.bf16 %v957, %v957
    %v1006 = vpack.c.bf16 %v958, %v958
    %v1007 = vpack.c.bf16 %v959, %v959
    %v1008 = vpack.c.bf16 %v960, %v960
    %v1009 = vpack.c.bf16 %v961, %v961
    %v1010 = vpack.c.bf16 %v962, %v962
    %v1011 = vpack.c.bf16 %v963, %v963
    %v1012 = vpack.c.bf16 %v964, %v964
    %v1013 = vpack.c.bf16 %v965, %v965
    %v1014 = vpack.c.bf16 %v966, %v966
    %v1015 = vpack.c.bf16 %v967, %v967
    %v1016 = vpack.c.bf16 %v968, %v968
    %v1017 = vpack.c.bf16 %v969, %v969
    %v1018 = vpack.c.bf16 %v970, %v970
    %v1019 = vpack.c.bf16 %v971, %v971
    %v1020 = vpack.c.bf16 %v972, %v972
    %v1021 = vpack.c.bf16 %v973, %v973
    %v1022 = vpack.c.bf16 %v974, %v974
    %v1023 = vpack.c.bf16 %v975, %v975
    %v1024 = vpack.c.bf16 %v976, %v976
    %v1025 = vpack.c.bf16 %v977, %v977
    %v1026 = vpack.c.bf16 %v978, %v978
    %v1027 = vpack.c.bf16 %v979, %v979
    %v1028 = vpack.c.bf16 %v980, %v980
    %v1029 = vpack.c.bf16 %v981, %v981
    %v1030 = vpack.c.bf16 %v982, %v982
    %v1031 = vpack.c.bf16 %v983, %v983
    %v1032 = vpack.c.bf16 %v984, %v984
    %v1033 = vpack.c.bf16 %v985, %v985
    %v1034 = vpack.c.bf16 %v986, %v986
    %v1035 = vpack.c.bf16 %v987, %v987
    %v1036 = vpack.c.bf16 %v988, %v988
    %v1037 = vpack.c.bf16 %v989, %v989
    %v1038 = vpack.c.bf16 %v990, %v990
    %v1039 = vpack.c.bf16 %v991, %v991
    %v1040 = vpack.c.bf16 %v992, %v992
    %v1041 = vpack.c.bf16 %v993, %v993
    %v1042 = vpack.c.bf16 %v994, %v994
    %v1043 = vpack.c.bf16 %v995, %v995
    %v1044 = vpack.c.bf16 %v996, %v996
    %v1045 = vpack.c.bf16 %v997, %v997
    %v1046 = vpack.c.bf16 %v998, %v998
    %v1047 = vpack.c.bf16 %v999, %v999
    %vm1048 = vmpackc.low %vm904, %vm904
    %vm1049 = vmpackc.low %vm905, %vm905
    %vm1050 = vmpackc.low %vm906, %vm906
    %vm1051 = vmpackc.low %vm907, %vm907
    %vm1052 = vmpackc.low %vm908, %vm908
    %vm1053 = vmpackc.low %vm909, %vm909
    %vm1054 = vmpackc.low %vm910, %vm910
    %vm1055 = vmpackc.low %vm911, %vm911
    %vm1056 = vmpackc.low %vm912, %vm912
    %vm1057 = vmpackc.low %vm913, %vm913
    %vm1058 = vmpackc.low %vm914, %vm914
    %vm1059 = vmpackc.low %vm915, %vm915
    %vm1060 = vmpackc.low %vm916, %vm916
    %vm1061 = vmpackc.low %vm917, %vm917
    %vm1062 = vmpackc.low %vm918, %vm918
    %vm1063 = vmpackc.low %vm919, %vm919
    %vm1064 = vmpackc.low %vm920, %vm920
    %vm1065 = vmpackc.low %vm921, %vm921
    %vm1066 = vmpackc.low %vm922, %vm922
    %vm1067 = vmpackc.low %vm923, %vm923
    %vm1068 = vmpackc.low %vm924, %vm924
    %vm1069 = vmpackc.low %vm925, %vm925
    %vm1070 = vmpackc.low %vm926, %vm926
    %vm1071 = vmpackc.low %vm927, %vm927
    %vm1072 = vmpackc.low %vm928, %vm928
    %vm1073 = vmpackc.low %vm929, %vm929
    %vm1074 = vmpackc.low %vm930, %vm930
    %vm1075 = vmpackc.low %vm931, %vm931
    %vm1076 = vmpackc.low %vm932, %vm932
    %vm1077 = vmpackc.low %vm933, %vm933
    %vm1078 = vmpackc.low %vm934, %vm934
    %vm1079 = vmpackc.low %vm935, %vm935
    %vm1080 = vmpackc.low %vm936, %vm936
    %vm1081 = vmpackc.low %vm937, %vm937
    %vm1082 = vmpackc.low %vm938, %vm938
    %vm1083 = vmpackc.low %vm939, %vm939
    %vm1084 = vmpackc.low %vm940, %vm940
    %vm1085 = vmpackc.low %vm941, %vm941
    %vm1086 = vmpackc.low %vm942, %vm942
    %vm1087 = vmpackc.low %vm943, %vm943
    %vm1088 = vmpackc.low %vm944, %vm944
    %vm1089 = vmpackc.low %vm945, %vm945
    %vm1090 = vmpackc.low %vm946, %vm946
    %vm1091 = vmpackc.low %vm947, %vm947
    %vm1092 = vmpackc.low %vm948, %vm948
    %vm1093 = vmpackc.low %vm949, %vm949
    %vm1094 = vmpackc.low %vm950, %vm950
    %vm1095 = vmpackc.low %vm951, %vm951
    %v1096 = vsel %vm1048, %v808, %v1000
    %v1097 = vsel %vm1049, %v809, %v1001
    %v1098 = vsel %vm1050, %v810, %v1002
    %v1099 = vsel %vm1051, %v811, %v1003
    %v1100 = vsel %vm1052, %v812, %v1004
    %v1101 = vsel %vm1053, %v813, %v1005
    %v1102 = vsel %vm1054, %v814, %v1006
    %v1103 = vsel %vm1055, %v815, %v1007
    %v1104 = vsel %vm1056, %v816, %v1008
    %v1105 = vsel %vm1057, %v817, %v1009
    %v1106 = vsel %vm1058, %v818, %v1010
    %v1107 = vsel %vm1059, %v819, %v1011
    %v1108 = vsel %vm1060, %v820, %v1012
    %v1109 = vsel %vm1061, %v821, %v1013
    %v1110 = vsel %vm1062, %v822, %v1014
    %v1111 = vsel %vm1063, %v823, %v1015
    %v1112 = vsel %vm1064, %v824, %v1016
    %v1113 = vsel %vm1065, %v825, %v1017
    %v1114 = vsel %vm1066, %v826, %v1018
    %v1115 = vsel %vm1067, %v827, %v1019
    %v1116 = vsel %vm1068, %v828, %v1020
    %v1117 = vsel %vm1069, %v829, %v1021
    %v1118 = vsel %vm1070, %v830, %v1022
    %v1119 = vsel %vm1071, %v831, %v1023
    %v1120 = vsel %vm1072, %v832, %v1024
    %v1121 = vsel %vm1073, %v833, %v1025
    %v1122 = vsel %vm1074, %v834, %v1026
    %v1123 = vsel %vm1075, %v835, %v1027
    %v1124 = vsel %vm1076, %v836, %v1028
    %v1125 = vsel %vm1077, %v837, %v1029
    %v1126 = vsel %vm1078, %v838, %v1030
    %v1127 = vsel %vm1079, %v839, %v1031
    %v1128 = vsel %vm1080, %v840, %v1032
    %v1129 = vsel %vm1081, %v841, %v1033
    %v1130 = vsel %vm1082, %v842, %v1034
    %v1131 = vsel %vm1083, %v843, %v1035
    %v1132 = vsel %vm1084, %v844, %v1036
    %v1133 = vsel %vm1085, %v845, %v1037
    %v1134 = vsel %vm1086, %v846, %v1038
    %v1135 = vsel %vm1087, %v847, %v1039
    %v1136 = vsel %vm1088, %v848, %v1040
    %v1137 = vsel %vm1089, %v849, %v1041
    %v1138 = vsel %vm1090, %v850, %v1042
    %v1139 = vsel %vm1091, %v851, %v1043
    %v1140 = vsel %vm1092, %v852, %v1044
    %v1141 = vsel %vm1093, %v853, %v1045
    %v1142 = vsel %vm1094, %v854, %v1046
    %v1143 = vsel %vm1095, %v855, %v1047
    %v1144 = vunpack.c.l.bf16 %v1096
    %v1145 = vunpack.c.l.bf16 %v1097
    %v1146 = vunpack.c.l.bf16 %v1098
    %v1147 = vunpack.c.l.bf16 %v1099
    %v1148 = vunpack.c.l.bf16 %v1100
    %v1149 = vunpack.c.l.bf16 %v1101
    %v1150 = vunpack.c.l.bf16 %v1102
    %v1151 = vunpack.c.l.bf16 %v1103
    %v1152 = vunpack.c.l.bf16 %v1104
    %v1153 = vunpack.c.l.bf16 %v1105
    %v1154 = vunpack.c.l.bf16 %v1106
    %v1155 = vunpack.c.l.bf16 %v1107
    %v1156 = vunpack.c.l.bf16 %v1108
    %v1157 = vunpack.c.l.bf16 %v1109
    %v1158 = vunpack.c.l.bf16 %v1110
    %v1159 = vunpack.c.l.bf16 %v1111
    %v1160 = vunpack.c.l.bf16 %v1112
    %v1161 = vunpack.c.l.bf16 %v1113
    %v1162 = vunpack.c.l.bf16 %v1114
    %v1163 = vunpack.c.l.bf16 %v1115
    %v1164 = vunpack.c.l.bf16 %v1116
    %v1165 = vunpack.c.l.bf16 %v1117
    %v1166 = vunpack.c.l.bf16 %v1118
    %v1167 = vunpack.c.l.bf16 %v1119
    %v1168 = vunpack.c.l.bf16 %v1120
    %v1169 = vunpack.c.l.bf16 %v1121
    %v1170 = vunpack.c.l.bf16 %v1122
    %v1171 = vunpack.c.l.bf16 %v1123
    %v1172 = vunpack.c.l.bf16 %v1124
    %v1173 = vunpack.c.l.bf16 %v1125
    %v1174 = vunpack.c.l.bf16 %v1126
    %v1175 = vunpack.c.l.bf16 %v1127
    %v1176 = vunpack.c.l.bf16 %v1128
    %v1177 = vunpack.c.l.bf16 %v1129
    %v1178 = vunpack.c.l.bf16 %v1130
    %v1179 = vunpack.c.l.bf16 %v1131
    %v1180 = vunpack.c.l.bf16 %v1132
    %v1181 = vunpack.c.l.bf16 %v1133
    %v1182 = vunpack.c.l.bf16 %v1134
    %v1183 = vunpack.c.l.bf16 %v1135
    %v1184 = vunpack.c.l.bf16 %v1136
    %v1185 = vunpack.c.l.bf16 %v1137
    %v1186 = vunpack.c.l.bf16 %v1138
    %v1187 = vunpack.c.l.bf16 %v1139
    %v1188 = vunpack.c.l.bf16 %v1140
    %v1189 = vunpack.c.l.bf16 %v1141
    %v1190 = vunpack.c.l.bf16 %v1142
    %v1191 = vunpack.c.l.bf16 %v1143
    %v1192 = vperm.slane %v192, 1
    %1194 = vrot.lane.b32.xlu0 %v1192, 64
    %v1195 = vpop.permute.xlu0 %1194
    %v1197 = vmul.f32 %v1144, %v1195
    %v1198 = vmul.f32 %v1145, %v1195
    %v1199 = vmul.f32 %v1146, %v1195
    %v1200 = vmul.f32 %v1147, %v1195
    %v1201 = vmul.f32 %v1148, %v1195
    %v1202 = vmul.f32 %v1149, %v1195
    %v1203 = vmul.f32 %v1150, %v1195
    %v1204 = vmul.f32 %v1151, %v1195
    %v1205 = vmul.f32 %v1152, %v1195
    %v1206 = vmul.f32 %v1153, %v1195
    %v1207 = vmul.f32 %v1154, %v1195
    %v1208 = vmul.f32 %v1155, %v1195
    %v1209 = vmul.f32 %v1156, %v1195
    %v1210 = vmul.f32 %v1157, %v1195
    %v1211 = vmul.f32 %v1158, %v1195
    %v1212 = vmul.f32 %v1159, %v1195
    %v1213 = vmul.f32 %v1160, %v1195
    %v1214 = vmul.f32 %v1161, %v1195
    %v1215 = vmul.f32 %v1162, %v1195
    %v1216 = vmul.f32 %v1163, %v1195
    %v1217 = vmul.f32 %v1164, %v1195
    %v1218 = vmul.f32 %v1165, %v1195
    %v1219 = vmul.f32 %v1166, %v1195
    %v1220 = vmul.f32 %v1167, %v1195
    %v1221 = vmul.f32 %v1168, %v1195
    %v1222 = vmul.f32 %v1169, %v1195
    %v1223 = vmul.f32 %v1170, %v1195
    %v1224 = vmul.f32 %v1171, %v1195
    %v1225 = vmul.f32 %v1172, %v1195
    %v1226 = vmul.f32 %v1173, %v1195
    %v1227 = vmul.f32 %v1174, %v1195
    %v1228 = vmul.f32 %v1175, %v1195
    %v1229 = vmul.f32 %v1176, %v1195
    %v1230 = vmul.f32 %v1177, %v1195
    %v1231 = vmul.f32 %v1178, %v1195
    %v1232 = vmul.f32 %v1179, %v1195
    %v1233 = vmul.f32 %v1180, %v1195
    %v1234 = vmul.f32 %v1181, %v1195
    %v1235 = vmul.f32 %v1182, %v1195
    %v1236 = vmul.f32 %v1183, %v1195
    %v1237 = vmul.f32 %v1184, %v1195
    %v1238 = vmul.f32 %v1185, %v1195
    %v1239 = vmul.f32 %v1186, %v1195
    %v1240 = vmul.f32 %v1187, %v1195
    %v1241 = vmul.f32 %v1188, %v1195
    %v1242 = vmul.f32 %v1189, %v1195
    %v1243 = vmul.f32 %v1190, %v1195
    %v1244 = vmul.f32 %v1191, %v1195
    %1293 = vrot.lane.b32.xlu0 %v1197, 64
    %v1294 = vpop.permute.xlu0 %1293
    %1295 = vrot.lane.b32.xlu0 %v1198, 64
    %v1296 = vpop.permute.xlu0 %1295
    %1297 = vrot.lane.b32.xlu0 %v1199, 64
    %v1298 = vpop.permute.xlu0 %1297
    %1299 = vrot.lane.b32.xlu0 %v1200, 64
    %v1300 = vpop.permute.xlu0 %1299
    %1301 = vrot.lane.b32.xlu0 %v1201, 64
    %v1302 = vpop.permute.xlu0 %1301
    %1303 = vrot.lane.b32.xlu0 %v1202, 64
    %v1304 = vpop.permute.xlu0 %1303
    %1305 = vrot.lane.b32.xlu0 %v1203, 64
    %v1306 = vpop.permute.xlu0 %1305
    %1307 = vrot.lane.b32.xlu0 %v1204, 64
    %v1308 = vpop.permute.xlu0 %1307
    %1309 = vrot.lane.b32.xlu0 %v1205, 64
    %v1310 = vpop.permute.xlu0 %1309
    %1311 = vrot.lane.b32.xlu0 %v1206, 64
    %v1312 = vpop.permute.xlu0 %1311
    %1313 = vrot.lane.b32.xlu0 %v1207, 64
    %v1314 = vpop.permute.xlu0 %1313
    %1315 = vrot.lane.b32.xlu0 %v1208, 64
    %v1316 = vpop.permute.xlu0 %1315
    %1317 = vrot.lane.b32.xlu0 %v1209, 64
    %v1318 = vpop.permute.xlu0 %1317
    %1319 = vrot.lane.b32.xlu0 %v1210, 64
    %v1320 = vpop.permute.xlu0 %1319
    %1321 = vrot.lane.b32.xlu0 %v1211, 64
    %v1322 = vpop.permute.xlu0 %1321
    %1323 = vrot.lane.b32.xlu0 %v1212, 64
    %v1324 = vpop.permute.xlu0 %1323
    %1325 = vrot.lane.b32.xlu0 %v1213, 64
    %v1326 = vpop.permute.xlu0 %1325
    %1327 = vrot.lane.b32.xlu0 %v1214, 64
    %v1328 = vpop.permute.xlu0 %1327
    %1329 = vrot.lane.b32.xlu0 %v1215, 64
    %v1330 = vpop.permute.xlu0 %1329
    %1331 = vrot.lane.b32.xlu0 %v1216, 64
    %v1332 = vpop.permute.xlu0 %1331
    %1333 = vrot.lane.b32.xlu0 %v1217, 64
    %v1334 = vpop.permute.xlu0 %1333
    %1335 = vrot.lane.b32.xlu0 %v1218, 64
    %v1336 = vpop.permute.xlu0 %1335
    %1337 = vrot.lane.b32.xlu0 %v1219, 64
    %v1338 = vpop.permute.xlu0 %1337
    %1339 = vrot.lane.b32.xlu0 %v1220, 64
    %v1340 = vpop.permute.xlu0 %1339
    %1341 = vrot.lane.b32.xlu0 %v1221, 64
    %v1342 = vpop.permute.xlu0 %1341
    %1343 = vrot.lane.b32.xlu0 %v1222, 64
    %v1344 = vpop.permute.xlu0 %1343
    %1345 = vrot.lane.b32.xlu0 %v1223, 64
    %v1346 = vpop.permute.xlu0 %1345
    %1347 = vrot.lane.b32.xlu0 %v1224, 64
    %v1348 = vpop.permute.xlu0 %1347
    %1349 = vrot.lane.b32.xlu0 %v1225, 64
    %v1350 = vpop.permute.xlu0 %1349
    %1351 = vrot.lane.b32.xlu0 %v1226, 64
    %v1352 = vpop.permute.xlu0 %1351
    %1353 = vrot.lane.b32.xlu0 %v1227, 64
    %v1354 = vpop.permute.xlu0 %1353
    %1355 = vrot.lane.b32.xlu0 %v1228, 64
    %v1356 = vpop.permute.xlu0 %1355
    %1357 = vrot.lane.b32.xlu0 %v1229, 64
    %v1358 = vpop.permute.xlu0 %1357
    %1359 = vrot.lane.b32.xlu0 %v1230, 64
    %v1360 = vpop.permute.xlu0 %1359
    %1361 = vrot.lane.b32.xlu0 %v1231, 64
    %v1362 = vpop.permute.xlu0 %1361
    %1363 = vrot.lane.b32.xlu0 %v1232, 64
    %v1364 = vpop.permute.xlu0 %1363
    %1365 = vrot.lane.b32.xlu0 %v1233, 64
    %v1366 = vpop.permute.xlu0 %1365
    %1367 = vrot.lane.b32.xlu0 %v1234, 64
    %v1368 = vpop.permute.xlu0 %1367
    %1369 = vrot.lane.b32.xlu0 %v1235, 64
    %v1370 = vpop.permute.xlu0 %1369
    %1371 = vrot.lane.b32.xlu0 %v1236, 64
    %v1372 = vpop.permute.xlu0 %1371
    %1373 = vrot.lane.b32.xlu0 %v1237, 64
    %v1374 = vpop.permute.xlu0 %1373
    %1375 = vrot.lane.b32.xlu0 %v1238, 64
    %v1376 = vpop.permute.xlu0 %1375
    %1377 = vrot.lane.b32.xlu0 %v1239, 64
    %v1378 = vpop.permute.xlu0 %1377
    %1379 = vrot.lane.b32.xlu0 %v1240, 64
    %v1380 = vpop.permute.xlu0 %1379
    %1381 = vrot.lane.b32.xlu0 %v1241, 64
    %v1382 = vpop.permute.xlu0 %1381
    %1383 = vrot.lane.b32.xlu0 %v1242, 64
    %v1384 = vpop.permute.xlu0 %1383
    %1385 = vrot.lane.b32.xlu0 %v1243, 64
    %v1386 = vpop.permute.xlu0 %1385
    %1387 = vrot.lane.b32.xlu0 %v1244, 64
    %v1388 = vpop.permute.xlu0 %1387
    %vm1437 = vcmask 261120
    %v1438 = vsel %vm1437, %v1294, 0.0
    %1439 = vadd.xlane.f32.xlu0 %v1438
    %v1440 = vpop.xlane.xlu0 %1439
    %v1441 = vsel %vm1437, %v1296, 0.0
    %1442 = vadd.xlane.f32.xlu0 %v1441
    %v1443 = vpop.xlane.xlu0 %1442
    %v1444 = vsel %vm1437, %v1298, 0.0
    %1445 = vadd.xlane.f32.xlu0 %v1444
    %v1446 = vpop.xlane.xlu0 %1445
    %v1447 = vsel %vm1437, %v1300, 0.0
    %1448 = vadd.xlane.f32.xlu0 %v1447
    %v1449 = vpop.xlane.xlu0 %1448
    %v1450 = vsel %vm1437, %v1302, 0.0
    %1451 = vadd.xlane.f32.xlu0 %v1450
    %v1452 = vpop.xlane.xlu0 %1451
    %v1453 = vsel %vm1437, %v1304, 0.0
    %1454 = vadd.xlane.f32.xlu0 %v1453
    %v1455 = vpop.xlane.xlu0 %1454
    %v1456 = vsel %vm1437, %v1306, 0.0
    %1457 = vadd.xlane.f32.xlu0 %v1456
    %v1458 = vpop.xlane.xlu0 %1457
    %v1459 = vsel %vm1437, %v1308, 0.0
    %1460 = vadd.xlane.f32.xlu0 %v1459
    %v1461 = vpop.xlane.xlu0 %1460
    %v1462 = vsel %vm1437, %v1310, 0.0
    %1463 = vadd.xlane.f32.xlu0 %v1462
    %v1464 = vpop.xlane.xlu0 %1463
    %v1465 = vsel %vm1437, %v1312, 0.0
    %1466 = vadd.xlane.f32.xlu0 %v1465
    %v1467 = vpop.xlane.xlu0 %1466
    %v1468 = vsel %vm1437, %v1314, 0.0
    %1469 = vadd.xlane.f32.xlu0 %v1468
    %v1470 = vpop.xlane.xlu0 %1469
    %v1471 = vsel %vm1437, %v1316, 0.0
    %1472 = vadd.xlane.f32.xlu0 %v1471
    %v1473 = vpop.xlane.xlu0 %1472
    %v1474 = vsel %vm1437, %v1318, 0.0
    %1475 = vadd.xlane.f32.xlu0 %v1474
    %v1476 = vpop.xlane.xlu0 %1475
    %v1477 = vsel %vm1437, %v1320, 0.0
    %1478 = vadd.xlane.f32.xlu0 %v1477
    %v1479 = vpop.xlane.xlu0 %1478
    %v1480 = vsel %vm1437, %v1322, 0.0
    %1481 = vadd.xlane.f32.xlu0 %v1480
    %v1482 = vpop.xlane.xlu0 %1481
    %v1483 = vsel %vm1437, %v1324, 0.0
    %1484 = vadd.xlane.f32.xlu0 %v1483
    %v1485 = vpop.xlane.xlu0 %1484
    %v1486 = vsel %vm1437, %v1326, 0.0
    %1487 = vadd.xlane.f32.xlu0 %v1486
    %v1488 = vpop.xlane.xlu0 %1487
    %v1489 = vsel %vm1437, %v1328, 0.0
    %1490 = vadd.xlane.f32.xlu0 %v1489
    %v1491 = vpop.xlane.xlu0 %1490
    %v1492 = vsel %vm1437, %v1330, 0.0
    %1493 = vadd.xlane.f32.xlu0 %v1492
    %v1494 = vpop.xlane.xlu0 %1493
    %v1495 = vsel %vm1437, %v1332, 0.0
    %1496 = vadd.xlane.f32.xlu0 %v1495
    %v1497 = vpop.xlane.xlu0 %1496
    %v1498 = vsel %vm1437, %v1334, 0.0
    %1499 = vadd.xlane.f32.xlu0 %v1498
    %v1500 = vpop.xlane.xlu0 %1499
    %v1501 = vsel %vm1437, %v1336, 0.0
    %1502 = vadd.xlane.f32.xlu0 %v1501
    %v1503 = vpop.xlane.xlu0 %1502
    %v1504 = vsel %vm1437, %v1338, 0.0
    %1505 = vadd.xlane.f32.xlu0 %v1504
    %v1506 = vpop.xlane.xlu0 %1505
    %v1507 = vsel %vm1437, %v1340, 0.0
    %1508 = vadd.xlane.f32.xlu0 %v1507
    %v1509 = vpop.xlane.xlu0 %1508
    %v1510 = vsel %vm1437, %v1342, 0.0
    %1511 = vadd.xlane.f32.xlu0 %v1510
    %v1512 = vpop.xlane.xlu0 %1511
    %v1513 = vsel %vm1437, %v1344, 0.0
    %1514 = vadd.xlane.f32.xlu0 %v1513
    %v1515 = vpop.xlane.xlu0 %1514
    %v1516 = vsel %vm1437, %v1346, 0.0
    %1517 = vadd.xlane.f32.xlu0 %v1516
    %v1518 = vpop.xlane.xlu0 %1517
    %v1519 = vsel %vm1437, %v1348, 0.0
    %1520 = vadd.xlane.f32.xlu0 %v1519
    %v1521 = vpop.xlane.xlu0 %1520
    %v1522 = vsel %vm1437, %v1350, 0.0
    %1523 = vadd.xlane.f32.xlu0 %v1522
    %v1524 = vpop.xlane.xlu0 %1523
    %v1525 = vsel %vm1437, %v1352, 0.0
    %1526 = vadd.xlane.f32.xlu0 %v1525
    %v1527 = vpop.xlane.xlu0 %1526
    %v1528 = vsel %vm1437, %v1354, 0.0
    %1529 = vadd.xlane.f32.xlu0 %v1528
    %v1530 = vpop.xlane.xlu0 %1529
    %v1531 = vsel %vm1437, %v1356, 0.0
    %1532 = vadd.xlane.f32.xlu0 %v1531
    %v1533 = vpop.xlane.xlu0 %1532
    %v1534 = vsel %vm1437, %v1358, 0.0
    %1535 = vadd.xlane.f32.xlu0 %v1534
    %v1536 = vpop.xlane.xlu0 %1535
    %v1537 = vsel %vm1437, %v1360, 0.0
    %1538 = vadd.xlane.f32.xlu0 %v1537
    %v1539 = vpop.xlane.xlu0 %1538
    %v1540 = vsel %vm1437, %v1362, 0.0
    %1541 = vadd.xlane.f32.xlu0 %v1540
    %v1542 = vpop.xlane.xlu0 %1541
    %v1543 = vsel %vm1437, %v1364, 0.0
    %1544 = vadd.xlane.f32.xlu0 %v1543
    %v1545 = vpop.xlane.xlu0 %1544
    %v1546 = vsel %vm1437, %v1366, 0.0
    %1547 = vadd.xlane.f32.xlu0 %v1546
    %v1548 = vpop.xlane.xlu0 %1547
    %v1549 = vsel %vm1437, %v1368, 0.0
    %1550 = vadd.xlane.f32.xlu0 %v1549
    %v1551 = vpop.xlane.xlu0 %1550
    %v1552 = vsel %vm1437, %v1370, 0.0
    %1553 = vadd.xlane.f32.xlu0 %v1552
    %v1554 = vpop.xlane.xlu0 %1553
    %v1555 = vsel %vm1437, %v1372, 0.0
    %1556 = vadd.xlane.f32.xlu0 %v1555
    %v1557 = vpop.xlane.xlu0 %1556
    %v1558 = vsel %vm1437, %v1374, 0.0
    %1559 = vadd.xlane.f32.xlu0 %v1558
    %v1560 = vpop.xlane.xlu0 %1559
    %v1561 = vsel %vm1437, %v1376, 0.0
    %1562 = vadd.xlane.f32.xlu0 %v1561
    %v1563 = vpop.xlane.xlu0 %1562
    %v1564 = vsel %vm1437, %v1378, 0.0
    %1565 = vadd.xlane.f32.xlu0 %v1564
    %v1566 = vpop.xlane.xlu0 %1565
    %v1567 = vsel %vm1437, %v1380, 0.0
    %1568 = vadd.xlane.f32.xlu0 %v1567
    %v1569 = vpop.xlane.xlu0 %1568
    %v1570 = vsel %vm1437, %v1382, 0.0
    %1571 = vadd.xlane.f32.xlu0 %v1570
    %v1572 = vpop.xlane.xlu0 %1571
    %v1573 = vsel %vm1437, %v1384, 0.0
    %1574 = vadd.xlane.f32.xlu0 %v1573
    %v1575 = vpop.xlane.xlu0 %1574
    %v1576 = vsel %vm1437, %v1386, 0.0
    %1577 = vadd.xlane.f32.xlu0 %v1576
    %v1578 = vpop.xlane.xlu0 %1577
    %v1579 = vsel %vm1437, %v1388, 0.0
    %1580 = vadd.xlane.f32.xlu0 %v1579
    %v1581 = vpop.xlane.xlu0 %1580
    %v1585 = vperm.slane %v133, 0
    %v1586 = vlaneseq
    %v1587 = vshrl.u32 %v1586, 7
    %1589 = vset.pattern.permute.xlu0 %v1587
    %1590 = vperm.xlu0 %1589, %v1585
    %v1591 = vpop.permute.xlu0 %1590
    %v1592 = vlaneseq
    %v1593 = vshrl.u32 %v1592, 7
    %v1594 = vadd.s32 %v1593, 8
    %1595 = vset.pattern.permute.xlu0 %v1594
    %1596 = vperm.xlu0 %1595, %v1585
    %v1597 = vpop.permute.xlu0 %1596
    %v1598 = vperm.slane %v133, 1
    %v1599 = vlaneseq
    %v1600 = vshrl.u32 %v1599, 7
    %1602 = vset.pattern.permute.xlu0 %v1600
    %1603 = vperm.xlu0 %1602, %v1598
    %v1604 = vpop.permute.xlu0 %1603
    %v1605 = vlaneseq
    %v1606 = vshrl.u32 %v1605, 7
    %v1607 = vadd.s32 %v1606, 8
    %1608 = vset.pattern.permute.xlu0 %v1607
    %1609 = vperm.xlu0 %1608, %v1598
    %v1610 = vpop.permute.xlu0 %1609
    %v1611 = vperm.slane %v133, 2
    %v1612 = vlaneseq
    %v1613 = vshrl.u32 %v1612, 7
    %1615 = vset.pattern.permute.xlu0 %v1613
    %1616 = vperm.xlu0 %1615, %v1611
    %v1617 = vpop.permute.xlu0 %1616
    %v1618 = vlaneseq
    %v1619 = vshrl.u32 %v1618, 7
    %v1620 = vadd.s32 %v1619, 8
    %1621 = vset.pattern.permute.xlu0 %v1620
    %1622 = vperm.xlu0 %1621, %v1611
    %v1623 = vpop.permute.xlu0 %1622
    %v1624 = vperm.slane %v133, 3
    %v1625 = vlaneseq
    %v1626 = vshrl.u32 %v1625, 7
    %1628 = vset.pattern.permute.xlu0 %v1626
    %1629 = vperm.xlu0 %1628, %v1624
    %v1630 = vpop.permute.xlu0 %1629
    %v1631 = vlaneseq
    %v1632 = vshrl.u32 %v1631, 7
    %v1633 = vadd.s32 %v1632, 8
    %1634 = vset.pattern.permute.xlu0 %v1633
    %1635 = vperm.xlu0 %1634, %v1624
    %v1636 = vpop.permute.xlu0 %1635
    %v1637 = vperm.slane %v133, 4
    %v1638 = vlaneseq
    %v1639 = vshrl.u32 %v1638, 7
    %1641 = vset.pattern.permute.xlu0 %v1639
    %1642 = vperm.xlu0 %1641, %v1637
    %v1643 = vpop.permute.xlu0 %1642
    %v1644 = vlaneseq
    %v1645 = vshrl.u32 %v1644, 7
    %v1646 = vadd.s32 %v1645, 8
    %1647 = vset.pattern.permute.xlu0 %v1646
    %1648 = vperm.xlu0 %1647, %v1637
    %v1649 = vpop.permute.xlu0 %1648
    %v1650 = vperm.slane %v133, 5
    %v1651 = vlaneseq
    %v1652 = vshrl.u32 %v1651, 7
    %1654 = vset.pattern.permute.xlu0 %v1652
    %1655 = vperm.xlu0 %1654, %v1650
    %v1656 = vpop.permute.xlu0 %1655
    %v1657 = vlaneseq
    %v1658 = vshrl.u32 %v1657, 7
    %v1659 = vadd.s32 %v1658, 8
    %1660 = vset.pattern.permute.xlu0 %v1659
    %1661 = vperm.xlu0 %1660, %v1650
    %v1662 = vpop.permute.xlu0 %1661
    %v1663 = vperm.slane %v133, 6
    %v1664 = vlaneseq
    %v1665 = vshrl.u32 %v1664, 7
    %1667 = vset.pattern.permute.xlu0 %v1665
    %1668 = vperm.xlu0 %1667, %v1663
    %v1669 = vpop.permute.xlu0 %1668
    %v1670 = vlaneseq
    %v1671 = vshrl.u32 %v1670, 7
    %v1672 = vadd.s32 %v1671, 8
    %1673 = vset.pattern.permute.xlu0 %v1672
    %1674 = vperm.xlu0 %1673, %v1663
    %v1675 = vpop.permute.xlu0 %1674
    %v1676 = vperm.slane %v133, 7
    %v1677 = vlaneseq
    %v1678 = vshrl.u32 %v1677, 7
    %1680 = vset.pattern.permute.xlu0 %v1678
    %1681 = vperm.xlu0 %1680, %v1676
    %v1682 = vpop.permute.xlu0 %1681
    %v1683 = vlaneseq
    %v1684 = vshrl.u32 %v1683, 7
    %v1685 = vadd.s32 %v1684, 8
    %1686 = vset.pattern.permute.xlu0 %v1685
    %1687 = vperm.xlu0 %1686, %v1676
    %v1688 = vpop.permute.xlu0 %1687
    %v1689 = vperm.slane %v134, 0
    %v1690 = vlaneseq
    %v1691 = vshrl.u32 %v1690, 7
    %1693 = vset.pattern.permute.xlu0 %v1691
    %1694 = vperm.xlu0 %1693, %v1689
    %v1695 = vpop.permute.xlu0 %1694
    %v1696 = vlaneseq
    %v1697 = vshrl.u32 %v1696, 7
    %v1698 = vadd.s32 %v1697, 8
    %1699 = vset.pattern.permute.xlu0 %v1698
    %1700 = vperm.xlu0 %1699, %v1689
    %v1701 = vpop.permute.xlu0 %1700
    %v1702 = vperm.slane %v134, 1
    %v1703 = vlaneseq
    %v1704 = vshrl.u32 %v1703, 7
    %1706 = vset.pattern.permute.xlu0 %v1704
    %1707 = vperm.xlu0 %1706, %v1702
    %v1708 = vpop.permute.xlu0 %1707
    %v1709 = vlaneseq
    %v1710 = vshrl.u32 %v1709, 7
    %v1711 = vadd.s32 %v1710, 8
    %1712 = vset.pattern.permute.xlu0 %v1711
    %1713 = vperm.xlu0 %1712, %v1702
    %v1714 = vpop.permute.xlu0 %1713
    %v1715 = vperm.slane %v134, 2
    %v1716 = vlaneseq
    %v1717 = vshrl.u32 %v1716, 7
    %1719 = vset.pattern.permute.xlu0 %v1717
    %1720 = vperm.xlu0 %1719, %v1715
    %v1721 = vpop.permute.xlu0 %1720
    %v1722 = vlaneseq
    %v1723 = vshrl.u32 %v1722, 7
    %v1724 = vadd.s32 %v1723, 8
    %1725 = vset.pattern.permute.xlu0 %v1724
    %1726 = vperm.xlu0 %1725, %v1715
    %v1727 = vpop.permute.xlu0 %1726
    %v1728 = vperm.slane %v134, 3
    %v1729 = vlaneseq
    %v1730 = vshrl.u32 %v1729, 7
    %1732 = vset.pattern.permute.xlu0 %v1730
    %1733 = vperm.xlu0 %1732, %v1728
    %v1734 = vpop.permute.xlu0 %1733
    %v1735 = vlaneseq
    %v1736 = vshrl.u32 %v1735, 7
    %v1737 = vadd.s32 %v1736, 8
    %1738 = vset.pattern.permute.xlu0 %v1737
    %1739 = vperm.xlu0 %1738, %v1728
    %v1740 = vpop.permute.xlu0 %1739
    %v1741 = vperm.slane %v134, 4
    %v1742 = vlaneseq
    %v1743 = vshrl.u32 %v1742, 7
    %1745 = vset.pattern.permute.xlu0 %v1743
    %1746 = vperm.xlu0 %1745, %v1741
    %v1747 = vpop.permute.xlu0 %1746
    %v1748 = vlaneseq
    %v1749 = vshrl.u32 %v1748, 7
    %v1750 = vadd.s32 %v1749, 8
    %1751 = vset.pattern.permute.xlu0 %v1750
    %1752 = vperm.xlu0 %1751, %v1741
    %v1753 = vpop.permute.xlu0 %1752
    %v1754 = vperm.slane %v134, 5
    %v1755 = vlaneseq
    %v1756 = vshrl.u32 %v1755, 7
    %1758 = vset.pattern.permute.xlu0 %v1756
    %1759 = vperm.xlu0 %1758, %v1754
    %v1760 = vpop.permute.xlu0 %1759
    %v1761 = vlaneseq
    %v1762 = vshrl.u32 %v1761, 7
    %v1763 = vadd.s32 %v1762, 8
    %1764 = vset.pattern.permute.xlu0 %v1763
    %1765 = vperm.xlu0 %1764, %v1754
    %v1766 = vpop.permute.xlu0 %1765
    %v1767 = vperm.slane %v134, 6
    %v1768 = vlaneseq
    %v1769 = vshrl.u32 %v1768, 7
    %1771 = vset.pattern.permute.xlu0 %v1769
    %1772 = vperm.xlu0 %1771, %v1767
    %v1773 = vpop.permute.xlu0 %1772
    %v1774 = vlaneseq
    %v1775 = vshrl.u32 %v1774, 7
    %v1776 = vadd.s32 %v1775, 8
    %1777 = vset.pattern.permute.xlu0 %v1776
    %1778 = vperm.xlu0 %1777, %v1767
    %v1779 = vpop.permute.xlu0 %1778
    %v1780 = vperm.slane %v134, 7
    %v1781 = vlaneseq
    %v1782 = vshrl.u32 %v1781, 7
    %1784 = vset.pattern.permute.xlu0 %v1782
    %1785 = vperm.xlu0 %1784, %v1780
    %v1786 = vpop.permute.xlu0 %1785
    %v1787 = vlaneseq
    %v1788 = vshrl.u32 %v1787, 7
    %v1789 = vadd.s32 %v1788, 8
    %1790 = vset.pattern.permute.xlu0 %v1789
    %1791 = vperm.xlu0 %1790, %v1780
    %v1792 = vpop.permute.xlu0 %1791
    %v1793 = vperm.slane %v135, 0
    %v1794 = vlaneseq
    %v1795 = vshrl.u32 %v1794, 7
    %1797 = vset.pattern.permute.xlu0 %v1795
    %1798 = vperm.xlu0 %1797, %v1793
    %v1799 = vpop.permute.xlu0 %1798
    %v1800 = vlaneseq
    %v1801 = vshrl.u32 %v1800, 7
    %v1802 = vadd.s32 %v1801, 8
    %1803 = vset.pattern.permute.xlu0 %v1802
    %1804 = vperm.xlu0 %1803, %v1793
    %v1805 = vpop.permute.xlu0 %1804
    %v1806 = vperm.slane %v135, 1
    %v1807 = vlaneseq
    %v1808 = vshrl.u32 %v1807, 7
    %1810 = vset.pattern.permute.xlu0 %v1808
    %1811 = vperm.xlu0 %1810, %v1806
    %v1812 = vpop.permute.xlu0 %1811
    %v1813 = vlaneseq
    %v1814 = vshrl.u32 %v1813, 7
    %v1815 = vadd.s32 %v1814, 8
    %1816 = vset.pattern.permute.xlu0 %v1815
    %1817 = vperm.xlu0 %1816, %v1806
    %v1818 = vpop.permute.xlu0 %1817
    %v1819 = vperm.slane %v135, 2
    %v1820 = vlaneseq
    %v1821 = vshrl.u32 %v1820, 7
    %1823 = vset.pattern.permute.xlu0 %v1821
    %1824 = vperm.xlu0 %1823, %v1819
    %v1825 = vpop.permute.xlu0 %1824
    %v1826 = vlaneseq
    %v1827 = vshrl.u32 %v1826, 7
    %v1828 = vadd.s32 %v1827, 8
    %1829 = vset.pattern.permute.xlu0 %v1828
    %1830 = vperm.xlu0 %1829, %v1819
    %v1831 = vpop.permute.xlu0 %1830
    %v1832 = vperm.slane %v135, 3
    %v1833 = vlaneseq
    %v1834 = vshrl.u32 %v1833, 7
    %1836 = vset.pattern.permute.xlu0 %v1834
    %1837 = vperm.xlu0 %1836, %v1832
    %v1838 = vpop.permute.xlu0 %1837
    %v1839 = vlaneseq
    %v1840 = vshrl.u32 %v1839, 7
    %v1841 = vadd.s32 %v1840, 8
    %1842 = vset.pattern.permute.xlu0 %v1841
    %1843 = vperm.xlu0 %1842, %v1832
    %v1844 = vpop.permute.xlu0 %1843
    %v1845 = vperm.slane %v135, 4
    %v1846 = vlaneseq
    %v1847 = vshrl.u32 %v1846, 7
    %1849 = vset.pattern.permute.xlu0 %v1847
    %1850 = vperm.xlu0 %1849, %v1845
    %v1851 = vpop.permute.xlu0 %1850
    %v1852 = vlaneseq
    %v1853 = vshrl.u32 %v1852, 7
    %v1854 = vadd.s32 %v1853, 8
    %1855 = vset.pattern.permute.xlu0 %v1854
    %1856 = vperm.xlu0 %1855, %v1845
    %v1857 = vpop.permute.xlu0 %1856
    %v1858 = vperm.slane %v135, 5
    %v1859 = vlaneseq
    %v1860 = vshrl.u32 %v1859, 7
    %1862 = vset.pattern.permute.xlu0 %v1860
    %1863 = vperm.xlu0 %1862, %v1858
    %v1864 = vpop.permute.xlu0 %1863
    %v1865 = vlaneseq
    %v1866 = vshrl.u32 %v1865, 7
    %v1867 = vadd.s32 %v1866, 8
    %1868 = vset.pattern.permute.xlu0 %v1867
    %1869 = vperm.xlu0 %1868, %v1858
    %v1870 = vpop.permute.xlu0 %1869
    %v1871 = vperm.slane %v135, 6
    %v1872 = vlaneseq
    %v1873 = vshrl.u32 %v1872, 7
    %1875 = vset.pattern.permute.xlu0 %v1873
    %1876 = vperm.xlu0 %1875, %v1871
    %v1877 = vpop.permute.xlu0 %1876
    %v1878 = vlaneseq
    %v1879 = vshrl.u32 %v1878, 7
    %v1880 = vadd.s32 %v1879, 8
    %1881 = vset.pattern.permute.xlu0 %v1880
    %1882 = vperm.xlu0 %1881, %v1871
    %v1883 = vpop.permute.xlu0 %1882
    %v1884 = vperm.slane %v135, 7
    %v1885 = vlaneseq
    %v1886 = vshrl.u32 %v1885, 7
    %1888 = vset.pattern.permute.xlu0 %v1886
    %1889 = vperm.xlu0 %1888, %v1884
    %v1890 = vpop.permute.xlu0 %1889
    %v1891 = vlaneseq
    %v1892 = vshrl.u32 %v1891, 7
    %v1893 = vadd.s32 %v1892, 8
    %1894 = vset.pattern.permute.xlu0 %v1893
    %1895 = vperm.xlu0 %1894, %v1884
    %v1896 = vpop.permute.xlu0 %1895
    %v1945 = vadd.f32 %v1440, %v1591
    %v1946 = vadd.f32 %v1443, %v1597
    %v1947 = vadd.f32 %v1446, %v1604
    %v1948 = vadd.f32 %v1449, %v1610
    %v1949 = vadd.f32 %v1452, %v1617
    %v1950 = vadd.f32 %v1455, %v1623
    %v1951 = vadd.f32 %v1458, %v1630
    %v1952 = vadd.f32 %v1461, %v1636
    %v1953 = vadd.f32 %v1464, %v1643
    %v1954 = vadd.f32 %v1467, %v1649
    %v1955 = vadd.f32 %v1470, %v1656
    %v1956 = vadd.f32 %v1473, %v1662
    %v1957 = vadd.f32 %v1476, %v1669
    %v1958 = vadd.f32 %v1479, %v1675
    %v1959 = vadd.f32 %v1482, %v1682
    %v1960 = vadd.f32 %v1485, %v1688
    %v1961 = vadd.f32 %v1488, %v1695
    %v1962 = vadd.f32 %v1491, %v1701
    %v1963 = vadd.f32 %v1494, %v1708
    %v1964 = vadd.f32 %v1497, %v1714
    %v1965 = vadd.f32 %v1500, %v1721
    %v1966 = vadd.f32 %v1503, %v1727
    %v1967 = vadd.f32 %v1506, %v1734
    %v1968 = vadd.f32 %v1509, %v1740
    %v1969 = vadd.f32 %v1512, %v1747
    %v1970 = vadd.f32 %v1515, %v1753
    %v1971 = vadd.f32 %v1518, %v1760
    %v1972 = vadd.f32 %v1521, %v1766
    %v1973 = vadd.f32 %v1524, %v1773
    %v1974 = vadd.f32 %v1527, %v1779
    %v1975 = vadd.f32 %v1530, %v1786
    %v1976 = vadd.f32 %v1533, %v1792
    %v1977 = vadd.f32 %v1536, %v1799
    %v1978 = vadd.f32 %v1539, %v1805
    %v1979 = vadd.f32 %v1542, %v1812
    %v1980 = vadd.f32 %v1545, %v1818
    %v1981 = vadd.f32 %v1548, %v1825
    %v1982 = vadd.f32 %v1551, %v1831
    %v1983 = vadd.f32 %v1554, %v1838
    %v1984 = vadd.f32 %v1557, %v1844
    %v1985 = vadd.f32 %v1560, %v1851
    %v1986 = vadd.f32 %v1563, %v1857
    %v1987 = vadd.f32 %v1566, %v1864
    %v1988 = vadd.f32 %v1569, %v1870
    %v1989 = vadd.f32 %v1572, %v1877
    %v1990 = vadd.f32 %v1575, %v1883
    %v1991 = vadd.f32 %v1578, %v1890
    %v1992 = vadd.f32 %v1581, %v1896
    %2041 = vset.pattern.permute.xlu0 0
    %2042 = vperm.xlu0 %2041, %v1945
    %v2043 = vpop.permute.xlu0 %2042
    %2044 = vset.pattern.permute.xlu0 0
    %2045 = vperm.xlu0 %2044, %v1946
    %v2046 = vpop.permute.xlu0 %2045
    %2047 = vset.pattern.permute.xlu0 0
    %2048 = vperm.xlu0 %2047, %v1947
    %v2049 = vpop.permute.xlu0 %2048
    %2050 = vset.pattern.permute.xlu0 0
    %2051 = vperm.xlu0 %2050, %v1948
    %v2052 = vpop.permute.xlu0 %2051
    %2053 = vset.pattern.permute.xlu0 0
    %2054 = vperm.xlu0 %2053, %v1949
    %v2055 = vpop.permute.xlu0 %2054
    %2056 = vset.pattern.permute.xlu0 0
    %2057 = vperm.xlu0 %2056, %v1950
    %v2058 = vpop.permute.xlu0 %2057
    %2059 = vset.pattern.permute.xlu0 0
    %2060 = vperm.xlu0 %2059, %v1951
    %v2061 = vpop.permute.xlu0 %2060
    %2062 = vset.pattern.permute.xlu0 0
    %2063 = vperm.xlu0 %2062, %v1952
    %v2064 = vpop.permute.xlu0 %2063
    %2065 = vset.pattern.permute.xlu0 0
    %2066 = vperm.xlu0 %2065, %v1953
    %v2067 = vpop.permute.xlu0 %2066
    %2068 = vset.pattern.permute.xlu0 0
    %2069 = vperm.xlu0 %2068, %v1954
    %v2070 = vpop.permute.xlu0 %2069
    %2071 = vset.pattern.permute.xlu0 0
    %2072 = vperm.xlu0 %2071, %v1955
    %v2073 = vpop.permute.xlu0 %2072
    %2074 = vset.pattern.permute.xlu0 0
    %2075 = vperm.xlu0 %2074, %v1956
    %v2076 = vpop.permute.xlu0 %2075
    %2077 = vset.pattern.permute.xlu0 0
    %2078 = vperm.xlu0 %2077, %v1957
    %v2079 = vpop.permute.xlu0 %2078
    %2080 = vset.pattern.permute.xlu0 0
    %2081 = vperm.xlu0 %2080, %v1958
    %v2082 = vpop.permute.xlu0 %2081
    %2083 = vset.pattern.permute.xlu0 0
    %2084 = vperm.xlu0 %2083, %v1959
    %v2085 = vpop.permute.xlu0 %2084
    %2086 = vset.pattern.permute.xlu0 0
    %2087 = vperm.xlu0 %2086, %v1960
    %v2088 = vpop.permute.xlu0 %2087
    %2089 = vset.pattern.permute.xlu0 0
    %2090 = vperm.xlu0 %2089, %v1961
    %v2091 = vpop.permute.xlu0 %2090
    %2092 = vset.pattern.permute.xlu0 0
    %2093 = vperm.xlu0 %2092, %v1962
    %v2094 = vpop.permute.xlu0 %2093
    %2095 = vset.pattern.permute.xlu0 0
    %2096 = vperm.xlu0 %2095, %v1963
    %v2097 = vpop.permute.xlu0 %2096
    %2098 = vset.pattern.permute.xlu0 0
    %2099 = vperm.xlu0 %2098, %v1964
    %v2100 = vpop.permute.xlu0 %2099
    %2101 = vset.pattern.permute.xlu0 0
    %2102 = vperm.xlu0 %2101, %v1965
    %v2103 = vpop.permute.xlu0 %2102
    %2104 = vset.pattern.permute.xlu0 0
    %2105 = vperm.xlu0 %2104, %v1966
    %v2106 = vpop.permute.xlu0 %2105
    %2107 = vset.pattern.permute.xlu0 0
    %2108 = vperm.xlu0 %2107, %v1967
    %v2109 = vpop.permute.xlu0 %2108
    %2110 = vset.pattern.permute.xlu0 0
    %2111 = vperm.xlu0 %2110, %v1968
    %v2112 = vpop.permute.xlu0 %2111
    %2113 = vset.pattern.permute.xlu0 0
    %2114 = vperm.xlu0 %2113, %v1969
    %v2115 = vpop.permute.xlu0 %2114
    %2116 = vset.pattern.permute.xlu0 0
    %2117 = vperm.xlu0 %2116, %v1970
    %v2118 = vpop.permute.xlu0 %2117
    %2119 = vset.pattern.permute.xlu0 0
    %2120 = vperm.xlu0 %2119, %v1971
    %v2121 = vpop.permute.xlu0 %2120
    %2122 = vset.pattern.permute.xlu0 0
    %2123 = vperm.xlu0 %2122, %v1972
    %v2124 = vpop.permute.xlu0 %2123
    %2125 = vset.pattern.permute.xlu0 0
    %2126 = vperm.xlu0 %2125, %v1973
    %v2127 = vpop.permute.xlu0 %2126
    %2128 = vset.pattern.permute.xlu0 0
    %2129 = vperm.xlu0 %2128, %v1974
    %v2130 = vpop.permute.xlu0 %2129
    %2131 = vset.pattern.permute.xlu0 0
    %2132 = vperm.xlu0 %2131, %v1975
    %v2133 = vpop.permute.xlu0 %2132
    %2134 = vset.pattern.permute.xlu0 0
    %2135 = vperm.xlu0 %2134, %v1976
    %v2136 = vpop.permute.xlu0 %2135
    %2137 = vset.pattern.permute.xlu0 0
    %2138 = vperm.xlu0 %2137, %v1977
    %v2139 = vpop.permute.xlu0 %2138
    %2140 = vset.pattern.permute.xlu0 0
    %2141 = vperm.xlu0 %2140, %v1978
    %v2142 = vpop.permute.xlu0 %2141
    %2143 = vset.pattern.permute.xlu0 0
    %2144 = vperm.xlu0 %2143, %v1979
    %v2145 = vpop.permute.xlu0 %2144
    %2146 = vset.pattern.permute.xlu0 0
    %2147 = vperm.xlu0 %2146, %v1980
    %v2148 = vpop.permute.xlu0 %2147
    %2149 = vset.pattern.permute.xlu0 0
    %2150 = vperm.xlu0 %2149, %v1981
    %v2151 = vpop.permute.xlu0 %2150
    %2152 = vset.pattern.permute.xlu0 0
    %2153 = vperm.xlu0 %2152, %v1982
    %v2154 = vpop.permute.xlu0 %2153
    %2155 = vset.pattern.permute.xlu0 0
    %2156 = vperm.xlu0 %2155, %v1983
    %v2157 = vpop.permute.xlu0 %2156
    %2158 = vset.pattern.permute.xlu0 0
    %2159 = vperm.xlu0 %2158, %v1984
    %v2160 = vpop.permute.xlu0 %2159
    %2161 = vset.pattern.permute.xlu0 0
    %2162 = vperm.xlu0 %2161, %v1985
    %v2163 = vpop.permute.xlu0 %2162
    %2164 = vset.pattern.permute.xlu0 0
    %2165 = vperm.xlu0 %2164, %v1986
    %v2166 = vpop.permute.xlu0 %2165
    %2167 = vset.pattern.permute.xlu0 0
    %2168 = vperm.xlu0 %2167, %v1987
    %v2169 = vpop.permute.xlu0 %2168
    %2170 = vset.pattern.permute.xlu0 0
    %2171 = vperm.xlu0 %2170, %v1988
    %v2172 = vpop.permute.xlu0 %2171
    %2173 = vset.pattern.permute.xlu0 0
    %2174 = vperm.xlu0 %2173, %v1989
    %v2175 = vpop.permute.xlu0 %2174
    %2176 = vset.pattern.permute.xlu0 0
    %2177 = vperm.xlu0 %2176, %v1990
    %v2178 = vpop.permute.xlu0 %2177
    %2179 = vset.pattern.permute.xlu0 0
    %2180 = vperm.xlu0 %2179, %v1991
    %v2181 = vpop.permute.xlu0 %2180
    %2182 = vset.pattern.permute.xlu0 0
    %2183 = vperm.xlu0 %2182, %v1992
    %v2184 = vpop.permute.xlu0 %2183
    %v2185 = vlaneseq
    %v2186 = vand.u32 %v2185, 127
    %v2187 = vperm.slane %v2043, %v2186
    %v2188 = vadd.s32 %v2186, 4294967288
    %v2189 = vperm.slane %v2046, %v2188
    %vm2190 = vcmask 130112
    %v2191 = vsel %vm2190, %v2189, %v2187
    %v2192 = vperm.slane %v2049, %v2186
    %v2193 = vperm.slane %v2052, %v2188
    %v2194 = vsel %vm2190, %v2193, %v2192
    %v2195 = vperm.slane %v2055, %v2186
    %v2196 = vperm.slane %v2058, %v2188
    %v2197 = vsel %vm2190, %v2196, %v2195
    %v2198 = vperm.slane %v2061, %v2186
    %v2199 = vperm.slane %v2064, %v2188
    %v2200 = vsel %vm2190, %v2199, %v2198
    %v2201 = vperm.slane %v2067, %v2186
    %v2202 = vperm.slane %v2070, %v2188
    %v2203 = vsel %vm2190, %v2202, %v2201
    %v2204 = vperm.slane %v2073, %v2186
    %v2205 = vperm.slane %v2076, %v2188
    %v2206 = vsel %vm2190, %v2205, %v2204
    %v2207 = vperm.slane %v2079, %v2186
    %v2208 = vperm.slane %v2082, %v2188
    %v2209 = vsel %vm2190, %v2208, %v2207
    %v2210 = vperm.slane %v2085, %v2186
    %v2211 = vperm.slane %v2088, %v2188
    %v2212 = vsel %vm2190, %v2211, %v2210
    %v2213 = vperm.slane %v2091, %v2186
    %v2214 = vperm.slane %v2094, %v2188
    %v2215 = vsel %vm2190, %v2214, %v2213
    %v2216 = vperm.slane %v2097, %v2186
    %v2217 = vperm.slane %v2100, %v2188
    %v2218 = vsel %vm2190, %v2217, %v2216
    %v2219 = vperm.slane %v2103, %v2186
    %v2220 = vperm.slane %v2106, %v2188
    %v2221 = vsel %vm2190, %v2220, %v2219
    %v2222 = vperm.slane %v2109, %v2186
    %v2223 = vperm.slane %v2112, %v2188
    %v2224 = vsel %vm2190, %v2223, %v2222
    %v2225 = vperm.slane %v2115, %v2186
    %v2226 = vperm.slane %v2118, %v2188
    %v2227 = vsel %vm2190, %v2226, %v2225
    %v2228 = vperm.slane %v2121, %v2186
    %v2229 = vperm.slane %v2124, %v2188
    %v2230 = vsel %vm2190, %v2229, %v2228
    %v2231 = vperm.slane %v2127, %v2186
    %v2232 = vperm.slane %v2130, %v2188
    %v2233 = vsel %vm2190, %v2232, %v2231
    %v2234 = vperm.slane %v2133, %v2186
    %v2235 = vperm.slane %v2136, %v2188
    %v2236 = vsel %vm2190, %v2235, %v2234
    %v2237 = vperm.slane %v2139, %v2186
    %v2238 = vperm.slane %v2142, %v2188
    %v2239 = vsel %vm2190, %v2238, %v2237
    %v2240 = vperm.slane %v2145, %v2186
    %v2241 = vperm.slane %v2148, %v2188
    %v2242 = vsel %vm2190, %v2241, %v2240
    %v2243 = vperm.slane %v2151, %v2186
    %v2244 = vperm.slane %v2154, %v2188
    %v2245 = vsel %vm2190, %v2244, %v2243
    %v2246 = vperm.slane %v2157, %v2186
    %v2247 = vperm.slane %v2160, %v2188
    %v2248 = vsel %vm2190, %v2247, %v2246
    %v2249 = vperm.slane %v2163, %v2186
    %v2250 = vperm.slane %v2166, %v2188
    %v2251 = vsel %vm2190, %v2250, %v2249
    %v2252 = vperm.slane %v2169, %v2186
    %v2253 = vperm.slane %v2172, %v2188
    %v2254 = vsel %vm2190, %v2253, %v2252
    %v2255 = vperm.slane %v2175, %v2186
    %v2256 = vperm.slane %v2178, %v2188
    %v2257 = vsel %vm2190, %v2256, %v2255
    %v2258 = vperm.slane %v2181, %v2186
    %v2259 = vperm.slane %v2184, %v2188
    %v2260 = vsel %vm2190, %v2259, %v2258
    %v2261 = vsel %vm520, %v2194, %v2191
    %v2262 = vsel %vm524, %v2197, %v2261
    %v2263 = vsel %vm528, %v2200, %v2262
    %vm2264 = vcmask 1044484
    %v2265 = vsel %vm2264, %v2203, %v2263
    %vm2266 = vcmask 1045509
    %v2267 = vsel %vm2266, %v2206, %v2265
    %vm2268 = vcmask 1046534
    %v2269 = vsel %vm2268, %v2209, %v2267
    %vm2270 = vcmask 1047559
    %v2271 = vsel %vm2270, %v2212, %v2269
    %v2272 = vsel %vm520, %v2218, %v2215
    %v2273 = vsel %vm524, %v2221, %v2272
    %v2274 = vsel %vm528, %v2224, %v2273
    %v2275 = vsel %vm2264, %v2227, %v2274
    %v2276 = vsel %vm2266, %v2230, %v2275
    %v2277 = vsel %vm2268, %v2233, %v2276
    %v2278 = vsel %vm2270, %v2236, %v2277
    %v2279 = vsel %vm520, %v2242, %v2239
    %v2280 = vsel %vm524, %v2245, %v2279
    %v2281 = vsel %vm528, %v2248, %v2280
    %v2282 = vsel %vm2264, %v2251, %v2281
    %v2283 = vsel %vm2266, %v2254, %v2282
    %v2284 = vsel %vm2268, %v2257, %v2283
    %v2285 = vsel %vm2270, %v2260, %v2284
    %vm2289 = vcmask 130048
    %v2290 = vsel %vm2289, %v2271, -inf
    %2291 = vmax.xlane.f32.xlu0 %v2290
    %v2292 = vpop.xlane.xlu0 %2291
    %v2293 = vsel %vm2289, %v2278, -inf
    %2294 = vmax.xlane.f32.xlu0 %v2293
    %v2295 = vpop.xlane.xlu0 %2294
    %v2296 = vsel %vm2289, %v2285, -inf
    %2297 = vmax.xlane.f32.xlu0 %v2296
    %v2298 = vpop.xlane.xlu0 %2297
    %vm2299 = vcmp.gt.f32.partialorder %v2292, -5e+29
    %vm2300 = vcmp.gt.f32.partialorder %v2295, -5e+29
    %vm2301 = vcmp.gt.f32.partialorder %v2298, -5e+29
    %v2302 = vsel %vm2299, %v2292, 0.0
    %v2303 = vsel %vm2300, %v2295, 0.0
    %v2304 = vsel %vm2301, %v2298, 0.0
    %v2308 = vperm.slane %v2302, 0
    %v2309 = vperm.slane %v2302, 1
    %v2310 = vperm.slane %v2302, 2
    %v2311 = vperm.slane %v2302, 3
    %v2312 = vperm.slane %v2302, 4
    %v2313 = vperm.slane %v2302, 5
    %v2314 = vperm.slane %v2302, 6
    %v2315 = vperm.slane %v2302, 7
    %v2316 = vperm.slane %v2303, 0
    %v2317 = vperm.slane %v2303, 1
    %v2318 = vperm.slane %v2303, 2
    %v2319 = vperm.slane %v2303, 3
    %v2320 = vperm.slane %v2303, 4
    %v2321 = vperm.slane %v2303, 5
    %v2322 = vperm.slane %v2303, 6
    %v2323 = vperm.slane %v2303, 7
    %v2324 = vperm.slane %v2304, 0
    %v2325 = vperm.slane %v2304, 1
    %v2326 = vperm.slane %v2304, 2
    %v2327 = vperm.slane %v2304, 3
    %v2328 = vperm.slane %v2304, 4
    %v2329 = vperm.slane %v2304, 5
    %v2330 = vperm.slane %v2304, 6
    %v2331 = vperm.slane %v2304, 7
    %v2356 = vsub.f32 %v1945, %v2308
    %v2357 = vsub.f32 %v1946, %v2308
    %v2358 = vsub.f32 %v1947, %v2309
    %v2359 = vsub.f32 %v1948, %v2309
    %v2360 = vsub.f32 %v1949, %v2310
    %v2361 = vsub.f32 %v1950, %v2310
    %v2362 = vsub.f32 %v1951, %v2311
    %v2363 = vsub.f32 %v1952, %v2311
    %v2364 = vsub.f32 %v1953, %v2312
    %v2365 = vsub.f32 %v1954, %v2312
    %v2366 = vsub.f32 %v1955, %v2313
    %v2367 = vsub.f32 %v1956, %v2313
    %v2368 = vsub.f32 %v1957, %v2314
    %v2369 = vsub.f32 %v1958, %v2314
    %v2370 = vsub.f32 %v1959, %v2315
    %v2371 = vsub.f32 %v1960, %v2315
    %v2372 = vsub.f32 %v1961, %v2316
    %v2373 = vsub.f32 %v1962, %v2316
    %v2374 = vsub.f32 %v1963, %v2317
    %v2375 = vsub.f32 %v1964, %v2317
    %v2376 = vsub.f32 %v1965, %v2318
    %v2377 = vsub.f32 %v1966, %v2318
    %v2378 = vsub.f32 %v1967, %v2319
    %v2379 = vsub.f32 %v1968, %v2319
    %v2380 = vsub.f32 %v1969, %v2320
    %v2381 = vsub.f32 %v1970, %v2320
    %v2382 = vsub.f32 %v1971, %v2321
    %v2383 = vsub.f32 %v1972, %v2321
    %v2384 = vsub.f32 %v1973, %v2322
    %v2385 = vsub.f32 %v1974, %v2322
    %v2386 = vsub.f32 %v1975, %v2323
    %v2387 = vsub.f32 %v1976, %v2323
    %v2388 = vsub.f32 %v1977, %v2324
    %v2389 = vsub.f32 %v1978, %v2324
    %v2390 = vsub.f32 %v1979, %v2325
    %v2391 = vsub.f32 %v1980, %v2325
    %v2392 = vsub.f32 %v1981, %v2326
    %v2393 = vsub.f32 %v1982, %v2326
    %v2394 = vsub.f32 %v1983, %v2327
    %v2395 = vsub.f32 %v1984, %v2327
    %v2396 = vsub.f32 %v1985, %v2328
    %v2397 = vsub.f32 %v1986, %v2328
    %v2398 = vsub.f32 %v1987, %v2329
    %v2399 = vsub.f32 %v1988, %v2329
    %v2400 = vsub.f32 %v1989, %v2330
    %v2401 = vsub.f32 %v1990, %v2330
    %v2402 = vsub.f32 %v1991, %v2331
    %v2403 = vsub.f32 %v1992, %v2331
    %v2404 = vmul.f32 %v2356, 1.442695
    %v2405 = vpow.pop %v2404
    %v2406 = vmul.f32 %v2357, 1.442695
    %v2407 = vpow.pop %v2406
    %v2408 = vmul.f32 %v2358, 1.442695
    %v2409 = vpow.pop %v2408
    %v2410 = vmul.f32 %v2359, 1.442695
    %v2411 = vpow.pop %v2410
    %v2412 = vmul.f32 %v2360, 1.442695
    %v2413 = vpow.pop %v2412
    %v2414 = vmul.f32 %v2361, 1.442695
    %v2415 = vpow.pop %v2414
    %v2416 = vmul.f32 %v2362, 1.442695
    %v2417 = vpow.pop %v2416
    %v2418 = vmul.f32 %v2363, 1.442695
    %v2419 = vpow.pop %v2418
    %v2420 = vmul.f32 %v2364, 1.442695
    %v2421 = vpow.pop %v2420
    %v2422 = vmul.f32 %v2365, 1.442695
    %v2423 = vpow.pop %v2422
    %v2424 = vmul.f32 %v2366, 1.442695
    %v2425 = vpow.pop %v2424
    %v2426 = vmul.f32 %v2367, 1.442695
    %v2427 = vpow.pop %v2426
    %v2428 = vmul.f32 %v2368, 1.442695
    %v2429 = vpow.pop %v2428
    %v2430 = vmul.f32 %v2369, 1.442695
    %v2431 = vpow.pop %v2430
    %v2432 = vmul.f32 %v2370, 1.442695
    %v2433 = vpow.pop %v2432
    %v2434 = vmul.f32 %v2371, 1.442695
    %v2435 = vpow.pop %v2434
    %v2436 = vmul.f32 %v2372, 1.442695
    %v2437 = vpow.pop %v2436
    %v2438 = vmul.f32 %v2373, 1.442695
    %v2439 = vpow.pop %v2438
    %v2440 = vmul.f32 %v2374, 1.442695
    %v2441 = vpow.pop %v2440
    %v2442 = vmul.f32 %v2375, 1.442695
    %v2443 = vpow.pop %v2442
    %v2444 = vmul.f32 %v2376, 1.442695
    %v2445 = vpow.pop %v2444
    %v2446 = vmul.f32 %v2377, 1.442695
    %v2447 = vpow.pop %v2446
    %v2448 = vmul.f32 %v2378, 1.442695
    %v2449 = vpow.pop %v2448
    %v2450 = vmul.f32 %v2379, 1.442695
    %v2451 = vpow.pop %v2450
    %v2452 = vmul.f32 %v2380, 1.442695
    %v2453 = vpow.pop %v2452
    %v2454 = vmul.f32 %v2381, 1.442695
    %v2455 = vpow.pop %v2454
    %v2456 = vmul.f32 %v2382, 1.442695
    %v2457 = vpow.pop %v2456
    %v2458 = vmul.f32 %v2383, 1.442695
    %v2459 = vpow.pop %v2458
    %v2460 = vmul.f32 %v2384, 1.442695
    %v2461 = vpow.pop %v2460
    %v2462 = vmul.f32 %v2385, 1.442695
    %v2463 = vpow.pop %v2462
    %v2464 = vmul.f32 %v2386, 1.442695
    %v2465 = vpow.pop %v2464
    %v2466 = vmul.f32 %v2387, 1.442695
    %v2467 = vpow.pop %v2466
    %v2468 = vmul.f32 %v2388, 1.442695
    %v2469 = vpow.pop %v2468
    %v2470 = vmul.f32 %v2389, 1.442695
    %v2471 = vpow.pop %v2470
    %v2472 = vmul.f32 %v2390, 1.442695
    %v2473 = vpow.pop %v2472
    %v2474 = vmul.f32 %v2391, 1.442695
    %v2475 = vpow.pop %v2474
    %v2476 = vmul.f32 %v2392, 1.442695
    %v2477 = vpow.pop %v2476
    %v2478 = vmul.f32 %v2393, 1.442695
    %v2479 = vpow.pop %v2478
    %v2480 = vmul.f32 %v2394, 1.442695
    %v2481 = vpow.pop %v2480
    %v2482 = vmul.f32 %v2395, 1.442695
    %v2483 = vpow.pop %v2482
    %v2484 = vmul.f32 %v2396, 1.442695
    %v2485 = vpow.pop %v2484
    %v2486 = vmul.f32 %v2397, 1.442695
    %v2487 = vpow.pop %v2486
    %v2488 = vmul.f32 %v2398, 1.442695
    %v2489 = vpow.pop %v2488
    %v2490 = vmul.f32 %v2399, 1.442695
    %v2491 = vpow.pop %v2490
    %v2492 = vmul.f32 %v2400, 1.442695
    %v2493 = vpow.pop %v2492
    %v2494 = vmul.f32 %v2401, 1.442695
    %v2495 = vpow.pop %v2494
    %v2496 = vmul.f32 %v2402, 1.442695
    %v2497 = vpow.pop %v2496
    %v2498 = vmul.f32 %v2403, 1.442695
    %v2499 = vpow.pop %v2498
    %2548 = vset.pattern.permute.xlu0 0
    %2549 = vperm.xlu0 %2548, %v2405
    %v2550 = vpop.permute.xlu0 %2549
    %2551 = vset.pattern.permute.xlu0 0
    %2552 = vperm.xlu0 %2551, %v2407
    %v2553 = vpop.permute.xlu0 %2552
    %2554 = vset.pattern.permute.xlu0 0
    %2555 = vperm.xlu0 %2554, %v2409
    %v2556 = vpop.permute.xlu0 %2555
    %2557 = vset.pattern.permute.xlu0 0
    %2558 = vperm.xlu0 %2557, %v2411
    %v2559 = vpop.permute.xlu0 %2558
    %2560 = vset.pattern.permute.xlu0 0
    %2561 = vperm.xlu0 %2560, %v2413
    %v2562 = vpop.permute.xlu0 %2561
    %2563 = vset.pattern.permute.xlu0 0
    %2564 = vperm.xlu0 %2563, %v2415
    %v2565 = vpop.permute.xlu0 %2564
    %2566 = vset.pattern.permute.xlu0 0
    %2567 = vperm.xlu0 %2566, %v2417
    %v2568 = vpop.permute.xlu0 %2567
    %2569 = vset.pattern.permute.xlu0 0
    %2570 = vperm.xlu0 %2569, %v2419
    %v2571 = vpop.permute.xlu0 %2570
    %2572 = vset.pattern.permute.xlu0 0
    %2573 = vperm.xlu0 %2572, %v2421
    %v2574 = vpop.permute.xlu0 %2573
    %2575 = vset.pattern.permute.xlu0 0
    %2576 = vperm.xlu0 %2575, %v2423
    %v2577 = vpop.permute.xlu0 %2576
    %2578 = vset.pattern.permute.xlu0 0
    %2579 = vperm.xlu0 %2578, %v2425
    %v2580 = vpop.permute.xlu0 %2579
    %2581 = vset.pattern.permute.xlu0 0
    %2582 = vperm.xlu0 %2581, %v2427
    %v2583 = vpop.permute.xlu0 %2582
    %2584 = vset.pattern.permute.xlu0 0
    %2585 = vperm.xlu0 %2584, %v2429
    %v2586 = vpop.permute.xlu0 %2585
    %2587 = vset.pattern.permute.xlu0 0
    %2588 = vperm.xlu0 %2587, %v2431
    %v2589 = vpop.permute.xlu0 %2588
    %2590 = vset.pattern.permute.xlu0 0
    %2591 = vperm.xlu0 %2590, %v2433
    %v2592 = vpop.permute.xlu0 %2591
    %2593 = vset.pattern.permute.xlu0 0
    %2594 = vperm.xlu0 %2593, %v2435
    %v2595 = vpop.permute.xlu0 %2594
    %2596 = vset.pattern.permute.xlu0 0
    %2597 = vperm.xlu0 %2596, %v2437
    %v2598 = vpop.permute.xlu0 %2597
    %2599 = vset.pattern.permute.xlu0 0
    %2600 = vperm.xlu0 %2599, %v2439
    %v2601 = vpop.permute.xlu0 %2600
    %2602 = vset.pattern.permute.xlu0 0
    %2603 = vperm.xlu0 %2602, %v2441
    %v2604 = vpop.permute.xlu0 %2603
    %2605 = vset.pattern.permute.xlu0 0
    %2606 = vperm.xlu0 %2605, %v2443
    %v2607 = vpop.permute.xlu0 %2606
    %2608 = vset.pattern.permute.xlu0 0
    %2609 = vperm.xlu0 %2608, %v2445
    %v2610 = vpop.permute.xlu0 %2609
    %2611 = vset.pattern.permute.xlu0 0
    %2612 = vperm.xlu0 %2611, %v2447
    %v2613 = vpop.permute.xlu0 %2612
    %2614 = vset.pattern.permute.xlu0 0
    %2615 = vperm.xlu0 %2614, %v2449
    %v2616 = vpop.permute.xlu0 %2615
    %2617 = vset.pattern.permute.xlu0 0
    %2618 = vperm.xlu0 %2617, %v2451
    %v2619 = vpop.permute.xlu0 %2618
    %2620 = vset.pattern.permute.xlu0 0
    %2621 = vperm.xlu0 %2620, %v2453
    %v2622 = vpop.permute.xlu0 %2621
    %2623 = vset.pattern.permute.xlu0 0
    %2624 = vperm.xlu0 %2623, %v2455
    %v2625 = vpop.permute.xlu0 %2624
    %2626 = vset.pattern.permute.xlu0 0
    %2627 = vperm.xlu0 %2626, %v2457
    %v2628 = vpop.permute.xlu0 %2627
    %2629 = vset.pattern.permute.xlu0 0
    %2630 = vperm.xlu0 %2629, %v2459
    %v2631 = vpop.permute.xlu0 %2630
    %2632 = vset.pattern.permute.xlu0 0
    %2633 = vperm.xlu0 %2632, %v2461
    %v2634 = vpop.permute.xlu0 %2633
    %2635 = vset.pattern.permute.xlu0 0
    %2636 = vperm.xlu0 %2635, %v2463
    %v2637 = vpop.permute.xlu0 %2636
    %2638 = vset.pattern.permute.xlu0 0
    %2639 = vperm.xlu0 %2638, %v2465
    %v2640 = vpop.permute.xlu0 %2639
    %2641 = vset.pattern.permute.xlu0 0
    %2642 = vperm.xlu0 %2641, %v2467
    %v2643 = vpop.permute.xlu0 %2642
    %2644 = vset.pattern.permute.xlu0 0
    %2645 = vperm.xlu0 %2644, %v2469
    %v2646 = vpop.permute.xlu0 %2645
    %2647 = vset.pattern.permute.xlu0 0
    %2648 = vperm.xlu0 %2647, %v2471
    %v2649 = vpop.permute.xlu0 %2648
    %2650 = vset.pattern.permute.xlu0 0
    %2651 = vperm.xlu0 %2650, %v2473
    %v2652 = vpop.permute.xlu0 %2651
    %2653 = vset.pattern.permute.xlu0 0
    %2654 = vperm.xlu0 %2653, %v2475
    %v2655 = vpop.permute.xlu0 %2654
    %2656 = vset.pattern.permute.xlu0 0
    %2657 = vperm.xlu0 %2656, %v2477
    %v2658 = vpop.permute.xlu0 %2657
    %2659 = vset.pattern.permute.xlu0 0
    %2660 = vperm.xlu0 %2659, %v2479
    %v2661 = vpop.permute.xlu0 %2660
    %2662 = vset.pattern.permute.xlu0 0
    %2663 = vperm.xlu0 %2662, %v2481
    %v2664 = vpop.permute.xlu0 %2663
    %2665 = vset.pattern.permute.xlu0 0
    %2666 = vperm.xlu0 %2665, %v2483
    %v2667 = vpop.permute.xlu0 %2666
    %2668 = vset.pattern.permute.xlu0 0
    %2669 = vperm.xlu0 %2668, %v2485
    %v2670 = vpop.permute.xlu0 %2669
    %2671 = vset.pattern.permute.xlu0 0
    %2672 = vperm.xlu0 %2671, %v2487
    %v2673 = vpop.permute.xlu0 %2672
    %2674 = vset.pattern.permute.xlu0 0
    %2675 = vperm.xlu0 %2674, %v2489
    %v2676 = vpop.permute.xlu0 %2675
    %2677 = vset.pattern.permute.xlu0 0
    %2678 = vperm.xlu0 %2677, %v2491
    %v2679 = vpop.permute.xlu0 %2678
    %2680 = vset.pattern.permute.xlu0 0
    %2681 = vperm.xlu0 %2680, %v2493
    %v2682 = vpop.permute.xlu0 %2681
    %2683 = vset.pattern.permute.xlu0 0
    %2684 = vperm.xlu0 %2683, %v2495
    %v2685 = vpop.permute.xlu0 %2684
    %2686 = vset.pattern.permute.xlu0 0
    %2687 = vperm.xlu0 %2686, %v2497
    %v2688 = vpop.permute.xlu0 %2687
    %2689 = vset.pattern.permute.xlu0 0
    %2690 = vperm.xlu0 %2689, %v2499
    %v2691 = vpop.permute.xlu0 %2690
    %v2692 = vperm.slane %v2550, %v2186
    %v2693 = vperm.slane %v2553, %v2188
    %v2694 = vsel %vm2190, %v2693, %v2692
    %v2695 = vperm.slane %v2556, %v2186
    %v2696 = vperm.slane %v2559, %v2188
    %v2697 = vsel %vm2190, %v2696, %v2695
    %v2698 = vperm.slane %v2562, %v2186
    %v2699 = vperm.slane %v2565, %v2188
    %v2700 = vsel %vm2190, %v2699, %v2698
    %v2701 = vperm.slane %v2568, %v2186
    %v2702 = vperm.slane %v2571, %v2188
    %v2703 = vsel %vm2190, %v2702, %v2701
    %v2704 = vperm.slane %v2574, %v2186
    %v2705 = vperm.slane %v2577, %v2188
    %v2706 = vsel %vm2190, %v2705, %v2704
    %v2707 = vperm.slane %v2580, %v2186
    %v2708 = vperm.slane %v2583, %v2188
    %v2709 = vsel %vm2190, %v2708, %v2707
    %v2710 = vperm.slane %v2586, %v2186
    %v2711 = vperm.slane %v2589, %v2188
    %v2712 = vsel %vm2190, %v2711, %v2710
    %v2713 = vperm.slane %v2592, %v2186
    %v2714 = vperm.slane %v2595, %v2188
    %v2715 = vsel %vm2190, %v2714, %v2713
    %v2716 = vperm.slane %v2598, %v2186
    %v2717 = vperm.slane %v2601, %v2188
    %v2718 = vsel %vm2190, %v2717, %v2716
    %v2719 = vperm.slane %v2604, %v2186
    %v2720 = vperm.slane %v2607, %v2188
    %v2721 = vsel %vm2190, %v2720, %v2719
    %v2722 = vperm.slane %v2610, %v2186
    %v2723 = vperm.slane %v2613, %v2188
    %v2724 = vsel %vm2190, %v2723, %v2722
    %v2725 = vperm.slane %v2616, %v2186
    %v2726 = vperm.slane %v2619, %v2188
    %v2727 = vsel %vm2190, %v2726, %v2725
    %v2728 = vperm.slane %v2622, %v2186
    %v2729 = vperm.slane %v2625, %v2188
    %v2730 = vsel %vm2190, %v2729, %v2728
    %v2731 = vperm.slane %v2628, %v2186
    %v2732 = vperm.slane %v2631, %v2188
    %v2733 = vsel %vm2190, %v2732, %v2731
    %v2734 = vperm.slane %v2634, %v2186
    %v2735 = vperm.slane %v2637, %v2188
    %v2736 = vsel %vm2190, %v2735, %v2734
    %v2737 = vperm.slane %v2640, %v2186
    %v2738 = vperm.slane %v2643, %v2188
    %v2739 = vsel %vm2190, %v2738, %v2737
    %v2740 = vperm.slane %v2646, %v2186
    %v2741 = vperm.slane %v2649, %v2188
    %v2742 = vsel %vm2190, %v2741, %v2740
    %v2743 = vperm.slane %v2652, %v2186
    %v2744 = vperm.slane %v2655, %v2188
    %v2745 = vsel %vm2190, %v2744, %v2743
    %v2746 = vperm.slane %v2658, %v2186
    %v2747 = vperm.slane %v2661, %v2188
    %v2748 = vsel %vm2190, %v2747, %v2746
    %v2749 = vperm.slane %v2664, %v2186
    %v2750 = vperm.slane %v2667, %v2188
    %v2751 = vsel %vm2190, %v2750, %v2749
    %v2752 = vperm.slane %v2670, %v2186
    %v2753 = vperm.slane %v2673, %v2188
    %v2754 = vsel %vm2190, %v2753, %v2752
    %v2755 = vperm.slane %v2676, %v2186
    %v2756 = vperm.slane %v2679, %v2188
    %v2757 = vsel %vm2190, %v2756, %v2755
    %v2758 = vperm.slane %v2682, %v2186
    %v2759 = vperm.slane %v2685, %v2188
    %v2760 = vsel %vm2190, %v2759, %v2758
    %v2761 = vperm.slane %v2688, %v2186
    %v2762 = vperm.slane %v2691, %v2188
    %v2763 = vsel %vm2190, %v2762, %v2761
    %v2764 = vsel %vm520, %v2697, %v2694
    %v2765 = vsel %vm524, %v2700, %v2764
    %v2766 = vsel %vm528, %v2703, %v2765
    %v2767 = vsel %vm2264, %v2706, %v2766
    %v2768 = vsel %vm2266, %v2709, %v2767
    %v2769 = vsel %vm2268, %v2712, %v2768
    %v2770 = vsel %vm2270, %v2715, %v2769
    %v2771 = vsel %vm520, %v2721, %v2718
    %v2772 = vsel %vm524, %v2724, %v2771
    %v2773 = vsel %vm528, %v2727, %v2772
    %v2774 = vsel %vm2264, %v2730, %v2773
    %v2775 = vsel %vm2266, %v2733, %v2774
    %v2776 = vsel %vm2268, %v2736, %v2775
    %v2777 = vsel %vm2270, %v2739, %v2776
    %v2778 = vsel %vm520, %v2745, %v2742
    %v2779 = vsel %vm524, %v2748, %v2778
    %v2780 = vsel %vm528, %v2751, %v2779
    %v2781 = vsel %vm2264, %v2754, %v2780
    %v2782 = vsel %vm2266, %v2757, %v2781
    %v2783 = vsel %vm2268, %v2760, %v2782
    %v2784 = vsel %vm2270, %v2763, %v2783
    %v2788 = vsel %vm2289, %v2770, 0.0
    %2789 = vadd.xlane.f32.xlu0 %v2788
    %v2790 = vpop.xlane.xlu0 %2789
    %v2791 = vsel %vm2289, %v2777, 0.0
    %2792 = vadd.xlane.f32.xlu0 %v2791
    %v2793 = vpop.xlane.xlu0 %2792
    %v2794 = vsel %vm2289, %v2784, 0.0
    %2795 = vadd.xlane.f32.xlu0 %v2794
    %v2796 = vpop.xlane.xlu0 %2795
    %v2797 = vpack.c.bf16 %v2407, %v2405
    %v2798 = vpack.c.bf16 %v2411, %v2409
    %v2799 = vpack.c.bf16 %v2415, %v2413
    %v2800 = vpack.c.bf16 %v2419, %v2417
    %v2801 = vpack.c.bf16 %v2423, %v2421
    %v2802 = vpack.c.bf16 %v2427, %v2425
    %v2803 = vpack.c.bf16 %v2431, %v2429
    %v2804 = vpack.c.bf16 %v2435, %v2433
    %v2805 = vpack.c.bf16 %v2439, %v2437
    %v2806 = vpack.c.bf16 %v2443, %v2441
    %v2807 = vpack.c.bf16 %v2447, %v2445
    %v2808 = vpack.c.bf16 %v2451, %v2449
    %v2809 = vpack.c.bf16 %v2455, %v2453
    %v2810 = vpack.c.bf16 %v2459, %v2457
    %v2811 = vpack.c.bf16 %v2463, %v2461
    %v2812 = vpack.c.bf16 %v2467, %v2465
    %v2813 = vpack.c.bf16 %v2471, %v2469
    %v2814 = vpack.c.bf16 %v2475, %v2473
    %v2815 = vpack.c.bf16 %v2479, %v2477
    %v2816 = vpack.c.bf16 %v2483, %v2481
    %v2817 = vpack.c.bf16 %v2487, %v2485
    %v2818 = vpack.c.bf16 %v2491, %v2489
    %v2819 = vpack.c.bf16 %v2495, %v2493
    %v2820 = vpack.c.bf16 %v2499, %v2497
    %v2845 = vunpack.c.l.b16 %v2797
    %v2846 = vunpack.c.h.b16 %v2797
    %v2847 = vunpack.c.l.b16 %v2798
    %v2848 = vunpack.c.h.b16 %v2798
    %v2849 = vunpack.c.l.b16 %v2799
    %v2850 = vunpack.c.h.b16 %v2799
    %v2851 = vunpack.c.l.b16 %v2800
    %v2852 = vunpack.c.h.b16 %v2800
    %v2853 = vunpack.c.l.b16 %v2801
    %v2854 = vunpack.c.h.b16 %v2801
    %v2855 = vunpack.c.l.b16 %v2802
    %v2856 = vunpack.c.h.b16 %v2802
    %v2857 = vunpack.c.l.b16 %v2803
    %v2858 = vunpack.c.h.b16 %v2803
    %v2859 = vunpack.c.l.b16 %v2804
    %v2860 = vunpack.c.h.b16 %v2804
    %v2861 = vunpack.c.l.b16 %v2805
    %v2862 = vunpack.c.h.b16 %v2805
    %v2863 = vunpack.c.l.b16 %v2806
    %v2864 = vunpack.c.h.b16 %v2806
    %v2865 = vunpack.c.l.b16 %v2807
    %v2866 = vunpack.c.h.b16 %v2807
    %v2867 = vunpack.c.l.b16 %v2808
    %v2868 = vunpack.c.h.b16 %v2808
    %v2869 = vunpack.c.l.b16 %v2809
    %v2870 = vunpack.c.h.b16 %v2809
    %v2871 = vunpack.c.l.b16 %v2810
    %v2872 = vunpack.c.h.b16 %v2810
    %v2873 = vunpack.c.l.b16 %v2811
    %v2874 = vunpack.c.h.b16 %v2811
    %v2875 = vunpack.c.l.b16 %v2812
    %v2876 = vunpack.c.h.b16 %v2812
    %v2877 = vunpack.c.l.b16 %v2813
    %v2878 = vunpack.c.h.b16 %v2813
    %v2879 = vunpack.c.l.b16 %v2814
    %v2880 = vunpack.c.h.b16 %v2814
    %v2881 = vunpack.c.l.b16 %v2815
    %v2882 = vunpack.c.h.b16 %v2815
    %v2883 = vunpack.c.l.b16 %v2816
    %v2884 = vunpack.c.h.b16 %v2816
    %v2885 = vunpack.c.l.b16 %v2817
    %v2886 = vunpack.c.h.b16 %v2817
    %v2887 = vunpack.c.l.b16 %v2818
    %v2888 = vunpack.c.h.b16 %v2818
    %v2889 = vunpack.c.l.b16 %v2819
    %v2890 = vunpack.c.h.b16 %v2819
    %v2891 = vunpack.c.l.b16 %v2820
    %v2892 = vunpack.c.h.b16 %v2820
    %2893 = vset.pattern.permute.xlu0 0
    %2894 = vperm.xlu0 %2893, %v2845
    %v2895 = vpop.permute.xlu0 %2894
    %2896 = vset.pattern.permute.xlu0 0
    %2897 = vperm.xlu0 %2896, %v2846
    %v2898 = vpop.permute.xlu0 %2897
    %2899 = vset.pattern.permute.xlu0 0
    %2900 = vperm.xlu0 %2899, %v2847
    %v2901 = vpop.permute.xlu0 %2900
    %2902 = vset.pattern.permute.xlu0 0
    %2903 = vperm.xlu0 %2902, %v2848
    %v2904 = vpop.permute.xlu0 %2903
    %2905 = vset.pattern.permute.xlu0 0
    %2906 = vperm.xlu0 %2905, %v2849
    %v2907 = vpop.permute.xlu0 %2906
    %2908 = vset.pattern.permute.xlu0 0
    %2909 = vperm.xlu0 %2908, %v2850
    %v2910 = vpop.permute.xlu0 %2909
    %2911 = vset.pattern.permute.xlu0 0
    %2912 = vperm.xlu0 %2911, %v2851
    %v2913 = vpop.permute.xlu0 %2912
    %2914 = vset.pattern.permute.xlu0 0
    %2915 = vperm.xlu0 %2914, %v2852
    %v2916 = vpop.permute.xlu0 %2915
    %2917 = vset.pattern.permute.xlu0 0
    %2918 = vperm.xlu0 %2917, %v2853
    %v2919 = vpop.permute.xlu0 %2918
    %2920 = vset.pattern.permute.xlu0 0
    %2921 = vperm.xlu0 %2920, %v2854
    %v2922 = vpop.permute.xlu0 %2921
    %2923 = vset.pattern.permute.xlu0 0
    %2924 = vperm.xlu0 %2923, %v2855
    %v2925 = vpop.permute.xlu0 %2924
    %2926 = vset.pattern.permute.xlu0 0
    %2927 = vperm.xlu0 %2926, %v2856
    %v2928 = vpop.permute.xlu0 %2927
    %2929 = vset.pattern.permute.xlu0 0
    %2930 = vperm.xlu0 %2929, %v2857
    %v2931 = vpop.permute.xlu0 %2930
    %2932 = vset.pattern.permute.xlu0 0
    %2933 = vperm.xlu0 %2932, %v2858
    %v2934 = vpop.permute.xlu0 %2933
    %2935 = vset.pattern.permute.xlu0 0
    %2936 = vperm.xlu0 %2935, %v2859
    %v2937 = vpop.permute.xlu0 %2936
    %2938 = vset.pattern.permute.xlu0 0
    %2939 = vperm.xlu0 %2938, %v2860
    %v2940 = vpop.permute.xlu0 %2939
    %2941 = vset.pattern.permute.xlu0 0
    %2942 = vperm.xlu0 %2941, %v2861
    %v2943 = vpop.permute.xlu0 %2942
    %2944 = vset.pattern.permute.xlu0 0
    %2945 = vperm.xlu0 %2944, %v2862
    %v2946 = vpop.permute.xlu0 %2945
    %2947 = vset.pattern.permute.xlu0 0
    %2948 = vperm.xlu0 %2947, %v2863
    %v2949 = vpop.permute.xlu0 %2948
    %2950 = vset.pattern.permute.xlu0 0
    %2951 = vperm.xlu0 %2950, %v2864
    %v2952 = vpop.permute.xlu0 %2951
    %2953 = vset.pattern.permute.xlu0 0
    %2954 = vperm.xlu0 %2953, %v2865
    %v2955 = vpop.permute.xlu0 %2954
    %2956 = vset.pattern.permute.xlu0 0
    %2957 = vperm.xlu0 %2956, %v2866
    %v2958 = vpop.permute.xlu0 %2957
    %2959 = vset.pattern.permute.xlu0 0
    %2960 = vperm.xlu0 %2959, %v2867
    %v2961 = vpop.permute.xlu0 %2960
    %2962 = vset.pattern.permute.xlu0 0
    %2963 = vperm.xlu0 %2962, %v2868
    %v2964 = vpop.permute.xlu0 %2963
    %2965 = vset.pattern.permute.xlu0 0
    %2966 = vperm.xlu0 %2965, %v2869
    %v2967 = vpop.permute.xlu0 %2966
    %2968 = vset.pattern.permute.xlu0 0
    %2969 = vperm.xlu0 %2968, %v2870
    %v2970 = vpop.permute.xlu0 %2969
    %2971 = vset.pattern.permute.xlu0 0
    %2972 = vperm.xlu0 %2971, %v2871
    %v2973 = vpop.permute.xlu0 %2972
    %2974 = vset.pattern.permute.xlu0 0
    %2975 = vperm.xlu0 %2974, %v2872
    %v2976 = vpop.permute.xlu0 %2975
    %2977 = vset.pattern.permute.xlu0 0
    %2978 = vperm.xlu0 %2977, %v2873
    %v2979 = vpop.permute.xlu0 %2978
    %2980 = vset.pattern.permute.xlu0 0
    %2981 = vperm.xlu0 %2980, %v2874
    %v2982 = vpop.permute.xlu0 %2981
    %2983 = vset.pattern.permute.xlu0 0
    %2984 = vperm.xlu0 %2983, %v2875
    %v2985 = vpop.permute.xlu0 %2984
    %2986 = vset.pattern.permute.xlu0 0
    %2987 = vperm.xlu0 %2986, %v2876
    %v2988 = vpop.permute.xlu0 %2987
    %2989 = vset.pattern.permute.xlu0 0
    %2990 = vperm.xlu0 %2989, %v2877
    %v2991 = vpop.permute.xlu0 %2990
    %2992 = vset.pattern.permute.xlu0 0
    %2993 = vperm.xlu0 %2992, %v2878
    %v2994 = vpop.permute.xlu0 %2993
    %2995 = vset.pattern.permute.xlu0 0
    %2996 = vperm.xlu0 %2995, %v2879
    %v2997 = vpop.permute.xlu0 %2996
    %2998 = vset.pattern.permute.xlu0 0
    %2999 = vperm.xlu0 %2998, %v2880
    %v3000 = vpop.permute.xlu0 %2999
    %3001 = vset.pattern.permute.xlu0 0
    %3002 = vperm.xlu0 %3001, %v2881
    %v3003 = vpop.permute.xlu0 %3002
    %3004 = vset.pattern.permute.xlu0 0
    %3005 = vperm.xlu0 %3004, %v2882
    %v3006 = vpop.permute.xlu0 %3005
    %3007 = vset.pattern.permute.xlu0 0
    %3008 = vperm.xlu0 %3007, %v2883
    %v3009 = vpop.permute.xlu0 %3008
    %3010 = vset.pattern.permute.xlu0 0
    %3011 = vperm.xlu0 %3010, %v2884
    %v3012 = vpop.permute.xlu0 %3011
    %3013 = vset.pattern.permute.xlu0 0
    %3014 = vperm.xlu0 %3013, %v2885
    %v3015 = vpop.permute.xlu0 %3014
    %3016 = vset.pattern.permute.xlu0 0
    %3017 = vperm.xlu0 %3016, %v2886
    %v3018 = vpop.permute.xlu0 %3017
    %3019 = vset.pattern.permute.xlu0 0
    %3020 = vperm.xlu0 %3019, %v2887
    %v3021 = vpop.permute.xlu0 %3020
    %3022 = vset.pattern.permute.xlu0 0
    %3023 = vperm.xlu0 %3022, %v2888
    %v3024 = vpop.permute.xlu0 %3023
    %3025 = vset.pattern.permute.xlu0 0
    %3026 = vperm.xlu0 %3025, %v2889
    %v3027 = vpop.permute.xlu0 %3026
    %3028 = vset.pattern.permute.xlu0 0
    %3029 = vperm.xlu0 %3028, %v2890
    %v3030 = vpop.permute.xlu0 %3029
    %3031 = vset.pattern.permute.xlu0 0
    %3032 = vperm.xlu0 %3031, %v2891
    %v3033 = vpop.permute.xlu0 %3032
    %3034 = vset.pattern.permute.xlu0 0
    %3035 = vperm.xlu0 %3034, %v2892
    %v3036 = vpop.permute.xlu0 %3035
    %v3037 = vperm.slane %v2895, %v2186
    %v3038 = vperm.slane %v2898, %v2188
    %v3039 = vsel %vm2190, %v3038, %v3037
    %v3040 = vperm.slane %v2901, %v2186
    %v3041 = vperm.slane %v2904, %v2188
    %v3042 = vsel %vm2190, %v3041, %v3040
    %v3043 = vperm.slane %v2907, %v2186
    %v3044 = vperm.slane %v2910, %v2188
    %v3045 = vsel %vm2190, %v3044, %v3043
    %v3046 = vperm.slane %v2913, %v2186
    %v3047 = vperm.slane %v2916, %v2188
    %v3048 = vsel %vm2190, %v3047, %v3046
    %v3049 = vperm.slane %v2919, %v2186
    %v3050 = vperm.slane %v2922, %v2188
    %v3051 = vsel %vm2190, %v3050, %v3049
    %v3052 = vperm.slane %v2925, %v2186
    %v3053 = vperm.slane %v2928, %v2188
    %v3054 = vsel %vm2190, %v3053, %v3052
    %v3055 = vperm.slane %v2931, %v2186
    %v3056 = vperm.slane %v2934, %v2188
    %v3057 = vsel %vm2190, %v3056, %v3055
    %v3058 = vperm.slane %v2937, %v2186
    %v3059 = vperm.slane %v2940, %v2188
    %v3060 = vsel %vm2190, %v3059, %v3058
    %v3061 = vperm.slane %v2943, %v2186
    %v3062 = vperm.slane %v2946, %v2188
    %v3063 = vsel %vm2190, %v3062, %v3061
    %v3064 = vperm.slane %v2949, %v2186
    %v3065 = vperm.slane %v2952, %v2188
    %v3066 = vsel %vm2190, %v3065, %v3064
    %v3067 = vperm.slane %v2955, %v2186
    %v3068 = vperm.slane %v2958, %v2188
    %v3069 = vsel %vm2190, %v3068, %v3067
    %v3070 = vperm.slane %v2961, %v2186
    %v3071 = vperm.slane %v2964, %v2188
    %v3072 = vsel %vm2190, %v3071, %v3070
    %v3073 = vperm.slane %v2967, %v2186
    %v3074 = vperm.slane %v2970, %v2188
    %v3075 = vsel %vm2190, %v3074, %v3073
    %v3076 = vperm.slane %v2973, %v2186
    %v3077 = vperm.slane %v2976, %v2188
    %v3078 = vsel %vm2190, %v3077, %v3076
    %v3079 = vperm.slane %v2979, %v2186
    %v3080 = vperm.slane %v2982, %v2188
    %v3081 = vsel %vm2190, %v3080, %v3079
    %v3082 = vperm.slane %v2985, %v2186
    %v3083 = vperm.slane %v2988, %v2188
    %v3084 = vsel %vm2190, %v3083, %v3082
    %v3085 = vperm.slane %v2991, %v2186
    %v3086 = vperm.slane %v2994, %v2188
    %v3087 = vsel %vm2190, %v3086, %v3085
    %v3088 = vperm.slane %v2997, %v2186
    %v3089 = vperm.slane %v3000, %v2188
    %v3090 = vsel %vm2190, %v3089, %v3088
    %v3091 = vperm.slane %v3003, %v2186
    %v3092 = vperm.slane %v3006, %v2188
    %v3093 = vsel %vm2190, %v3092, %v3091
    %v3094 = vperm.slane %v3009, %v2186
    %v3095 = vperm.slane %v3012, %v2188
    %v3096 = vsel %vm2190, %v3095, %v3094
    %v3097 = vperm.slane %v3015, %v2186
    %v3098 = vperm.slane %v3018, %v2188
    %v3099 = vsel %vm2190, %v3098, %v3097
    %v3100 = vperm.slane %v3021, %v2186
    %v3101 = vperm.slane %v3024, %v2188
    %v3102 = vsel %vm2190, %v3101, %v3100
    %v3103 = vperm.slane %v3027, %v2186
    %v3104 = vperm.slane %v3030, %v2188
    %v3105 = vsel %vm2190, %v3104, %v3103
    %v3106 = vperm.slane %v3033, %v2186
    %v3107 = vperm.slane %v3036, %v2188
    %v3108 = vsel %vm2190, %v3107, %v3106
    %v3109 = vsel %vm520, %v3042, %v3039
    %v3110 = vsel %vm524, %v3045, %v3109
    %v3111 = vsel %vm528, %v3048, %v3110
    %v3112 = vsel %vm2264, %v3051, %v3111
    %v3113 = vsel %vm2266, %v3054, %v3112
    %v3114 = vsel %vm2268, %v3057, %v3113
    %v3115 = vsel %vm2270, %v3060, %v3114
    %v3116 = vsel %vm520, %v3066, %v3063
    %v3117 = vsel %vm524, %v3069, %v3116
    %v3118 = vsel %vm528, %v3072, %v3117
    %v3119 = vsel %vm2264, %v3075, %v3118
    %v3120 = vsel %vm2266, %v3078, %v3119
    %v3121 = vsel %vm2268, %v3081, %v3120
    %v3122 = vsel %vm2270, %v3084, %v3121
    %v3123 = vsel %vm520, %v3090, %v3087
    %v3124 = vsel %vm524, %v3093, %v3123
    %v3125 = vsel %vm528, %v3096, %v3124
    %v3126 = vsel %vm2264, %v3099, %v3125
    %v3127 = vsel %vm2266, %v3102, %v3126
    %v3128 = vsel %vm2268, %v3105, %v3127
    %v3129 = vsel %vm2270, %v3108, %v3128
    %v3130 = vpack.c.b16 %v3122, %v3115
    %v3131 = vpack.c.b16 %v3129, %v3129
    %v3134 = vunpack.c.l.b16 %v313
    %v3135 = vunpack.c.l.b16 %v314
    %v3136 = vpack.c.b16 %v3135, %v3134
    %v3139 = vsel %vm2289, %v3130, 0
    %v3142 = vsel %vm2289, %v3131, 0
    %3144 = vmatpush.bf16.msra.mxu0 0
    %3145 = vmatpush.bf16.msra.mxu0 0
    %3146 = vmatpush.bf16.msra.mxu0 0
    %3147 = vmatpush.bf16.msra.mxu0 0
    %3148 = vmatpush.bf16.msra.mxu0 0
    %3149 = vmatpush.bf16.msra.mxu0 0
    %3150 = vmatpush.bf16.msra.mxu0 0
    %3151 = vmatpush.bf16.msra.mxu0 %v3136
    %3152 = vmatmul.bf16.gmra.mxu0 %v3139
    %v3153 = vpop.f32.mrf.mxu0
    %v3154 = vadd.f32 0.0, %v3153
    %v3155 = vpop.f32.mrf.mxu0
    %v3156 = vadd.f32 0.0, %v3155
    %3157 = vmatmul.bf16.gmra.mxu0 %v3142
    %v3158 = vpop.f32.mrf.mxu0
    %v3159 = vadd.f32 0.0, %v3158
    %v3160 = vpop.f32.mrf.mxu0
    %3161 = vdwg.mxu0
    %vm3162 = vcmp.gt.f32.partialorder %v2790, 0.0
    %vm3163 = vcmp.gt.f32.partialorder %v2793, 0.0
    %vm3164 = vcmp.gt.f32.partialorder %v2796, 0.0
    %v3165 = vsel %vm3162, %v2790, 1.0
    %v3166 = vsel %vm3163, %v2793, 1.0
    %v3167 = vsel %vm3164, %v2796, 1.0
    %v3168 = vrcp.pop %v3165
    %v3169 = vrcp.pop %v3166
    %v3170 = vrcp.pop %v3167
    %v3171 = vmul.f32 %v3154, %v3168
    %v3172 = vmul.f32 %v3156, %v3169
    %v3173 = vmul.f32 %v3159, %v3170
    %v3174 = vperm.slane %v192, 3
    %v3175 = vadd.f32 %v3171, %v3174
    %v3176 = vadd.f32 %v3172, %v3174
    %v3177 = vadd.f32 %v3173, %v3174
    %3178 = vxpose.xlu0.b32.start [1/16] %v435, 128
    %3179 = vxpose.xlu0.b32.cont [2/16] %v437, 128
    %3180 = vxpose.xlu0.b32.cont [3/16] %v440, 128
    %3181 = vxpose.xlu0.b32.cont [4/16] 0.0, 128
    %3182 = vxpose.xlu0.b32.cont [5/16] 0.0, 128
    %3183 = vxpose.xlu0.b32.cont [6/16] 0.0, 128
    %3184 = vxpose.xlu0.b32.cont [7/16] 0.0, 128
    %3185 = vxpose.xlu0.b32.cont [8/16] 0.0, 128
    %3186 = vxpose.xlu0.b32.cont [9/16] 0.0, 128
    %3187 = vxpose.xlu0.b32.cont [10/16] 0.0, 128
    %3188 = vxpose.xlu0.b32.cont [11/16] 0.0, 128
    %3189 = vxpose.xlu0.b32.cont [12/16] 0.0, 128
    %3190 = vxpose.xlu0.b32.cont [13/16] 0.0, 128
    %3191 = vxpose.xlu0.b32.cont [14/16] 0.0, 128
    %3192 = vxpose.xlu0.b32.cont [15/16] 0.0, 128
    %3193 = vxpose.xlu0.b32.end [16/16] 0.0, 128
    %v3194 = vpop.trf.xlu0
    %v3195 = vpop.trf.xlu0
    %v3196 = vpop.trf.xlu0
    %v3197 = vpop.trf.xlu0
    %v3198 = vpop.trf.xlu0
    %v3199 = vpop.trf.xlu0
    %v3200 = vpop.trf.xlu0
    %v3201 = vpop.trf.xlu0
    %v3202 = vpop.trf.xlu0
    %v3203 = vpop.trf.xlu0
    %v3204 = vpop.trf.xlu0
    %v3205 = vpop.trf.xlu0
    %v3206 = vpop.trf.xlu0
    %v3207 = vpop.trf.xlu0
    %v3208 = vpop.trf.xlu0
    %v3209 = vpop.trf.xlu0
    %3211 = vset.pattern.permute.xlu0 1
    %3212 = vperm.xlu0 %3211, %v309
    %v3213 = vpop.permute.xlu0 %3212
    %3216 = vset.pattern.permute.xlu0 1
    %3217 = vperm.xlu0 %3216, %v311
    %v3218 = vpop.permute.xlu0 %3217
    %v3220 = vperm.slane %v3194, 0
    %v3221 = vadd.f32 %v3213, %v3220
    %v3222 = vadd.f32 %v3218, %v3220
    %vm3223 = vcmp.ge.f32.partialorder %v3221, 0.0
    %vm3224 = vcmp.ge.f32.partialorder %v3222, 0.0
    %v3225 = vmul.f32 %v3221, 0.2
    %v3226 = vmul.f32 %v3222, 0.2
    %v3227 = vsel %vm3223, %v3221, %v3225
    %v3228 = vsel %vm3224, %v3222, %v3226
    %v3229 = vadd.f32 %v3227, %v136
    %v3230 = vadd.f32 %v3228, %v137
    %vm3231 = vcmask 195584
    %v3232 = vsel %vm3231, %v3229, -inf
    %3233 = vmax.xlane.f32.xlu0 %v3232
    %v3234 = vpop.xlane.xlu0 %3233
    %v3235 = vsel %vm3231, %v3230, -inf
    %3236 = vmax.xlane.f32.xlu0 %v3235
    %v3237 = vpop.xlane.xlu0 %3236
    %vm3238 = vcmp.gt.f32.partialorder %v3234, -5e+29
    %vm3239 = vcmp.gt.f32.partialorder %v3237, -5e+29
    %v3240 = vsel %vm3238, %v3234, 0.0
    %v3241 = vsel %vm3239, %v3237, 0.0
    %v3242 = vsub.f32 %v3229, %v3240
    %v3243 = vsub.f32 %v3230, %v3241
    %v3244 = vmul.f32 %v3242, 1.442695
    %v3245 = vpow.pop %v3244
    %v3246 = vmul.f32 %v3243, 1.442695
    %v3247 = vpow.pop %v3246
    %v3248 = vsel %vm3231, %v3245, 0.0
    %3249 = vadd.xlane.f32.xlu0 %v3248
    %v3250 = vpop.xlane.xlu0 %3249
    %v3251 = vsel %vm3231, %v3247, 0.0
    %3252 = vadd.xlane.f32.xlu0 %v3251
    %v3253 = vpop.xlane.xlu0 %3252
    %v3254 = vpack.c.bf16 %v3247, %v3245
    %v3255 = vunpack.c.l.b16 %v443
    %v3256 = vunpack.c.l.b16 %v444
    %v3257 = vunpack.c.l.b16 %v445
    %v3258 = vpack.c.b16 %v3256, %v3255
    %v3259 = vpack.c.b16 %v3257, %v3257
    %v3262 = vsel %vm3231, %v3254, 0
    %vm3264 = vcmask 1043456
    %v3266 = vsel %vm3264, %v3259, 0
    %3268 = vmatpush.bf16.msra.mxu0 0
    %3269 = vmatpush.bf16.msra.mxu0 0
    %3270 = vmatpush.bf16.msra.mxu0 0
    %3271 = vmatpush.bf16.msra.mxu0 0
    %3272 = vmatpush.bf16.msra.mxu0 0
    %3273 = vmatpush.bf16.msra.mxu0 0
    %3274 = vmatpush.bf16.msra.mxu0 %v3266
    %3275 = vmatpush.bf16.msra.mxu0 %v3258
    %3276 = vmatmul.bf16.gmra.mxu0 %v3262
    %v3277 = vpop.f32.mrf.mxu0
    %v3278 = vadd.f32 0.0, %v3277
    %v3279 = vpop.f32.mrf.mxu0
    %v3280 = vadd.f32 0.0, %v3279
    %3281 = vdwg.mxu0
    %vm3282 = vcmp.gt.f32.partialorder %v3250, 0.0
    %vm3283 = vcmp.gt.f32.partialorder %v3253, 0.0
    %v3284 = vsel %vm3282, %v3250, 1.0
    %v3285 = vsel %vm3283, %v3253, 1.0
    %v3286 = vrcp.pop %v3284
    %v3287 = vrcp.pop %v3285
    %v3288 = vmul.f32 %v3278, %v3286
    %v3289 = vmul.f32 %v3280, %v3287
    %v3290 = vperm.slane %v192, 4
    %v3291 = vadd.f32 %v3288, %v3290
    %v3292 = vadd.f32 %v3289, %v3290
    %3293 = vxpose.xlu0.b32.start [1/16] %v309, 128
    %3294 = vxpose.xlu0.b32.cont [2/16] %v311, 128
    %3295 = vxpose.xlu0.b32.cont [3/16] 0.0, 128
    %3296 = vxpose.xlu0.b32.cont [4/16] 0.0, 128
    %3297 = vxpose.xlu0.b32.cont [5/16] 0.0, 128
    %3298 = vxpose.xlu0.b32.cont [6/16] 0.0, 128
    %3299 = vxpose.xlu0.b32.cont [7/16] 0.0, 128
    %3300 = vxpose.xlu0.b32.cont [8/16] 0.0, 128
    %3301 = vxpose.xlu0.b32.cont [9/16] 0.0, 128
    %3302 = vxpose.xlu0.b32.cont [10/16] 0.0, 128
    %3303 = vxpose.xlu0.b32.cont [11/16] 0.0, 128
    %3304 = vxpose.xlu0.b32.cont [12/16] 0.0, 128
    %3305 = vxpose.xlu0.b32.cont [13/16] 0.0, 128
    %3306 = vxpose.xlu0.b32.cont [14/16] 0.0, 128
    %3307 = vxpose.xlu0.b32.cont [15/16] 0.0, 128
    %3308 = vxpose.xlu0.b32.end [16/16] 0.0, 128
    %v3309 = vpop.trf.xlu0
    %v3310 = vpop.trf.xlu0
    %v3311 = vpop.trf.xlu0
    %v3312 = vpop.trf.xlu0
    %v3313 = vpop.trf.xlu0
    %v3314 = vpop.trf.xlu0
    %v3315 = vpop.trf.xlu0
    %v3316 = vpop.trf.xlu0
    %v3317 = vpop.trf.xlu0
    %v3318 = vpop.trf.xlu0
    %v3319 = vpop.trf.xlu0
    %v3320 = vpop.trf.xlu0
    %v3321 = vpop.trf.xlu0
    %v3322 = vpop.trf.xlu0
    %v3323 = vpop.trf.xlu0
    %v3324 = vpop.trf.xlu0
    %3326 = vset.pattern.permute.xlu0 65
    %3327 = vperm.xlu0 %3326, %v505
    %v3328 = vpop.permute.xlu0 %3327
    %v3330 = vperm.slane %v3309, 0
    %v3331 = vadd.f32 %v3328, %v3330
    %vm3332 = vcmp.ge.f32.partialorder %v3331, 0.0
    %v3333 = vmul.f32 %v3331, 0.2
    %v3334 = vsel %vm3332, %v3331, %v3333
    %v3335 = vadd.f32 %v3334, %v138
    %v3336 = vsel %vm2289, %v3335, -inf
    %3337 = vmax.xlane.f32.xlu0 %v3336
    %v3338 = vpop.xlane.xlu0 %3337
    %vm3339 = vcmp.gt.f32.partialorder %v3338, -5e+29
    %v3340 = vsel %vm3339, %v3338, 0.0
    %v3341 = vsub.f32 %v3335, %v3340
    %v3342 = vmul.f32 %v3341, 1.442695
    %v3343 = vpow.pop %v3342
    %v3344 = vsel %vm2289, %v3343, 0.0
    %3345 = vadd.xlane.f32.xlu0 %v3344
    %v3346 = vpop.xlane.xlu0 %3345
    %v3347 = vpack.c.bf16 %v3343, %v3343
    %3348 = vrot.lane.b32.xlu0 %v3136, 96
    %v3349 = vpop.permute.xlu0 %3348
    %v3352 = vsel %vm2289, %v3347, 0
    %3354 = vmatpush.bf16.msra.mxu0 0
    %3355 = vmatpush.bf16.msra.mxu0 0
    %3356 = vmatpush.bf16.msra.mxu0 0
    %3357 = vmatpush.bf16.msra.mxu0 0
    %3358 = vmatpush.bf16.msra.mxu0 0
    %3359 = vmatpush.bf16.msra.mxu0 0
    %3360 = vmatpush.bf16.msra.mxu0 0
    %3361 = vmatpush.bf16.msra.mxu0 %v3349
    %3362 = vmatmul.bf16.gmra.mxu0 %v3352
    %v3363 = vpop.f32.mrf.mxu0
    %v3364 = vadd.f32 0.0, %v3363
    %v3365 = vpop.f32.mrf.mxu0
    %3366 = vdwg.mxu0
    %vm3367 = vcmp.gt.f32.partialorder %v3346, 0.0
    %v3368 = vsel %vm3367, %v3346, 1.0
    %v3369 = vrcp.pop %v3368
    %v3370 = vmul.f32 %v3364, %v3369
    %v3371 = vperm.slane %v192, 5
    %v3372 = vadd.f32 %v3370, %v3371
    %3373 = vrot.lane.b32.xlu0 %v505, 64
    %v3374 = vpop.permute.xlu0 %3373
    %3376 = vxpose.xlu0.b32.start [1/16] %v3374, 128
    %3377 = vxpose.xlu0.b32.cont [2/16] 0.0, 128
    %3378 = vxpose.xlu0.b32.cont [3/16] 0.0, 128
    %3379 = vxpose.xlu0.b32.cont [4/16] 0.0, 128
    %3380 = vxpose.xlu0.b32.cont [5/16] 0.0, 128
    %3381 = vxpose.xlu0.b32.cont [6/16] 0.0, 128
    %3382 = vxpose.xlu0.b32.cont [7/16] 0.0, 128
    %3383 = vxpose.xlu0.b32.cont [8/16] 0.0, 128
    %3384 = vxpose.xlu0.b32.cont [9/16] 0.0, 128
    %3385 = vxpose.xlu0.b32.cont [10/16] 0.0, 128
    %3386 = vxpose.xlu0.b32.cont [11/16] 0.0, 128
    %3387 = vxpose.xlu0.b32.cont [12/16] 0.0, 128
    %3388 = vxpose.xlu0.b32.cont [13/16] 0.0, 128
    %3389 = vxpose.xlu0.b32.cont [14/16] 0.0, 128
    %3390 = vxpose.xlu0.b32.cont [15/16] 0.0, 128
    %3391 = vxpose.xlu0.b32.end [16/16] 0.0, 128
    %v3392 = vpop.trf.xlu0
    %v3393 = vpop.trf.xlu0
    %v3394 = vpop.trf.xlu0
    %v3395 = vpop.trf.xlu0
    %v3396 = vpop.trf.xlu0
    %v3397 = vpop.trf.xlu0
    %v3398 = vpop.trf.xlu0
    %v3399 = vpop.trf.xlu0
    %v3400 = vpop.trf.xlu0
    %v3401 = vpop.trf.xlu0
    %v3402 = vpop.trf.xlu0
    %v3403 = vpop.trf.xlu0
    %v3404 = vpop.trf.xlu0
    %v3405 = vpop.trf.xlu0
    %v3406 = vpop.trf.xlu0
    %v3407 = vpop.trf.xlu0
    %3408 = vset.pattern.permute.xlu0 2
    %3409 = vperm.xlu0 %3408, %v309
    %v3410 = vpop.permute.xlu0 %3409
    %3412 = vset.pattern.permute.xlu0 2
    %3413 = vperm.xlu0 %3412, %v311
    %v3414 = vpop.permute.xlu0 %3413
    %v3416 = vperm.slane %v3392, 0
    %v3417 = vadd.f32 %v3410, %v3416
    %v3418 = vadd.f32 %v3414, %v3416
    %vm3419 = vcmp.ge.f32.partialorder %v3417, 0.0
    %vm3420 = vcmp.ge.f32.partialorder %v3418, 0.0
    %v3421 = vmul.f32 %v3417, 0.2
    %v3422 = vmul.f32 %v3418, 0.2
    %v3423 = vsel %vm3419, %v3417, %v3421
    %v3424 = vsel %vm3420, %v3418, %v3422
    %v3425 = vadd.f32 %v3423, %v139
    %v3426 = vadd.f32 %v3424, %v140
    %vm3427 = vcmask 64512
    %v3428 = vsel %vm3427, %v3425, -inf
    %3429 = vmax.xlane.f32.xlu0 %v3428
    %v3430 = vpop.xlane.xlu0 %3429
    %v3431 = vsel %vm3427, %v3426, -inf
    %3432 = vmax.xlane.f32.xlu0 %v3431
    %v3433 = vpop.xlane.xlu0 %3432
    %vm3434 = vcmp.gt.f32.partialorder %v3430, -5e+29
    %vm3435 = vcmp.gt.f32.partialorder %v3433, -5e+29
    %v3436 = vsel %vm3434, %v3430, 0.0
    %v3437 = vsel %vm3435, %v3433, 0.0
    %v3438 = vsub.f32 %v3425, %v3436
    %v3439 = vsub.f32 %v3426, %v3437
    %v3440 = vmul.f32 %v3438, 1.442695
    %v3441 = vpow.pop %v3440
    %v3442 = vmul.f32 %v3439, 1.442695
    %v3443 = vpow.pop %v3442
    %v3444 = vsel %vm3427, %v3441, 0.0
    %3445 = vadd.xlane.f32.xlu0 %v3444
    %v3446 = vpop.xlane.xlu0 %3445
    %v3447 = vsel %vm3427, %v3443, 0.0
    %3448 = vadd.xlane.f32.xlu0 %v3447
    %v3449 = vpop.xlane.xlu0 %3448
    %v3450 = vpack.c.bf16 %v3443, %v3441
    %v3452 = vsel %vm3427, %v3450, 0
    %v3455 = vsel %vm3264, %v508, 0
    %3457 = vmatpush.bf16.msra.mxu0 0
    %3458 = vmatpush.bf16.msra.mxu0 0
    %3459 = vmatpush.bf16.msra.mxu0 0
    %3460 = vmatpush.bf16.msra.mxu0 0
    %3461 = vmatpush.bf16.msra.mxu0 0
    %3462 = vmatpush.bf16.msra.mxu0 0
    %3463 = vmatpush.bf16.msra.mxu0 0
    %3464 = vmatpush.bf16.msra.mxu0 %v3455
    %3465 = vmatmul.bf16.gmra.mxu0 %v3452
    %v3466 = vpop.f32.mrf.mxu0
    %v3467 = vadd.f32 0.0, %v3466
    %v3468 = vpop.f32.mrf.mxu0
    %v3469 = vadd.f32 0.0, %v3468
    %3470 = vdwg.mxu0
    %vm3471 = vcmp.gt.f32.partialorder %v3446, 0.0
    %vm3472 = vcmp.gt.f32.partialorder %v3449, 0.0
    %v3473 = vsel %vm3471, %v3446, 1.0
    %v3474 = vsel %vm3472, %v3449, 1.0
    %v3475 = vrcp.pop %v3473
    %v3476 = vrcp.pop %v3474
    %v3477 = vmul.f32 %v3467, %v3475
    %v3478 = vmul.f32 %v3469, %v3476
    %v3479 = vperm.slane %v192, 6
    %v3480 = vadd.f32 %v3477, %v3479
    %v3481 = vadd.f32 %v3478, %v3479
    %v3482 = vadd.f32 %v3291, %v3480
    %v3483 = vadd.f32 %v3292, %v3481
    %v3484 = vunpack.c.l.bf16 %v443
    %v3485 = vunpack.c.l.bf16 %v444
    %v3486 = vunpack.c.l.bf16 %v445
    %3490 = vrot.lane.b32.xlu0 %v3484, 64
    %v3491 = vpop.permute.xlu0 %3490
    %3492 = vrot.lane.b32.xlu0 %v3485, 64
    %v3493 = vpop.permute.xlu0 %3492
    %3494 = vrot.lane.b32.xlu0 %v3486, 64
    %v3495 = vpop.permute.xlu0 %3494
    %v3499 = vadd.f32 %v726, %v3491
    %v3500 = vadd.f32 %v726, %v3493
    %v3501 = vadd.f32 %v726, %v3495
    %v3502 = vadd.f32 %v727, %v3491
    %v3503 = vadd.f32 %v727, %v3493
    %v3504 = vadd.f32 %v727, %v3495
    %v3505 = vadd.f32 %v728, %v3491
    %v3506 = vadd.f32 %v728, %v3493
    %v3507 = vadd.f32 %v728, %v3495
    %v3508 = vadd.f32 %v729, %v3491
    %v3509 = vadd.f32 %v729, %v3493
    %v3510 = vadd.f32 %v729, %v3495
    %v3511 = vadd.f32 %v730, %v3491
    %v3512 = vadd.f32 %v730, %v3493
    %v3513 = vadd.f32 %v730, %v3495
    %v3514 = vadd.f32 %v731, %v3491
    %v3515 = vadd.f32 %v731, %v3493
    %v3516 = vadd.f32 %v731, %v3495
    %v3517 = vadd.f32 %v732, %v3491
    %v3518 = vadd.f32 %v732, %v3493
    %v3519 = vadd.f32 %v732, %v3495
    %v3520 = vadd.f32 %v733, %v3491
    %v3521 = vadd.f32 %v733, %v3493
    %v3522 = vadd.f32 %v733, %v3495
    %v3523 = vadd.f32 %v734, %v3491
    %v3524 = vadd.f32 %v734, %v3493
    %v3525 = vadd.f32 %v734, %v3495
    %v3526 = vadd.f32 %v735, %v3491
    %v3527 = vadd.f32 %v735, %v3493
    %v3528 = vadd.f32 %v735, %v3495
    %v3529 = vadd.f32 %v736, %v3491
    %v3530 = vadd.f32 %v736, %v3493
    %v3531 = vadd.f32 %v736, %v3495
    %v3532 = vadd.f32 %v737, %v3491
    %v3533 = vadd.f32 %v737, %v3493
    %v3534 = vadd.f32 %v737, %v3495
    %v3535 = vadd.f32 %v738, %v3491
    %v3536 = vadd.f32 %v738, %v3493
    %v3537 = vadd.f32 %v738, %v3495
    %v3538 = vadd.f32 %v739, %v3491
    %v3539 = vadd.f32 %v739, %v3493
    %v3540 = vadd.f32 %v739, %v3495
    %v3541 = vadd.f32 %v740, %v3491
    %v3542 = vadd.f32 %v740, %v3493
    %v3543 = vadd.f32 %v740, %v3495
    %v3544 = vadd.f32 %v741, %v3491
    %v3545 = vadd.f32 %v741, %v3493
    %v3546 = vadd.f32 %v741, %v3495
    %v3547 = vadd.f32 %v742, %v3491
    %v3548 = vadd.f32 %v742, %v3493
    %v3549 = vadd.f32 %v742, %v3495
    %v3550 = vadd.f32 %v743, %v3491
    %v3551 = vadd.f32 %v743, %v3493
    %v3552 = vadd.f32 %v743, %v3495
    %v3553 = vadd.f32 %v744, %v3491
    %v3554 = vadd.f32 %v744, %v3493
    %v3555 = vadd.f32 %v744, %v3495
    %v3556 = vadd.f32 %v745, %v3491
    %v3557 = vadd.f32 %v745, %v3493
    %v3558 = vadd.f32 %v745, %v3495
    %v3559 = vadd.f32 %v746, %v3491
    %v3560 = vadd.f32 %v746, %v3493
    %v3561 = vadd.f32 %v746, %v3495
    %v3562 = vadd.f32 %v747, %v3491
    %v3563 = vadd.f32 %v747, %v3493
    %v3564 = vadd.f32 %v747, %v3495
    %v3565 = vadd.f32 %v748, %v3491
    %v3566 = vadd.f32 %v748, %v3493
    %v3567 = vadd.f32 %v748, %v3495
    %v3568 = vadd.f32 %v749, %v3491
    %v3569 = vadd.f32 %v749, %v3493
    %v3570 = vadd.f32 %v749, %v3495
    %v3571 = vpack.c.bf16 %v3499, %v3499
    %v3572 = vpack.c.bf16 %v3500, %v3500
    %v3573 = vpack.c.bf16 %v3501, %v3501
    %v3574 = vpack.c.bf16 %v3502, %v3502
    %v3575 = vpack.c.bf16 %v3503, %v3503
    %v3576 = vpack.c.bf16 %v3504, %v3504
    %v3577 = vpack.c.bf16 %v3505, %v3505
    %v3578 = vpack.c.bf16 %v3506, %v3506
    %v3579 = vpack.c.bf16 %v3507, %v3507
    %v3580 = vpack.c.bf16 %v3508, %v3508
    %v3581 = vpack.c.bf16 %v3509, %v3509
    %v3582 = vpack.c.bf16 %v3510, %v3510
    %v3583 = vpack.c.bf16 %v3511, %v3511
    %v3584 = vpack.c.bf16 %v3512, %v3512
    %v3585 = vpack.c.bf16 %v3513, %v3513
    %v3586 = vpack.c.bf16 %v3514, %v3514
    %v3587 = vpack.c.bf16 %v3515, %v3515
    %v3588 = vpack.c.bf16 %v3516, %v3516
    %v3589 = vpack.c.bf16 %v3517, %v3517
    %v3590 = vpack.c.bf16 %v3518, %v3518
    %v3591 = vpack.c.bf16 %v3519, %v3519
    %v3592 = vpack.c.bf16 %v3520, %v3520
    %v3593 = vpack.c.bf16 %v3521, %v3521
    %v3594 = vpack.c.bf16 %v3522, %v3522
    %v3595 = vpack.c.bf16 %v3523, %v3523
    %v3596 = vpack.c.bf16 %v3524, %v3524
    %v3597 = vpack.c.bf16 %v3525, %v3525
    %v3598 = vpack.c.bf16 %v3526, %v3526
    %v3599 = vpack.c.bf16 %v3527, %v3527
    %v3600 = vpack.c.bf16 %v3528, %v3528
    %v3601 = vpack.c.bf16 %v3529, %v3529
    %v3602 = vpack.c.bf16 %v3530, %v3530
    %v3603 = vpack.c.bf16 %v3531, %v3531
    %v3604 = vpack.c.bf16 %v3532, %v3532
    %v3605 = vpack.c.bf16 %v3533, %v3533
    %v3606 = vpack.c.bf16 %v3534, %v3534
    %v3607 = vpack.c.bf16 %v3535, %v3535
    %v3608 = vpack.c.bf16 %v3536, %v3536
    %v3609 = vpack.c.bf16 %v3537, %v3537
    %v3610 = vpack.c.bf16 %v3538, %v3538
    %v3611 = vpack.c.bf16 %v3539, %v3539
    %v3612 = vpack.c.bf16 %v3540, %v3540
    %v3613 = vpack.c.bf16 %v3541, %v3541
    %v3614 = vpack.c.bf16 %v3542, %v3542
    %v3615 = vpack.c.bf16 %v3543, %v3543
    %v3616 = vpack.c.bf16 %v3544, %v3544
    %v3617 = vpack.c.bf16 %v3545, %v3545
    %v3618 = vpack.c.bf16 %v3546, %v3546
    %v3619 = vpack.c.bf16 %v3547, %v3547
    %v3620 = vpack.c.bf16 %v3548, %v3548
    %v3621 = vpack.c.bf16 %v3549, %v3549
    %v3622 = vpack.c.bf16 %v3550, %v3550
    %v3623 = vpack.c.bf16 %v3551, %v3551
    %v3624 = vpack.c.bf16 %v3552, %v3552
    %v3625 = vpack.c.bf16 %v3553, %v3553
    %v3626 = vpack.c.bf16 %v3554, %v3554
    %v3627 = vpack.c.bf16 %v3555, %v3555
    %v3628 = vpack.c.bf16 %v3556, %v3556
    %v3629 = vpack.c.bf16 %v3557, %v3557
    %v3630 = vpack.c.bf16 %v3558, %v3558
    %v3631 = vpack.c.bf16 %v3559, %v3559
    %v3632 = vpack.c.bf16 %v3560, %v3560
    %v3633 = vpack.c.bf16 %v3561, %v3561
    %v3634 = vpack.c.bf16 %v3562, %v3562
    %v3635 = vpack.c.bf16 %v3563, %v3563
    %v3636 = vpack.c.bf16 %v3564, %v3564
    %v3637 = vpack.c.bf16 %v3565, %v3565
    %v3638 = vpack.c.bf16 %v3566, %v3566
    %v3639 = vpack.c.bf16 %v3567, %v3567
    %v3640 = vpack.c.bf16 %v3568, %v3568
    %v3641 = vpack.c.bf16 %v3569, %v3569
    %v3642 = vpack.c.bf16 %v3570, %v3570
    %v3643 = vunpack.c.l.bf16 %v3571
    %v3644 = vunpack.c.l.bf16 %v3572
    %v3645 = vunpack.c.l.bf16 %v3573
    %v3646 = vunpack.c.l.bf16 %v3574
    %v3647 = vunpack.c.l.bf16 %v3575
    %v3648 = vunpack.c.l.bf16 %v3576
    %v3649 = vunpack.c.l.bf16 %v3577
    %v3650 = vunpack.c.l.bf16 %v3578
    %v3651 = vunpack.c.l.bf16 %v3579
    %v3652 = vunpack.c.l.bf16 %v3580
    %v3653 = vunpack.c.l.bf16 %v3581
    %v3654 = vunpack.c.l.bf16 %v3582
    %v3655 = vunpack.c.l.bf16 %v3583
    %v3656 = vunpack.c.l.bf16 %v3584
    %v3657 = vunpack.c.l.bf16 %v3585
    %v3658 = vunpack.c.l.bf16 %v3586
    %v3659 = vunpack.c.l.bf16 %v3587
    %v3660 = vunpack.c.l.bf16 %v3588
    %v3661 = vunpack.c.l.bf16 %v3589
    %v3662 = vunpack.c.l.bf16 %v3590
    %v3663 = vunpack.c.l.bf16 %v3591
    %v3664 = vunpack.c.l.bf16 %v3592
    %v3665 = vunpack.c.l.bf16 %v3593
    %v3666 = vunpack.c.l.bf16 %v3594
    %v3667 = vunpack.c.l.bf16 %v3595
    %v3668 = vunpack.c.l.bf16 %v3596
    %v3669 = vunpack.c.l.bf16 %v3597
    %v3670 = vunpack.c.l.bf16 %v3598
    %v3671 = vunpack.c.l.bf16 %v3599
    %v3672 = vunpack.c.l.bf16 %v3600
    %v3673 = vunpack.c.l.bf16 %v3601
    %v3674 = vunpack.c.l.bf16 %v3602
    %v3675 = vunpack.c.l.bf16 %v3603
    %v3676 = vunpack.c.l.bf16 %v3604
    %v3677 = vunpack.c.l.bf16 %v3605
    %v3678 = vunpack.c.l.bf16 %v3606
    %v3679 = vunpack.c.l.bf16 %v3607
    %v3680 = vunpack.c.l.bf16 %v3608
    %v3681 = vunpack.c.l.bf16 %v3609
    %v3682 = vunpack.c.l.bf16 %v3610
    %v3683 = vunpack.c.l.bf16 %v3611
    %v3684 = vunpack.c.l.bf16 %v3612
    %v3685 = vunpack.c.l.bf16 %v3613
    %v3686 = vunpack.c.l.bf16 %v3614
    %v3687 = vunpack.c.l.bf16 %v3615
    %v3688 = vunpack.c.l.bf16 %v3616
    %v3689 = vunpack.c.l.bf16 %v3617
    %v3690 = vunpack.c.l.bf16 %v3618
    %v3691 = vunpack.c.l.bf16 %v3619
    %v3692 = vunpack.c.l.bf16 %v3620
    %v3693 = vunpack.c.l.bf16 %v3621
    %v3694 = vunpack.c.l.bf16 %v3622
    %v3695 = vunpack.c.l.bf16 %v3623
    %v3696 = vunpack.c.l.bf16 %v3624
    %v3697 = vunpack.c.l.bf16 %v3625
    %v3698 = vunpack.c.l.bf16 %v3626
    %v3699 = vunpack.c.l.bf16 %v3627
    %v3700 = vunpack.c.l.bf16 %v3628
    %v3701 = vunpack.c.l.bf16 %v3629
    %v3702 = vunpack.c.l.bf16 %v3630
    %v3703 = vunpack.c.l.bf16 %v3631
    %v3704 = vunpack.c.l.bf16 %v3632
    %v3705 = vunpack.c.l.bf16 %v3633
    %v3706 = vunpack.c.l.bf16 %v3634
    %v3707 = vunpack.c.l.bf16 %v3635
    %v3708 = vunpack.c.l.bf16 %v3636
    %v3709 = vunpack.c.l.bf16 %v3637
    %v3710 = vunpack.c.l.bf16 %v3638
    %v3711 = vunpack.c.l.bf16 %v3639
    %v3712 = vunpack.c.l.bf16 %v3640
    %v3713 = vunpack.c.l.bf16 %v3641
    %v3714 = vunpack.c.l.bf16 %v3642
    %vm3715 = vcmp.ge.f32.partialorder %v3643, 0.0
    %vm3716 = vcmp.ge.f32.partialorder %v3644, 0.0
    %vm3717 = vcmp.ge.f32.partialorder %v3645, 0.0
    %vm3718 = vcmp.ge.f32.partialorder %v3646, 0.0
    %vm3719 = vcmp.ge.f32.partialorder %v3647, 0.0
    %vm3720 = vcmp.ge.f32.partialorder %v3648, 0.0
    %vm3721 = vcmp.ge.f32.partialorder %v3649, 0.0
    %vm3722 = vcmp.ge.f32.partialorder %v3650, 0.0
    %vm3723 = vcmp.ge.f32.partialorder %v3651, 0.0
    %vm3724 = vcmp.ge.f32.partialorder %v3652, 0.0
    %vm3725 = vcmp.ge.f32.partialorder %v3653, 0.0
    %vm3726 = vcmp.ge.f32.partialorder %v3654, 0.0
    %vm3727 = vcmp.ge.f32.partialorder %v3655, 0.0
    %vm3728 = vcmp.ge.f32.partialorder %v3656, 0.0
    %vm3729 = vcmp.ge.f32.partialorder %v3657, 0.0
    %vm3730 = vcmp.ge.f32.partialorder %v3658, 0.0
    %vm3731 = vcmp.ge.f32.partialorder %v3659, 0.0
    %vm3732 = vcmp.ge.f32.partialorder %v3660, 0.0
    %vm3733 = vcmp.ge.f32.partialorder %v3661, 0.0
    %vm3734 = vcmp.ge.f32.partialorder %v3662, 0.0
    %vm3735 = vcmp.ge.f32.partialorder %v3663, 0.0
    %vm3736 = vcmp.ge.f32.partialorder %v3664, 0.0
    %vm3737 = vcmp.ge.f32.partialorder %v3665, 0.0
    %vm3738 = vcmp.ge.f32.partialorder %v3666, 0.0
    %vm3739 = vcmp.ge.f32.partialorder %v3667, 0.0
    %vm3740 = vcmp.ge.f32.partialorder %v3668, 0.0
    %vm3741 = vcmp.ge.f32.partialorder %v3669, 0.0
    %vm3742 = vcmp.ge.f32.partialorder %v3670, 0.0
    %vm3743 = vcmp.ge.f32.partialorder %v3671, 0.0
    %vm3744 = vcmp.ge.f32.partialorder %v3672, 0.0
    %vm3745 = vcmp.ge.f32.partialorder %v3673, 0.0
    %vm3746 = vcmp.ge.f32.partialorder %v3674, 0.0
    %vm3747 = vcmp.ge.f32.partialorder %v3675, 0.0
    %vm3748 = vcmp.ge.f32.partialorder %v3676, 0.0
    %vm3749 = vcmp.ge.f32.partialorder %v3677, 0.0
    %vm3750 = vcmp.ge.f32.partialorder %v3678, 0.0
    %vm3751 = vcmp.ge.f32.partialorder %v3679, 0.0
    %vm3752 = vcmp.ge.f32.partialorder %v3680, 0.0
    %vm3753 = vcmp.ge.f32.partialorder %v3681, 0.0
    %vm3754 = vcmp.ge.f32.partialorder %v3682, 0.0
    %vm3755 = vcmp.ge.f32.partialorder %v3683, 0.0
    %vm3756 = vcmp.ge.f32.partialorder %v3684, 0.0
    %vm3757 = vcmp.ge.f32.partialorder %v3685, 0.0
    %vm3758 = vcmp.ge.f32.partialorder %v3686, 0.0
    %vm3759 = vcmp.ge.f32.partialorder %v3687, 0.0
    %vm3760 = vcmp.ge.f32.partialorder %v3688, 0.0
    %vm3761 = vcmp.ge.f32.partialorder %v3689, 0.0
    %vm3762 = vcmp.ge.f32.partialorder %v3690, 0.0
    %vm3763 = vcmp.ge.f32.partialorder %v3691, 0.0
    %vm3764 = vcmp.ge.f32.partialorder %v3692, 0.0
    %vm3765 = vcmp.ge.f32.partialorder %v3693, 0.0
    %vm3766 = vcmp.ge.f32.partialorder %v3694, 0.0
    %vm3767 = vcmp.ge.f32.partialorder %v3695, 0.0
    %vm3768 = vcmp.ge.f32.partialorder %v3696, 0.0
    %vm3769 = vcmp.ge.f32.partialorder %v3697, 0.0
    %vm3770 = vcmp.ge.f32.partialorder %v3698, 0.0
    %vm3771 = vcmp.ge.f32.partialorder %v3699, 0.0
    %vm3772 = vcmp.ge.f32.partialorder %v3700, 0.0
    %vm3773 = vcmp.ge.f32.partialorder %v3701, 0.0
    %vm3774 = vcmp.ge.f32.partialorder %v3702, 0.0
    %vm3775 = vcmp.ge.f32.partialorder %v3703, 0.0
    %vm3776 = vcmp.ge.f32.partialorder %v3704, 0.0
    %vm3777 = vcmp.ge.f32.partialorder %v3705, 0.0
    %vm3778 = vcmp.ge.f32.partialorder %v3706, 0.0
    %vm3779 = vcmp.ge.f32.partialorder %v3707, 0.0
    %vm3780 = vcmp.ge.f32.partialorder %v3708, 0.0
    %vm3781 = vcmp.ge.f32.partialorder %v3709, 0.0
    %vm3782 = vcmp.ge.f32.partialorder %v3710, 0.0
    %vm3783 = vcmp.ge.f32.partialorder %v3711, 0.0
    %vm3784 = vcmp.ge.f32.partialorder %v3712, 0.0
    %vm3785 = vcmp.ge.f32.partialorder %v3713, 0.0
    %vm3786 = vcmp.ge.f32.partialorder %v3714, 0.0
    %v3787 = vmul.f32 %v3643, 0.20019531
    %v3788 = vmul.f32 %v3644, 0.20019531
    %v3789 = vmul.f32 %v3645, 0.20019531
    %v3790 = vmul.f32 %v3646, 0.20019531
    %v3791 = vmul.f32 %v3647, 0.20019531
    %v3792 = vmul.f32 %v3648, 0.20019531
    %v3793 = vmul.f32 %v3649, 0.20019531
    %v3794 = vmul.f32 %v3650, 0.20019531
    %v3795 = vmul.f32 %v3651, 0.20019531
    %v3796 = vmul.f32 %v3652, 0.20019531
    %v3797 = vmul.f32 %v3653, 0.20019531
    %v3798 = vmul.f32 %v3654, 0.20019531
    %v3799 = vmul.f32 %v3655, 0.20019531
    %v3800 = vmul.f32 %v3656, 0.20019531
    %v3801 = vmul.f32 %v3657, 0.20019531
    %v3802 = vmul.f32 %v3658, 0.20019531
    %v3803 = vmul.f32 %v3659, 0.20019531
    %v3804 = vmul.f32 %v3660, 0.20019531
    %v3805 = vmul.f32 %v3661, 0.20019531
    %v3806 = vmul.f32 %v3662, 0.20019531
    %v3807 = vmul.f32 %v3663, 0.20019531
    %v3808 = vmul.f32 %v3664, 0.20019531
    %v3809 = vmul.f32 %v3665, 0.20019531
    %v3810 = vmul.f32 %v3666, 0.20019531
    %v3811 = vmul.f32 %v3667, 0.20019531
    %v3812 = vmul.f32 %v3668, 0.20019531
    %v3813 = vmul.f32 %v3669, 0.20019531
    %v3814 = vmul.f32 %v3670, 0.20019531
    %v3815 = vmul.f32 %v3671, 0.20019531
    %v3816 = vmul.f32 %v3672, 0.20019531
    %v3817 = vmul.f32 %v3673, 0.20019531
    %v3818 = vmul.f32 %v3674, 0.20019531
    %v3819 = vmul.f32 %v3675, 0.20019531
    %v3820 = vmul.f32 %v3676, 0.20019531
    %v3821 = vmul.f32 %v3677, 0.20019531
    %v3822 = vmul.f32 %v3678, 0.20019531
    %v3823 = vmul.f32 %v3679, 0.20019531
    %v3824 = vmul.f32 %v3680, 0.20019531
    %v3825 = vmul.f32 %v3681, 0.20019531
    %v3826 = vmul.f32 %v3682, 0.20019531
    %v3827 = vmul.f32 %v3683, 0.20019531
    %v3828 = vmul.f32 %v3684, 0.20019531
    %v3829 = vmul.f32 %v3685, 0.20019531
    %v3830 = vmul.f32 %v3686, 0.20019531
    %v3831 = vmul.f32 %v3687, 0.20019531
    %v3832 = vmul.f32 %v3688, 0.20019531
    %v3833 = vmul.f32 %v3689, 0.20019531
    %v3834 = vmul.f32 %v3690, 0.20019531
    %v3835 = vmul.f32 %v3691, 0.20019531
    %v3836 = vmul.f32 %v3692, 0.20019531
    %v3837 = vmul.f32 %v3693, 0.20019531
    %v3838 = vmul.f32 %v3694, 0.20019531
    %v3839 = vmul.f32 %v3695, 0.20019531
    %v3840 = vmul.f32 %v3696, 0.20019531
    %v3841 = vmul.f32 %v3697, 0.20019531
    %v3842 = vmul.f32 %v3698, 0.20019531
    %v3843 = vmul.f32 %v3699, 0.20019531
    %v3844 = vmul.f32 %v3700, 0.20019531
    %v3845 = vmul.f32 %v3701, 0.20019531
    %v3846 = vmul.f32 %v3702, 0.20019531
    %v3847 = vmul.f32 %v3703, 0.20019531
    %v3848 = vmul.f32 %v3704, 0.20019531
    %v3849 = vmul.f32 %v3705, 0.20019531
    %v3850 = vmul.f32 %v3706, 0.20019531
    %v3851 = vmul.f32 %v3707, 0.20019531
    %v3852 = vmul.f32 %v3708, 0.20019531
    %v3853 = vmul.f32 %v3709, 0.20019531
    %v3854 = vmul.f32 %v3710, 0.20019531
    %v3855 = vmul.f32 %v3711, 0.20019531
    %v3856 = vmul.f32 %v3712, 0.20019531
    %v3857 = vmul.f32 %v3713, 0.20019531
    %v3858 = vmul.f32 %v3714, 0.20019531
    %v3859 = vpack.c.bf16 %v3787, %v3787
    %v3860 = vpack.c.bf16 %v3788, %v3788
    %v3861 = vpack.c.bf16 %v3789, %v3789
    %v3862 = vpack.c.bf16 %v3790, %v3790
    %v3863 = vpack.c.bf16 %v3791, %v3791
    %v3864 = vpack.c.bf16 %v3792, %v3792
    %v3865 = vpack.c.bf16 %v3793, %v3793
    %v3866 = vpack.c.bf16 %v3794, %v3794
    %v3867 = vpack.c.bf16 %v3795, %v3795
    %v3868 = vpack.c.bf16 %v3796, %v3796
    %v3869 = vpack.c.bf16 %v3797, %v3797
    %v3870 = vpack.c.bf16 %v3798, %v3798
    %v3871 = vpack.c.bf16 %v3799, %v3799
    %v3872 = vpack.c.bf16 %v3800, %v3800
    %v3873 = vpack.c.bf16 %v3801, %v3801
    %v3874 = vpack.c.bf16 %v3802, %v3802
    %v3875 = vpack.c.bf16 %v3803, %v3803
    %v3876 = vpack.c.bf16 %v3804, %v3804
    %v3877 = vpack.c.bf16 %v3805, %v3805
    %v3878 = vpack.c.bf16 %v3806, %v3806
    %v3879 = vpack.c.bf16 %v3807, %v3807
    %v3880 = vpack.c.bf16 %v3808, %v3808
    %v3881 = vpack.c.bf16 %v3809, %v3809
    %v3882 = vpack.c.bf16 %v3810, %v3810
    %v3883 = vpack.c.bf16 %v3811, %v3811
    %v3884 = vpack.c.bf16 %v3812, %v3812
    %v3885 = vpack.c.bf16 %v3813, %v3813
    %v3886 = vpack.c.bf16 %v3814, %v3814
    %v3887 = vpack.c.bf16 %v3815, %v3815
    %v3888 = vpack.c.bf16 %v3816, %v3816
    %v3889 = vpack.c.bf16 %v3817, %v3817
    %v3890 = vpack.c.bf16 %v3818, %v3818
    %v3891 = vpack.c.bf16 %v3819, %v3819
    %v3892 = vpack.c.bf16 %v3820, %v3820
    %v3893 = vpack.c.bf16 %v3821, %v3821
    %v3894 = vpack.c.bf16 %v3822, %v3822
    %v3895 = vpack.c.bf16 %v3823, %v3823
    %v3896 = vpack.c.bf16 %v3824, %v3824
    %v3897 = vpack.c.bf16 %v3825, %v3825
    %v3898 = vpack.c.bf16 %v3826, %v3826
    %v3899 = vpack.c.bf16 %v3827, %v3827
    %v3900 = vpack.c.bf16 %v3828, %v3828
    %v3901 = vpack.c.bf16 %v3829, %v3829
    %v3902 = vpack.c.bf16 %v3830, %v3830
    %v3903 = vpack.c.bf16 %v3831, %v3831
    %v3904 = vpack.c.bf16 %v3832, %v3832
    %v3905 = vpack.c.bf16 %v3833, %v3833
    %v3906 = vpack.c.bf16 %v3834, %v3834
    %v3907 = vpack.c.bf16 %v3835, %v3835
    %v3908 = vpack.c.bf16 %v3836, %v3836
    %v3909 = vpack.c.bf16 %v3837, %v3837
    %v3910 = vpack.c.bf16 %v3838, %v3838
    %v3911 = vpack.c.bf16 %v3839, %v3839
    %v3912 = vpack.c.bf16 %v3840, %v3840
    %v3913 = vpack.c.bf16 %v3841, %v3841
    %v3914 = vpack.c.bf16 %v3842, %v3842
    %v3915 = vpack.c.bf16 %v3843, %v3843
    %v3916 = vpack.c.bf16 %v3844, %v3844
    %v3917 = vpack.c.bf16 %v3845, %v3845
    %v3918 = vpack.c.bf16 %v3846, %v3846
    %v3919 = vpack.c.bf16 %v3847, %v3847
    %v3920 = vpack.c.bf16 %v3848, %v3848
    %v3921 = vpack.c.bf16 %v3849, %v3849
    %v3922 = vpack.c.bf16 %v3850, %v3850
    %v3923 = vpack.c.bf16 %v3851, %v3851
    %v3924 = vpack.c.bf16 %v3852, %v3852
    %v3925 = vpack.c.bf16 %v3853, %v3853
    %v3926 = vpack.c.bf16 %v3854, %v3854
    %v3927 = vpack.c.bf16 %v3855, %v3855
    %v3928 = vpack.c.bf16 %v3856, %v3856
    %v3929 = vpack.c.bf16 %v3857, %v3857
    %v3930 = vpack.c.bf16 %v3858, %v3858
    %vm3931 = vmpackc.low %vm3715, %vm3715
    %vm3932 = vmpackc.low %vm3716, %vm3716
    %vm3933 = vmpackc.low %vm3717, %vm3717
    %vm3934 = vmpackc.low %vm3718, %vm3718
    %vm3935 = vmpackc.low %vm3719, %vm3719
    %vm3936 = vmpackc.low %vm3720, %vm3720
    %vm3937 = vmpackc.low %vm3721, %vm3721
    %vm3938 = vmpackc.low %vm3722, %vm3722
    %vm3939 = vmpackc.low %vm3723, %vm3723
    %vm3940 = vmpackc.low %vm3724, %vm3724
    %vm3941 = vmpackc.low %vm3725, %vm3725
    %vm3942 = vmpackc.low %vm3726, %vm3726
    %vm3943 = vmpackc.low %vm3727, %vm3727
    %vm3944 = vmpackc.low %vm3728, %vm3728
    %vm3945 = vmpackc.low %vm3729, %vm3729
    %vm3946 = vmpackc.low %vm3730, %vm3730
    %vm3947 = vmpackc.low %vm3731, %vm3731
    %vm3948 = vmpackc.low %vm3732, %vm3732
    %vm3949 = vmpackc.low %vm3733, %vm3733
    %vm3950 = vmpackc.low %vm3734, %vm3734
    %vm3951 = vmpackc.low %vm3735, %vm3735
    %vm3952 = vmpackc.low %vm3736, %vm3736
    %vm3953 = vmpackc.low %vm3737, %vm3737
    %vm3954 = vmpackc.low %vm3738, %vm3738
    %vm3955 = vmpackc.low %vm3739, %vm3739
    %vm3956 = vmpackc.low %vm3740, %vm3740
    %vm3957 = vmpackc.low %vm3741, %vm3741
    %vm3958 = vmpackc.low %vm3742, %vm3742
    %vm3959 = vmpackc.low %vm3743, %vm3743
    %vm3960 = vmpackc.low %vm3744, %vm3744
    %vm3961 = vmpackc.low %vm3745, %vm3745
    %vm3962 = vmpackc.low %vm3746, %vm3746
    %vm3963 = vmpackc.low %vm3747, %vm3747
    %vm3964 = vmpackc.low %vm3748, %vm3748
    %vm3965 = vmpackc.low %vm3749, %vm3749
    %vm3966 = vmpackc.low %vm3750, %vm3750
    %vm3967 = vmpackc.low %vm3751, %vm3751
    %vm3968 = vmpackc.low %vm3752, %vm3752
    %vm3969 = vmpackc.low %vm3753, %vm3753
    %vm3970 = vmpackc.low %vm3754, %vm3754
    %vm3971 = vmpackc.low %vm3755, %vm3755
    %vm3972 = vmpackc.low %vm3756, %vm3756
    %vm3973 = vmpackc.low %vm3757, %vm3757
    %vm3974 = vmpackc.low %vm3758, %vm3758
    %vm3975 = vmpackc.low %vm3759, %vm3759
    %vm3976 = vmpackc.low %vm3760, %vm3760
    %vm3977 = vmpackc.low %vm3761, %vm3761
    %vm3978 = vmpackc.low %vm3762, %vm3762
    %vm3979 = vmpackc.low %vm3763, %vm3763
    %vm3980 = vmpackc.low %vm3764, %vm3764
    %vm3981 = vmpackc.low %vm3765, %vm3765
    %vm3982 = vmpackc.low %vm3766, %vm3766
    %vm3983 = vmpackc.low %vm3767, %vm3767
    %vm3984 = vmpackc.low %vm3768, %vm3768
    %vm3985 = vmpackc.low %vm3769, %vm3769
    %vm3986 = vmpackc.low %vm3770, %vm3770
    %vm3987 = vmpackc.low %vm3771, %vm3771
    %vm3988 = vmpackc.low %vm3772, %vm3772
    %vm3989 = vmpackc.low %vm3773, %vm3773
    %vm3990 = vmpackc.low %vm3774, %vm3774
    %vm3991 = vmpackc.low %vm3775, %vm3775
    %vm3992 = vmpackc.low %vm3776, %vm3776
    %vm3993 = vmpackc.low %vm3777, %vm3777
    %vm3994 = vmpackc.low %vm3778, %vm3778
    %vm3995 = vmpackc.low %vm3779, %vm3779
    %vm3996 = vmpackc.low %vm3780, %vm3780
    %vm3997 = vmpackc.low %vm3781, %vm3781
    %vm3998 = vmpackc.low %vm3782, %vm3782
    %vm3999 = vmpackc.low %vm3783, %vm3783
    %vm4000 = vmpackc.low %vm3784, %vm3784
    %vm4001 = vmpackc.low %vm3785, %vm3785
    %vm4002 = vmpackc.low %vm3786, %vm3786
    %v4003 = vsel %vm3931, %v3571, %v3859
    %v4004 = vsel %vm3932, %v3572, %v3860
    %v4005 = vsel %vm3933, %v3573, %v3861
    %v4006 = vsel %vm3934, %v3574, %v3862
    %v4007 = vsel %vm3935, %v3575, %v3863
    %v4008 = vsel %vm3936, %v3576, %v3864
    %v4009 = vsel %vm3937, %v3577, %v3865
    %v4010 = vsel %vm3938, %v3578, %v3866
    %v4011 = vsel %vm3939, %v3579, %v3867
    %v4012 = vsel %vm3940, %v3580, %v3868
    %v4013 = vsel %vm3941, %v3581, %v3869
    %v4014 = vsel %vm3942, %v3582, %v3870
    %v4015 = vsel %vm3943, %v3583, %v3871
    %v4016 = vsel %vm3944, %v3584, %v3872
    %v4017 = vsel %vm3945, %v3585, %v3873
    %v4018 = vsel %vm3946, %v3586, %v3874
    %v4019 = vsel %vm3947, %v3587, %v3875
    %v4020 = vsel %vm3948, %v3588, %v3876
    %v4021 = vsel %vm3949, %v3589, %v3877
    %v4022 = vsel %vm3950, %v3590, %v3878
    %v4023 = vsel %vm3951, %v3591, %v3879
    %v4024 = vsel %vm3952, %v3592, %v3880
    %v4025 = vsel %vm3953, %v3593, %v3881
    %v4026 = vsel %vm3954, %v3594, %v3882
    %v4027 = vsel %vm3955, %v3595, %v3883
    %v4028 = vsel %vm3956, %v3596, %v3884
    %v4029 = vsel %vm3957, %v3597, %v3885
    %v4030 = vsel %vm3958, %v3598, %v3886
    %v4031 = vsel %vm3959, %v3599, %v3887
    %v4032 = vsel %vm3960, %v3600, %v3888
    %v4033 = vsel %vm3961, %v3601, %v3889
    %v4034 = vsel %vm3962, %v3602, %v3890
    %v4035 = vsel %vm3963, %v3603, %v3891
    %v4036 = vsel %vm3964, %v3604, %v3892
    %v4037 = vsel %vm3965, %v3605, %v3893
    %v4038 = vsel %vm3966, %v3606, %v3894
    %v4039 = vsel %vm3967, %v3607, %v3895
    %v4040 = vsel %vm3968, %v3608, %v3896
    %v4041 = vsel %vm3969, %v3609, %v3897
    %v4042 = vsel %vm3970, %v3610, %v3898
    %v4043 = vsel %vm3971, %v3611, %v3899
    %v4044 = vsel %vm3972, %v3612, %v3900
    %v4045 = vsel %vm3973, %v3613, %v3901
    %v4046 = vsel %vm3974, %v3614, %v3902
    %v4047 = vsel %vm3975, %v3615, %v3903
    %v4048 = vsel %vm3976, %v3616, %v3904
    %v4049 = vsel %vm3977, %v3617, %v3905
    %v4050 = vsel %vm3978, %v3618, %v3906
    %v4051 = vsel %vm3979, %v3619, %v3907
    %v4052 = vsel %vm3980, %v3620, %v3908
    %v4053 = vsel %vm3981, %v3621, %v3909
    %v4054 = vsel %vm3982, %v3622, %v3910
    %v4055 = vsel %vm3983, %v3623, %v3911
    %v4056 = vsel %vm3984, %v3624, %v3912
    %v4057 = vsel %vm3985, %v3625, %v3913
    %v4058 = vsel %vm3986, %v3626, %v3914
    %v4059 = vsel %vm3987, %v3627, %v3915
    %v4060 = vsel %vm3988, %v3628, %v3916
    %v4061 = vsel %vm3989, %v3629, %v3917
    %v4062 = vsel %vm3990, %v3630, %v3918
    %v4063 = vsel %vm3991, %v3631, %v3919
    %v4064 = vsel %vm3992, %v3632, %v3920
    %v4065 = vsel %vm3993, %v3633, %v3921
    %v4066 = vsel %vm3994, %v3634, %v3922
    %v4067 = vsel %vm3995, %v3635, %v3923
    %v4068 = vsel %vm3996, %v3636, %v3924
    %v4069 = vsel %vm3997, %v3637, %v3925
    %v4070 = vsel %vm3998, %v3638, %v3926
    %v4071 = vsel %vm3999, %v3639, %v3927
    %v4072 = vsel %vm4000, %v3640, %v3928
    %v4073 = vsel %vm4001, %v3641, %v3929
    %v4074 = vsel %vm4002, %v3642, %v3930
    %v4075 = vunpack.c.l.bf16 %v4003
    %v4076 = vunpack.c.l.bf16 %v4004
    %v4077 = vunpack.c.l.bf16 %v4005
    %v4078 = vunpack.c.l.bf16 %v4006
    %v4079 = vunpack.c.l.bf16 %v4007
    %v4080 = vunpack.c.l.bf16 %v4008
    %v4081 = vunpack.c.l.bf16 %v4009
    %v4082 = vunpack.c.l.bf16 %v4010
    %v4083 = vunpack.c.l.bf16 %v4011
    %v4084 = vunpack.c.l.bf16 %v4012
    %v4085 = vunpack.c.l.bf16 %v4013
    %v4086 = vunpack.c.l.bf16 %v4014
    %v4087 = vunpack.c.l.bf16 %v4015
    %v4088 = vunpack.c.l.bf16 %v4016
    %v4089 = vunpack.c.l.bf16 %v4017
    %v4090 = vunpack.c.l.bf16 %v4018
    %v4091 = vunpack.c.l.bf16 %v4019
    %v4092 = vunpack.c.l.bf16 %v4020
    %v4093 = vunpack.c.l.bf16 %v4021
    %v4094 = vunpack.c.l.bf16 %v4022
    %v4095 = vunpack.c.l.bf16 %v4023
    %v4096 = vunpack.c.l.bf16 %v4024
    %v4097 = vunpack.c.l.bf16 %v4025
    %v4098 = vunpack.c.l.bf16 %v4026
    %v4099 = vunpack.c.l.bf16 %v4027
    %v4100 = vunpack.c.l.bf16 %v4028
    %v4101 = vunpack.c.l.bf16 %v4029
    %v4102 = vunpack.c.l.bf16 %v4030
    %v4103 = vunpack.c.l.bf16 %v4031
    %v4104 = vunpack.c.l.bf16 %v4032
    %v4105 = vunpack.c.l.bf16 %v4033
    %v4106 = vunpack.c.l.bf16 %v4034
    %v4107 = vunpack.c.l.bf16 %v4035
    %v4108 = vunpack.c.l.bf16 %v4036
    %v4109 = vunpack.c.l.bf16 %v4037
    %v4110 = vunpack.c.l.bf16 %v4038
    %v4111 = vunpack.c.l.bf16 %v4039
    %v4112 = vunpack.c.l.bf16 %v4040
    %v4113 = vunpack.c.l.bf16 %v4041
    %v4114 = vunpack.c.l.bf16 %v4042
    %v4115 = vunpack.c.l.bf16 %v4043
    %v4116 = vunpack.c.l.bf16 %v4044
    %v4117 = vunpack.c.l.bf16 %v4045
    %v4118 = vunpack.c.l.bf16 %v4046
    %v4119 = vunpack.c.l.bf16 %v4047
    %v4120 = vunpack.c.l.bf16 %v4048
    %v4121 = vunpack.c.l.bf16 %v4049
    %v4122 = vunpack.c.l.bf16 %v4050
    %v4123 = vunpack.c.l.bf16 %v4051
    %v4124 = vunpack.c.l.bf16 %v4052
    %v4125 = vunpack.c.l.bf16 %v4053
    %v4126 = vunpack.c.l.bf16 %v4054
    %v4127 = vunpack.c.l.bf16 %v4055
    %v4128 = vunpack.c.l.bf16 %v4056
    %v4129 = vunpack.c.l.bf16 %v4057
    %v4130 = vunpack.c.l.bf16 %v4058
    %v4131 = vunpack.c.l.bf16 %v4059
    %v4132 = vunpack.c.l.bf16 %v4060
    %v4133 = vunpack.c.l.bf16 %v4061
    %v4134 = vunpack.c.l.bf16 %v4062
    %v4135 = vunpack.c.l.bf16 %v4063
    %v4136 = vunpack.c.l.bf16 %v4064
    %v4137 = vunpack.c.l.bf16 %v4065
    %v4138 = vunpack.c.l.bf16 %v4066
    %v4139 = vunpack.c.l.bf16 %v4067
    %v4140 = vunpack.c.l.bf16 %v4068
    %v4141 = vunpack.c.l.bf16 %v4069
    %v4142 = vunpack.c.l.bf16 %v4070
    %v4143 = vunpack.c.l.bf16 %v4071
    %v4144 = vunpack.c.l.bf16 %v4072
    %v4145 = vunpack.c.l.bf16 %v4073
    %v4146 = vunpack.c.l.bf16 %v4074
    %v4147 = vperm.slane %v192, 2
    %4149 = vrot.lane.b32.xlu0 %v4147, 96
    %v4150 = vpop.permute.xlu0 %4149
    %v4152 = vmul.f32 %v4075, %v4150
    %v4153 = vmul.f32 %v4076, %v4150
    %v4154 = vmul.f32 %v4077, %v4150
    %v4155 = vmul.f32 %v4078, %v4150
    %v4156 = vmul.f32 %v4079, %v4150
    %v4157 = vmul.f32 %v4080, %v4150
    %v4158 = vmul.f32 %v4081, %v4150
    %v4159 = vmul.f32 %v4082, %v4150
    %v4160 = vmul.f32 %v4083, %v4150
    %v4161 = vmul.f32 %v4084, %v4150
    %v4162 = vmul.f32 %v4085, %v4150
    %v4163 = vmul.f32 %v4086, %v4150
    %v4164 = vmul.f32 %v4087, %v4150
    %v4165 = vmul.f32 %v4088, %v4150
    %v4166 = vmul.f32 %v4089, %v4150
    %v4167 = vmul.f32 %v4090, %v4150
    %v4168 = vmul.f32 %v4091, %v4150
    %v4169 = vmul.f32 %v4092, %v4150
    %v4170 = vmul.f32 %v4093, %v4150
    %v4171 = vmul.f32 %v4094, %v4150
    %v4172 = vmul.f32 %v4095, %v4150
    %v4173 = vmul.f32 %v4096, %v4150
    %v4174 = vmul.f32 %v4097, %v4150
    %v4175 = vmul.f32 %v4098, %v4150
    %v4176 = vmul.f32 %v4099, %v4150
    %v4177 = vmul.f32 %v4100, %v4150
    %v4178 = vmul.f32 %v4101, %v4150
    %v4179 = vmul.f32 %v4102, %v4150
    %v4180 = vmul.f32 %v4103, %v4150
    %v4181 = vmul.f32 %v4104, %v4150
    %v4182 = vmul.f32 %v4105, %v4150
    %v4183 = vmul.f32 %v4106, %v4150
    %v4184 = vmul.f32 %v4107, %v4150
    %v4185 = vmul.f32 %v4108, %v4150
    %v4186 = vmul.f32 %v4109, %v4150
    %v4187 = vmul.f32 %v4110, %v4150
    %v4188 = vmul.f32 %v4111, %v4150
    %v4189 = vmul.f32 %v4112, %v4150
    %v4190 = vmul.f32 %v4113, %v4150
    %v4191 = vmul.f32 %v4114, %v4150
    %v4192 = vmul.f32 %v4115, %v4150
    %v4193 = vmul.f32 %v4116, %v4150
    %v4194 = vmul.f32 %v4117, %v4150
    %v4195 = vmul.f32 %v4118, %v4150
    %v4196 = vmul.f32 %v4119, %v4150
    %v4197 = vmul.f32 %v4120, %v4150
    %v4198 = vmul.f32 %v4121, %v4150
    %v4199 = vmul.f32 %v4122, %v4150
    %v4200 = vmul.f32 %v4123, %v4150
    %v4201 = vmul.f32 %v4124, %v4150
    %v4202 = vmul.f32 %v4125, %v4150
    %v4203 = vmul.f32 %v4126, %v4150
    %v4204 = vmul.f32 %v4127, %v4150
    %v4205 = vmul.f32 %v4128, %v4150
    %v4206 = vmul.f32 %v4129, %v4150
    %v4207 = vmul.f32 %v4130, %v4150
    %v4208 = vmul.f32 %v4131, %v4150
    %v4209 = vmul.f32 %v4132, %v4150
    %v4210 = vmul.f32 %v4133, %v4150
    %v4211 = vmul.f32 %v4134, %v4150
    %v4212 = vmul.f32 %v4135, %v4150
    %v4213 = vmul.f32 %v4136, %v4150
    %v4214 = vmul.f32 %v4137, %v4150
    %v4215 = vmul.f32 %v4138, %v4150
    %v4216 = vmul.f32 %v4139, %v4150
    %v4217 = vmul.f32 %v4140, %v4150
    %v4218 = vmul.f32 %v4141, %v4150
    %v4219 = vmul.f32 %v4142, %v4150
    %v4220 = vmul.f32 %v4143, %v4150
    %v4221 = vmul.f32 %v4144, %v4150
    %v4222 = vmul.f32 %v4145, %v4150
    %v4223 = vmul.f32 %v4146, %v4150
    %4296 = vrot.lane.b32.xlu0 %v4152, 32
    %v4297 = vpop.permute.xlu0 %4296
    %4298 = vrot.lane.b32.xlu0 %v4153, 32
    %v4299 = vpop.permute.xlu0 %4298
    %4300 = vrot.lane.b32.xlu0 %v4154, 32
    %v4301 = vpop.permute.xlu0 %4300
    %4302 = vrot.lane.b32.xlu0 %v4155, 32
    %v4303 = vpop.permute.xlu0 %4302
    %4304 = vrot.lane.b32.xlu0 %v4156, 32
    %v4305 = vpop.permute.xlu0 %4304
    %4306 = vrot.lane.b32.xlu0 %v4157, 32
    %v4307 = vpop.permute.xlu0 %4306
    %4308 = vrot.lane.b32.xlu0 %v4158, 32
    %v4309 = vpop.permute.xlu0 %4308
    %4310 = vrot.lane.b32.xlu0 %v4159, 32
    %v4311 = vpop.permute.xlu0 %4310
    %4312 = vrot.lane.b32.xlu0 %v4160, 32
    %v4313 = vpop.permute.xlu0 %4312
    %4314 = vrot.lane.b32.xlu0 %v4161, 32
    %v4315 = vpop.permute.xlu0 %4314
    %4316 = vrot.lane.b32.xlu0 %v4162, 32
    %v4317 = vpop.permute.xlu0 %4316
    %4318 = vrot.lane.b32.xlu0 %v4163, 32
    %v4319 = vpop.permute.xlu0 %4318
    %4320 = vrot.lane.b32.xlu0 %v4164, 32
    %v4321 = vpop.permute.xlu0 %4320
    %4322 = vrot.lane.b32.xlu0 %v4165, 32
    %v4323 = vpop.permute.xlu0 %4322
    %4324 = vrot.lane.b32.xlu0 %v4166, 32
    %v4325 = vpop.permute.xlu0 %4324
    %4326 = vrot.lane.b32.xlu0 %v4167, 32
    %v4327 = vpop.permute.xlu0 %4326
    %4328 = vrot.lane.b32.xlu0 %v4168, 32
    %v4329 = vpop.permute.xlu0 %4328
    %4330 = vrot.lane.b32.xlu0 %v4169, 32
    %v4331 = vpop.permute.xlu0 %4330
    %4332 = vrot.lane.b32.xlu0 %v4170, 32
    %v4333 = vpop.permute.xlu0 %4332
    %4334 = vrot.lane.b32.xlu0 %v4171, 32
    %v4335 = vpop.permute.xlu0 %4334
    %4336 = vrot.lane.b32.xlu0 %v4172, 32
    %v4337 = vpop.permute.xlu0 %4336
    %4338 = vrot.lane.b32.xlu0 %v4173, 32
    %v4339 = vpop.permute.xlu0 %4338
    %4340 = vrot.lane.b32.xlu0 %v4174, 32
    %v4341 = vpop.permute.xlu0 %4340
    %4342 = vrot.lane.b32.xlu0 %v4175, 32
    %v4343 = vpop.permute.xlu0 %4342
    %4344 = vrot.lane.b32.xlu0 %v4176, 32
    %v4345 = vpop.permute.xlu0 %4344
    %4346 = vrot.lane.b32.xlu0 %v4177, 32
    %v4347 = vpop.permute.xlu0 %4346
    %4348 = vrot.lane.b32.xlu0 %v4178, 32
    %v4349 = vpop.permute.xlu0 %4348
    %4350 = vrot.lane.b32.xlu0 %v4179, 32
    %v4351 = vpop.permute.xlu0 %4350
    %4352 = vrot.lane.b32.xlu0 %v4180, 32
    %v4353 = vpop.permute.xlu0 %4352
    %4354 = vrot.lane.b32.xlu0 %v4181, 32
    %v4355 = vpop.permute.xlu0 %4354
    %4356 = vrot.lane.b32.xlu0 %v4182, 32
    %v4357 = vpop.permute.xlu0 %4356
    %4358 = vrot.lane.b32.xlu0 %v4183, 32
    %v4359 = vpop.permute.xlu0 %4358
    %4360 = vrot.lane.b32.xlu0 %v4184, 32
    %v4361 = vpop.permute.xlu0 %4360
    %4362 = vrot.lane.b32.xlu0 %v4185, 32
    %v4363 = vpop.permute.xlu0 %4362
    %4364 = vrot.lane.b32.xlu0 %v4186, 32
    %v4365 = vpop.permute.xlu0 %4364
    %4366 = vrot.lane.b32.xlu0 %v4187, 32
    %v4367 = vpop.permute.xlu0 %4366
    %4368 = vrot.lane.b32.xlu0 %v4188, 32
    %v4369 = vpop.permute.xlu0 %4368
    %4370 = vrot.lane.b32.xlu0 %v4189, 32
    %v4371 = vpop.permute.xlu0 %4370
    %4372 = vrot.lane.b32.xlu0 %v4190, 32
    %v4373 = vpop.permute.xlu0 %4372
    %4374 = vrot.lane.b32.xlu0 %v4191, 32
    %v4375 = vpop.permute.xlu0 %4374
    %4376 = vrot.lane.b32.xlu0 %v4192, 32
    %v4377 = vpop.permute.xlu0 %4376
    %4378 = vrot.lane.b32.xlu0 %v4193, 32
    %v4379 = vpop.permute.xlu0 %4378
    %4380 = vrot.lane.b32.xlu0 %v4194, 32
    %v4381 = vpop.permute.xlu0 %4380
    %4382 = vrot.lane.b32.xlu0 %v4195, 32
    %v4383 = vpop.permute.xlu0 %4382
    %4384 = vrot.lane.b32.xlu0 %v4196, 32
    %v4385 = vpop.permute.xlu0 %4384
    %4386 = vrot.lane.b32.xlu0 %v4197, 32
    %v4387 = vpop.permute.xlu0 %4386
    %4388 = vrot.lane.b32.xlu0 %v4198, 32
    %v4389 = vpop.permute.xlu0 %4388
    %4390 = vrot.lane.b32.xlu0 %v4199, 32
    %v4391 = vpop.permute.xlu0 %4390
    %4392 = vrot.lane.b32.xlu0 %v4200, 32
    %v4393 = vpop.permute.xlu0 %4392
    %4394 = vrot.lane.b32.xlu0 %v4201, 32
    %v4395 = vpop.permute.xlu0 %4394
    %4396 = vrot.lane.b32.xlu0 %v4202, 32
    %v4397 = vpop.permute.xlu0 %4396
    %4398 = vrot.lane.b32.xlu0 %v4203, 32
    %v4399 = vpop.permute.xlu0 %4398
    %4400 = vrot.lane.b32.xlu0 %v4204, 32
    %v4401 = vpop.permute.xlu0 %4400
    %4402 = vrot.lane.b32.xlu0 %v4205, 32
    %v4403 = vpop.permute.xlu0 %4402
    %4404 = vrot.lane.b32.xlu0 %v4206, 32
    %v4405 = vpop.permute.xlu0 %4404
    %4406 = vrot.lane.b32.xlu0 %v4207, 32
    %v4407 = vpop.permute.xlu0 %4406
    %4408 = vrot.lane.b32.xlu0 %v4208, 32
    %v4409 = vpop.permute.xlu0 %4408
    %4410 = vrot.lane.b32.xlu0 %v4209, 32
    %v4411 = vpop.permute.xlu0 %4410
    %4412 = vrot.lane.b32.xlu0 %v4210, 32
    %v4413 = vpop.permute.xlu0 %4412
    %4414 = vrot.lane.b32.xlu0 %v4211, 32
    %v4415 = vpop.permute.xlu0 %4414
    %4416 = vrot.lane.b32.xlu0 %v4212, 32
    %v4417 = vpop.permute.xlu0 %4416
    %4418 = vrot.lane.b32.xlu0 %v4213, 32
    %v4419 = vpop.permute.xlu0 %4418
    %4420 = vrot.lane.b32.xlu0 %v4214, 32
    %v4421 = vpop.permute.xlu0 %4420
    %4422 = vrot.lane.b32.xlu0 %v4215, 32
    %v4423 = vpop.permute.xlu0 %4422
    %4424 = vrot.lane.b32.xlu0 %v4216, 32
    %v4425 = vpop.permute.xlu0 %4424
    %4426 = vrot.lane.b32.xlu0 %v4217, 32
    %v4427 = vpop.permute.xlu0 %4426
    %4428 = vrot.lane.b32.xlu0 %v4218, 32
    %v4429 = vpop.permute.xlu0 %4428
    %4430 = vrot.lane.b32.xlu0 %v4219, 32
    %v4431 = vpop.permute.xlu0 %4430
    %4432 = vrot.lane.b32.xlu0 %v4220, 32
    %v4433 = vpop.permute.xlu0 %4432
    %4434 = vrot.lane.b32.xlu0 %v4221, 32
    %v4435 = vpop.permute.xlu0 %4434
    %4436 = vrot.lane.b32.xlu0 %v4222, 32
    %v4437 = vpop.permute.xlu0 %4436
    %4438 = vrot.lane.b32.xlu0 %v4223, 32
    %v4439 = vpop.permute.xlu0 %4438
    %v4512 = vsel %vm1437, %v4297, 0.0
    %4513 = vadd.xlane.f32.xlu0 %v4512
    %v4514 = vpop.xlane.xlu0 %4513
    %v4515 = vsel %vm1437, %v4299, 0.0
    %4516 = vadd.xlane.f32.xlu0 %v4515
    %v4517 = vpop.xlane.xlu0 %4516
    %v4518 = vsel %vm1437, %v4301, 0.0
    %4519 = vadd.xlane.f32.xlu0 %v4518
    %v4520 = vpop.xlane.xlu0 %4519
    %v4521 = vsel %vm1437, %v4303, 0.0
    %4522 = vadd.xlane.f32.xlu0 %v4521
    %v4523 = vpop.xlane.xlu0 %4522
    %v4524 = vsel %vm1437, %v4305, 0.0
    %4525 = vadd.xlane.f32.xlu0 %v4524
    %v4526 = vpop.xlane.xlu0 %4525
    %v4527 = vsel %vm1437, %v4307, 0.0
    %4528 = vadd.xlane.f32.xlu0 %v4527
    %v4529 = vpop.xlane.xlu0 %4528
    %v4530 = vsel %vm1437, %v4309, 0.0
    %4531 = vadd.xlane.f32.xlu0 %v4530
    %v4532 = vpop.xlane.xlu0 %4531
    %v4533 = vsel %vm1437, %v4311, 0.0
    %4534 = vadd.xlane.f32.xlu0 %v4533
    %v4535 = vpop.xlane.xlu0 %4534
    %v4536 = vsel %vm1437, %v4313, 0.0
    %4537 = vadd.xlane.f32.xlu0 %v4536
    %v4538 = vpop.xlane.xlu0 %4537
    %v4539 = vsel %vm1437, %v4315, 0.0
    %4540 = vadd.xlane.f32.xlu0 %v4539
    %v4541 = vpop.xlane.xlu0 %4540
    %v4542 = vsel %vm1437, %v4317, 0.0
    %4543 = vadd.xlane.f32.xlu0 %v4542
    %v4544 = vpop.xlane.xlu0 %4543
    %v4545 = vsel %vm1437, %v4319, 0.0
    %4546 = vadd.xlane.f32.xlu0 %v4545
    %v4547 = vpop.xlane.xlu0 %4546
    %v4548 = vsel %vm1437, %v4321, 0.0
    %4549 = vadd.xlane.f32.xlu0 %v4548
    %v4550 = vpop.xlane.xlu0 %4549
    %v4551 = vsel %vm1437, %v4323, 0.0
    %4552 = vadd.xlane.f32.xlu0 %v4551
    %v4553 = vpop.xlane.xlu0 %4552
    %v4554 = vsel %vm1437, %v4325, 0.0
    %4555 = vadd.xlane.f32.xlu0 %v4554
    %v4556 = vpop.xlane.xlu0 %4555
    %v4557 = vsel %vm1437, %v4327, 0.0
    %4558 = vadd.xlane.f32.xlu0 %v4557
    %v4559 = vpop.xlane.xlu0 %4558
    %v4560 = vsel %vm1437, %v4329, 0.0
    %4561 = vadd.xlane.f32.xlu0 %v4560
    %v4562 = vpop.xlane.xlu0 %4561
    %v4563 = vsel %vm1437, %v4331, 0.0
    %4564 = vadd.xlane.f32.xlu0 %v4563
    %v4565 = vpop.xlane.xlu0 %4564
    %v4566 = vsel %vm1437, %v4333, 0.0
    %4567 = vadd.xlane.f32.xlu0 %v4566
    %v4568 = vpop.xlane.xlu0 %4567
    %v4569 = vsel %vm1437, %v4335, 0.0
    %4570 = vadd.xlane.f32.xlu0 %v4569
    %v4571 = vpop.xlane.xlu0 %4570
    %v4572 = vsel %vm1437, %v4337, 0.0
    %4573 = vadd.xlane.f32.xlu0 %v4572
    %v4574 = vpop.xlane.xlu0 %4573
    %v4575 = vsel %vm1437, %v4339, 0.0
    %4576 = vadd.xlane.f32.xlu0 %v4575
    %v4577 = vpop.xlane.xlu0 %4576
    %v4578 = vsel %vm1437, %v4341, 0.0
    %4579 = vadd.xlane.f32.xlu0 %v4578
    %v4580 = vpop.xlane.xlu0 %4579
    %v4581 = vsel %vm1437, %v4343, 0.0
    %4582 = vadd.xlane.f32.xlu0 %v4581
    %v4583 = vpop.xlane.xlu0 %4582
    %v4584 = vsel %vm1437, %v4345, 0.0
    %4585 = vadd.xlane.f32.xlu0 %v4584
    %v4586 = vpop.xlane.xlu0 %4585
    %v4587 = vsel %vm1437, %v4347, 0.0
    %4588 = vadd.xlane.f32.xlu0 %v4587
    %v4589 = vpop.xlane.xlu0 %4588
    %v4590 = vsel %vm1437, %v4349, 0.0
    %4591 = vadd.xlane.f32.xlu0 %v4590
    %v4592 = vpop.xlane.xlu0 %4591
    %v4593 = vsel %vm1437, %v4351, 0.0
    %4594 = vadd.xlane.f32.xlu0 %v4593
    %v4595 = vpop.xlane.xlu0 %4594
    %v4596 = vsel %vm1437, %v4353, 0.0
    %4597 = vadd.xlane.f32.xlu0 %v4596
    %v4598 = vpop.xlane.xlu0 %4597
    %v4599 = vsel %vm1437, %v4355, 0.0
    %4600 = vadd.xlane.f32.xlu0 %v4599
    %v4601 = vpop.xlane.xlu0 %4600
    %v4602 = vsel %vm1437, %v4357, 0.0
    %4603 = vadd.xlane.f32.xlu0 %v4602
    %v4604 = vpop.xlane.xlu0 %4603
    %v4605 = vsel %vm1437, %v4359, 0.0
    %4606 = vadd.xlane.f32.xlu0 %v4605
    %v4607 = vpop.xlane.xlu0 %4606
    %v4608 = vsel %vm1437, %v4361, 0.0
    %4609 = vadd.xlane.f32.xlu0 %v4608
    %v4610 = vpop.xlane.xlu0 %4609
    %v4611 = vsel %vm1437, %v4363, 0.0
    %4612 = vadd.xlane.f32.xlu0 %v4611
    %v4613 = vpop.xlane.xlu0 %4612
    %v4614 = vsel %vm1437, %v4365, 0.0
    %4615 = vadd.xlane.f32.xlu0 %v4614
    %v4616 = vpop.xlane.xlu0 %4615
    %v4617 = vsel %vm1437, %v4367, 0.0
    %4618 = vadd.xlane.f32.xlu0 %v4617
    %v4619 = vpop.xlane.xlu0 %4618
    %v4620 = vsel %vm1437, %v4369, 0.0
    %4621 = vadd.xlane.f32.xlu0 %v4620
    %v4622 = vpop.xlane.xlu0 %4621
    %v4623 = vsel %vm1437, %v4371, 0.0
    %4624 = vadd.xlane.f32.xlu0 %v4623
    %v4625 = vpop.xlane.xlu0 %4624
    %v4626 = vsel %vm1437, %v4373, 0.0
    %4627 = vadd.xlane.f32.xlu0 %v4626
    %v4628 = vpop.xlane.xlu0 %4627
    %v4629 = vsel %vm1437, %v4375, 0.0
    %4630 = vadd.xlane.f32.xlu0 %v4629
    %v4631 = vpop.xlane.xlu0 %4630
    %v4632 = vsel %vm1437, %v4377, 0.0
    %4633 = vadd.xlane.f32.xlu0 %v4632
    %v4634 = vpop.xlane.xlu0 %4633
    %v4635 = vsel %vm1437, %v4379, 0.0
    %4636 = vadd.xlane.f32.xlu0 %v4635
    %v4637 = vpop.xlane.xlu0 %4636
    %v4638 = vsel %vm1437, %v4381, 0.0
    %4639 = vadd.xlane.f32.xlu0 %v4638
    %v4640 = vpop.xlane.xlu0 %4639
    %v4641 = vsel %vm1437, %v4383, 0.0
    %4642 = vadd.xlane.f32.xlu0 %v4641
    %v4643 = vpop.xlane.xlu0 %4642
    %v4644 = vsel %vm1437, %v4385, 0.0
    %4645 = vadd.xlane.f32.xlu0 %v4644
    %v4646 = vpop.xlane.xlu0 %4645
    %v4647 = vsel %vm1437, %v4387, 0.0
    %4648 = vadd.xlane.f32.xlu0 %v4647
    %v4649 = vpop.xlane.xlu0 %4648
    %v4650 = vsel %vm1437, %v4389, 0.0
    %4651 = vadd.xlane.f32.xlu0 %v4650
    %v4652 = vpop.xlane.xlu0 %4651
    %v4653 = vsel %vm1437, %v4391, 0.0
    %4654 = vadd.xlane.f32.xlu0 %v4653
    %v4655 = vpop.xlane.xlu0 %4654
    %v4656 = vsel %vm1437, %v4393, 0.0
    %4657 = vadd.xlane.f32.xlu0 %v4656
    %v4658 = vpop.xlane.xlu0 %4657
    %v4659 = vsel %vm1437, %v4395, 0.0
    %4660 = vadd.xlane.f32.xlu0 %v4659
    %v4661 = vpop.xlane.xlu0 %4660
    %v4662 = vsel %vm1437, %v4397, 0.0
    %4663 = vadd.xlane.f32.xlu0 %v4662
    %v4664 = vpop.xlane.xlu0 %4663
    %v4665 = vsel %vm1437, %v4399, 0.0
    %4666 = vadd.xlane.f32.xlu0 %v4665
    %v4667 = vpop.xlane.xlu0 %4666
    %v4668 = vsel %vm1437, %v4401, 0.0
    %4669 = vadd.xlane.f32.xlu0 %v4668
    %v4670 = vpop.xlane.xlu0 %4669
    %v4671 = vsel %vm1437, %v4403, 0.0
    %4672 = vadd.xlane.f32.xlu0 %v4671
    %v4673 = vpop.xlane.xlu0 %4672
    %v4674 = vsel %vm1437, %v4405, 0.0
    %4675 = vadd.xlane.f32.xlu0 %v4674
    %v4676 = vpop.xlane.xlu0 %4675
    %v4677 = vsel %vm1437, %v4407, 0.0
    %4678 = vadd.xlane.f32.xlu0 %v4677
    %v4679 = vpop.xlane.xlu0 %4678
    %v4680 = vsel %vm1437, %v4409, 0.0
    %4681 = vadd.xlane.f32.xlu0 %v4680
    %v4682 = vpop.xlane.xlu0 %4681
    %v4683 = vsel %vm1437, %v4411, 0.0
    %4684 = vadd.xlane.f32.xlu0 %v4683
    %v4685 = vpop.xlane.xlu0 %4684
    %v4686 = vsel %vm1437, %v4413, 0.0
    %4687 = vadd.xlane.f32.xlu0 %v4686
    %v4688 = vpop.xlane.xlu0 %4687
    %v4689 = vsel %vm1437, %v4415, 0.0
    %4690 = vadd.xlane.f32.xlu0 %v4689
    %v4691 = vpop.xlane.xlu0 %4690
    %v4692 = vsel %vm1437, %v4417, 0.0
    %4693 = vadd.xlane.f32.xlu0 %v4692
    %v4694 = vpop.xlane.xlu0 %4693
    %v4695 = vsel %vm1437, %v4419, 0.0
    %4696 = vadd.xlane.f32.xlu0 %v4695
    %v4697 = vpop.xlane.xlu0 %4696
    %v4698 = vsel %vm1437, %v4421, 0.0
    %4699 = vadd.xlane.f32.xlu0 %v4698
    %v4700 = vpop.xlane.xlu0 %4699
    %v4701 = vsel %vm1437, %v4423, 0.0
    %4702 = vadd.xlane.f32.xlu0 %v4701
    %v4703 = vpop.xlane.xlu0 %4702
    %v4704 = vsel %vm1437, %v4425, 0.0
    %4705 = vadd.xlane.f32.xlu0 %v4704
    %v4706 = vpop.xlane.xlu0 %4705
    %v4707 = vsel %vm1437, %v4427, 0.0
    %4708 = vadd.xlane.f32.xlu0 %v4707
    %v4709 = vpop.xlane.xlu0 %4708
    %v4710 = vsel %vm1437, %v4429, 0.0
    %4711 = vadd.xlane.f32.xlu0 %v4710
    %v4712 = vpop.xlane.xlu0 %4711
    %v4713 = vsel %vm1437, %v4431, 0.0
    %4714 = vadd.xlane.f32.xlu0 %v4713
    %v4715 = vpop.xlane.xlu0 %4714
    %v4716 = vsel %vm1437, %v4433, 0.0
    %4717 = vadd.xlane.f32.xlu0 %v4716
    %v4718 = vpop.xlane.xlu0 %4717
    %v4719 = vsel %vm1437, %v4435, 0.0
    %4720 = vadd.xlane.f32.xlu0 %v4719
    %v4721 = vpop.xlane.xlu0 %4720
    %v4722 = vsel %vm1437, %v4437, 0.0
    %4723 = vadd.xlane.f32.xlu0 %v4722
    %v4724 = vpop.xlane.xlu0 %4723
    %v4725 = vsel %vm1437, %v4439, 0.0
    %4726 = vadd.xlane.f32.xlu0 %v4725
    %v4727 = vpop.xlane.xlu0 %4726
    %v4731 = vperm.slane %v141, 0
    %v4732 = vlaneseq
    %v4733 = vshrl.u32 %v4732, 7
    %4735 = vset.pattern.permute.xlu0 %v4733
    %4736 = vperm.xlu0 %4735, %v4731
    %v4737 = vpop.permute.xlu0 %4736
    %v4738 = vlaneseq
    %v4739 = vshrl.u32 %v4738, 7
    %v4740 = vadd.s32 %v4739, 8
    %4741 = vset.pattern.permute.xlu0 %v4740
    %4742 = vperm.xlu0 %4741, %v4731
    %v4743 = vpop.permute.xlu0 %4742
    %v4744 = vlaneseq
    %v4745 = vshrl.u32 %v4744, 7
    %v4746 = vadd.s32 %v4745, 16
    %4747 = vset.pattern.permute.xlu0 %v4746
    %4748 = vperm.xlu0 %4747, %v4731
    %v4749 = vpop.permute.xlu0 %4748
    %v4750 = vperm.slane %v141, 1
    %v4751 = vlaneseq
    %v4752 = vshrl.u32 %v4751, 7
    %4754 = vset.pattern.permute.xlu0 %v4752
    %4755 = vperm.xlu0 %4754, %v4750
    %v4756 = vpop.permute.xlu0 %4755
    %v4757 = vlaneseq
    %v4758 = vshrl.u32 %v4757, 7
    %v4759 = vadd.s32 %v4758, 8
    %4760 = vset.pattern.permute.xlu0 %v4759
    %4761 = vperm.xlu0 %4760, %v4750
    %v4762 = vpop.permute.xlu0 %4761
    %v4763 = vlaneseq
    %v4764 = vshrl.u32 %v4763, 7
    %v4765 = vadd.s32 %v4764, 16
    %4766 = vset.pattern.permute.xlu0 %v4765
    %4767 = vperm.xlu0 %4766, %v4750
    %v4768 = vpop.permute.xlu0 %4767
    %v4769 = vperm.slane %v141, 2
    %v4770 = vlaneseq
    %v4771 = vshrl.u32 %v4770, 7
    %4773 = vset.pattern.permute.xlu0 %v4771
    %4774 = vperm.xlu0 %4773, %v4769
    %v4775 = vpop.permute.xlu0 %4774
    %v4776 = vlaneseq
    %v4777 = vshrl.u32 %v4776, 7
    %v4778 = vadd.s32 %v4777, 8
    %4779 = vset.pattern.permute.xlu0 %v4778
    %4780 = vperm.xlu0 %4779, %v4769
    %v4781 = vpop.permute.xlu0 %4780
    %v4782 = vlaneseq
    %v4783 = vshrl.u32 %v4782, 7
    %v4784 = vadd.s32 %v4783, 16
    %4785 = vset.pattern.permute.xlu0 %v4784
    %4786 = vperm.xlu0 %4785, %v4769
    %v4787 = vpop.permute.xlu0 %4786
    %v4788 = vperm.slane %v141, 3
    %v4789 = vlaneseq
    %v4790 = vshrl.u32 %v4789, 7
    %4792 = vset.pattern.permute.xlu0 %v4790
    %4793 = vperm.xlu0 %4792, %v4788
    %v4794 = vpop.permute.xlu0 %4793
    %v4795 = vlaneseq
    %v4796 = vshrl.u32 %v4795, 7
    %v4797 = vadd.s32 %v4796, 8
    %4798 = vset.pattern.permute.xlu0 %v4797
    %4799 = vperm.xlu0 %4798, %v4788
    %v4800 = vpop.permute.xlu0 %4799
    %v4801 = vlaneseq
    %v4802 = vshrl.u32 %v4801, 7
    %v4803 = vadd.s32 %v4802, 16
    %4804 = vset.pattern.permute.xlu0 %v4803
    %4805 = vperm.xlu0 %4804, %v4788
    %v4806 = vpop.permute.xlu0 %4805
    %v4807 = vperm.slane %v141, 4
    %v4808 = vlaneseq
    %v4809 = vshrl.u32 %v4808, 7
    %4811 = vset.pattern.permute.xlu0 %v4809
    %4812 = vperm.xlu0 %4811, %v4807
    %v4813 = vpop.permute.xlu0 %4812
    %v4814 = vlaneseq
    %v4815 = vshrl.u32 %v4814, 7
    %v4816 = vadd.s32 %v4815, 8
    %4817 = vset.pattern.permute.xlu0 %v4816
    %4818 = vperm.xlu0 %4817, %v4807
    %v4819 = vpop.permute.xlu0 %4818
    %v4820 = vlaneseq
    %v4821 = vshrl.u32 %v4820, 7
    %v4822 = vadd.s32 %v4821, 16
    %4823 = vset.pattern.permute.xlu0 %v4822
    %4824 = vperm.xlu0 %4823, %v4807
    %v4825 = vpop.permute.xlu0 %4824
    %v4826 = vperm.slane %v141, 5
    %v4827 = vlaneseq
    %v4828 = vshrl.u32 %v4827, 7
    %4830 = vset.pattern.permute.xlu0 %v4828
    %4831 = vperm.xlu0 %4830, %v4826
    %v4832 = vpop.permute.xlu0 %4831
    %v4833 = vlaneseq
    %v4834 = vshrl.u32 %v4833, 7
    %v4835 = vadd.s32 %v4834, 8
    %4836 = vset.pattern.permute.xlu0 %v4835
    %4837 = vperm.xlu0 %4836, %v4826
    %v4838 = vpop.permute.xlu0 %4837
    %v4839 = vlaneseq
    %v4840 = vshrl.u32 %v4839, 7
    %v4841 = vadd.s32 %v4840, 16
    %4842 = vset.pattern.permute.xlu0 %v4841
    %4843 = vperm.xlu0 %4842, %v4826
    %v4844 = vpop.permute.xlu0 %4843
    %v4845 = vperm.slane %v141, 6
    %v4846 = vlaneseq
    %v4847 = vshrl.u32 %v4846, 7
    %4849 = vset.pattern.permute.xlu0 %v4847
    %4850 = vperm.xlu0 %4849, %v4845
    %v4851 = vpop.permute.xlu0 %4850
    %v4852 = vlaneseq
    %v4853 = vshrl.u32 %v4852, 7
    %v4854 = vadd.s32 %v4853, 8
    %4855 = vset.pattern.permute.xlu0 %v4854
    %4856 = vperm.xlu0 %4855, %v4845
    %v4857 = vpop.permute.xlu0 %4856
    %v4858 = vlaneseq
    %v4859 = vshrl.u32 %v4858, 7
    %v4860 = vadd.s32 %v4859, 16
    %4861 = vset.pattern.permute.xlu0 %v4860
    %4862 = vperm.xlu0 %4861, %v4845
    %v4863 = vpop.permute.xlu0 %4862
    %v4864 = vperm.slane %v141, 7
    %v4865 = vlaneseq
    %v4866 = vshrl.u32 %v4865, 7
    %4868 = vset.pattern.permute.xlu0 %v4866
    %4869 = vperm.xlu0 %4868, %v4864
    %v4870 = vpop.permute.xlu0 %4869
    %v4871 = vlaneseq
    %v4872 = vshrl.u32 %v4871, 7
    %v4873 = vadd.s32 %v4872, 8
    %4874 = vset.pattern.permute.xlu0 %v4873
    %4875 = vperm.xlu0 %4874, %v4864
    %v4876 = vpop.permute.xlu0 %4875
    %v4877 = vlaneseq
    %v4878 = vshrl.u32 %v4877, 7
    %v4879 = vadd.s32 %v4878, 16
    %4880 = vset.pattern.permute.xlu0 %v4879
    %4881 = vperm.xlu0 %4880, %v4864
    %v4882 = vpop.permute.xlu0 %4881
    %v4883 = vperm.slane %v142, 0
    %v4884 = vlaneseq
    %v4885 = vshrl.u32 %v4884, 7
    %4887 = vset.pattern.permute.xlu0 %v4885
    %4888 = vperm.xlu0 %4887, %v4883
    %v4889 = vpop.permute.xlu0 %4888
    %v4890 = vlaneseq
    %v4891 = vshrl.u32 %v4890, 7
    %v4892 = vadd.s32 %v4891, 8
    %4893 = vset.pattern.permute.xlu0 %v4892
    %4894 = vperm.xlu0 %4893, %v4883
    %v4895 = vpop.permute.xlu0 %4894
    %v4896 = vlaneseq
    %v4897 = vshrl.u32 %v4896, 7
    %v4898 = vadd.s32 %v4897, 16
    %4899 = vset.pattern.permute.xlu0 %v4898
    %4900 = vperm.xlu0 %4899, %v4883
    %v4901 = vpop.permute.xlu0 %4900
    %v4902 = vperm.slane %v142, 1
    %v4903 = vlaneseq
    %v4904 = vshrl.u32 %v4903, 7
    %4906 = vset.pattern.permute.xlu0 %v4904
    %4907 = vperm.xlu0 %4906, %v4902
    %v4908 = vpop.permute.xlu0 %4907
    %v4909 = vlaneseq
    %v4910 = vshrl.u32 %v4909, 7
    %v4911 = vadd.s32 %v4910, 8
    %4912 = vset.pattern.permute.xlu0 %v4911
    %4913 = vperm.xlu0 %4912, %v4902
    %v4914 = vpop.permute.xlu0 %4913
    %v4915 = vlaneseq
    %v4916 = vshrl.u32 %v4915, 7
    %v4917 = vadd.s32 %v4916, 16
    %4918 = vset.pattern.permute.xlu0 %v4917
    %4919 = vperm.xlu0 %4918, %v4902
    %v4920 = vpop.permute.xlu0 %4919
    %v4921 = vperm.slane %v142, 2
    %v4922 = vlaneseq
    %v4923 = vshrl.u32 %v4922, 7
    %4925 = vset.pattern.permute.xlu0 %v4923
    %4926 = vperm.xlu0 %4925, %v4921
    %v4927 = vpop.permute.xlu0 %4926
    %v4928 = vlaneseq
    %v4929 = vshrl.u32 %v4928, 7
    %v4930 = vadd.s32 %v4929, 8
    %4931 = vset.pattern.permute.xlu0 %v4930
    %4932 = vperm.xlu0 %4931, %v4921
    %v4933 = vpop.permute.xlu0 %4932
    %v4934 = vlaneseq
    %v4935 = vshrl.u32 %v4934, 7
    %v4936 = vadd.s32 %v4935, 16
    %4937 = vset.pattern.permute.xlu0 %v4936
    %4938 = vperm.xlu0 %4937, %v4921
    %v4939 = vpop.permute.xlu0 %4938
    %v4940 = vperm.slane %v142, 3
    %v4941 = vlaneseq
    %v4942 = vshrl.u32 %v4941, 7
    %4944 = vset.pattern.permute.xlu0 %v4942
    %4945 = vperm.xlu0 %4944, %v4940
    %v4946 = vpop.permute.xlu0 %4945
    %v4947 = vlaneseq
    %v4948 = vshrl.u32 %v4947, 7
    %v4949 = vadd.s32 %v4948, 8
    %4950 = vset.pattern.permute.xlu0 %v4949
    %4951 = vperm.xlu0 %4950, %v4940
    %v4952 = vpop.permute.xlu0 %4951
    %v4953 = vlaneseq
    %v4954 = vshrl.u32 %v4953, 7
    %v4955 = vadd.s32 %v4954, 16
    %4956 = vset.pattern.permute.xlu0 %v4955
    %4957 = vperm.xlu0 %4956, %v4940
    %v4958 = vpop.permute.xlu0 %4957
    %v4959 = vperm.slane %v142, 4
    %v4960 = vlaneseq
    %v4961 = vshrl.u32 %v4960, 7
    %4963 = vset.pattern.permute.xlu0 %v4961
    %4964 = vperm.xlu0 %4963, %v4959
    %v4965 = vpop.permute.xlu0 %4964
    %v4966 = vlaneseq
    %v4967 = vshrl.u32 %v4966, 7
    %v4968 = vadd.s32 %v4967, 8
    %4969 = vset.pattern.permute.xlu0 %v4968
    %4970 = vperm.xlu0 %4969, %v4959
    %v4971 = vpop.permute.xlu0 %4970
    %v4972 = vlaneseq
    %v4973 = vshrl.u32 %v4972, 7
    %v4974 = vadd.s32 %v4973, 16
    %4975 = vset.pattern.permute.xlu0 %v4974
    %4976 = vperm.xlu0 %4975, %v4959
    %v4977 = vpop.permute.xlu0 %4976
    %v4978 = vperm.slane %v142, 5
    %v4979 = vlaneseq
    %v4980 = vshrl.u32 %v4979, 7
    %4982 = vset.pattern.permute.xlu0 %v4980
    %4983 = vperm.xlu0 %4982, %v4978
    %v4984 = vpop.permute.xlu0 %4983
    %v4985 = vlaneseq
    %v4986 = vshrl.u32 %v4985, 7
    %v4987 = vadd.s32 %v4986, 8
    %4988 = vset.pattern.permute.xlu0 %v4987
    %4989 = vperm.xlu0 %4988, %v4978
    %v4990 = vpop.permute.xlu0 %4989
    %v4991 = vlaneseq
    %v4992 = vshrl.u32 %v4991, 7
    %v4993 = vadd.s32 %v4992, 16
    %4994 = vset.pattern.permute.xlu0 %v4993
    %4995 = vperm.xlu0 %4994, %v4978
    %v4996 = vpop.permute.xlu0 %4995
    %v4997 = vperm.slane %v142, 6
    %v4998 = vlaneseq
    %v4999 = vshrl.u32 %v4998, 7
    %5001 = vset.pattern.permute.xlu0 %v4999
    %5002 = vperm.xlu0 %5001, %v4997
    %v5003 = vpop.permute.xlu0 %5002
    %v5004 = vlaneseq
    %v5005 = vshrl.u32 %v5004, 7
    %v5006 = vadd.s32 %v5005, 8
    %5007 = vset.pattern.permute.xlu0 %v5006
    %5008 = vperm.xlu0 %5007, %v4997
    %v5009 = vpop.permute.xlu0 %5008
    %v5010 = vlaneseq
    %v5011 = vshrl.u32 %v5010, 7
    %v5012 = vadd.s32 %v5011, 16
    %5013 = vset.pattern.permute.xlu0 %v5012
    %5014 = vperm.xlu0 %5013, %v4997
    %v5015 = vpop.permute.xlu0 %5014
    %v5016 = vperm.slane %v142, 7
    %v5017 = vlaneseq
    %v5018 = vshrl.u32 %v5017, 7
    %5020 = vset.pattern.permute.xlu0 %v5018
    %5021 = vperm.xlu0 %5020, %v5016
    %v5022 = vpop.permute.xlu0 %5021
    %v5023 = vlaneseq
    %v5024 = vshrl.u32 %v5023, 7
    %v5025 = vadd.s32 %v5024, 8
    %5026 = vset.pattern.permute.xlu0 %v5025
    %5027 = vperm.xlu0 %5026, %v5016
    %v5028 = vpop.permute.xlu0 %5027
    %v5029 = vlaneseq
    %v5030 = vshrl.u32 %v5029, 7
    %v5031 = vadd.s32 %v5030, 16
    %5032 = vset.pattern.permute.xlu0 %v5031
    %5033 = vperm.xlu0 %5032, %v5016
    %v5034 = vpop.permute.xlu0 %5033
    %v5035 = vperm.slane %v143, 0
    %v5036 = vlaneseq
    %v5037 = vshrl.u32 %v5036, 7
    %5039 = vset.pattern.permute.xlu0 %v5037
    %5040 = vperm.xlu0 %5039, %v5035
    %v5041 = vpop.permute.xlu0 %5040
    %v5042 = vlaneseq
    %v5043 = vshrl.u32 %v5042, 7
    %v5044 = vadd.s32 %v5043, 8
    %5045 = vset.pattern.permute.xlu0 %v5044
    %5046 = vperm.xlu0 %5045, %v5035
    %v5047 = vpop.permute.xlu0 %5046
    %v5048 = vlaneseq
    %v5049 = vshrl.u32 %v5048, 7
    %v5050 = vadd.s32 %v5049, 16
    %5051 = vset.pattern.permute.xlu0 %v5050
    %5052 = vperm.xlu0 %5051, %v5035
    %v5053 = vpop.permute.xlu0 %5052
    %v5054 = vperm.slane %v143, 1
    %v5055 = vlaneseq
    %v5056 = vshrl.u32 %v5055, 7
    %5058 = vset.pattern.permute.xlu0 %v5056
    %5059 = vperm.xlu0 %5058, %v5054
    %v5060 = vpop.permute.xlu0 %5059
    %v5061 = vlaneseq
    %v5062 = vshrl.u32 %v5061, 7
    %v5063 = vadd.s32 %v5062, 8
    %5064 = vset.pattern.permute.xlu0 %v5063
    %5065 = vperm.xlu0 %5064, %v5054
    %v5066 = vpop.permute.xlu0 %5065
    %v5067 = vlaneseq
    %v5068 = vshrl.u32 %v5067, 7
    %v5069 = vadd.s32 %v5068, 16
    %5070 = vset.pattern.permute.xlu0 %v5069
    %5071 = vperm.xlu0 %5070, %v5054
    %v5072 = vpop.permute.xlu0 %5071
    %v5073 = vperm.slane %v143, 2
    %v5074 = vlaneseq
    %v5075 = vshrl.u32 %v5074, 7
    %5077 = vset.pattern.permute.xlu0 %v5075
    %5078 = vperm.xlu0 %5077, %v5073
    %v5079 = vpop.permute.xlu0 %5078
    %v5080 = vlaneseq
    %v5081 = vshrl.u32 %v5080, 7
    %v5082 = vadd.s32 %v5081, 8
    %5083 = vset.pattern.permute.xlu0 %v5082
    %5084 = vperm.xlu0 %5083, %v5073
    %v5085 = vpop.permute.xlu0 %5084
    %v5086 = vlaneseq
    %v5087 = vshrl.u32 %v5086, 7
    %v5088 = vadd.s32 %v5087, 16
    %5089 = vset.pattern.permute.xlu0 %v5088
    %5090 = vperm.xlu0 %5089, %v5073
    %v5091 = vpop.permute.xlu0 %5090
    %v5092 = vperm.slane %v143, 3
    %v5093 = vlaneseq
    %v5094 = vshrl.u32 %v5093, 7
    %5096 = vset.pattern.permute.xlu0 %v5094
    %5097 = vperm.xlu0 %5096, %v5092
    %v5098 = vpop.permute.xlu0 %5097
    %v5099 = vlaneseq
    %v5100 = vshrl.u32 %v5099, 7
    %v5101 = vadd.s32 %v5100, 8
    %5102 = vset.pattern.permute.xlu0 %v5101
    %5103 = vperm.xlu0 %5102, %v5092
    %v5104 = vpop.permute.xlu0 %5103
    %v5105 = vlaneseq
    %v5106 = vshrl.u32 %v5105, 7
    %v5107 = vadd.s32 %v5106, 16
    %5108 = vset.pattern.permute.xlu0 %v5107
    %5109 = vperm.xlu0 %5108, %v5092
    %v5110 = vpop.permute.xlu0 %5109
    %v5111 = vperm.slane %v143, 4
    %v5112 = vlaneseq
    %v5113 = vshrl.u32 %v5112, 7
    %5115 = vset.pattern.permute.xlu0 %v5113
    %5116 = vperm.xlu0 %5115, %v5111
    %v5117 = vpop.permute.xlu0 %5116
    %v5118 = vlaneseq
    %v5119 = vshrl.u32 %v5118, 7
    %v5120 = vadd.s32 %v5119, 8
    %5121 = vset.pattern.permute.xlu0 %v5120
    %5122 = vperm.xlu0 %5121, %v5111
    %v5123 = vpop.permute.xlu0 %5122
    %v5124 = vlaneseq
    %v5125 = vshrl.u32 %v5124, 7
    %v5126 = vadd.s32 %v5125, 16
    %5127 = vset.pattern.permute.xlu0 %v5126
    %5128 = vperm.xlu0 %5127, %v5111
    %v5129 = vpop.permute.xlu0 %5128
    %v5130 = vperm.slane %v143, 5
    %v5131 = vlaneseq
    %v5132 = vshrl.u32 %v5131, 7
    %5134 = vset.pattern.permute.xlu0 %v5132
    %5135 = vperm.xlu0 %5134, %v5130
    %v5136 = vpop.permute.xlu0 %5135
    %v5137 = vlaneseq
    %v5138 = vshrl.u32 %v5137, 7
    %v5139 = vadd.s32 %v5138, 8
    %5140 = vset.pattern.permute.xlu0 %v5139
    %5141 = vperm.xlu0 %5140, %v5130
    %v5142 = vpop.permute.xlu0 %5141
    %v5143 = vlaneseq
    %v5144 = vshrl.u32 %v5143, 7
    %v5145 = vadd.s32 %v5144, 16
    %5146 = vset.pattern.permute.xlu0 %v5145
    %5147 = vperm.xlu0 %5146, %v5130
    %v5148 = vpop.permute.xlu0 %5147
    %v5149 = vperm.slane %v143, 6
    %v5150 = vlaneseq
    %v5151 = vshrl.u32 %v5150, 7
    %5153 = vset.pattern.permute.xlu0 %v5151
    %5154 = vperm.xlu0 %5153, %v5149
    %v5155 = vpop.permute.xlu0 %5154
    %v5156 = vlaneseq
    %v5157 = vshrl.u32 %v5156, 7
    %v5158 = vadd.s32 %v5157, 8
    %5159 = vset.pattern.permute.xlu0 %v5158
    %5160 = vperm.xlu0 %5159, %v5149
    %v5161 = vpop.permute.xlu0 %5160
    %v5162 = vlaneseq
    %v5163 = vshrl.u32 %v5162, 7
    %v5164 = vadd.s32 %v5163, 16
    %5165 = vset.pattern.permute.xlu0 %v5164
    %5166 = vperm.xlu0 %5165, %v5149
    %v5167 = vpop.permute.xlu0 %5166
    %v5168 = vperm.slane %v143, 7
    %v5169 = vlaneseq
    %v5170 = vshrl.u32 %v5169, 7
    %5172 = vset.pattern.permute.xlu0 %v5170
    %5173 = vperm.xlu0 %5172, %v5168
    %v5174 = vpop.permute.xlu0 %5173
    %v5175 = vlaneseq
    %v5176 = vshrl.u32 %v5175, 7
    %v5177 = vadd.s32 %v5176, 8
    %5178 = vset.pattern.permute.xlu0 %v5177
    %5179 = vperm.xlu0 %5178, %v5168
    %v5180 = vpop.permute.xlu0 %5179
    %v5181 = vlaneseq
    %v5182 = vshrl.u32 %v5181, 7
    %v5183 = vadd.s32 %v5182, 16
    %5184 = vset.pattern.permute.xlu0 %v5183
    %5185 = vperm.xlu0 %5184, %v5168
    %v5186 = vpop.permute.xlu0 %5185
    %v5259 = vadd.f32 %v4514, %v4737
    %v5260 = vadd.f32 %v4517, %v4743
    %v5261 = vadd.f32 %v4520, %v4749
    %v5262 = vadd.f32 %v4523, %v4756
    %v5263 = vadd.f32 %v4526, %v4762
    %v5264 = vadd.f32 %v4529, %v4768
    %v5265 = vadd.f32 %v4532, %v4775
    %v5266 = vadd.f32 %v4535, %v4781
    %v5267 = vadd.f32 %v4538, %v4787
    %v5268 = vadd.f32 %v4541, %v4794
    %v5269 = vadd.f32 %v4544, %v4800
    %v5270 = vadd.f32 %v4547, %v4806
    %v5271 = vadd.f32 %v4550, %v4813
    %v5272 = vadd.f32 %v4553, %v4819
    %v5273 = vadd.f32 %v4556, %v4825
    %v5274 = vadd.f32 %v4559, %v4832
    %v5275 = vadd.f32 %v4562, %v4838
    %v5276 = vadd.f32 %v4565, %v4844
    %v5277 = vadd.f32 %v4568, %v4851
    %v5278 = vadd.f32 %v4571, %v4857
    %v5279 = vadd.f32 %v4574, %v4863
    %v5280 = vadd.f32 %v4577, %v4870
    %v5281 = vadd.f32 %v4580, %v4876
    %v5282 = vadd.f32 %v4583, %v4882
    %v5283 = vadd.f32 %v4586, %v4889
    %v5284 = vadd.f32 %v4589, %v4895
    %v5285 = vadd.f32 %v4592, %v4901
    %v5286 = vadd.f32 %v4595, %v4908
    %v5287 = vadd.f32 %v4598, %v4914
    %v5288 = vadd.f32 %v4601, %v4920
    %v5289 = vadd.f32 %v4604, %v4927
    %v5290 = vadd.f32 %v4607, %v4933
    %v5291 = vadd.f32 %v4610, %v4939
    %v5292 = vadd.f32 %v4613, %v4946
    %v5293 = vadd.f32 %v4616, %v4952
    %v5294 = vadd.f32 %v4619, %v4958
    %v5295 = vadd.f32 %v4622, %v4965
    %v5296 = vadd.f32 %v4625, %v4971
    %v5297 = vadd.f32 %v4628, %v4977
    %v5298 = vadd.f32 %v4631, %v4984
    %v5299 = vadd.f32 %v4634, %v4990
    %v5300 = vadd.f32 %v4637, %v4996
    %v5301 = vadd.f32 %v4640, %v5003
    %v5302 = vadd.f32 %v4643, %v5009
    %v5303 = vadd.f32 %v4646, %v5015
    %v5304 = vadd.f32 %v4649, %v5022
    %v5305 = vadd.f32 %v4652, %v5028
    %v5306 = vadd.f32 %v4655, %v5034
    %v5307 = vadd.f32 %v4658, %v5041
    %v5308 = vadd.f32 %v4661, %v5047
    %v5309 = vadd.f32 %v4664, %v5053
    %v5310 = vadd.f32 %v4667, %v5060
    %v5311 = vadd.f32 %v4670, %v5066
    %v5312 = vadd.f32 %v4673, %v5072
    %v5313 = vadd.f32 %v4676, %v5079
    %v5314 = vadd.f32 %v4679, %v5085
    %v5315 = vadd.f32 %v4682, %v5091
    %v5316 = vadd.f32 %v4685, %v5098
    %v5317 = vadd.f32 %v4688, %v5104
    %v5318 = vadd.f32 %v4691, %v5110
    %v5319 = vadd.f32 %v4694, %v5117
    %v5320 = vadd.f32 %v4697, %v5123
    %v5321 = vadd.f32 %v4700, %v5129
    %v5322 = vadd.f32 %v4703, %v5136
    %v5323 = vadd.f32 %v4706, %v5142
    %v5324 = vadd.f32 %v4709, %v5148
    %v5325 = vadd.f32 %v4712, %v5155
    %v5326 = vadd.f32 %v4715, %v5161
    %v5327 = vadd.f32 %v4718, %v5167
    %v5328 = vadd.f32 %v4721, %v5174
    %v5329 = vadd.f32 %v4724, %v5180
    %v5330 = vadd.f32 %v4727, %v5186
    %5403 = vset.pattern.permute.xlu0 0
    %5404 = vperm.xlu0 %5403, %v5259
    %v5405 = vpop.permute.xlu0 %5404
    %5406 = vset.pattern.permute.xlu0 0
    %5407 = vperm.xlu0 %5406, %v5260
    %v5408 = vpop.permute.xlu0 %5407
    %5409 = vset.pattern.permute.xlu0 0
    %5410 = vperm.xlu0 %5409, %v5261
    %v5411 = vpop.permute.xlu0 %5410
    %5412 = vset.pattern.permute.xlu0 0
    %5413 = vperm.xlu0 %5412, %v5262
    %v5414 = vpop.permute.xlu0 %5413
    %5415 = vset.pattern.permute.xlu0 0
    %5416 = vperm.xlu0 %5415, %v5263
    %v5417 = vpop.permute.xlu0 %5416
    %5418 = vset.pattern.permute.xlu0 0
    %5419 = vperm.xlu0 %5418, %v5264
    %v5420 = vpop.permute.xlu0 %5419
    %5421 = vset.pattern.permute.xlu0 0
    %5422 = vperm.xlu0 %5421, %v5265
    %v5423 = vpop.permute.xlu0 %5422
    %5424 = vset.pattern.permute.xlu0 0
    %5425 = vperm.xlu0 %5424, %v5266
    %v5426 = vpop.permute.xlu0 %5425
    %5427 = vset.pattern.permute.xlu0 0
    %5428 = vperm.xlu0 %5427, %v5267
    %v5429 = vpop.permute.xlu0 %5428
    %5430 = vset.pattern.permute.xlu0 0
    %5431 = vperm.xlu0 %5430, %v5268
    %v5432 = vpop.permute.xlu0 %5431
    %5433 = vset.pattern.permute.xlu0 0
    %5434 = vperm.xlu0 %5433, %v5269
    %v5435 = vpop.permute.xlu0 %5434
    %5436 = vset.pattern.permute.xlu0 0
    %5437 = vperm.xlu0 %5436, %v5270
    %v5438 = vpop.permute.xlu0 %5437
    %5439 = vset.pattern.permute.xlu0 0
    %5440 = vperm.xlu0 %5439, %v5271
    %v5441 = vpop.permute.xlu0 %5440
    %5442 = vset.pattern.permute.xlu0 0
    %5443 = vperm.xlu0 %5442, %v5272
    %v5444 = vpop.permute.xlu0 %5443
    %5445 = vset.pattern.permute.xlu0 0
    %5446 = vperm.xlu0 %5445, %v5273
    %v5447 = vpop.permute.xlu0 %5446
    %5448 = vset.pattern.permute.xlu0 0
    %5449 = vperm.xlu0 %5448, %v5274
    %v5450 = vpop.permute.xlu0 %5449
    %5451 = vset.pattern.permute.xlu0 0
    %5452 = vperm.xlu0 %5451, %v5275
    %v5453 = vpop.permute.xlu0 %5452
    %5454 = vset.pattern.permute.xlu0 0
    %5455 = vperm.xlu0 %5454, %v5276
    %v5456 = vpop.permute.xlu0 %5455
    %5457 = vset.pattern.permute.xlu0 0
    %5458 = vperm.xlu0 %5457, %v5277
    %v5459 = vpop.permute.xlu0 %5458
    %5460 = vset.pattern.permute.xlu0 0
    %5461 = vperm.xlu0 %5460, %v5278
    %v5462 = vpop.permute.xlu0 %5461
    %5463 = vset.pattern.permute.xlu0 0
    %5464 = vperm.xlu0 %5463, %v5279
    %v5465 = vpop.permute.xlu0 %5464
    %5466 = vset.pattern.permute.xlu0 0
    %5467 = vperm.xlu0 %5466, %v5280
    %v5468 = vpop.permute.xlu0 %5467
    %5469 = vset.pattern.permute.xlu0 0
    %5470 = vperm.xlu0 %5469, %v5281
    %v5471 = vpop.permute.xlu0 %5470
    %5472 = vset.pattern.permute.xlu0 0
    %5473 = vperm.xlu0 %5472, %v5282
    %v5474 = vpop.permute.xlu0 %5473
    %5475 = vset.pattern.permute.xlu0 0
    %5476 = vperm.xlu0 %5475, %v5283
    %v5477 = vpop.permute.xlu0 %5476
    %5478 = vset.pattern.permute.xlu0 0
    %5479 = vperm.xlu0 %5478, %v5284
    %v5480 = vpop.permute.xlu0 %5479
    %5481 = vset.pattern.permute.xlu0 0
    %5482 = vperm.xlu0 %5481, %v5285
    %v5483 = vpop.permute.xlu0 %5482
    %5484 = vset.pattern.permute.xlu0 0
    %5485 = vperm.xlu0 %5484, %v5286
    %v5486 = vpop.permute.xlu0 %5485
    %5487 = vset.pattern.permute.xlu0 0
    %5488 = vperm.xlu0 %5487, %v5287
    %v5489 = vpop.permute.xlu0 %5488
    %5490 = vset.pattern.permute.xlu0 0
    %5491 = vperm.xlu0 %5490, %v5288
    %v5492 = vpop.permute.xlu0 %5491
    %5493 = vset.pattern.permute.xlu0 0
    %5494 = vperm.xlu0 %5493, %v5289
    %v5495 = vpop.permute.xlu0 %5494
    %5496 = vset.pattern.permute.xlu0 0
    %5497 = vperm.xlu0 %5496, %v5290
    %v5498 = vpop.permute.xlu0 %5497
    %5499 = vset.pattern.permute.xlu0 0
    %5500 = vperm.xlu0 %5499, %v5291
    %v5501 = vpop.permute.xlu0 %5500
    %5502 = vset.pattern.permute.xlu0 0
    %5503 = vperm.xlu0 %5502, %v5292
    %v5504 = vpop.permute.xlu0 %5503
    %5505 = vset.pattern.permute.xlu0 0
    %5506 = vperm.xlu0 %5505, %v5293
    %v5507 = vpop.permute.xlu0 %5506
    %5508 = vset.pattern.permute.xlu0 0
    %5509 = vperm.xlu0 %5508, %v5294
    %v5510 = vpop.permute.xlu0 %5509
    %5511 = vset.pattern.permute.xlu0 0
    %5512 = vperm.xlu0 %5511, %v5295
    %v5513 = vpop.permute.xlu0 %5512
    %5514 = vset.pattern.permute.xlu0 0
    %5515 = vperm.xlu0 %5514, %v5296
    %v5516 = vpop.permute.xlu0 %5515
    %5517 = vset.pattern.permute.xlu0 0
    %5518 = vperm.xlu0 %5517, %v5297
    %v5519 = vpop.permute.xlu0 %5518
    %5520 = vset.pattern.permute.xlu0 0
    %5521 = vperm.xlu0 %5520, %v5298
    %v5522 = vpop.permute.xlu0 %5521
    %5523 = vset.pattern.permute.xlu0 0
    %5524 = vperm.xlu0 %5523, %v5299
    %v5525 = vpop.permute.xlu0 %5524
    %5526 = vset.pattern.permute.xlu0 0
    %5527 = vperm.xlu0 %5526, %v5300
    %v5528 = vpop.permute.xlu0 %5527
    %5529 = vset.pattern.permute.xlu0 0
    %5530 = vperm.xlu0 %5529, %v5301
    %v5531 = vpop.permute.xlu0 %5530
    %5532 = vset.pattern.permute.xlu0 0
    %5533 = vperm.xlu0 %5532, %v5302
    %v5534 = vpop.permute.xlu0 %5533
    %5535 = vset.pattern.permute.xlu0 0
    %5536 = vperm.xlu0 %5535, %v5303
    %v5537 = vpop.permute.xlu0 %5536
    %5538 = vset.pattern.permute.xlu0 0
    %5539 = vperm.xlu0 %5538, %v5304
    %v5540 = vpop.permute.xlu0 %5539
    %5541 = vset.pattern.permute.xlu0 0
    %5542 = vperm.xlu0 %5541, %v5305
    %v5543 = vpop.permute.xlu0 %5542
    %5544 = vset.pattern.permute.xlu0 0
    %5545 = vperm.xlu0 %5544, %v5306
    %v5546 = vpop.permute.xlu0 %5545
    %5547 = vset.pattern.permute.xlu0 0
    %5548 = vperm.xlu0 %5547, %v5307
    %v5549 = vpop.permute.xlu0 %5548
    %5550 = vset.pattern.permute.xlu0 0
    %5551 = vperm.xlu0 %5550, %v5308
    %v5552 = vpop.permute.xlu0 %5551
    %5553 = vset.pattern.permute.xlu0 0
    %5554 = vperm.xlu0 %5553, %v5309
    %v5555 = vpop.permute.xlu0 %5554
    %5556 = vset.pattern.permute.xlu0 0
    %5557 = vperm.xlu0 %5556, %v5310
    %v5558 = vpop.permute.xlu0 %5557
    %5559 = vset.pattern.permute.xlu0 0
    %5560 = vperm.xlu0 %5559, %v5311
    %v5561 = vpop.permute.xlu0 %5560
    %5562 = vset.pattern.permute.xlu0 0
    %5563 = vperm.xlu0 %5562, %v5312
    %v5564 = vpop.permute.xlu0 %5563
    %5565 = vset.pattern.permute.xlu0 0
    %5566 = vperm.xlu0 %5565, %v5313
    %v5567 = vpop.permute.xlu0 %5566
    %5568 = vset.pattern.permute.xlu0 0
    %5569 = vperm.xlu0 %5568, %v5314
    %v5570 = vpop.permute.xlu0 %5569
    %5571 = vset.pattern.permute.xlu0 0
    %5572 = vperm.xlu0 %5571, %v5315
    %v5573 = vpop.permute.xlu0 %5572
    %5574 = vset.pattern.permute.xlu0 0
    %5575 = vperm.xlu0 %5574, %v5316
    %v5576 = vpop.permute.xlu0 %5575
    %5577 = vset.pattern.permute.xlu0 0
    %5578 = vperm.xlu0 %5577, %v5317
    %v5579 = vpop.permute.xlu0 %5578
    %5580 = vset.pattern.permute.xlu0 0
    %5581 = vperm.xlu0 %5580, %v5318
    %v5582 = vpop.permute.xlu0 %5581
    %5583 = vset.pattern.permute.xlu0 0
    %5584 = vperm.xlu0 %5583, %v5319
    %v5585 = vpop.permute.xlu0 %5584
    %5586 = vset.pattern.permute.xlu0 0
    %5587 = vperm.xlu0 %5586, %v5320
    %v5588 = vpop.permute.xlu0 %5587
    %5589 = vset.pattern.permute.xlu0 0
    %5590 = vperm.xlu0 %5589, %v5321
    %v5591 = vpop.permute.xlu0 %5590
    %5592 = vset.pattern.permute.xlu0 0
    %5593 = vperm.xlu0 %5592, %v5322
    %v5594 = vpop.permute.xlu0 %5593
    %5595 = vset.pattern.permute.xlu0 0
    %5596 = vperm.xlu0 %5595, %v5323
    %v5597 = vpop.permute.xlu0 %5596
    %5598 = vset.pattern.permute.xlu0 0
    %5599 = vperm.xlu0 %5598, %v5324
    %v5600 = vpop.permute.xlu0 %5599
    %5601 = vset.pattern.permute.xlu0 0
    %5602 = vperm.xlu0 %5601, %v5325
    %v5603 = vpop.permute.xlu0 %5602
    %5604 = vset.pattern.permute.xlu0 0
    %5605 = vperm.xlu0 %5604, %v5326
    %v5606 = vpop.permute.xlu0 %5605
    %5607 = vset.pattern.permute.xlu0 0
    %5608 = vperm.xlu0 %5607, %v5327
    %v5609 = vpop.permute.xlu0 %5608
    %5610 = vset.pattern.permute.xlu0 0
    %5611 = vperm.xlu0 %5610, %v5328
    %v5612 = vpop.permute.xlu0 %5611
    %5613 = vset.pattern.permute.xlu0 0
    %5614 = vperm.xlu0 %5613, %v5329
    %v5615 = vpop.permute.xlu0 %5614
    %5616 = vset.pattern.permute.xlu0 0
    %5617 = vperm.xlu0 %5616, %v5330
    %v5618 = vpop.permute.xlu0 %5617
    %v5619 = vperm.slane %v5405, %v2186
    %v5620 = vperm.slane %v5408, %v2188
    %v5621 = vsel %vm2190, %v5620, %v5619
    %v5622 = vadd.s32 %v2186, 4294967280
    %v5623 = vperm.slane %v5411, %v5622
    %vm5624 = vcmask 195712
    %v5625 = vsel %vm5624, %v5623, %v5621
    %v5626 = vperm.slane %v5414, %v2186
    %v5627 = vperm.slane %v5417, %v2188
    %v5628 = vsel %vm2190, %v5627, %v5626
    %v5629 = vperm.slane %v5420, %v5622
    %v5630 = vsel %vm5624, %v5629, %v5628
    %v5631 = vperm.slane %v5423, %v2186
    %v5632 = vperm.slane %v5426, %v2188
    %v5633 = vsel %vm2190, %v5632, %v5631
    %v5634 = vperm.slane %v5429, %v5622
    %v5635 = vsel %vm5624, %v5634, %v5633
    %v5636 = vperm.slane %v5432, %v2186
    %v5637 = vperm.slane %v5435, %v2188
    %v5638 = vsel %vm2190, %v5637, %v5636
    %v5639 = vperm.slane %v5438, %v5622
    %v5640 = vsel %vm5624, %v5639, %v5638
    %v5641 = vperm.slane %v5441, %v2186
    %v5642 = vperm.slane %v5444, %v2188
    %v5643 = vsel %vm2190, %v5642, %v5641
    %v5644 = vperm.slane %v5447, %v5622
    %v5645 = vsel %vm5624, %v5644, %v5643
    %v5646 = vperm.slane %v5450, %v2186
    %v5647 = vperm.slane %v5453, %v2188
    %v5648 = vsel %vm2190, %v5647, %v5646
    %v5649 = vperm.slane %v5456, %v5622
    %v5650 = vsel %vm5624, %v5649, %v5648
    %v5651 = vperm.slane %v5459, %v2186
    %v5652 = vperm.slane %v5462, %v2188
    %v5653 = vsel %vm2190, %v5652, %v5651
    %v5654 = vperm.slane %v5465, %v5622
    %v5655 = vsel %vm5624, %v5654, %v5653
    %v5656 = vperm.slane %v5468, %v2186
    %v5657 = vperm.slane %v5471, %v2188
    %v5658 = vsel %vm2190, %v5657, %v5656
    %v5659 = vperm.slane %v5474, %v5622
    %v5660 = vsel %vm5624, %v5659, %v5658
    %v5661 = vperm.slane %v5477, %v2186
    %v5662 = vperm.slane %v5480, %v2188
    %v5663 = vsel %vm2190, %v5662, %v5661
    %v5664 = vperm.slane %v5483, %v5622
    %v5665 = vsel %vm5624, %v5664, %v5663
    %v5666 = vperm.slane %v5486, %v2186
    %v5667 = vperm.slane %v5489, %v2188
    %v5668 = vsel %vm2190, %v5667, %v5666
    %v5669 = vperm.slane %v5492, %v5622
    %v5670 = vsel %vm5624, %v5669, %v5668
    %v5671 = vperm.slane %v5495, %v2186
    %v5672 = vperm.slane %v5498, %v2188
    %v5673 = vsel %vm2190, %v5672, %v5671
    %v5674 = vperm.slane %v5501, %v5622
    %v5675 = vsel %vm5624, %v5674, %v5673
    %v5676 = vperm.slane %v5504, %v2186
    %v5677 = vperm.slane %v5507, %v2188
    %v5678 = vsel %vm2190, %v5677, %v5676
    %v5679 = vperm.slane %v5510, %v5622
    %v5680 = vsel %vm5624, %v5679, %v5678
    %v5681 = vperm.slane %v5513, %v2186
    %v5682 = vperm.slane %v5516, %v2188
    %v5683 = vsel %vm2190, %v5682, %v5681
    %v5684 = vperm.slane %v5519, %v5622
    %v5685 = vsel %vm5624, %v5684, %v5683
    %v5686 = vperm.slane %v5522, %v2186
    %v5687 = vperm.slane %v5525, %v2188
    %v5688 = vsel %vm2190, %v5687, %v5686
    %v5689 = vperm.slane %v5528, %v5622
    %v5690 = vsel %vm5624, %v5689, %v5688
    %v5691 = vperm.slane %v5531, %v2186
    %v5692 = vperm.slane %v5534, %v2188
    %v5693 = vsel %vm2190, %v5692, %v5691
    %v5694 = vperm.slane %v5537, %v5622
    %v5695 = vsel %vm5624, %v5694, %v5693
    %v5696 = vperm.slane %v5540, %v2186
    %v5697 = vperm.slane %v5543, %v2188
    %v5698 = vsel %vm2190, %v5697, %v5696
    %v5699 = vperm.slane %v5546, %v5622
    %v5700 = vsel %vm5624, %v5699, %v5698
    %v5701 = vperm.slane %v5549, %v2186
    %v5702 = vperm.slane %v5552, %v2188
    %v5703 = vsel %vm2190, %v5702, %v5701
    %v5704 = vperm.slane %v5555, %v5622
    %v5705 = vsel %vm5624, %v5704, %v5703
    %v5706 = vperm.slane %v5558, %v2186
    %v5707 = vperm.slane %v5561, %v2188
    %v5708 = vsel %vm2190, %v5707, %v5706
    %v5709 = vperm.slane %v5564, %v5622
    %v5710 = vsel %vm5624, %v5709, %v5708
    %v5711 = vperm.slane %v5567, %v2186
    %v5712 = vperm.slane %v5570, %v2188
    %v5713 = vsel %vm2190, %v5712, %v5711
    %v5714 = vperm.slane %v5573, %v5622
    %v5715 = vsel %vm5624, %v5714, %v5713
    %v5716 = vperm.slane %v5576, %v2186
    %v5717 = vperm.slane %v5579, %v2188
    %v5718 = vsel %vm2190, %v5717, %v5716
    %v5719 = vperm.slane %v5582, %v5622
    %v5720 = vsel %vm5624, %v5719, %v5718
    %v5721 = vperm.slane %v5585, %v2186
    %v5722 = vperm.slane %v5588, %v2188
    %v5723 = vsel %vm2190, %v5722, %v5721
    %v5724 = vperm.slane %v5591, %v5622
    %v5725 = vsel %vm5624, %v5724, %v5723
    %v5726 = vperm.slane %v5594, %v2186
    %v5727 = vperm.slane %v5597, %v2188
    %v5728 = vsel %vm2190, %v5727, %v5726
    %v5729 = vperm.slane %v5600, %v5622
    %v5730 = vsel %vm5624, %v5729, %v5728
    %v5731 = vperm.slane %v5603, %v2186
    %v5732 = vperm.slane %v5606, %v2188
    %v5733 = vsel %vm2190, %v5732, %v5731
    %v5734 = vperm.slane %v5609, %v5622
    %v5735 = vsel %vm5624, %v5734, %v5733
    %v5736 = vperm.slane %v5612, %v2186
    %v5737 = vperm.slane %v5615, %v2188
    %v5738 = vsel %vm2190, %v5737, %v5736
    %v5739 = vperm.slane %v5618, %v5622
    %v5740 = vsel %vm5624, %v5739, %v5738
    %v5741 = vsel %vm520, %v5630, %v5625
    %v5742 = vsel %vm524, %v5635, %v5741
    %v5743 = vsel %vm528, %v5640, %v5742
    %v5744 = vsel %vm2264, %v5645, %v5743
    %v5745 = vsel %vm2266, %v5650, %v5744
    %v5746 = vsel %vm2268, %v5655, %v5745
    %v5747 = vsel %vm2270, %v5660, %v5746
    %v5748 = vsel %vm520, %v5670, %v5665
    %v5749 = vsel %vm524, %v5675, %v5748
    %v5750 = vsel %vm528, %v5680, %v5749
    %v5751 = vsel %vm2264, %v5685, %v5750
    %v5752 = vsel %vm2266, %v5690, %v5751
    %v5753 = vsel %vm2268, %v5695, %v5752
    %v5754 = vsel %vm2270, %v5700, %v5753
    %v5755 = vsel %vm520, %v5710, %v5705
    %v5756 = vsel %vm524, %v5715, %v5755
    %v5757 = vsel %vm528, %v5720, %v5756
    %v5758 = vsel %vm2264, %v5725, %v5757
    %v5759 = vsel %vm2266, %v5730, %v5758
    %v5760 = vsel %vm2268, %v5735, %v5759
    %v5761 = vsel %vm2270, %v5740, %v5760
    %v5765 = vsel %vm3231, %v5747, -inf
    %5766 = vmax.xlane.f32.xlu0 %v5765
    %v5767 = vpop.xlane.xlu0 %5766
    %v5768 = vsel %vm3231, %v5754, -inf
    %5769 = vmax.xlane.f32.xlu0 %v5768
    %v5770 = vpop.xlane.xlu0 %5769
    %v5771 = vsel %vm3231, %v5761, -inf
    %5772 = vmax.xlane.f32.xlu0 %v5771
    %v5773 = vpop.xlane.xlu0 %5772
    %vm5774 = vcmp.gt.f32.partialorder %v5767, -5e+29
    %vm5775 = vcmp.gt.f32.partialorder %v5770, -5e+29
    %vm5776 = vcmp.gt.f32.partialorder %v5773, -5e+29
    %v5777 = vsel %vm5774, %v5767, 0.0
    %v5778 = vsel %vm5775, %v5770, 0.0
    %v5779 = vsel %vm5776, %v5773, 0.0
    %v5783 = vperm.slane %v5777, 0
    %v5784 = vperm.slane %v5777, 1
    %v5785 = vperm.slane %v5777, 2
    %v5786 = vperm.slane %v5777, 3
    %v5787 = vperm.slane %v5777, 4
    %v5788 = vperm.slane %v5777, 5
    %v5789 = vperm.slane %v5777, 6
    %v5790 = vperm.slane %v5777, 7
    %v5791 = vperm.slane %v5778, 0
    %v5792 = vperm.slane %v5778, 1
    %v5793 = vperm.slane %v5778, 2
    %v5794 = vperm.slane %v5778, 3
    %v5795 = vperm.slane %v5778, 4
    %v5796 = vperm.slane %v5778, 5
    %v5797 = vperm.slane %v5778, 6
    %v5798 = vperm.slane %v5778, 7
    %v5799 = vperm.slane %v5779, 0
    %v5800 = vperm.slane %v5779, 1
    %v5801 = vperm.slane %v5779, 2
    %v5802 = vperm.slane %v5779, 3
    %v5803 = vperm.slane %v5779, 4
    %v5804 = vperm.slane %v5779, 5
    %v5805 = vperm.slane %v5779, 6
    %v5806 = vperm.slane %v5779, 7
    %v5831 = vsub.f32 %v5259, %v5783
    %v5832 = vsub.f32 %v5260, %v5783
    %v5833 = vsub.f32 %v5261, %v5783
    %v5834 = vsub.f32 %v5262, %v5784
    %v5835 = vsub.f32 %v5263, %v5784
    %v5836 = vsub.f32 %v5264, %v5784
    %v5837 = vsub.f32 %v5265, %v5785
    %v5838 = vsub.f32 %v5266, %v5785
    %v5839 = vsub.f32 %v5267, %v5785
    %v5840 = vsub.f32 %v5268, %v5786
    %v5841 = vsub.f32 %v5269, %v5786
    %v5842 = vsub.f32 %v5270, %v5786
    %v5843 = vsub.f32 %v5271, %v5787
    %v5844 = vsub.f32 %v5272, %v5787
    %v5845 = vsub.f32 %v5273, %v5787
    %v5846 = vsub.f32 %v5274, %v5788
    %v5847 = vsub.f32 %v5275, %v5788
    %v5848 = vsub.f32 %v5276, %v5788
    %v5849 = vsub.f32 %v5277, %v5789
    %v5850 = vsub.f32 %v5278, %v5789
    %v5851 = vsub.f32 %v5279, %v5789
    %v5852 = vsub.f32 %v5280, %v5790
    %v5853 = vsub.f32 %v5281, %v5790
    %v5854 = vsub.f32 %v5282, %v5790
    %v5855 = vsub.f32 %v5283, %v5791
    %v5856 = vsub.f32 %v5284, %v5791
    %v5857 = vsub.f32 %v5285, %v5791
    %v5858 = vsub.f32 %v5286, %v5792
    %v5859 = vsub.f32 %v5287, %v5792
    %v5860 = vsub.f32 %v5288, %v5792
    %v5861 = vsub.f32 %v5289, %v5793
    %v5862 = vsub.f32 %v5290, %v5793
    %v5863 = vsub.f32 %v5291, %v5793
    %v5864 = vsub.f32 %v5292, %v5794
    %v5865 = vsub.f32 %v5293, %v5794
    %v5866 = vsub.f32 %v5294, %v5794
    %v5867 = vsub.f32 %v5295, %v5795
    %v5868 = vsub.f32 %v5296, %v5795
    %v5869 = vsub.f32 %v5297, %v5795
    %v5870 = vsub.f32 %v5298, %v5796
    %v5871 = vsub.f32 %v5299, %v5796
    %v5872 = vsub.f32 %v5300, %v5796
    %v5873 = vsub.f32 %v5301, %v5797
    %v5874 = vsub.f32 %v5302, %v5797
    %v5875 = vsub.f32 %v5303, %v5797
    %v5876 = vsub.f32 %v5304, %v5798
    %v5877 = vsub.f32 %v5305, %v5798
    %v5878 = vsub.f32 %v5306, %v5798
    %v5879 = vsub.f32 %v5307, %v5799
    %v5880 = vsub.f32 %v5308, %v5799
    %v5881 = vsub.f32 %v5309, %v5799
    %v5882 = vsub.f32 %v5310, %v5800
    %v5883 = vsub.f32 %v5311, %v5800
    %v5884 = vsub.f32 %v5312, %v5800
    %v5885 = vsub.f32 %v5313, %v5801
    %v5886 = vsub.f32 %v5314, %v5801
    %v5887 = vsub.f32 %v5315, %v5801
    %v5888 = vsub.f32 %v5316, %v5802
    %v5889 = vsub.f32 %v5317, %v5802
    %v5890 = vsub.f32 %v5318, %v5802
    %v5891 = vsub.f32 %v5319, %v5803
    %v5892 = vsub.f32 %v5320, %v5803
    %v5893 = vsub.f32 %v5321, %v5803
    %v5894 = vsub.f32 %v5322, %v5804
    %v5895 = vsub.f32 %v5323, %v5804
    %v5896 = vsub.f32 %v5324, %v5804
    %v5897 = vsub.f32 %v5325, %v5805
    %v5898 = vsub.f32 %v5326, %v5805
    %v5899 = vsub.f32 %v5327, %v5805
    %v5900 = vsub.f32 %v5328, %v5806
    %v5901 = vsub.f32 %v5329, %v5806
    %v5902 = vsub.f32 %v5330, %v5806
    %v5903 = vmul.f32 %v5831, 1.442695
    %v5904 = vpow.pop %v5903
    %v5905 = vmul.f32 %v5832, 1.442695
    %v5906 = vpow.pop %v5905
    %v5907 = vmul.f32 %v5833, 1.442695
    %v5908 = vpow.pop %v5907
    %v5909 = vmul.f32 %v5834, 1.442695
    %v5910 = vpow.pop %v5909
    %v5911 = vmul.f32 %v5835, 1.442695
    %v5912 = vpow.pop %v5911
    %v5913 = vmul.f32 %v5836, 1.442695
    %v5914 = vpow.pop %v5913
    %v5915 = vmul.f32 %v5837, 1.442695
    %v5916 = vpow.pop %v5915
    %v5917 = vmul.f32 %v5838, 1.442695
    %v5918 = vpow.pop %v5917
    %v5919 = vmul.f32 %v5839, 1.442695
    %v5920 = vpow.pop %v5919
    %v5921 = vmul.f32 %v5840, 1.442695
    %v5922 = vpow.pop %v5921
    %v5923 = vmul.f32 %v5841, 1.442695
    %v5924 = vpow.pop %v5923
    %v5925 = vmul.f32 %v5842, 1.442695
    %v5926 = vpow.pop %v5925
    %v5927 = vmul.f32 %v5843, 1.442695
    %v5928 = vpow.pop %v5927
    %v5929 = vmul.f32 %v5844, 1.442695
    %v5930 = vpow.pop %v5929
    %v5931 = vmul.f32 %v5845, 1.442695
    %v5932 = vpow.pop %v5931
    %v5933 = vmul.f32 %v5846, 1.442695
    %v5934 = vpow.pop %v5933
    %v5935 = vmul.f32 %v5847, 1.442695
    %v5936 = vpow.pop %v5935
    %v5937 = vmul.f32 %v5848, 1.442695
    %v5938 = vpow.pop %v5937
    %v5939 = vmul.f32 %v5849, 1.442695
    %v5940 = vpow.pop %v5939
    %v5941 = vmul.f32 %v5850, 1.442695
    %v5942 = vpow.pop %v5941
    %v5943 = vmul.f32 %v5851, 1.442695
    %v5944 = vpow.pop %v5943
    %v5945 = vmul.f32 %v5852, 1.442695
    %v5946 = vpow.pop %v5945
    %v5947 = vmul.f32 %v5853, 1.442695
    %v5948 = vpow.pop %v5947
    %v5949 = vmul.f32 %v5854, 1.442695
    %v5950 = vpow.pop %v5949
    %v5951 = vmul.f32 %v5855, 1.442695
    %v5952 = vpow.pop %v5951
    %v5953 = vmul.f32 %v5856, 1.442695
    %v5954 = vpow.pop %v5953
    %v5955 = vmul.f32 %v5857, 1.442695
    %v5956 = vpow.pop %v5955
    %v5957 = vmul.f32 %v5858, 1.442695
    %v5958 = vpow.pop %v5957
    %v5959 = vmul.f32 %v5859, 1.442695
    %v5960 = vpow.pop %v5959
    %v5961 = vmul.f32 %v5860, 1.442695
    %v5962 = vpow.pop %v5961
    %v5963 = vmul.f32 %v5861, 1.442695
    %v5964 = vpow.pop %v5963
    %v5965 = vmul.f32 %v5862, 1.442695
    %v5966 = vpow.pop %v5965
    %v5967 = vmul.f32 %v5863, 1.442695
    %v5968 = vpow.pop %v5967
    %v5969 = vmul.f32 %v5864, 1.442695
    %v5970 = vpow.pop %v5969
    %v5971 = vmul.f32 %v5865, 1.442695
    %v5972 = vpow.pop %v5971
    %v5973 = vmul.f32 %v5866, 1.442695
    %v5974 = vpow.pop %v5973
    %v5975 = vmul.f32 %v5867, 1.442695
    %v5976 = vpow.pop %v5975
    %v5977 = vmul.f32 %v5868, 1.442695
    %v5978 = vpow.pop %v5977
    %v5979 = vmul.f32 %v5869, 1.442695
    %v5980 = vpow.pop %v5979
    %v5981 = vmul.f32 %v5870, 1.442695
    %v5982 = vpow.pop %v5981
    %v5983 = vmul.f32 %v5871, 1.442695
    %v5984 = vpow.pop %v5983
    %v5985 = vmul.f32 %v5872, 1.442695
    %v5986 = vpow.pop %v5985
    %v5987 = vmul.f32 %v5873, 1.442695
    %v5988 = vpow.pop %v5987
    %v5989 = vmul.f32 %v5874, 1.442695
    %v5990 = vpow.pop %v5989
    %v5991 = vmul.f32 %v5875, 1.442695
    %v5992 = vpow.pop %v5991
    %v5993 = vmul.f32 %v5876, 1.442695
    %v5994 = vpow.pop %v5993
    %v5995 = vmul.f32 %v5877, 1.442695
    %v5996 = vpow.pop %v5995
    %v5997 = vmul.f32 %v5878, 1.442695
    %v5998 = vpow.pop %v5997
    %v5999 = vmul.f32 %v5879, 1.442695
    %v6000 = vpow.pop %v5999
    %v6001 = vmul.f32 %v5880, 1.442695
    %v6002 = vpow.pop %v6001
    %v6003 = vmul.f32 %v5881, 1.442695
    %v6004 = vpow.pop %v6003
    %v6005 = vmul.f32 %v5882, 1.442695
    %v6006 = vpow.pop %v6005
    %v6007 = vmul.f32 %v5883, 1.442695
    %v6008 = vpow.pop %v6007
    %v6009 = vmul.f32 %v5884, 1.442695
    %v6010 = vpow.pop %v6009
    %v6011 = vmul.f32 %v5885, 1.442695
    %v6012 = vpow.pop %v6011
    %v6013 = vmul.f32 %v5886, 1.442695
    %v6014 = vpow.pop %v6013
    %v6015 = vmul.f32 %v5887, 1.442695
    %v6016 = vpow.pop %v6015
    %v6017 = vmul.f32 %v5888, 1.442695
    %v6018 = vpow.pop %v6017
    %v6019 = vmul.f32 %v5889, 1.442695
    %v6020 = vpow.pop %v6019
    %v6021 = vmul.f32 %v5890, 1.442695
    %v6022 = vpow.pop %v6021
    %v6023 = vmul.f32 %v5891, 1.442695
    %v6024 = vpow.pop %v6023
    %v6025 = vmul.f32 %v5892, 1.442695
    %v6026 = vpow.pop %v6025
    %v6027 = vmul.f32 %v5893, 1.442695
    %v6028 = vpow.pop %v6027
    %v6029 = vmul.f32 %v5894, 1.442695
    %v6030 = vpow.pop %v6029
    %v6031 = vmul.f32 %v5895, 1.442695
    %v6032 = vpow.pop %v6031
    %v6033 = vmul.f32 %v5896, 1.442695
    %v6034 = vpow.pop %v6033
    %v6035 = vmul.f32 %v5897, 1.442695
    %v6036 = vpow.pop %v6035
    %v6037 = vmul.f32 %v5898, 1.442695
    %v6038 = vpow.pop %v6037
    %v6039 = vmul.f32 %v5899, 1.442695
    %v6040 = vpow.pop %v6039
    %v6041 = vmul.f32 %v5900, 1.442695
    %v6042 = vpow.pop %v6041
    %v6043 = vmul.f32 %v5901, 1.442695
    %v6044 = vpow.pop %v6043
    %v6045 = vmul.f32 %v5902, 1.442695
    %v6046 = vpow.pop %v6045
    %6119 = vset.pattern.permute.xlu0 0
    %6120 = vperm.xlu0 %6119, %v5904
    %v6121 = vpop.permute.xlu0 %6120
    %6122 = vset.pattern.permute.xlu0 0
    %6123 = vperm.xlu0 %6122, %v5906
    %v6124 = vpop.permute.xlu0 %6123
    %6125 = vset.pattern.permute.xlu0 0
    %6126 = vperm.xlu0 %6125, %v5908
    %v6127 = vpop.permute.xlu0 %6126
    %6128 = vset.pattern.permute.xlu0 0
    %6129 = vperm.xlu0 %6128, %v5910
    %v6130 = vpop.permute.xlu0 %6129
    %6131 = vset.pattern.permute.xlu0 0
    %6132 = vperm.xlu0 %6131, %v5912
    %v6133 = vpop.permute.xlu0 %6132
    %6134 = vset.pattern.permute.xlu0 0
    %6135 = vperm.xlu0 %6134, %v5914
    %v6136 = vpop.permute.xlu0 %6135
    %6137 = vset.pattern.permute.xlu0 0
    %6138 = vperm.xlu0 %6137, %v5916
    %v6139 = vpop.permute.xlu0 %6138
    %6140 = vset.pattern.permute.xlu0 0
    %6141 = vperm.xlu0 %6140, %v5918
    %v6142 = vpop.permute.xlu0 %6141
    %6143 = vset.pattern.permute.xlu0 0
    %6144 = vperm.xlu0 %6143, %v5920
    %v6145 = vpop.permute.xlu0 %6144
    %6146 = vset.pattern.permute.xlu0 0
    %6147 = vperm.xlu0 %6146, %v5922
    %v6148 = vpop.permute.xlu0 %6147
    %6149 = vset.pattern.permute.xlu0 0
    %6150 = vperm.xlu0 %6149, %v5924
    %v6151 = vpop.permute.xlu0 %6150
    %6152 = vset.pattern.permute.xlu0 0
    %6153 = vperm.xlu0 %6152, %v5926
    %v6154 = vpop.permute.xlu0 %6153
    %6155 = vset.pattern.permute.xlu0 0
    %6156 = vperm.xlu0 %6155, %v5928
    %v6157 = vpop.permute.xlu0 %6156
    %6158 = vset.pattern.permute.xlu0 0
    %6159 = vperm.xlu0 %6158, %v5930
    %v6160 = vpop.permute.xlu0 %6159
    %6161 = vset.pattern.permute.xlu0 0
    %6162 = vperm.xlu0 %6161, %v5932
    %v6163 = vpop.permute.xlu0 %6162
    %6164 = vset.pattern.permute.xlu0 0
    %6165 = vperm.xlu0 %6164, %v5934
    %v6166 = vpop.permute.xlu0 %6165
    %6167 = vset.pattern.permute.xlu0 0
    %6168 = vperm.xlu0 %6167, %v5936
    %v6169 = vpop.permute.xlu0 %6168
    %6170 = vset.pattern.permute.xlu0 0
    %6171 = vperm.xlu0 %6170, %v5938
    %v6172 = vpop.permute.xlu0 %6171
    %6173 = vset.pattern.permute.xlu0 0
    %6174 = vperm.xlu0 %6173, %v5940
    %v6175 = vpop.permute.xlu0 %6174
    %6176 = vset.pattern.permute.xlu0 0
    %6177 = vperm.xlu0 %6176, %v5942
    %v6178 = vpop.permute.xlu0 %6177
    %6179 = vset.pattern.permute.xlu0 0
    %6180 = vperm.xlu0 %6179, %v5944
    %v6181 = vpop.permute.xlu0 %6180
    %6182 = vset.pattern.permute.xlu0 0
    %6183 = vperm.xlu0 %6182, %v5946
    %v6184 = vpop.permute.xlu0 %6183
    %6185 = vset.pattern.permute.xlu0 0
    %6186 = vperm.xlu0 %6185, %v5948
    %v6187 = vpop.permute.xlu0 %6186
    %6188 = vset.pattern.permute.xlu0 0
    %6189 = vperm.xlu0 %6188, %v5950
    %v6190 = vpop.permute.xlu0 %6189
    %6191 = vset.pattern.permute.xlu0 0
    %6192 = vperm.xlu0 %6191, %v5952
    %v6193 = vpop.permute.xlu0 %6192
    %6194 = vset.pattern.permute.xlu0 0
    %6195 = vperm.xlu0 %6194, %v5954
    %v6196 = vpop.permute.xlu0 %6195
    %6197 = vset.pattern.permute.xlu0 0
    %6198 = vperm.xlu0 %6197, %v5956
    %v6199 = vpop.permute.xlu0 %6198
    %6200 = vset.pattern.permute.xlu0 0
    %6201 = vperm.xlu0 %6200, %v5958
    %v6202 = vpop.permute.xlu0 %6201
    %6203 = vset.pattern.permute.xlu0 0
    %6204 = vperm.xlu0 %6203, %v5960
    %v6205 = vpop.permute.xlu0 %6204
    %6206 = vset.pattern.permute.xlu0 0
    %6207 = vperm.xlu0 %6206, %v5962
    %v6208 = vpop.permute.xlu0 %6207
    %6209 = vset.pattern.permute.xlu0 0
    %6210 = vperm.xlu0 %6209, %v5964
    %v6211 = vpop.permute.xlu0 %6210
    %6212 = vset.pattern.permute.xlu0 0
    %6213 = vperm.xlu0 %6212, %v5966
    %v6214 = vpop.permute.xlu0 %6213
    %6215 = vset.pattern.permute.xlu0 0
    %6216 = vperm.xlu0 %6215, %v5968
    %v6217 = vpop.permute.xlu0 %6216
    %6218 = vset.pattern.permute.xlu0 0
    %6219 = vperm.xlu0 %6218, %v5970
    %v6220 = vpop.permute.xlu0 %6219
    %6221 = vset.pattern.permute.xlu0 0
    %6222 = vperm.xlu0 %6221, %v5972
    %v6223 = vpop.permute.xlu0 %6222
    %6224 = vset.pattern.permute.xlu0 0
    %6225 = vperm.xlu0 %6224, %v5974
    %v6226 = vpop.permute.xlu0 %6225
    %6227 = vset.pattern.permute.xlu0 0
    %6228 = vperm.xlu0 %6227, %v5976
    %v6229 = vpop.permute.xlu0 %6228
    %6230 = vset.pattern.permute.xlu0 0
    %6231 = vperm.xlu0 %6230, %v5978
    %v6232 = vpop.permute.xlu0 %6231
    %6233 = vset.pattern.permute.xlu0 0
    %6234 = vperm.xlu0 %6233, %v5980
    %v6235 = vpop.permute.xlu0 %6234
    %6236 = vset.pattern.permute.xlu0 0
    %6237 = vperm.xlu0 %6236, %v5982
    %v6238 = vpop.permute.xlu0 %6237
    %6239 = vset.pattern.permute.xlu0 0
    %6240 = vperm.xlu0 %6239, %v5984
    %v6241 = vpop.permute.xlu0 %6240
    %6242 = vset.pattern.permute.xlu0 0
    %6243 = vperm.xlu0 %6242, %v5986
    %v6244 = vpop.permute.xlu0 %6243
    %6245 = vset.pattern.permute.xlu0 0
    %6246 = vperm.xlu0 %6245, %v5988
    %v6247 = vpop.permute.xlu0 %6246
    %6248 = vset.pattern.permute.xlu0 0
    %6249 = vperm.xlu0 %6248, %v5990
    %v6250 = vpop.permute.xlu0 %6249
    %6251 = vset.pattern.permute.xlu0 0
    %6252 = vperm.xlu0 %6251, %v5992
    %v6253 = vpop.permute.xlu0 %6252
    %6254 = vset.pattern.permute.xlu0 0
    %6255 = vperm.xlu0 %6254, %v5994
    %v6256 = vpop.permute.xlu0 %6255
    %6257 = vset.pattern.permute.xlu0 0
    %6258 = vperm.xlu0 %6257, %v5996
    %v6259 = vpop.permute.xlu0 %6258
    %6260 = vset.pattern.permute.xlu0 0
    %6261 = vperm.xlu0 %6260, %v5998
    %v6262 = vpop.permute.xlu0 %6261
    %6263 = vset.pattern.permute.xlu0 0
    %6264 = vperm.xlu0 %6263, %v6000
    %v6265 = vpop.permute.xlu0 %6264
    %6266 = vset.pattern.permute.xlu0 0
    %6267 = vperm.xlu0 %6266, %v6002
    %v6268 = vpop.permute.xlu0 %6267
    %6269 = vset.pattern.permute.xlu0 0
    %6270 = vperm.xlu0 %6269, %v6004
    %v6271 = vpop.permute.xlu0 %6270
    %6272 = vset.pattern.permute.xlu0 0
    %6273 = vperm.xlu0 %6272, %v6006
    %v6274 = vpop.permute.xlu0 %6273
    %6275 = vset.pattern.permute.xlu0 0
    %6276 = vperm.xlu0 %6275, %v6008
    %v6277 = vpop.permute.xlu0 %6276
    %6278 = vset.pattern.permute.xlu0 0
    %6279 = vperm.xlu0 %6278, %v6010
    %v6280 = vpop.permute.xlu0 %6279
    %6281 = vset.pattern.permute.xlu0 0
    %6282 = vperm.xlu0 %6281, %v6012
    %v6283 = vpop.permute.xlu0 %6282
    %6284 = vset.pattern.permute.xlu0 0
    %6285 = vperm.xlu0 %6284, %v6014
    %v6286 = vpop.permute.xlu0 %6285
    %6287 = vset.pattern.permute.xlu0 0
    %6288 = vperm.xlu0 %6287, %v6016
    %v6289 = vpop.permute.xlu0 %6288
    %6290 = vset.pattern.permute.xlu0 0
    %6291 = vperm.xlu0 %6290, %v6018
    %v6292 = vpop.permute.xlu0 %6291
    %6293 = vset.pattern.permute.xlu0 0
    %6294 = vperm.xlu0 %6293, %v6020
    %v6295 = vpop.permute.xlu0 %6294
    %6296 = vset.pattern.permute.xlu0 0
    %6297 = vperm.xlu0 %6296, %v6022
    %v6298 = vpop.permute.xlu0 %6297
    %6299 = vset.pattern.permute.xlu0 0
    %6300 = vperm.xlu0 %6299, %v6024
    %v6301 = vpop.permute.xlu0 %6300
    %6302 = vset.pattern.permute.xlu0 0
    %6303 = vperm.xlu0 %6302, %v6026
    %v6304 = vpop.permute.xlu0 %6303
    %6305 = vset.pattern.permute.xlu0 0
    %6306 = vperm.xlu0 %6305, %v6028
    %v6307 = vpop.permute.xlu0 %6306
    %6308 = vset.pattern.permute.xlu0 0
    %6309 = vperm.xlu0 %6308, %v6030
    %v6310 = vpop.permute.xlu0 %6309
    %6311 = vset.pattern.permute.xlu0 0
    %6312 = vperm.xlu0 %6311, %v6032
    %v6313 = vpop.permute.xlu0 %6312
    %6314 = vset.pattern.permute.xlu0 0
    %6315 = vperm.xlu0 %6314, %v6034
    %v6316 = vpop.permute.xlu0 %6315
    %6317 = vset.pattern.permute.xlu0 0
    %6318 = vperm.xlu0 %6317, %v6036
    %v6319 = vpop.permute.xlu0 %6318
    %6320 = vset.pattern.permute.xlu0 0
    %6321 = vperm.xlu0 %6320, %v6038
    %v6322 = vpop.permute.xlu0 %6321
    %6323 = vset.pattern.permute.xlu0 0
    %6324 = vperm.xlu0 %6323, %v6040
    %v6325 = vpop.permute.xlu0 %6324
    %6326 = vset.pattern.permute.xlu0 0
    %6327 = vperm.xlu0 %6326, %v6042
    %v6328 = vpop.permute.xlu0 %6327
    %6329 = vset.pattern.permute.xlu0 0
    %6330 = vperm.xlu0 %6329, %v6044
    %v6331 = vpop.permute.xlu0 %6330
    %6332 = vset.pattern.permute.xlu0 0
    %6333 = vperm.xlu0 %6332, %v6046
    %v6334 = vpop.permute.xlu0 %6333
    %v6335 = vperm.slane %v6121, %v2186
    %v6336 = vperm.slane %v6124, %v2188
    %v6337 = vsel %vm2190, %v6336, %v6335
    %v6338 = vperm.slane %v6127, %v5622
    %v6339 = vsel %vm5624, %v6338, %v6337
    %v6340 = vperm.slane %v6130, %v2186
    %v6341 = vperm.slane %v6133, %v2188
    %v6342 = vsel %vm2190, %v6341, %v6340
    %v6343 = vperm.slane %v6136, %v5622
    %v6344 = vsel %vm5624, %v6343, %v6342
    %v6345 = vperm.slane %v6139, %v2186
    %v6346 = vperm.slane %v6142, %v2188
    %v6347 = vsel %vm2190, %v6346, %v6345
    %v6348 = vperm.slane %v6145, %v5622
    %v6349 = vsel %vm5624, %v6348, %v6347
    %v6350 = vperm.slane %v6148, %v2186
    %v6351 = vperm.slane %v6151, %v2188
    %v6352 = vsel %vm2190, %v6351, %v6350
    %v6353 = vperm.slane %v6154, %v5622
    %v6354 = vsel %vm5624, %v6353, %v6352
    %v6355 = vperm.slane %v6157, %v2186
    %v6356 = vperm.slane %v6160, %v2188
    %v6357 = vsel %vm2190, %v6356, %v6355
    %v6358 = vperm.slane %v6163, %v5622
    %v6359 = vsel %vm5624, %v6358, %v6357
    %v6360 = vperm.slane %v6166, %v2186
    %v6361 = vperm.slane %v6169, %v2188
    %v6362 = vsel %vm2190, %v6361, %v6360
    %v6363 = vperm.slane %v6172, %v5622
    %v6364 = vsel %vm5624, %v6363, %v6362
    %v6365 = vperm.slane %v6175, %v2186
    %v6366 = vperm.slane %v6178, %v2188
    %v6367 = vsel %vm2190, %v6366, %v6365
    %v6368 = vperm.slane %v6181, %v5622
    %v6369 = vsel %vm5624, %v6368, %v6367
    %v6370 = vperm.slane %v6184, %v2186
    %v6371 = vperm.slane %v6187, %v2188
    %v6372 = vsel %vm2190, %v6371, %v6370
    %v6373 = vperm.slane %v6190, %v5622
    %v6374 = vsel %vm5624, %v6373, %v6372
    %v6375 = vperm.slane %v6193, %v2186
    %v6376 = vperm.slane %v6196, %v2188
    %v6377 = vsel %vm2190, %v6376, %v6375
    %v6378 = vperm.slane %v6199, %v5622
    %v6379 = vsel %vm5624, %v6378, %v6377
    %v6380 = vperm.slane %v6202, %v2186
    %v6381 = vperm.slane %v6205, %v2188
    %v6382 = vsel %vm2190, %v6381, %v6380
    %v6383 = vperm.slane %v6208, %v5622
    %v6384 = vsel %vm5624, %v6383, %v6382
    %v6385 = vperm.slane %v6211, %v2186
    %v6386 = vperm.slane %v6214, %v2188
    %v6387 = vsel %vm2190, %v6386, %v6385
    %v6388 = vperm.slane %v6217, %v5622
    %v6389 = vsel %vm5624, %v6388, %v6387
    %v6390 = vperm.slane %v6220, %v2186
    %v6391 = vperm.slane %v6223, %v2188
    %v6392 = vsel %vm2190, %v6391, %v6390
    %v6393 = vperm.slane %v6226, %v5622
    %v6394 = vsel %vm5624, %v6393, %v6392
    %v6395 = vperm.slane %v6229, %v2186
    %v6396 = vperm.slane %v6232, %v2188
    %v6397 = vsel %vm2190, %v6396, %v6395
    %v6398 = vperm.slane %v6235, %v5622
    %v6399 = vsel %vm5624, %v6398, %v6397
    %v6400 = vperm.slane %v6238, %v2186
    %v6401 = vperm.slane %v6241, %v2188
    %v6402 = vsel %vm2190, %v6401, %v6400
    %v6403 = vperm.slane %v6244, %v5622
    %v6404 = vsel %vm5624, %v6403, %v6402
    %v6405 = vperm.slane %v6247, %v2186
    %v6406 = vperm.slane %v6250, %v2188
    %v6407 = vsel %vm2190, %v6406, %v6405
    %v6408 = vperm.slane %v6253, %v5622
    %v6409 = vsel %vm5624, %v6408, %v6407
    %v6410 = vperm.slane %v6256, %v2186
    %v6411 = vperm.slane %v6259, %v2188
    %v6412 = vsel %vm2190, %v6411, %v6410
    %v6413 = vperm.slane %v6262, %v5622
    %v6414 = vsel %vm5624, %v6413, %v6412
    %v6415 = vperm.slane %v6265, %v2186
    %v6416 = vperm.slane %v6268, %v2188
    %v6417 = vsel %vm2190, %v6416, %v6415
    %v6418 = vperm.slane %v6271, %v5622
    %v6419 = vsel %vm5624, %v6418, %v6417
    %v6420 = vperm.slane %v6274, %v2186
    %v6421 = vperm.slane %v6277, %v2188
    %v6422 = vsel %vm2190, %v6421, %v6420
    %v6423 = vperm.slane %v6280, %v5622
    %v6424 = vsel %vm5624, %v6423, %v6422
    %v6425 = vperm.slane %v6283, %v2186
    %v6426 = vperm.slane %v6286, %v2188
    %v6427 = vsel %vm2190, %v6426, %v6425
    %v6428 = vperm.slane %v6289, %v5622
    %v6429 = vsel %vm5624, %v6428, %v6427
    %v6430 = vperm.slane %v6292, %v2186
    %v6431 = vperm.slane %v6295, %v2188
    %v6432 = vsel %vm2190, %v6431, %v6430
    %v6433 = vperm.slane %v6298, %v5622
    %v6434 = vsel %vm5624, %v6433, %v6432
    %v6435 = vperm.slane %v6301, %v2186
    %v6436 = vperm.slane %v6304, %v2188
    %v6437 = vsel %vm2190, %v6436, %v6435
    %v6438 = vperm.slane %v6307, %v5622
    %v6439 = vsel %vm5624, %v6438, %v6437
    %v6440 = vperm.slane %v6310, %v2186
    %v6441 = vperm.slane %v6313, %v2188
    %v6442 = vsel %vm2190, %v6441, %v6440
    %v6443 = vperm.slane %v6316, %v5622
    %v6444 = vsel %vm5624, %v6443, %v6442
    %v6445 = vperm.slane %v6319, %v2186
    %v6446 = vperm.slane %v6322, %v2188
    %v6447 = vsel %vm2190, %v6446, %v6445
    %v6448 = vperm.slane %v6325, %v5622
    %v6449 = vsel %vm5624, %v6448, %v6447
    %v6450 = vperm.slane %v6328, %v2186
    %v6451 = vperm.slane %v6331, %v2188
    %v6452 = vsel %vm2190, %v6451, %v6450
    %v6453 = vperm.slane %v6334, %v5622
    %v6454 = vsel %vm5624, %v6453, %v6452
    %v6455 = vsel %vm520, %v6344, %v6339
    %v6456 = vsel %vm524, %v6349, %v6455
    %v6457 = vsel %vm528, %v6354, %v6456
    %v6458 = vsel %vm2264, %v6359, %v6457
    %v6459 = vsel %vm2266, %v6364, %v6458
    %v6460 = vsel %vm2268, %v6369, %v6459
    %v6461 = vsel %vm2270, %v6374, %v6460
    %v6462 = vsel %vm520, %v6384, %v6379
    %v6463 = vsel %vm524, %v6389, %v6462
    %v6464 = vsel %vm528, %v6394, %v6463
    %v6465 = vsel %vm2264, %v6399, %v6464
    %v6466 = vsel %vm2266, %v6404, %v6465
    %v6467 = vsel %vm2268, %v6409, %v6466
    %v6468 = vsel %vm2270, %v6414, %v6467
    %v6469 = vsel %vm520, %v6424, %v6419
    %v6470 = vsel %vm524, %v6429, %v6469
    %v6471 = vsel %vm528, %v6434, %v6470
    %v6472 = vsel %vm2264, %v6439, %v6471
    %v6473 = vsel %vm2266, %v6444, %v6472
    %v6474 = vsel %vm2268, %v6449, %v6473
    %v6475 = vsel %vm2270, %v6454, %v6474
    %v6479 = vsel %vm3231, %v6461, 0.0
    %6480 = vadd.xlane.f32.xlu0 %v6479
    %v6481 = vpop.xlane.xlu0 %6480
    %v6482 = vsel %vm3231, %v6468, 0.0
    %6483 = vadd.xlane.f32.xlu0 %v6482
    %v6484 = vpop.xlane.xlu0 %6483
    %v6485 = vsel %vm3231, %v6475, 0.0
    %6486 = vadd.xlane.f32.xlu0 %v6485
    %v6487 = vpop.xlane.xlu0 %6486
    %v6488 = vpack.c.bf16 %v5906, %v5904
    %v6489 = vpack.c.bf16 %v5908, %v5908
    %v6490 = vpack.c.bf16 %v5912, %v5910
    %v6491 = vpack.c.bf16 %v5914, %v5914
    %v6492 = vpack.c.bf16 %v5918, %v5916
    %v6493 = vpack.c.bf16 %v5920, %v5920
    %v6494 = vpack.c.bf16 %v5924, %v5922
    %v6495 = vpack.c.bf16 %v5926, %v5926
    %v6496 = vpack.c.bf16 %v5930, %v5928
    %v6497 = vpack.c.bf16 %v5932, %v5932
    %v6498 = vpack.c.bf16 %v5936, %v5934
    %v6499 = vpack.c.bf16 %v5938, %v5938
    %v6500 = vpack.c.bf16 %v5942, %v5940
    %v6501 = vpack.c.bf16 %v5944, %v5944
    %v6502 = vpack.c.bf16 %v5948, %v5946
    %v6503 = vpack.c.bf16 %v5950, %v5950
    %v6504 = vpack.c.bf16 %v5954, %v5952
    %v6505 = vpack.c.bf16 %v5956, %v5956
    %v6506 = vpack.c.bf16 %v5960, %v5958
    %v6507 = vpack.c.bf16 %v5962, %v5962
    %v6508 = vpack.c.bf16 %v5966, %v5964
    %v6509 = vpack.c.bf16 %v5968, %v5968
    %v6510 = vpack.c.bf16 %v5972, %v5970
    %v6511 = vpack.c.bf16 %v5974, %v5974
    %v6512 = vpack.c.bf16 %v5978, %v5976
    %v6513 = vpack.c.bf16 %v5980, %v5980
    %v6514 = vpack.c.bf16 %v5984, %v5982
    %v6515 = vpack.c.bf16 %v5986, %v5986
    %v6516 = vpack.c.bf16 %v5990, %v5988
    %v6517 = vpack.c.bf16 %v5992, %v5992
    %v6518 = vpack.c.bf16 %v5996, %v5994
    %v6519 = vpack.c.bf16 %v5998, %v5998
    %v6520 = vpack.c.bf16 %v6002, %v6000
    %v6521 = vpack.c.bf16 %v6004, %v6004
    %v6522 = vpack.c.bf16 %v6008, %v6006
    %v6523 = vpack.c.bf16 %v6010, %v6010
    %v6524 = vpack.c.bf16 %v6014, %v6012
    %v6525 = vpack.c.bf16 %v6016, %v6016
    %v6526 = vpack.c.bf16 %v6020, %v6018
    %v6527 = vpack.c.bf16 %v6022, %v6022
    %v6528 = vpack.c.bf16 %v6026, %v6024
    %v6529 = vpack.c.bf16 %v6028, %v6028
    %v6530 = vpack.c.bf16 %v6032, %v6030
    %v6531 = vpack.c.bf16 %v6034, %v6034
    %v6532 = vpack.c.bf16 %v6038, %v6036
    %v6533 = vpack.c.bf16 %v6040, %v6040
    %v6534 = vpack.c.bf16 %v6044, %v6042
    %v6535 = vpack.c.bf16 %v6046, %v6046
    %v6584 = vunpack.c.l.b16 %v6488
    %v6585 = vunpack.c.h.b16 %v6488
    %v6586 = vunpack.c.l.b16 %v6489
    %v6587 = vunpack.c.l.b16 %v6490
    %v6588 = vunpack.c.h.b16 %v6490
    %v6589 = vunpack.c.l.b16 %v6491
    %v6590 = vunpack.c.l.b16 %v6492
    %v6591 = vunpack.c.h.b16 %v6492
    %v6592 = vunpack.c.l.b16 %v6493
    %v6593 = vunpack.c.l.b16 %v6494
    %v6594 = vunpack.c.h.b16 %v6494
    %v6595 = vunpack.c.l.b16 %v6495
    %v6596 = vunpack.c.l.b16 %v6496
    %v6597 = vunpack.c.h.b16 %v6496
    %v6598 = vunpack.c.l.b16 %v6497
    %v6599 = vunpack.c.l.b16 %v6498
    %v6600 = vunpack.c.h.b16 %v6498
    %v6601 = vunpack.c.l.b16 %v6499
    %v6602 = vunpack.c.l.b16 %v6500
    %v6603 = vunpack.c.h.b16 %v6500
    %v6604 = vunpack.c.l.b16 %v6501
    %v6605 = vunpack.c.l.b16 %v6502
    %v6606 = vunpack.c.h.b16 %v6502
    %v6607 = vunpack.c.l.b16 %v6503
    %v6608 = vunpack.c.l.b16 %v6504
    %v6609 = vunpack.c.h.b16 %v6504
    %v6610 = vunpack.c.l.b16 %v6505
    %v6611 = vunpack.c.l.b16 %v6506
    %v6612 = vunpack.c.h.b16 %v6506
    %v6613 = vunpack.c.l.b16 %v6507
    %v6614 = vunpack.c.l.b16 %v6508
    %v6615 = vunpack.c.h.b16 %v6508
    %v6616 = vunpack.c.l.b16 %v6509
    %v6617 = vunpack.c.l.b16 %v6510
    %v6618 = vunpack.c.h.b16 %v6510
    %v6619 = vunpack.c.l.b16 %v6511
    %v6620 = vunpack.c.l.b16 %v6512
    %v6621 = vunpack.c.h.b16 %v6512
    %v6622 = vunpack.c.l.b16 %v6513
    %v6623 = vunpack.c.l.b16 %v6514
    %v6624 = vunpack.c.h.b16 %v6514
    %v6625 = vunpack.c.l.b16 %v6515
    %v6626 = vunpack.c.l.b16 %v6516
    %v6627 = vunpack.c.h.b16 %v6516
    %v6628 = vunpack.c.l.b16 %v6517
    %v6629 = vunpack.c.l.b16 %v6518
    %v6630 = vunpack.c.h.b16 %v6518
    %v6631 = vunpack.c.l.b16 %v6519
    %v6632 = vunpack.c.l.b16 %v6520
    %v6633 = vunpack.c.h.b16 %v6520
    %v6634 = vunpack.c.l.b16 %v6521
    %v6635 = vunpack.c.l.b16 %v6522
    %v6636 = vunpack.c.h.b16 %v6522
    %v6637 = vunpack.c.l.b16 %v6523
    %v6638 = vunpack.c.l.b16 %v6524
    %v6639 = vunpack.c.h.b16 %v6524
    %v6640 = vunpack.c.l.b16 %v6525
    %v6641 = vunpack.c.l.b16 %v6526
    %v6642 = vunpack.c.h.b16 %v6526
    %v6643 = vunpack.c.l.b16 %v6527
    %v6644 = vunpack.c.l.b16 %v6528
    %v6645 = vunpack.c.h.b16 %v6528
    %v6646 = vunpack.c.l.b16 %v6529
    %v6647 = vunpack.c.l.b16 %v6530
    %v6648 = vunpack.c.h.b16 %v6530
    %v6649 = vunpack.c.l.b16 %v6531
    %v6650 = vunpack.c.l.b16 %v6532
    %v6651 = vunpack.c.h.b16 %v6532
    %v6652 = vunpack.c.l.b16 %v6533
    %v6653 = vunpack.c.l.b16 %v6534
    %v6654 = vunpack.c.h.b16 %v6534
    %v6655 = vunpack.c.l.b16 %v6535
    %6656 = vset.pattern.permute.xlu0 0
    %6657 = vperm.xlu0 %6656, %v6584
    %v6658 = vpop.permute.xlu0 %6657
    %6659 = vset.pattern.permute.xlu0 0
    %6660 = vperm.xlu0 %6659, %v6585
    %v6661 = vpop.permute.xlu0 %6660
    %6662 = vset.pattern.permute.xlu0 0
    %6663 = vperm.xlu0 %6662, %v6586
    %v6664 = vpop.permute.xlu0 %6663
    %6665 = vset.pattern.permute.xlu0 0
    %6666 = vperm.xlu0 %6665, %v6587
    %v6667 = vpop.permute.xlu0 %6666
    %6668 = vset.pattern.permute.xlu0 0
    %6669 = vperm.xlu0 %6668, %v6588
    %v6670 = vpop.permute.xlu0 %6669
    %6671 = vset.pattern.permute.xlu0 0
    %6672 = vperm.xlu0 %6671, %v6589
    %v6673 = vpop.permute.xlu0 %6672
    %6674 = vset.pattern.permute.xlu0 0
    %6675 = vperm.xlu0 %6674, %v6590
    %v6676 = vpop.permute.xlu0 %6675
    %6677 = vset.pattern.permute.xlu0 0
    %6678 = vperm.xlu0 %6677, %v6591
    %v6679 = vpop.permute.xlu0 %6678
    %6680 = vset.pattern.permute.xlu0 0
    %6681 = vperm.xlu0 %6680, %v6592
    %v6682 = vpop.permute.xlu0 %6681
    %6683 = vset.pattern.permute.xlu0 0
    %6684 = vperm.xlu0 %6683, %v6593
    %v6685 = vpop.permute.xlu0 %6684
    %6686 = vset.pattern.permute.xlu0 0
    %6687 = vperm.xlu0 %6686, %v6594
    %v6688 = vpop.permute.xlu0 %6687
    %6689 = vset.pattern.permute.xlu0 0
    %6690 = vperm.xlu0 %6689, %v6595
    %v6691 = vpop.permute.xlu0 %6690
    %6692 = vset.pattern.permute.xlu0 0
    %6693 = vperm.xlu0 %6692, %v6596
    %v6694 = vpop.permute.xlu0 %6693
    %6695 = vset.pattern.permute.xlu0 0
    %6696 = vperm.xlu0 %6695, %v6597
    %v6697 = vpop.permute.xlu0 %6696
    %6698 = vset.pattern.permute.xlu0 0
    %6699 = vperm.xlu0 %6698, %v6598
    %v6700 = vpop.permute.xlu0 %6699
    %6701 = vset.pattern.permute.xlu0 0
    %6702 = vperm.xlu0 %6701, %v6599
    %v6703 = vpop.permute.xlu0 %6702
    %6704 = vset.pattern.permute.xlu0 0
    %6705 = vperm.xlu0 %6704, %v6600
    %v6706 = vpop.permute.xlu0 %6705
    %6707 = vset.pattern.permute.xlu0 0
    %6708 = vperm.xlu0 %6707, %v6601
    %v6709 = vpop.permute.xlu0 %6708
    %6710 = vset.pattern.permute.xlu0 0
    %6711 = vperm.xlu0 %6710, %v6602
    %v6712 = vpop.permute.xlu0 %6711
    %6713 = vset.pattern.permute.xlu0 0
    %6714 = vperm.xlu0 %6713, %v6603
    %v6715 = vpop.permute.xlu0 %6714
    %6716 = vset.pattern.permute.xlu0 0
    %6717 = vperm.xlu0 %6716, %v6604
    %v6718 = vpop.permute.xlu0 %6717
    %6719 = vset.pattern.permute.xlu0 0
    %6720 = vperm.xlu0 %6719, %v6605
    %v6721 = vpop.permute.xlu0 %6720
    %6722 = vset.pattern.permute.xlu0 0
    %6723 = vperm.xlu0 %6722, %v6606
    %v6724 = vpop.permute.xlu0 %6723
    %6725 = vset.pattern.permute.xlu0 0
    %6726 = vperm.xlu0 %6725, %v6607
    %v6727 = vpop.permute.xlu0 %6726
    %6728 = vset.pattern.permute.xlu0 0
    %6729 = vperm.xlu0 %6728, %v6608
    %v6730 = vpop.permute.xlu0 %6729
    %6731 = vset.pattern.permute.xlu0 0
    %6732 = vperm.xlu0 %6731, %v6609
    %v6733 = vpop.permute.xlu0 %6732
    %6734 = vset.pattern.permute.xlu0 0
    %6735 = vperm.xlu0 %6734, %v6610
    %v6736 = vpop.permute.xlu0 %6735
    %6737 = vset.pattern.permute.xlu0 0
    %6738 = vperm.xlu0 %6737, %v6611
    %v6739 = vpop.permute.xlu0 %6738
    %6740 = vset.pattern.permute.xlu0 0
    %6741 = vperm.xlu0 %6740, %v6612
    %v6742 = vpop.permute.xlu0 %6741
    %6743 = vset.pattern.permute.xlu0 0
    %6744 = vperm.xlu0 %6743, %v6613
    %v6745 = vpop.permute.xlu0 %6744
    %6746 = vset.pattern.permute.xlu0 0
    %6747 = vperm.xlu0 %6746, %v6614
    %v6748 = vpop.permute.xlu0 %6747
    %6749 = vset.pattern.permute.xlu0 0
    %6750 = vperm.xlu0 %6749, %v6615
    %v6751 = vpop.permute.xlu0 %6750
    %6752 = vset.pattern.permute.xlu0 0
    %6753 = vperm.xlu0 %6752, %v6616
    %v6754 = vpop.permute.xlu0 %6753
    %6755 = vset.pattern.permute.xlu0 0
    %6756 = vperm.xlu0 %6755, %v6617
    %v6757 = vpop.permute.xlu0 %6756
    %6758 = vset.pattern.permute.xlu0 0
    %6759 = vperm.xlu0 %6758, %v6618
    %v6760 = vpop.permute.xlu0 %6759
    %6761 = vset.pattern.permute.xlu0 0
    %6762 = vperm.xlu0 %6761, %v6619
    %v6763 = vpop.permute.xlu0 %6762
    %6764 = vset.pattern.permute.xlu0 0
    %6765 = vperm.xlu0 %6764, %v6620
    %v6766 = vpop.permute.xlu0 %6765
    %6767 = vset.pattern.permute.xlu0 0
    %6768 = vperm.xlu0 %6767, %v6621
    %v6769 = vpop.permute.xlu0 %6768
    %6770 = vset.pattern.permute.xlu0 0
    %6771 = vperm.xlu0 %6770, %v6622
    %v6772 = vpop.permute.xlu0 %6771
    %6773 = vset.pattern.permute.xlu0 0
    %6774 = vperm.xlu0 %6773, %v6623
    %v6775 = vpop.permute.xlu0 %6774
    %6776 = vset.pattern.permute.xlu0 0
    %6777 = vperm.xlu0 %6776, %v6624
    %v6778 = vpop.permute.xlu0 %6777
    %6779 = vset.pattern.permute.xlu0 0
    %6780 = vperm.xlu0 %6779, %v6625
    %v6781 = vpop.permute.xlu0 %6780
    %6782 = vset.pattern.permute.xlu0 0
    %6783 = vperm.xlu0 %6782, %v6626
    %v6784 = vpop.permute.xlu0 %6783
    %6785 = vset.pattern.permute.xlu0 0
    %6786 = vperm.xlu0 %6785, %v6627
    %v6787 = vpop.permute.xlu0 %6786
    %6788 = vset.pattern.permute.xlu0 0
    %6789 = vperm.xlu0 %6788, %v6628
    %v6790 = vpop.permute.xlu0 %6789
    %6791 = vset.pattern.permute.xlu0 0
    %6792 = vperm.xlu0 %6791, %v6629
    %v6793 = vpop.permute.xlu0 %6792
    %6794 = vset.pattern.permute.xlu0 0
    %6795 = vperm.xlu0 %6794, %v6630
    %v6796 = vpop.permute.xlu0 %6795
    %6797 = vset.pattern.permute.xlu0 0
    %6798 = vperm.xlu0 %6797, %v6631
    %v6799 = vpop.permute.xlu0 %6798
    %6800 = vset.pattern.permute.xlu0 0
    %6801 = vperm.xlu0 %6800, %v6632
    %v6802 = vpop.permute.xlu0 %6801
    %6803 = vset.pattern.permute.xlu0 0
    %6804 = vperm.xlu0 %6803, %v6633
    %v6805 = vpop.permute.xlu0 %6804
    %6806 = vset.pattern.permute.xlu0 0
    %6807 = vperm.xlu0 %6806, %v6634
    %v6808 = vpop.permute.xlu0 %6807
    %6809 = vset.pattern.permute.xlu0 0
    %6810 = vperm.xlu0 %6809, %v6635
    %v6811 = vpop.permute.xlu0 %6810
    %6812 = vset.pattern.permute.xlu0 0
    %6813 = vperm.xlu0 %6812, %v6636
    %v6814 = vpop.permute.xlu0 %6813
    %6815 = vset.pattern.permute.xlu0 0
    %6816 = vperm.xlu0 %6815, %v6637
    %v6817 = vpop.permute.xlu0 %6816
    %6818 = vset.pattern.permute.xlu0 0
    %6819 = vperm.xlu0 %6818, %v6638
    %v6820 = vpop.permute.xlu0 %6819
    %6821 = vset.pattern.permute.xlu0 0
    %6822 = vperm.xlu0 %6821, %v6639
    %v6823 = vpop.permute.xlu0 %6822
    %6824 = vset.pattern.permute.xlu0 0
    %6825 = vperm.xlu0 %6824, %v6640
    %v6826 = vpop.permute.xlu0 %6825
    %6827 = vset.pattern.permute.xlu0 0
    %6828 = vperm.xlu0 %6827, %v6641
    %v6829 = vpop.permute.xlu0 %6828
    %6830 = vset.pattern.permute.xlu0 0
    %6831 = vperm.xlu0 %6830, %v6642
    %v6832 = vpop.permute.xlu0 %6831
    %6833 = vset.pattern.permute.xlu0 0
    %6834 = vperm.xlu0 %6833, %v6643
    %v6835 = vpop.permute.xlu0 %6834
    %6836 = vset.pattern.permute.xlu0 0
    %6837 = vperm.xlu0 %6836, %v6644
    %v6838 = vpop.permute.xlu0 %6837
    %6839 = vset.pattern.permute.xlu0 0
    %6840 = vperm.xlu0 %6839, %v6645
    %v6841 = vpop.permute.xlu0 %6840
    %6842 = vset.pattern.permute.xlu0 0
    %6843 = vperm.xlu0 %6842, %v6646
    %v6844 = vpop.permute.xlu0 %6843
    %6845 = vset.pattern.permute.xlu0 0
    %6846 = vperm.xlu0 %6845, %v6647
    %v6847 = vpop.permute.xlu0 %6846
    %6848 = vset.pattern.permute.xlu0 0
    %6849 = vperm.xlu0 %6848, %v6648
    %v6850 = vpop.permute.xlu0 %6849
    %6851 = vset.pattern.permute.xlu0 0
    %6852 = vperm.xlu0 %6851, %v6649
    %v6853 = vpop.permute.xlu0 %6852
    %6854 = vset.pattern.permute.xlu0 0
    %6855 = vperm.xlu0 %6854, %v6650
    %v6856 = vpop.permute.xlu0 %6855
    %6857 = vset.pattern.permute.xlu0 0
    %6858 = vperm.xlu0 %6857, %v6651
    %v6859 = vpop.permute.xlu0 %6858
    %6860 = vset.pattern.permute.xlu0 0
    %6861 = vperm.xlu0 %6860, %v6652
    %v6862 = vpop.permute.xlu0 %6861
    %6863 = vset.pattern.permute.xlu0 0
    %6864 = vperm.xlu0 %6863, %v6653
    %v6865 = vpop.permute.xlu0 %6864
    %6866 = vset.pattern.permute.xlu0 0
    %6867 = vperm.xlu0 %6866, %v6654
    %v6868 = vpop.permute.xlu0 %6867
    %6869 = vset.pattern.permute.xlu0 0
    %6870 = vperm.xlu0 %6869, %v6655
    %v6871 = vpop.permute.xlu0 %6870
    %v6872 = vperm.slane %v6658, %v2186
    %v6873 = vperm.slane %v6661, %v2188
    %v6874 = vsel %vm2190, %v6873, %v6872
    %v6875 = vperm.slane %v6664, %v5622
    %v6876 = vsel %vm5624, %v6875, %v6874
    %v6877 = vperm.slane %v6667, %v2186
    %v6878 = vperm.slane %v6670, %v2188
    %v6879 = vsel %vm2190, %v6878, %v6877
    %v6880 = vperm.slane %v6673, %v5622
    %v6881 = vsel %vm5624, %v6880, %v6879
    %v6882 = vperm.slane %v6676, %v2186
    %v6883 = vperm.slane %v6679, %v2188
    %v6884 = vsel %vm2190, %v6883, %v6882
    %v6885 = vperm.slane %v6682, %v5622
    %v6886 = vsel %vm5624, %v6885, %v6884
    %v6887 = vperm.slane %v6685, %v2186
    %v6888 = vperm.slane %v6688, %v2188
    %v6889 = vsel %vm2190, %v6888, %v6887
    %v6890 = vperm.slane %v6691, %v5622
    %v6891 = vsel %vm5624, %v6890, %v6889
    %v6892 = vperm.slane %v6694, %v2186
    %v6893 = vperm.slane %v6697, %v2188
    %v6894 = vsel %vm2190, %v6893, %v6892
    %v6895 = vperm.slane %v6700, %v5622
    %v6896 = vsel %vm5624, %v6895, %v6894
    %v6897 = vperm.slane %v6703, %v2186
    %v6898 = vperm.slane %v6706, %v2188
    %v6899 = vsel %vm2190, %v6898, %v6897
    %v6900 = vperm.slane %v6709, %v5622
    %v6901 = vsel %vm5624, %v6900, %v6899
    %v6902 = vperm.slane %v6712, %v2186
    %v6903 = vperm.slane %v6715, %v2188
    %v6904 = vsel %vm2190, %v6903, %v6902
    %v6905 = vperm.slane %v6718, %v5622
    %v6906 = vsel %vm5624, %v6905, %v6904
    %v6907 = vperm.slane %v6721, %v2186
    %v6908 = vperm.slane %v6724, %v2188
    %v6909 = vsel %vm2190, %v6908, %v6907
    %v6910 = vperm.slane %v6727, %v5622
    %v6911 = vsel %vm5624, %v6910, %v6909
    %v6912 = vperm.slane %v6730, %v2186
    %v6913 = vperm.slane %v6733, %v2188
    %v6914 = vsel %vm2190, %v6913, %v6912
    %v6915 = vperm.slane %v6736, %v5622
    %v6916 = vsel %vm5624, %v6915, %v6914
    %v6917 = vperm.slane %v6739, %v2186
    %v6918 = vperm.slane %v6742, %v2188
    %v6919 = vsel %vm2190, %v6918, %v6917
    %v6920 = vperm.slane %v6745, %v5622
    %v6921 = vsel %vm5624, %v6920, %v6919
    %v6922 = vperm.slane %v6748, %v2186
    %v6923 = vperm.slane %v6751, %v2188
    %v6924 = vsel %vm2190, %v6923, %v6922
    %v6925 = vperm.slane %v6754, %v5622
    %v6926 = vsel %vm5624, %v6925, %v6924
    %v6927 = vperm.slane %v6757, %v2186
    %v6928 = vperm.slane %v6760, %v2188
    %v6929 = vsel %vm2190, %v6928, %v6927
    %v6930 = vperm.slane %v6763, %v5622
    %v6931 = vsel %vm5624, %v6930, %v6929
    %v6932 = vperm.slane %v6766, %v2186
    %v6933 = vperm.slane %v6769, %v2188
    %v6934 = vsel %vm2190, %v6933, %v6932
    %v6935 = vperm.slane %v6772, %v5622
    %v6936 = vsel %vm5624, %v6935, %v6934
    %v6937 = vperm.slane %v6775, %v2186
    %v6938 = vperm.slane %v6778, %v2188
    %v6939 = vsel %vm2190, %v6938, %v6937
    %v6940 = vperm.slane %v6781, %v5622
    %v6941 = vsel %vm5624, %v6940, %v6939
    %v6942 = vperm.slane %v6784, %v2186
    %v6943 = vperm.slane %v6787, %v2188
    %v6944 = vsel %vm2190, %v6943, %v6942
    %v6945 = vperm.slane %v6790, %v5622
    %v6946 = vsel %vm5624, %v6945, %v6944
    %v6947 = vperm.slane %v6793, %v2186
    %v6948 = vperm.slane %v6796, %v2188
    %v6949 = vsel %vm2190, %v6948, %v6947
    %v6950 = vperm.slane %v6799, %v5622
    %v6951 = vsel %vm5624, %v6950, %v6949
    %v6952 = vperm.slane %v6802, %v2186
    %v6953 = vperm.slane %v6805, %v2188
    %v6954 = vsel %vm2190, %v6953, %v6952
    %v6955 = vperm.slane %v6808, %v5622
    %v6956 = vsel %vm5624, %v6955, %v6954
    %v6957 = vperm.slane %v6811, %v2186
    %v6958 = vperm.slane %v6814, %v2188
    %v6959 = vsel %vm2190, %v6958, %v6957
    %v6960 = vperm.slane %v6817, %v5622
    %v6961 = vsel %vm5624, %v6960, %v6959
    %v6962 = vperm.slane %v6820, %v2186
    %v6963 = vperm.slane %v6823, %v2188
    %v6964 = vsel %vm2190, %v6963, %v6962
    %v6965 = vperm.slane %v6826, %v5622
    %v6966 = vsel %vm5624, %v6965, %v6964
    %v6967 = vperm.slane %v6829, %v2186
    %v6968 = vperm.slane %v6832, %v2188
    %v6969 = vsel %vm2190, %v6968, %v6967
    %v6970 = vperm.slane %v6835, %v5622
    %v6971 = vsel %vm5624, %v6970, %v6969
    %v6972 = vperm.slane %v6838, %v2186
    %v6973 = vperm.slane %v6841, %v2188
    %v6974 = vsel %vm2190, %v6973, %v6972
    %v6975 = vperm.slane %v6844, %v5622
    %v6976 = vsel %vm5624, %v6975, %v6974
    %v6977 = vperm.slane %v6847, %v2186
    %v6978 = vperm.slane %v6850, %v2188
    %v6979 = vsel %vm2190, %v6978, %v6977
    %v6980 = vperm.slane %v6853, %v5622
    %v6981 = vsel %vm5624, %v6980, %v6979
    %v6982 = vperm.slane %v6856, %v2186
    %v6983 = vperm.slane %v6859, %v2188
    %v6984 = vsel %vm2190, %v6983, %v6982
    %v6985 = vperm.slane %v6862, %v5622
    %v6986 = vsel %vm5624, %v6985, %v6984
    %v6987 = vperm.slane %v6865, %v2186
    %v6988 = vperm.slane %v6868, %v2188
    %v6989 = vsel %vm2190, %v6988, %v6987
    %v6990 = vperm.slane %v6871, %v5622
    %v6991 = vsel %vm5624, %v6990, %v6989
    %v6992 = vsel %vm520, %v6881, %v6876
    %v6993 = vsel %vm524, %v6886, %v6992
    %v6994 = vsel %vm528, %v6891, %v6993
    %v6995 = vsel %vm2264, %v6896, %v6994
    %v6996 = vsel %vm2266, %v6901, %v6995
    %v6997 = vsel %vm2268, %v6906, %v6996
    %v6998 = vsel %vm2270, %v6911, %v6997
    %v6999 = vsel %vm520, %v6921, %v6916
    %v7000 = vsel %vm524, %v6926, %v6999
    %v7001 = vsel %vm528, %v6931, %v7000
    %v7002 = vsel %vm2264, %v6936, %v7001
    %v7003 = vsel %vm2266, %v6941, %v7002
    %v7004 = vsel %vm2268, %v6946, %v7003
    %v7005 = vsel %vm2270, %v6951, %v7004
    %v7006 = vsel %vm520, %v6961, %v6956
    %v7007 = vsel %vm524, %v6966, %v7006
    %v7008 = vsel %vm528, %v6971, %v7007
    %v7009 = vsel %vm2264, %v6976, %v7008
    %v7010 = vsel %vm2266, %v6981, %v7009
    %v7011 = vsel %vm2268, %v6986, %v7010
    %v7012 = vsel %vm2270, %v6991, %v7011
    %v7013 = vpack.c.b16 %v7005, %v6998
    %v7014 = vpack.c.b16 %v7012, %v7012
    %7015 = vrot.lane.b32.xlu0 %v3258, 96
    %v7016 = vpop.permute.xlu0 %7015
    %7017 = vrot.lane.b32.xlu0 %v3259, 96
    %v7018 = vpop.permute.xlu0 %7017
    %v7021 = vsel %vm3231, %v7013, 0
    %v7024 = vsel %vm3231, %v7014, 0
    %v7027 = vsel %vm3264, %v7018, 0
    %7029 = vmatpush.bf16.msra.mxu0 0
    %7030 = vmatpush.bf16.msra.mxu0 0
    %7031 = vmatpush.bf16.msra.mxu0 0
    %7032 = vmatpush.bf16.msra.mxu0 0
    %7033 = vmatpush.bf16.msra.mxu0 0
    %7034 = vmatpush.bf16.msra.mxu0 0
    %7035 = vmatpush.bf16.msra.mxu0 %v7027
    %7036 = vmatpush.bf16.msra.mxu0 %v7016
    %7037 = vmatmul.bf16.gmra.mxu0 %v7021
    %v7038 = vpop.f32.mrf.mxu0
    %v7039 = vadd.f32 0.0, %v7038
    %v7040 = vpop.f32.mrf.mxu0
    %v7041 = vadd.f32 0.0, %v7040
    %7042 = vmatmul.bf16.gmra.mxu0 %v7024
    %v7043 = vpop.f32.mrf.mxu0
    %v7044 = vadd.f32 0.0, %v7043
    %v7045 = vpop.f32.mrf.mxu0
    %7046 = vdwg.mxu0
    %vm7047 = vcmp.gt.f32.partialorder %v6481, 0.0
    %vm7048 = vcmp.gt.f32.partialorder %v6484, 0.0
    %vm7049 = vcmp.gt.f32.partialorder %v6487, 0.0
    %v7050 = vsel %vm7047, %v6481, 1.0
    %v7051 = vsel %vm7048, %v6484, 1.0
    %v7052 = vsel %vm7049, %v6487, 1.0
    %v7053 = vrcp.pop %v7050
    %v7054 = vrcp.pop %v7051
    %v7055 = vrcp.pop %v7052
    %v7056 = vmul.f32 %v7039, %v7053
    %v7057 = vmul.f32 %v7041, %v7054
    %v7058 = vmul.f32 %v7044, %v7055
    %v7059 = vperm.slane %v192, 7
    %v7060 = vadd.f32 %v7056, %v7059
    %v7061 = vadd.f32 %v7057, %v7059
    %v7062 = vadd.f32 %v7058, %v7059
    %v7063 = vadd.f32 %v3175, %v7060
    %v7064 = vadd.f32 %v3176, %v7061
    %v7065 = vadd.f32 %v3177, %v7062
    %v7066 = vmax.f32 %v3482, 0.0
    %v7067 = vmax.f32 %v3483, 0.0
    %v7068 = vpack.c.bf16 %v7067, %v7066
    %v7069 = vmax.f32 %v7063, 0.0
    %v7070 = vmax.f32 %v7064, 0.0
    %v7071 = vmax.f32 %v7065, 0.0
    %v7072 = vpack.c.bf16 %v7070, %v7069
    %v7073 = vpack.c.bf16 %v7071, %v7071
    %v7074 = vmax.f32 %v3372, 0.0
    %v7075 = vpack.c.bf16 %v7074, %v7074
    %v7076 = vld [vmem:[#allocation9] sm:$0xff]
    %v7077 = vld [vmem:[#allocation9 + $0x8] sm:$0xf]
    %v7078 = vld [vmem:[#allocation9 + $0xc] sm:$0xff]
    %v7079 = vld [vmem:[#allocation9 + $0x14] sm:$0xf]
    %v7080 = vld [vmem:[#allocation9 + $0x18] sm:$0xff]
    %v7081 = vld [vmem:[#allocation9 + $0x20] sm:$0xf]
    %v7082 = vld [vmem:[#allocation9 + $0x24] sm:$0xff]
    %v7083 = vld [vmem:[#allocation9 + $0x2c] sm:$0xf]
    %v7084 = vld [vmem:[#allocation10] sm:$0xff]
    %v7085 = vld [vmem:[#allocation10 + $0x8] sm:$0xff]
    %v7086 = vld [vmem:[#allocation10 + $0x10] sm:$0xff]
    %v7087 = vld [vmem:[#allocation10 + $0x18] sm:$0xff]
    %v7088 = vperm.slane %v7084, 0
    %v7093 = vunpack.c.l.b16 %v7076
    %v7094 = vunpack.c.l.b16 %v7078
    %v7095 = vunpack.c.l.b16 %v7080
    %v7096 = vunpack.c.l.b16 %v7082
    %v7097 = vpack.c.b16 %v7094, %v7093
    %v7098 = vpack.c.b16 %v7096, %v7095
    %v7102 = vsel %vm1437, %v7068, 0
    %7104 = vmatpush.bf16.msra.mxu0 0
    %7105 = vmatpush.bf16.msra.mxu0 0
    %7106 = vmatpush.bf16.msra.mxu0 0
    %7107 = vmatpush.bf16.msra.mxu0 0
    %7108 = vmatpush.bf16.msra.mxu0 0
    %7109 = vmatpush.bf16.msra.mxu0 0
    %7110 = vmatpush.bf16.msra.mxu0 %v7098
    %7111 = vmatpush.bf16.msra.mxu0 %v7097
    %7112 = vmatmul.bf16.gmra.mxu0 %v7102
    %v7113 = vpop.f32.mrf.mxu0
    %v7114 = vadd.f32 %v7088, %v7113
    %v7115 = vpop.f32.mrf.mxu0
    %v7116 = vadd.f32 %v7088, %v7115
    %7117 = vdwg.mxu0
    %v7118 = vperm.slane %v7085, 0
    %v7119 = vunpack.c.h.b16 %v7076
    %v7120 = vunpack.c.h.b16 %v7078
    %v7121 = vunpack.c.h.b16 %v7080
    %v7122 = vunpack.c.h.b16 %v7082
    %v7123 = vpack.c.b16 %v7120, %v7119
    %v7124 = vpack.c.b16 %v7122, %v7121
    %v7128 = vsel %vm1437, %v7072, 0
    %v7131 = vsel %vm1437, %v7073, 0
    %7133 = vmatpush.bf16.msra.mxu0 0
    %7134 = vmatpush.bf16.msra.mxu0 0
    %7135 = vmatpush.bf16.msra.mxu0 0
    %7136 = vmatpush.bf16.msra.mxu0 0
    %7137 = vmatpush.bf16.msra.mxu0 0
    %7138 = vmatpush.bf16.msra.mxu0 0
    %7139 = vmatpush.bf16.msra.mxu0 %v7124
    %7140 = vmatpush.bf16.msra.mxu0 %v7123
    %7141 = vmatmul.bf16.gmra.mxu0 %v7128
    %v7142 = vpop.f32.mrf.mxu0
    %v7143 = vadd.f32 %v7118, %v7142
    %v7144 = vpop.f32.mrf.mxu0
    %v7145 = vadd.f32 %v7118, %v7144
    %7146 = vmatmul.bf16.gmra.mxu0 %v7131
    %v7147 = vpop.f32.mrf.mxu0
    %v7148 = vadd.f32 %v7118, %v7147
    %v7149 = vpop.f32.mrf.mxu0
    %7150 = vdwg.mxu0
    %v7151 = vpack.c.bf16 %v7143, %v7143
    %v7152 = vpack.c.bf16 %v7145, %v7145
    %v7153 = vpack.c.bf16 %v7148, %v7148
    %v7154 = vperm.slane %v7086, 0
    %v7159 = vunpack.c.l.b16 %v7077
    %v7160 = vunpack.c.l.b16 %v7079
    %v7161 = vunpack.c.l.b16 %v7081
    %v7162 = vunpack.c.l.b16 %v7083
    %v7163 = vpack.c.b16 %v7160, %v7159
    %v7164 = vpack.c.b16 %v7162, %v7161
    %v7168 = vsel %vm1437, %v7075, 0
    %7170 = vmatpush.bf16.msra.mxu0 0
    %7171 = vmatpush.bf16.msra.mxu0 0
    %7172 = vmatpush.bf16.msra.mxu0 0
    %7173 = vmatpush.bf16.msra.mxu0 0
    %7174 = vmatpush.bf16.msra.mxu0 0
    %7175 = vmatpush.bf16.msra.mxu0 0
    %7176 = vmatpush.bf16.msra.mxu0 %v7164
    %7177 = vmatpush.bf16.msra.mxu0 %v7163
    %7178 = vmatmul.bf16.gmra.mxu0 %v7168
    %v7179 = vpop.f32.mrf.mxu0
    %v7180 = vadd.f32 %v7154, %v7179
    %v7181 = vpop.f32.mrf.mxu0
    %7182 = vdwg.mxu0
    %v7183 = vpack.c.bf16 %v7180, %v7180
    %7187 = vrot.lane.b32.xlu0 %v7143, 64
    %v7188 = vpop.permute.xlu0 %7187
    %7189 = vrot.lane.b32.xlu0 %v7145, 64
    %v7190 = vpop.permute.xlu0 %7189
    %7191 = vrot.lane.b32.xlu0 %v7148, 64
    %v7192 = vpop.permute.xlu0 %7191
    %7196 = vxpose.xlu0.b32.start [1/16] %v7188, 128
    %7197 = vxpose.xlu0.b32.cont [2/16] %v7190, 128
    %7198 = vxpose.xlu0.b32.cont [3/16] %v7192, 128
    %7199 = vxpose.xlu0.b32.cont [4/16] 0.0, 128
    %7200 = vxpose.xlu0.b32.cont [5/16] 0.0, 128
    %7201 = vxpose.xlu0.b32.cont [6/16] 0.0, 128
    %7202 = vxpose.xlu0.b32.cont [7/16] 0.0, 128
    %7203 = vxpose.xlu0.b32.cont [8/16] 0.0, 128
    %7204 = vxpose.xlu0.b32.cont [9/16] 0.0, 128
    %7205 = vxpose.xlu0.b32.cont [10/16] 0.0, 128
    %7206 = vxpose.xlu0.b32.cont [11/16] 0.0, 128
    %7207 = vxpose.xlu0.b32.cont [12/16] 0.0, 128
    %7208 = vxpose.xlu0.b32.cont [13/16] 0.0, 128
    %7209 = vxpose.xlu0.b32.cont [14/16] 0.0, 128
    %7210 = vxpose.xlu0.b32.cont [15/16] 0.0, 128
    %7211 = vxpose.xlu0.b32.end [16/16] 0.0, 128
    %v7212 = vpop.trf.xlu0
    %v7213 = vpop.trf.xlu0
    %v7214 = vpop.trf.xlu0
    %v7215 = vpop.trf.xlu0
    %v7216 = vpop.trf.xlu0
    %v7217 = vpop.trf.xlu0
    %v7218 = vpop.trf.xlu0
    %v7219 = vpop.trf.xlu0
    %v7220 = vpop.trf.xlu0
    %v7221 = vpop.trf.xlu0
    %v7222 = vpop.trf.xlu0
    %v7223 = vpop.trf.xlu0
    %v7224 = vpop.trf.xlu0
    %v7225 = vpop.trf.xlu0
    %v7226 = vpop.trf.xlu0
    %v7227 = vpop.trf.xlu0
    %7229 = vset.pattern.permute.xlu0 65
    %7230 = vperm.xlu0 %7229, %v7114
    %v7231 = vpop.permute.xlu0 %7230
    %7234 = vset.pattern.permute.xlu0 65
    %7235 = vperm.xlu0 %7234, %v7116
    %v7236 = vpop.permute.xlu0 %7235
    %v7238 = vperm.slane %v7212, 0
    %v7239 = vadd.f32 %v7231, %v7238
    %v7240 = vadd.f32 %v7236, %v7238
    %vm7241 = vcmp.ge.f32.partialorder %v7239, 0.0
    %vm7242 = vcmp.ge.f32.partialorder %v7240, 0.0
    %v7243 = vmul.f32 %v7239, 0.2
    %v7244 = vmul.f32 %v7240, 0.2
    %v7245 = vsel %vm7241, %v7239, %v7243
    %v7246 = vsel %vm7242, %v7240, %v7244
    %v7247 = vadd.f32 %v7245, %v136
    %v7248 = vadd.f32 %v7246, %v137
    %v7249 = vsel %vm3231, %v7247, -inf
    %7250 = vmax.xlane.f32.xlu0 %v7249
    %v7251 = vpop.xlane.xlu0 %7250
    %v7252 = vsel %vm3231, %v7248, -inf
    %7253 = vmax.xlane.f32.xlu0 %v7252
    %v7254 = vpop.xlane.xlu0 %7253
    %vm7255 = vcmp.gt.f32.partialorder %v7251, -5e+29
    %vm7256 = vcmp.gt.f32.partialorder %v7254, -5e+29
    %v7257 = vsel %vm7255, %v7251, 0.0
    %v7258 = vsel %vm7256, %v7254, 0.0
    %v7259 = vsub.f32 %v7247, %v7257
    %v7260 = vsub.f32 %v7248, %v7258
    %v7261 = vmul.f32 %v7259, 1.442695
    %v7262 = vpow.pop %v7261
    %v7263 = vmul.f32 %v7260, 1.442695
    %v7264 = vpow.pop %v7263
    %v7265 = vsel %vm3231, %v7262, 0.0
    %7266 = vadd.xlane.f32.xlu0 %v7265
    %v7267 = vpop.xlane.xlu0 %7266
    %v7268 = vsel %vm3231, %v7264, 0.0
    %7269 = vadd.xlane.f32.xlu0 %v7268
    %v7270 = vpop.xlane.xlu0 %7269
    %v7271 = vpack.c.bf16 %v7264, %v7262
    %v7275 = vunpack.c.l.b16 %v7151
    %v7276 = vunpack.c.l.b16 %v7152
    %v7277 = vunpack.c.l.b16 %v7153
    %v7278 = vpack.c.b16 %v7276, %v7275
    %v7279 = vpack.c.b16 %v7277, %v7277
    %v7282 = vsel %vm3231, %v7271, 0
    %v7285 = vsel %vm3264, %v7279, 0
    %7287 = vmatpush.bf16.msra.mxu0 0
    %7288 = vmatpush.bf16.msra.mxu0 0
    %7289 = vmatpush.bf16.msra.mxu0 0
    %7290 = vmatpush.bf16.msra.mxu0 0
    %7291 = vmatpush.bf16.msra.mxu0 0
    %7292 = vmatpush.bf16.msra.mxu0 0
    %7293 = vmatpush.bf16.msra.mxu0 %v7285
    %7294 = vmatpush.bf16.msra.mxu0 %v7278
    %7295 = vmatmul.bf16.gmra.mxu0 %v7282
    %v7296 = vpop.f32.mrf.mxu0
    %v7297 = vadd.f32 0.0, %v7296
    %v7298 = vpop.f32.mrf.mxu0
    %v7299 = vadd.f32 0.0, %v7298
    %7300 = vdwg.mxu0
    %vm7301 = vcmp.gt.f32.partialorder %v7267, 0.0
    %vm7302 = vcmp.gt.f32.partialorder %v7270, 0.0
    %v7303 = vsel %vm7301, %v7267, 1.0
    %v7304 = vsel %vm7302, %v7270, 1.0
    %v7305 = vrcp.pop %v7303
    %v7306 = vrcp.pop %v7304
    %v7307 = vmul.f32 %v7297, %v7305
    %v7308 = vmul.f32 %v7299, %v7306
    %v7309 = vperm.slane %v7084, 4
    %v7310 = vadd.f32 %v7307, %v7309
    %v7311 = vadd.f32 %v7308, %v7309
    %7313 = vrot.lane.b32.xlu0 %v7180, 96
    %v7314 = vpop.permute.xlu0 %7313
    %7316 = vxpose.xlu0.b32.start [1/16] %v7314, 128
    %7317 = vxpose.xlu0.b32.cont [2/16] 0.0, 128
    %7318 = vxpose.xlu0.b32.cont [3/16] 0.0, 128
    %7319 = vxpose.xlu0.b32.cont [4/16] 0.0, 128
    %7320 = vxpose.xlu0.b32.cont [5/16] 0.0, 128
    %7321 = vxpose.xlu0.b32.cont [6/16] 0.0, 128
    %7322 = vxpose.xlu0.b32.cont [7/16] 0.0, 128
    %7323 = vxpose.xlu0.b32.cont [8/16] 0.0, 128
    %7324 = vxpose.xlu0.b32.cont [9/16] 0.0, 128
    %7325 = vxpose.xlu0.b32.cont [10/16] 0.0, 128
    %7326 = vxpose.xlu0.b32.cont [11/16] 0.0, 128
    %7327 = vxpose.xlu0.b32.cont [12/16] 0.0, 128
    %7328 = vxpose.xlu0.b32.cont [13/16] 0.0, 128
    %7329 = vxpose.xlu0.b32.cont [14/16] 0.0, 128
    %7330 = vxpose.xlu0.b32.cont [15/16] 0.0, 128
    %7331 = vxpose.xlu0.b32.end [16/16] 0.0, 128
    %v7332 = vpop.trf.xlu0
    %v7333 = vpop.trf.xlu0
    %v7334 = vpop.trf.xlu0
    %v7335 = vpop.trf.xlu0
    %v7336 = vpop.trf.xlu0
    %v7337 = vpop.trf.xlu0
    %v7338 = vpop.trf.xlu0
    %v7339 = vpop.trf.xlu0
    %v7340 = vpop.trf.xlu0
    %v7341 = vpop.trf.xlu0
    %v7342 = vpop.trf.xlu0
    %v7343 = vpop.trf.xlu0
    %v7344 = vpop.trf.xlu0
    %v7345 = vpop.trf.xlu0
    %v7346 = vpop.trf.xlu0
    %v7347 = vpop.trf.xlu0
    %7348 = vset.pattern.permute.xlu0 66
    %7349 = vperm.xlu0 %7348, %v7114
    %v7350 = vpop.permute.xlu0 %7349
    %7352 = vset.pattern.permute.xlu0 66
    %7353 = vperm.xlu0 %7352, %v7116
    %v7354 = vpop.permute.xlu0 %7353
    %v7356 = vperm.slane %v7332, 0
    %v7357 = vadd.f32 %v7350, %v7356
    %v7358 = vadd.f32 %v7354, %v7356
    %vm7359 = vcmp.ge.f32.partialorder %v7357, 0.0
    %vm7360 = vcmp.ge.f32.partialorder %v7358, 0.0
    %v7361 = vmul.f32 %v7357, 0.2
    %v7362 = vmul.f32 %v7358, 0.2
    %v7363 = vsel %vm7359, %v7357, %v7361
    %v7364 = vsel %vm7360, %v7358, %v7362
    %v7365 = vadd.f32 %v7363, %v139
    %v7366 = vadd.f32 %v7364, %v140
    %v7367 = vsel %vm3427, %v7365, -inf
    %7368 = vmax.xlane.f32.xlu0 %v7367
    %v7369 = vpop.xlane.xlu0 %7368
    %v7370 = vsel %vm3427, %v7366, -inf
    %7371 = vmax.xlane.f32.xlu0 %v7370
    %v7372 = vpop.xlane.xlu0 %7371
    %vm7373 = vcmp.gt.f32.partialorder %v7369, -5e+29
    %vm7374 = vcmp.gt.f32.partialorder %v7372, -5e+29
    %v7375 = vsel %vm7373, %v7369, 0.0
    %v7376 = vsel %vm7374, %v7372, 0.0
    %v7377 = vsub.f32 %v7365, %v7375
    %v7378 = vsub.f32 %v7366, %v7376
    %v7379 = vmul.f32 %v7377, 1.442695
    %v7380 = vpow.pop %v7379
    %v7381 = vmul.f32 %v7378, 1.442695
    %v7382 = vpow.pop %v7381
    %v7383 = vsel %vm3427, %v7380, 0.0
    %7384 = vadd.xlane.f32.xlu0 %v7383
    %v7385 = vpop.xlane.xlu0 %7384
    %v7386 = vsel %vm3427, %v7382, 0.0
    %7387 = vadd.xlane.f32.xlu0 %v7386
    %v7388 = vpop.xlane.xlu0 %7387
    %v7389 = vpack.c.bf16 %v7382, %v7380
    %v7391 = vsel %vm3427, %v7389, 0
    %v7394 = vsel %vm3264, %v7183, 0
    %7396 = vmatpush.bf16.msra.mxu0 0
    %7397 = vmatpush.bf16.msra.mxu0 0
    %7398 = vmatpush.bf16.msra.mxu0 0
    %7399 = vmatpush.bf16.msra.mxu0 0
    %7400 = vmatpush.bf16.msra.mxu0 0
    %7401 = vmatpush.bf16.msra.mxu0 0
    %7402 = vmatpush.bf16.msra.mxu0 0
    %7403 = vmatpush.bf16.msra.mxu0 %v7394
    %7404 = vmatmul.bf16.gmra.mxu0 %v7391
    %v7405 = vpop.f32.mrf.mxu0
    %v7406 = vadd.f32 0.0, %v7405
    %v7407 = vpop.f32.mrf.mxu0
    %v7408 = vadd.f32 0.0, %v7407
    %7409 = vdwg.mxu0
    %vm7410 = vcmp.gt.f32.partialorder %v7385, 0.0
    %vm7411 = vcmp.gt.f32.partialorder %v7388, 0.0
    %v7412 = vsel %vm7410, %v7385, 1.0
    %v7413 = vsel %vm7411, %v7388, 1.0
    %v7414 = vrcp.pop %v7412
    %v7415 = vrcp.pop %v7413
    %v7416 = vmul.f32 %v7406, %v7414
    %v7417 = vmul.f32 %v7408, %v7415
    %v7418 = vperm.slane %v7084, 6
    %v7419 = vadd.f32 %v7416, %v7418
    %v7420 = vadd.f32 %v7417, %v7418
    %v7421 = vadd.f32 %v7310, %v7419
    %v7422 = vadd.f32 %v7311, %v7420
    %v7423 = vmax.f32 %v7421, 0.0
    %v7424 = vmax.f32 %v7422, 0.0
    %v7425 = vpack.c.bf16 %v7424, %v7423
    %v7426 = vld [vmem:[%s6] sm:$0xf]
    %v7427 = vld [vmem:[%s6 + $0x4] sm:$0xf]
    %v7428 = vperm.slane %v7087, 0
    %v7431 = vunpack.c.l.b16 %v7426
    %v7432 = vunpack.c.l.b16 %v7427
    %v7433 = vpack.c.b16 %v7432, %v7431
    %v7436 = vsel %vm2289, %v7425, 0
    %7438 = vmatpush.bf16.msra.mxu0 0
    %7439 = vmatpush.bf16.msra.mxu0 0
    %7440 = vmatpush.bf16.msra.mxu0 0
    %7441 = vmatpush.bf16.msra.mxu0 0
    %7442 = vmatpush.bf16.msra.mxu0 0
    %7443 = vmatpush.bf16.msra.mxu0 0
    %7444 = vmatpush.bf16.msra.mxu0 0
    %7445 = vmatpush.bf16.msra.mxu0 %v7433
    %7446 = vmatmul.bf16.gmra.mxu0 %v7436
    %v7447 = vpop.f32.mrf.mxu0
    %v7448 = vadd.f32 %v7428, %v7447
    %v7449 = vpop.f32.mrf.mxu0
    %v7450 = vadd.f32 %v7428, %v7449
    %7451 = vdwg.mxu0
    %7452 = vst.msk [vmem:[%s7] sm:$0xff] %vm3427, %v7448
    %7453 = vst.msk [vmem:[%s7 + $0x8] sm:$0xff] %vm3427, %v7450
    // Predicated region
    $region54: #{forward.1} parent=1 // pred_check
      _
    $region55: #{forward.1} parent=1 // pred_check_branch
      %7455 = sbr.rel (0) target = $region57
    $region56: #{forward.1} parent=1 // pred_region
      _
    $region57: #{forward.1} parent=1 // pred_fallthru
      _
    // Predicated region
    $region58: #{forward.1} parent=1 // pred_check
      _
    $region59: #{forward.1} parent=1 // pred_check_branch
      %7457 = sbr.rel (0) target = $region61
    $region60: #{forward.1} parent=1 // pred_region
      _
    $region61: #{forward.1} parent=1 // pred_fallthru
      _
    %7458 = vsyncpa [#allocation3], 1
    %7459 = vsyncpa [#allocation5], 1
    %7460 = vsyncpa [#allocation8], 1
    %7461 = vsyncpa [#allocation11], 1

</llo_original>
